<compile_context>
chip_gen: v7x
topology: tpu7x:2x2x1
jax: 0.10.0
libtpu: 0.0.40
codegen_flags: <defaults>
</compile_context>

<pallas_src>
import functools

import jax
import jax.numpy as jnp
from jax import lax
from jax.experimental import pallas as pl
from jax.experimental.pallas import tpu as pltpu


# ----------------------------------------------------------------------------
# In-kernel helper: dense single-head GAT message passing over complete graphs
# ----------------------------------------------------------------------------

def _gat_attention(z, a_src, a_dst, *, mask_self, slope=0.2):
    """z: (G, N, D) transformed node features; a_src/a_dst: (1, D).
    Softmax over incoming edges (source nodes) of each destination node."""
    _, n, _ = z.shape
    ssrc = jnp.sum(z * a_src[None], axis=-1)                     # (G, N)
    sdst = jnp.sum(z * a_dst[None], axis=-1, keepdims=True)      # (G, N, 1)
    e = sdst + ssrc[:, None, :]                                  # e[g, dst, src]
    e = jnp.where(e > 0, e, slope * e)                           # LeakyReLU(0.2)
    if mask_self:                                                # complete graph w/o self loops
        ii = lax.broadcasted_iota(jnp.int32, (n, n), 0)
        jj = lax.broadcasted_iota(jnp.int32, (n, n), 1)
        e = jnp.where((ii == jj)[None], -1e30, e)
    e = e - jnp.max(e, axis=-1, keepdims=True)
    p = jnp.exp(e)
    alpha = p / jnp.sum(p, axis=-1, keepdims=True)               # (G, Ndst, Nsrc)
    out = jnp.zeros_like(z)
    for i in range(n):   # N <= 6: unrolled broadcast-FMA aggregation (pure VPU)
        out = out + alpha[:, :, i:i + 1] * z[:, i:i + 1, :]
    return out


# ----------------------------------------------------------------------------
# The fused PastEncoder kernel (Bblk batch elements per grid step)
# ----------------------------------------------------------------------------

def _past_encoder_kernel(x_ref, p_ref, out_ref, nodes_scr, ftraj_scr, *,
                         Bblk, T, A, F, model_dim, rel_hidden, rel_out,
                         dilations, layout):
    def ld(name):                                   # free static slice of the packed slab
        r0, r, c = layout[name]
        return p_ref[r0:r0 + r, 0:c]

    X = x_ref[...]                                  # (Bblk, A, T, F) agent-major
    rows = Bblk * A * T
    h = X.reshape(rows, F)                          # row = (b, a, t)

    # ---- causal shift matrices (built ONCE per grid step, reused by both convs) ----
    rr = lax.broadcasted_iota(jnp.int32, (rows, rows), 0)
    cc = lax.broadcasted_iota(jnp.int32, (rows, rows), 1)
    t_of_row = rr % T
    shift_mats = {d: jnp.where((cc == rr - d) & (t_of_row >= d), 1.0, 0.0)
                  for d in sorted(set(dilations))}

    def conv_k2_relu(hf, wp, wc, b, smat):
        hprev = jnp.dot(smat, hf, preferred_element_type=jnp.float32)     # causal shift
        y = jnp.dot(hprev, wp, preferred_element_type=jnp.float32)
        y = y + jnp.dot(hf, wc, preferred_element_type=jnp.float32)
        return jnp.maximum(y + b, 0.0)

    # ---- TCN: 3 blocks, kernel_size=2, dilations 1/2/4, chomp + relu, residual ----
    for bi, d in enumerate(dilations):
        smat = shift_mats[d]
        inp = h
        h = conv_k2_relu(h, ld(f"tcn{bi}_w1p"), ld(f"tcn{bi}_w1c"), ld(f"tcn{bi}_b1"), smat)
        h = conv_k2_relu(h, ld(f"tcn{bi}_w2p"), ld(f"tcn{bi}_w2c"), ld(f"tcn{bi}_b2"), smat)
        res = jnp.dot(inp, ld(f"tcn{bi}_wd"),
                      preferred_element_type=jnp.float32) + ld(f"tcn{bi}_bd")
        h = jnp.maximum(h + res, 0.0)

    # ---- input_fc ----
    tf = jnp.dot(h, ld("input_fc_w"), preferred_element_type=jnp.float32) + ld("input_fc_b")
    tf4 = tf.reshape(Bblk, A, T, model_dim)

    # ---- agent GAT: ftraj assembled agent-major, then ONE (Bblk*A,64)@(64,64) matmul ----
    for t in range(T):
        ftraj_scr[:, :, t * model_dim:(t + 1) * model_dim] = tf4[:, :, t, :]
    ftraj = ftraj_scr[...].reshape(Bblk * A, T * model_dim)
    zg = jnp.dot(ftraj, ld("gat_fc"), preferred_element_type=jnp.float32)
    zg = zg.reshape(Bblk, A, T * model_dim)
    gat_out = _gat_attention(zg, ld("gat_a_src"), ld("gat_a_dst"), mask_self=True)
    base = T * model_dim
    out_ref[:, :, 0:base] = gat_out.astype(out_ref.dtype)

    # ---- relationGAT: window node features built in-kernel via scratch ----
    nW = T - 1
    per_team = A // 2                       # 2 teams of A//2 agents (reference implies A=4)
    N = 3 * per_team                        # 6 nodes per team/window graph
    # graph order (b, w, team); node order (step, agent_in_team)
    for s in range(3):
        hi = nW if s < 2 else nW - 1        # last window's 3rd step is zero-padded
        for a in range(A):
            team, aint = a // per_team, a % per_team
            nodes_scr[:, 0:hi, team, s * per_team + aint, :] = X[:, a, s:s + hi, :]
    nodes_scr[:, nW - 1:nW, :, 2 * per_team:3 * per_team, :] = jnp.zeros(
        (Bblk, 1, 2, per_team, F), jnp.float32)

    G = Bblk * nW * 2
    nodes = nodes_scr[...].reshape(G, N, F)
    z1 = jnp.dot(nodes.reshape(G * N, F), ld("rgat_fc1"),
                 preferred_element_type=jnp.float32).reshape(G, N, rel_hidden)
    h1 = _gat_attention(z1, ld("rgat_a1_src"), ld("rgat_a1_dst"), mask_self=False)
    h1 = jnp.where(h1 > 0, h1, jnp.exp(h1) - 1.0)          # ELU between the two GAT layers
    z2 = jnp.dot(h1.reshape(G * N, rel_hidden), ld("rgat_fc2"),
                 preferred_element_type=jnp.float32).reshape(G, N, rel_out)
    h2 = _gat_attention(z2, ld("rgat_a2_src"), ld("rgat_a2_dst"), mask_self=False)

    # scatter directly into the final per-agent layout: col = base + (w*3 + s)*rel_out
    H5 = h2.reshape(Bblk, nW, 2, N, rel_out)
    for w in range(nW):
        Hw = H5[:, w]                                      # (Bblk, 2, N, rel_out)
        for s in range(3):
            blk = Hw[:, :, s * per_team:(s + 1) * per_team, :].reshape(Bblk, A, rel_out)
            c0 = base + (w * 3 + s) * rel_out
            out_ref[:, :, c0:c0 + rel_out] = blk.astype(out_ref.dtype)


# ----------------------------------------------------------------------------
# Parameters: deterministic init + one-time packing into a single (rows, 128) slab
# ----------------------------------------------------------------------------

def _init(key, shape, scale=0.1):
    return scale * jax.random.normal(key, shape, dtype=jnp.float32)


def init_params(key, model_dim=8, obs_len=8, in_feat=8):
    keys = jax.random.split(key, 40)
    ki = iter(keys)
    p = {}
    p["input_fc_w"] = _init(next(ki), (in_feat, model_dim))
    p["input_fc_b"] = _init(next(ki), (model_dim,))
    chans = [in_feat, 32, 16, model_dim]
    blocks = []
    for li in range(3):
        cin, cout = chans[li], chans[li + 1]
        blocks.append(dict(
            w1_p=_init(next(ki), (cin, cout)), w1_c=_init(next(ki), (cin, cout)),
            b1=_init(next(ki), (cout,)),
            w2_p=_init(next(ki), (cout, cout)), w2_c=_init(next(ki), (cout, cout)),
            b2=_init(next(ki), (cout,)),
            wd=_init(next(ki), (cin, cout)), bd=_init(next(ki), (cout,)),
        ))
    p["tcn_blocks"] = blocks
    D = model_dim * obs_len
    p["gat_fc"] = _init(next(ki), (D, D))
    p["gat_a_src"] = _init(next(ki), (1, D))
    p["gat_a_dst"] = _init(next(ki), (1, D))
    p["rgat_fc1"] = _init(next(ki), (in_feat, 16))
    p["rgat_a1_src"] = _init(next(ki), (1, 16))
    p["rgat_a1_dst"] = _init(next(ki), (1, 16))
    p["rgat_fc2"] = _init(next(ki), (16, 8))
    p["rgat_a2_src"] = _init(next(ki), (1, 8))
    p["rgat_a2_dst"] = _init(next(ki), (1, 8))
    # TODO(synk): input_fc2 / input_fc3 exist in the reference __init__ but are never
    # used in forward(); they are omitted here.
    return p


_LANES = 128


def _round8(n):
    return ((n + 7) // 8) * 8


def _param_seq(params):
    seq = []
    for bi, blk in enumerate(params["tcn_blocks"]):
        seq += [(f"tcn{bi}_w1p", blk["w1_p"]), (f"tcn{bi}_w1c", blk["w1_c"]),
                (f"tcn{bi}_b1", blk["b1"].reshape(1, -1)),
                (f"tcn{bi}_w2p", blk["w2_p"]), (f"tcn{bi}_w2c", blk["w2_c"]),
                (f"tcn{bi}_b2", blk["b2"].reshape(1, -1)),
                (f"tcn{bi}_wd", blk["wd"]), (f"tcn{bi}_bd", blk["bd"].reshape(1, -1))]
    seq += [("input_fc_w", params["input_fc_w"]),
            ("input_fc_b", params["input_fc_b"].reshape(1, -1)),
            ("gat_fc", params["gat_fc"]),
            ("gat_a_src", params["gat_a_src"]), ("gat_a_dst", params["gat_a_dst"]),
            ("rgat_fc1", params["rgat_fc1"]),
            ("rgat_a1_src", params["rgat_a1_src"]), ("rgat_a1_dst", params["rgat_a1_dst"]),
            ("rgat_fc2", params["rgat_fc2"]),
            ("rgat_a2_src", params["rgat_a2_src"]), ("rgat_a2_dst", params["rgat_a2_dst"])]
    return seq


def pack_params(params):
    """Pack every weight/bias into ONE (rows, 128) fp32 slab (8-row-aligned offsets)
    so the kernel needs a single parameter DMA and unpacks with free static slices.
    Done once, outside the jitted forward (weight-stationary)."""
    seq = _param_seq(params)
    layout, slabs, row = {}, [], 0
    for name, arr in seq:
        r, c = arr.shape
        layout[name] = (row, int(r), int(c))
        slab = jnp.zeros((_round8(r), _LANES), jnp.float32).at[:r, :c].set(
            arr.astype(jnp.float32))
        slabs.append(slab)
        row += _round8(r)
    return jnp.concatenate(slabs, axis=0), layout


# ----------------------------------------------------------------------------
# Forward pass: one fused pallas_call, wrapper does only bitcast reshapes
# ----------------------------------------------------------------------------

def _pick_batch_block(B, rows_per_batch, target_rows=256):
    """Largest divisor of B keeping matmul rows <= target_rows, preferring to keep
    >=2 grid steps so v7x's two TensorCores both get work."""
    divs = [d for d in range(1, B + 1) if B % d == 0]
    pref = [d for d in divs if d * rows_per_batch <= target_rows and B // d >= 2]
    if pref:
        return max(pref)
    ok = [d for d in divs if d * rows_per_batch <= target_rows]
    return max(ok) if ok else 1


def past_encoder_forward(packed_params, inputs, *, layout, batch_size, agent_num,
                         obs_len, model_dim):
    B, A, T = batch_size, agent_num, obs_len
    BA, T_, F = inputs.shape
    assert BA == B * A and T_ == T and A == 4, "reference forward implies agent_num == 4"
    x4 = inputs.reshape(B, A, T, F)                       # bitcast only

    nW = T - 1
    rel_hidden = layout["rgat_fc1"][2]
    rel_out = layout["rgat_fc2"][2]
    out_cols = T * model_dim + nW * 3 * rel_out           # 64 + 168 = 232

    Bblk = _pick_batch_block(B, A * T)
    grid = (B // Bblk,)

    kern = functools.partial(
        _past_encoder_kernel, Bblk=Bblk, T=T, A=A, F=F, model_dim=model_dim,
        rel_hidden=rel_hidden, rel_out=rel_out, dilations=(1, 2, 4), layout=layout)

    out = pl.pallas_call(
        kern,
        out_shape=jax.ShapeDtypeStruct((B, A, out_cols), jnp.float32),
        grid=grid,
        in_specs=[pl.BlockSpec((Bblk, A, T, F), lambda i: (i, 0, 0, 0)),
                  pl.BlockSpec(packed_params.shape, lambda i: (0, 0))],   # revisited slab
        out_specs=pl.BlockSpec((Bblk, A, out_cols), lambda i: (i, 0, 0)),
        scratch_shapes=[pltpu.VMEM((Bblk, nW, 2, 3 * (A // 2), F), jnp.float32),
                        pltpu.VMEM((Bblk, A, T * model_dim), jnp.float32)],
        compiler_params=pltpu.CompilerParams(
            dimension_semantics=("parallel",)),
    )(x4, packed_params)

    # row-major order of (B, A, out_cols) already IS the final layout -> bitcast reshape
    return out.reshape(B * A, out_cols)


# ----------------------------------------------------------------------------
# Demo
# ----------------------------------------------------------------------------

if __name__ == "__main__":
    batch_size, agent_num, obs_len, feat, hidden_dim = 2, 4, 8, 8, 8
    key = jax.random.PRNGKey(0)
    pkey, xkey = jax.random.split(key)
    params = init_params(pkey, model_dim=hidden_dim, obs_len=obs_len, in_feat=feat)
    packed, layout = pack_params(params)          # one-time host-side packing
    inputs = jax.random.normal(xkey, (batch_size * agent_num, obs_len, feat), jnp.float32)

    fwd = jax.jit(functools.partial(past_encoder_forward, layout=layout,
                                    batch_size=batch_size, agent_num=agent_num,
                                    obs_len=obs_len, model_dim=hidden_dim))
    out = fwd(packed, inputs)
    jax.block_until_ready(out)
    expected = (batch_size * agent_num,
                hidden_dim * obs_len + (obs_len - 1) * 3 * 8)
    assert out.shape == expected, (out.shape, expected)
    assert bool(jnp.all(jnp.isfinite(out)))
    print("KERNEL_OK")
</pallas_src>

<mosaic_0001>
module attributes {stable_mosaic.version = 11 : i64} {
  func.func @_past_encoder_kernel(%arg0: i32, %arg1: memref<1x4x8x8xf32, #tpu.memory_space<vmem>>, %arg2: memref<504x128xf32, #tpu.memory_space<vmem>>, %arg3: memref<1x4x232xf32, #tpu.memory_space<vmem>>, %arg4: memref<1x7x2x6x8xf32, #tpu.memory_space<vmem>>, %arg5: memref<1x4x64xf32, #tpu.memory_space<vmem>>) attributes {dimension_semantics = [#tpu.dimension_semantics<parallel>], iteration_bounds = array<i64: 2>, scalar_prefetch = 0 : i64, scratch_operands = 2 : i64, tpu.core_type = #tpu.core_type<tc>, window_params = [{transform_indices = @transform_0, window_bounds = array<i64: 1, 4, 8, 8>}, {pipeline_mode = #tpu.pipeline_mode<synchronous>, transform_indices = @transform_1, window_bounds = array<i64: 504, 128>}, {transform_indices = @transform_2, window_bounds = array<i64: 1, 4, 232>}]} {
    %c0 = arith.constant 0 : index
    %c0_0 = arith.constant 0 : index
    %c0_1 = arith.constant 0 : index
    %c0_2 = arith.constant 0 : index
    %0 = vector.load %arg1[%c0, %c0_0, %c0_1, %c0_2] : memref<1x4x8x8xf32, #tpu.memory_space<vmem>>, vector<1x4x8x8xf32>
    %1 = vector.shape_cast %0 : vector<1x4x8x8xf32> to vector<32x8xf32>
    %2 = tpu.iota {dimensions = array<i32: 0>} : vector<32x32xi32>
    %3 = tpu.iota {dimensions = array<i32: 1>} : vector<32x32xi32>
    %c8_i32 = arith.constant 8 : i32
    %c0_i32 = arith.constant 0 : i32
    %4 = arith.cmpi eq, %c8_i32, %c0_i32 : i32
    %c1_i32 = arith.constant 1 : i32
    %5 = arith.select %4, %c1_i32, %c8_i32 : i32
    %6 = vector.broadcast %5 : i32 to vector<32x32xi32>
    %7 = arith.remsi %2, %6 : vector<32x32xi32>
    %c0_i32_3 = arith.constant 0 : i32
    %8 = vector.broadcast %c0_i32_3 : i32 to vector<32x32xi32>
    %9 = arith.cmpi ne, %7, %8 : vector<32x32xi32>
    %c0_i32_4 = arith.constant 0 : i32
    %10 = vector.broadcast %c0_i32_4 : i32 to vector<32x32xi32>
    %11 = arith.cmpi slt, %7, %10 : vector<32x32xi32>
    %c0_i32_5 = arith.constant 0 : i32
    %12 = arith.cmpi slt, %5, %c0_i32_5 : i32
    %13 = vector.broadcast %12 : i1 to vector<32x32xi1>
    %14 = vector.broadcast %13 : vector<32x32xi1> to vector<32x32xi1>
    %15 = arith.xori %11, %14 : vector<32x32xi1>
    %16 = arith.andi %15, %9 : vector<32x32xi1>
    %17 = vector.broadcast %5 : i32 to vector<32x32xi32>
    %18 = arith.addi %7, %17 : vector<32x32xi32>
    %19 = arith.select %16, %18, %7 : vector<32x32xi1>, vector<32x32xi32>
    %c1_i32_6 = arith.constant 1 : i32
    %20 = vector.broadcast %c1_i32_6 : i32 to vector<32x32xi32>
    %21 = arith.subi %2, %20 : vector<32x32xi32>
    %22 = arith.cmpi eq, %3, %21 : vector<32x32xi32>
    %c1_i32_7 = arith.constant 1 : i32
    %23 = vector.broadcast %c1_i32_7 : i32 to vector<32x32xi32>
    %24 = arith.cmpi sge, %19, %23 : vector<32x32xi32>
    %25 = arith.andi %22, %24 : vector<32x32xi1>
    %cst = arith.constant 1.000000e+00 : f32
    %cst_8 = arith.constant 0.000000e+00 : f32
    %26 = vector.broadcast %cst : f32 to vector<32x32xf32>
    %27 = vector.broadcast %cst_8 : f32 to vector<32x32xf32>
    %28 = arith.select %25, %26, %27 : vector<32x32xi1>, vector<32x32xf32>
    %c2_i32 = arith.constant 2 : i32
    %29 = vector.broadcast %c2_i32 : i32 to vector<32x32xi32>
    %30 = arith.subi %2, %29 : vector<32x32xi32>
    %31 = arith.cmpi eq, %3, %30 : vector<32x32xi32>
    %c2_i32_9 = arith.constant 2 : i32
    %32 = vector.broadcast %c2_i32_9 : i32 to vector<32x32xi32>
    %33 = arith.cmpi sge, %19, %32 : vector<32x32xi32>
    %34 = arith.andi %31, %33 : vector<32x32xi1>
    %cst_10 = arith.constant 1.000000e+00 : f32
    %cst_11 = arith.constant 0.000000e+00 : f32
    %35 = vector.broadcast %cst_10 : f32 to vector<32x32xf32>
    %36 = vector.broadcast %cst_11 : f32 to vector<32x32xf32>
    %37 = arith.select %34, %35, %36 : vector<32x32xi1>, vector<32x32xf32>
    %c4_i32 = arith.constant 4 : i32
    %38 = vector.broadcast %c4_i32 : i32 to vector<32x32xi32>
    %39 = arith.subi %2, %38 : vector<32x32xi32>
    %40 = arith.cmpi eq, %3, %39 : vector<32x32xi32>
    %c4_i32_12 = arith.constant 4 : i32
    %41 = vector.broadcast %c4_i32_12 : i32 to vector<32x32xi32>
    %42 = arith.cmpi sge, %19, %41 : vector<32x32xi32>
    %43 = arith.andi %40, %42 : vector<32x32xi1>
    %cst_13 = arith.constant 1.000000e+00 : f32
    %cst_14 = arith.constant 0.000000e+00 : f32
    %44 = vector.broadcast %cst_13 : f32 to vector<32x32xf32>
    %45 = vector.broadcast %cst_14 : f32 to vector<32x32xf32>
    %46 = arith.select %43, %44, %45 : vector<32x32xi1>, vector<32x32xf32>
    %c0_15 = arith.constant 0 : index
    %c0_16 = arith.constant 0 : index
    %47 = vector.load %arg2[%c0_15, %c0_16] : memref<504x128xf32, #tpu.memory_space<vmem>>, vector<8x32xf32>
    %c8 = arith.constant 8 : index
    %c0_17 = arith.constant 0 : index
    %48 = vector.load %arg2[%c8, %c0_17] : memref<504x128xf32, #tpu.memory_space<vmem>>, vector<8x32xf32>
    %c16 = arith.constant 16 : index
    %c0_18 = arith.constant 0 : index
    %49 = vector.load %arg2[%c16, %c0_18] : memref<504x128xf32, #tpu.memory_space<vmem>>, vector<1x32xf32>
    %cst_19 = arith.constant dense<0.000000e+00> : vector<32x8xf32>
    %50 = tpu.matmul %28, %1, %cst_19 {dimension_numbers = #tpu.dot_dimension_numbers<[1], [0], [0], [1], [0, 0, 1, 1], [], []>} : vector<32x32xf32>, vector<32x8xf32>, vector<32x8xf32> -> vector<32x8xf32>
    %cst_20 = arith.constant dense<0.000000e+00> : vector<32x32xf32>
    %51 = tpu.matmul %50, %47, %cst_20 {dimension_numbers = #tpu.dot_dimension_numbers<[1], [0], [0], [1], [0, 0, 1, 1], [], []>} : vector<32x8xf32>, vector<8x32xf32>, vector<32x32xf32> -> vector<32x32xf32>
    %cst_21 = arith.constant dense<0.000000e+00> : vector<32x32xf32>
    %52 = tpu.matmul %1, %48, %cst_21 {dimension_numbers = #tpu.dot_dimension_numbers<[1], [0], [0], [1], [0, 0, 1, 1], [], []>} : vector<32x8xf32>, vector<8x32xf32>, vector<32x32xf32> -> vector<32x32xf32>
    %53 = arith.addf %51, %52 : vector<32x32xf32>
    %54 = vector.broadcast %49 : vector<1x32xf32> to vector<32x32xf32>
    %55 = arith.addf %53, %54 : vector<32x32xf32>
    %cst_22 = arith.constant 0.000000e+00 : f32
    %56 = vector.broadcast %cst_22 : f32 to vector<32x32xf32>
    %57 = arith.maximumf %55, %56 : vector<32x32xf32>
    %c24 = arith.constant 24 : index
    %c0_23 = arith.constant 0 : index
    %58 = vector.load %arg2[%c24, %c0_23] : memref<504x128xf32, #tpu.memory_space<vmem>>, vector<32x32xf32>
    %c56 = arith.constant 56 : index
    %c0_24 = arith.constant 0 : index
    %59 = vector.load %arg2[%c56, %c0_24] : memref<504x128xf32, #tpu.memory_space<vmem>>, vector<32x32xf32>
    %c88 = arith.constant 88 : index
    %c0_25 = arith.constant 0 : index
    %60 = vector.load %arg2[%c88, %c0_25] : memref<504x128xf32, #tpu.memory_space<vmem>>, vector<1x32xf32>
    %cst_26 = arith.constant dense<0.000000e+00> : vector<32x32xf32>
    %61 = tpu.matmul %28, %57, %cst_26 {dimension_numbers = #tpu.dot_dimension_numbers<[1], [0], [0], [1], [0, 0, 1, 1], [], []>} : vector<32x32xf32>, vector<32x32xf32>, vector<32x32xf32> -> vector<32x32xf32>
    %cst_27 = arith.constant dense<0.000000e+00> : vector<32x32xf32>
    %62 = tpu.matmul %61, %58, %cst_27 {dimension_numbers = #tpu.dot_dimension_numbers<[1], [0], [0], [1], [0, 0, 1, 1], [], []>} : vector<32x32xf32>, vector<32x32xf32>, vector<32x32xf32> -> vector<32x32xf32>
    %cst_28 = arith.constant dense<0.000000e+00> : vector<32x32xf32>
    %63 = tpu.matmul %57, %59, %cst_28 {dimension_numbers = #tpu.dot_dimension_numbers<[1], [0], [0], [1], [0, 0, 1, 1], [], []>} : vector<32x32xf32>, vector<32x32xf32>, vector<32x32xf32> -> vector<32x32xf32>
    %64 = arith.addf %62, %63 : vector<32x32xf32>
    %65 = vector.broadcast %60 : vector<1x32xf32> to vector<32x32xf32>
    %66 = arith.addf %64, %65 : vector<32x32xf32>
    %cst_29 = arith.constant 0.000000e+00 : f32
    %67 = vector.broadcast %cst_29 : f32 to vector<32x32xf32>
    %68 = arith.maximumf %66, %67 : vector<32x32xf32>
    %c96 = arith.constant 96 : index
    %c0_30 = arith.constant 0 : index
    %69 = vector.load %arg2[%c96, %c0_30] : memref<504x128xf32, #tpu.memory_space<vmem>>, vector<8x32xf32>
    %cst_31 = arith.constant dense<0.000000e+00> : vector<32x32xf32>
    %70 = tpu.matmul %1, %69, %cst_31 {dimension_numbers = #tpu.dot_dimension_numbers<[1], [0], [0], [1], [0, 0, 1, 1], [], []>} : vector<32x8xf32>, vector<8x32xf32>, vector<32x32xf32> -> vector<32x32xf32>
    %c104 = arith.constant 104 : index
    %c0_32 = arith.constant 0 : index
    %71 = vector.load %arg2[%c104, %c0_32] : memref<504x128xf32, #tpu.memory_space<vmem>>, vector<1x32xf32>
    %72 = vector.broadcast %71 : vector<1x32xf32> to vector<32x32xf32>
    %73 = arith.addf %70, %72 : vector<32x32xf32>
    %74 = arith.addf %68, %73 : vector<32x32xf32>
    %cst_33 = arith.constant 0.000000e+00 : f32
    %75 = vector.broadcast %cst_33 : f32 to vector<32x32xf32>
    %76 = arith.maximumf %74, %75 : vector<32x32xf32>
    %c112 = arith.constant 112 : index
    %c0_34 = arith.constant 0 : index
    %77 = vector.load %arg2[%c112, %c0_34] : memref<504x128xf32, #tpu.memory_space<vmem>>, vector<32x16xf32>
    %c144 = arith.constant 144 : index
    %c0_35 = arith.constant 0 : index
    %78 = vector.load %arg2[%c144, %c0_35] : memref<504x128xf32, #tpu.memory_space<vmem>>, vector<32x16xf32>
    %c176 = arith.constant 176 : index
    %c0_36 = arith.constant 0 : index
    %79 = vector.load %arg2[%c176, %c0_36] : memref<504x128xf32, #tpu.memory_space<vmem>>, vector<1x16xf32>
    %cst_37 = arith.constant dense<0.000000e+00> : vector<32x32xf32>
    %80 = tpu.matmul %37, %76, %cst_37 {dimension_numbers = #tpu.dot_dimension_numbers<[1], [0], [0], [1], [0, 0, 1, 1], [], []>} : vector<32x32xf32>, vector<32x32xf32>, vector<32x32xf32> -> vector<32x32xf32>
    %cst_38 = arith.constant dense<0.000000e+00> : vector<32x16xf32>
    %81 = tpu.matmul %80, %77, %cst_38 {dimension_numbers = #tpu.dot_dimension_numbers<[1], [0], [0], [1], [0, 0, 1, 1], [], []>} : vector<32x32xf32>, vector<32x16xf32>, vector<32x16xf32> -> vector<32x16xf32>
    %cst_39 = arith.constant dense<0.000000e+00> : vector<32x16xf32>
    %82 = tpu.matmul %76, %78, %cst_39 {dimension_numbers = #tpu.dot_dimension_numbers<[1], [0], [0], [1], [0, 0, 1, 1], [], []>} : vector<32x32xf32>, vector<32x16xf32>, vector<32x16xf32> -> vector<32x16xf32>
    %83 = arith.addf %81, %82 : vector<32x16xf32>
    %84 = vector.broadcast %79 : vector<1x16xf32> to vector<32x16xf32>
    %85 = arith.addf %83, %84 : vector<32x16xf32>
    %cst_40 = arith.constant 0.000000e+00 : f32
    %86 = vector.broadcast %cst_40 : f32 to vector<32x16xf32>
    %87 = arith.maximumf %85, %86 : vector<32x16xf32>
    %c184 = arith.constant 184 : index
    %c0_41 = arith.constant 0 : index
    %88 = vector.load %arg2[%c184, %c0_41] : memref<504x128xf32, #tpu.memory_space<vmem>>, vector<16x16xf32>
    %c200 = arith.constant 200 : index
    %c0_42 = arith.constant 0 : index
    %89 = vector.load %arg2[%c200, %c0_42] : memref<504x128xf32, #tpu.memory_space<vmem>>, vector<16x16xf32>
    %c216 = arith.constant 216 : index
    %c0_43 = arith.constant 0 : index
    %90 = vector.load %arg2[%c216, %c0_43] : memref<504x128xf32, #tpu.memory_space<vmem>>, vector<1x16xf32>
    %cst_44 = arith.constant dense<0.000000e+00> : vector<32x16xf32>
    %91 = tpu.matmul %37, %87, %cst_44 {dimension_numbers = #tpu.dot_dimension_numbers<[1], [0], [0], [1], [0, 0, 1, 1], [], []>} : vector<32x32xf32>, vector<32x16xf32>, vector<32x16xf32> -> vector<32x16xf32>
    %cst_45 = arith.constant dense<0.000000e+00> : vector<32x16xf32>
    %92 = tpu.matmul %91, %88, %cst_45 {dimension_numbers = #tpu.dot_dimension_numbers<[1], [0], [0], [1], [0, 0, 1, 1], [], []>} : vector<32x16xf32>, vector<16x16xf32>, vector<32x16xf32> -> vector<32x16xf32>
    %cst_46 = arith.constant dense<0.000000e+00> : vector<32x16xf32>
    %93 = tpu.matmul %87, %89, %cst_46 {dimension_numbers = #tpu.dot_dimension_numbers<[1], [0], [0], [1], [0, 0, 1, 1], [], []>} : vector<32x16xf32>, vector<16x16xf32>, vector<32x16xf32> -> vector<32x16xf32>
    %94 = arith.addf %92, %93 : vector<32x16xf32>
    %95 = vector.broadcast %90 : vector<1x16xf32> to vector<32x16xf32>
    %96 = arith.addf %94, %95 : vector<32x16xf32>
    %cst_47 = arith.constant 0.000000e+00 : f32
    %97 = vector.broadcast %cst_47 : f32 to vector<32x16xf32>
    %98 = arith.maximumf %96, %97 : vector<32x16xf32>
    %c224 = arith.constant 224 : index
    %c0_48 = arith.constant 0 : index
    %99 = vector.load %arg2[%c224, %c0_48] : memref<504x128xf32, #tpu.memory_space<vmem>>, vector<32x16xf32>
    %cst_49 = arith.constant dense<0.000000e+00> : vector<32x16xf32>
    %100 = tpu.matmul %76, %99, %cst_49 {dimension_numbers = #tpu.dot_dimension_numbers<[1], [0], [0], [1], [0, 0, 1, 1], [], []>} : vector<32x32xf32>, vector<32x16xf32>, vector<32x16xf32> -> vector<32x16xf32>
    %c256 = arith.constant 256 : index
    %c0_50 = arith.constant 0 : index
    %101 = vector.load %arg2[%c256, %c0_50] : memref<504x128xf32, #tpu.memory_space<vmem>>, vector<1x16xf32>
    %102 = vector.broadcast %101 : vector<1x16xf32> to vector<32x16xf32>
    %103 = arith.addf %100, %102 : vector<32x16xf32>
    %104 = arith.addf %98, %103 : vector<32x16xf32>
    %cst_51 = arith.constant 0.000000e+00 : f32
    %105 = vector.broadcast %cst_51 : f32 to vector<32x16xf32>
    %106 = arith.maximumf %104, %105 : vector<32x16xf32>
    %c264 = arith.constant 264 : index
    %c0_52 = arith.constant 0 : index
    %107 = vector.load %arg2[%c264, %c0_52] : memref<504x128xf32, #tpu.memory_space<vmem>>, vector<16x8xf32>
    %c280 = arith.constant 280 : index
    %c0_53 = arith.constant 0 : index
    %108 = vector.load %arg2[%c280, %c0_53] : memref<504x128xf32, #tpu.memory_space<vmem>>, vector<16x8xf32>
    %c296 = arith.constant 296 : index
    %c0_54 = arith.constant 0 : index
    %109 = vector.load %arg2[%c296, %c0_54] : memref<504x128xf32, #tpu.memory_space<vmem>>, vector<1x8xf32>
    %cst_55 = arith.constant dense<0.000000e+00> : vector<32x16xf32>
    %110 = tpu.matmul %46, %106, %cst_55 {dimension_numbers = #tpu.dot_dimension_numbers<[1], [0], [0], [1], [0, 0, 1, 1], [], []>} : vector<32x32xf32>, vector<32x16xf32>, vector<32x16xf32> -> vector<32x16xf32>
    %cst_56 = arith.constant dense<0.000000e+00> : vector<32x8xf32>
    %111 = tpu.matmul %110, %107, %cst_56 {dimension_numbers = #tpu.dot_dimension_numbers<[1], [0], [0], [1], [0, 0, 1, 1], [], []>} : vector<32x16xf32>, vector<16x8xf32>, vector<32x8xf32> -> vector<32x8xf32>
    %cst_57 = arith.constant dense<0.000000e+00> : vector<32x8xf32>
    %112 = tpu.matmul %106, %108, %cst_57 {dimension_numbers = #tpu.dot_dimension_numbers<[1], [0], [0], [1], [0, 0, 1, 1], [], []>} : vector<32x16xf32>, vector<16x8xf32>, vector<32x8xf32> -> vector<32x8xf32>
    %113 = arith.addf %111, %112 : vector<32x8xf32>
    %114 = vector.broadcast %109 : vector<1x8xf32> to vector<32x8xf32>
    %115 = arith.addf %113, %114 : vector<32x8xf32>
    %cst_58 = arith.constant 0.000000e+00 : f32
    %116 = vector.broadcast %cst_58 : f32 to vector<32x8xf32>
    %117 = arith.maximumf %115, %116 : vector<32x8xf32>
    %c304 = arith.constant 304 : index
    %c0_59 = arith.constant 0 : index
    %118 = vector.load %arg2[%c304, %c0_59] : memref<504x128xf32, #tpu.memory_space<vmem>>, vector<8x8xf32>
    %c312 = arith.constant 312 : index
    %c0_60 = arith.constant 0 : index
    %119 = vector.load %arg2[%c312, %c0_60] : memref<504x128xf32, #tpu.memory_space<vmem>>, vector<8x8xf32>
    %c320 = arith.constant 320 : index
    %c0_61 = arith.constant 0 : index
    %120 = vector.load %arg2[%c320, %c0_61] : memref<504x128xf32, #tpu.memory_space<vmem>>, vector<1x8xf32>
    %cst_62 = arith.constant dense<0.000000e+00> : vector<32x8xf32>
    %121 = tpu.matmul %46, %117, %cst_62 {dimension_numbers = #tpu.dot_dimension_numbers<[1], [0], [0], [1], [0, 0, 1, 1], [], []>} : vector<32x32xf32>, vector<32x8xf32>, vector<32x8xf32> -> vector<32x8xf32>
    %cst_63 = arith.constant dense<0.000000e+00> : vector<32x8xf32>
    %122 = tpu.matmul %121, %118, %cst_63 {dimension_numbers = #tpu.dot_dimension_numbers<[1], [0], [0], [1], [0, 0, 1, 1], [], []>} : vector<32x8xf32>, vector<8x8xf32>, vector<32x8xf32> -> vector<32x8xf32>
    %cst_64 = arith.constant dense<0.000000e+00> : vector<32x8xf32>
    %123 = tpu.matmul %117, %119, %cst_64 {dimension_numbers = #tpu.dot_dimension_numbers<[1], [0], [0], [1], [0, 0, 1, 1], [], []>} : vector<32x8xf32>, vector<8x8xf32>, vector<32x8xf32> -> vector<32x8xf32>
    %124 = arith.addf %122, %123 : vector<32x8xf32>
    %125 = vector.broadcast %120 : vector<1x8xf32> to vector<32x8xf32>
    %126 = arith.addf %124, %125 : vector<32x8xf32>
    %cst_65 = arith.constant 0.000000e+00 : f32
    %127 = vector.broadcast %cst_65 : f32 to vector<32x8xf32>
    %128 = arith.maximumf %126, %127 : vector<32x8xf32>
    %c328 = arith.constant 328 : index
    %c0_66 = arith.constant 0 : index
    %129 = vector.load %arg2[%c328, %c0_66] : memref<504x128xf32, #tpu.memory_space<vmem>>, vector<16x8xf32>
    %cst_67 = arith.constant dense<0.000000e+00> : vector<32x8xf32>
    %130 = tpu.matmul %106, %129, %cst_67 {dimension_numbers = #tpu.dot_dimension_numbers<[1], [0], [0], [1], [0, 0, 1, 1], [], []>} : vector<32x16xf32>, vector<16x8xf32>, vector<32x8xf32> -> vector<32x8xf32>
    %c344 = arith.constant 344 : index
    %c0_68 = arith.constant 0 : index
    %131 = vector.load %arg2[%c344, %c0_68] : memref<504x128xf32, #tpu.memory_space<vmem>>, vector<1x8xf32>
    %132 = vector.broadcast %131 : vector<1x8xf32> to vector<32x8xf32>
    %133 = arith.addf %130, %132 : vector<32x8xf32>
    %134 = arith.addf %128, %133 : vector<32x8xf32>
    %cst_69 = arith.constant 0.000000e+00 : f32
    %135 = vector.broadcast %cst_69 : f32 to vector<32x8xf32>
    %136 = arith.maximumf %134, %135 : vector<32x8xf32>
    %c352 = arith.constant 352 : index
    %c0_70 = arith.constant 0 : index
    %137 = vector.load %arg2[%c352, %c0_70] : memref<504x128xf32, #tpu.memory_space<vmem>>, vector<8x8xf32>
    %cst_71 = arith.constant dense<0.000000e+00> : vector<32x8xf32>
    %138 = tpu.matmul %136, %137, %cst_71 {dimension_numbers = #tpu.dot_dimension_numbers<[1], [0], [0], [1], [0, 0, 1, 1], [], []>} : vector<32x8xf32>, vector<8x8xf32>, vector<32x8xf32> -> vector<32x8xf32>
    %c360 = arith.constant 360 : index
    %c0_72 = arith.constant 0 : index
    %139 = vector.load %arg2[%c360, %c0_72] : memref<504x128xf32, #tpu.memory_space<vmem>>, vector<1x8xf32>
    %140 = vector.broadcast %139 : vector<1x8xf32> to vector<32x8xf32>
    %141 = arith.addf %138, %140 : vector<32x8xf32>
    %142 = vector.shape_cast %141 : vector<32x8xf32> to vector<1x4x8x8xf32>
    %143 = vector.extract_strided_slice %142 {offsets = [0, 0, 0, 0], sizes = [1, 4, 1, 8], strides = [1, 1, 1, 1]} : vector<1x4x8x8xf32> to vector<1x4x1x8xf32>
    %144 = vector.shape_cast %143 : vector<1x4x1x8xf32> to vector<1x4x8xf32>
    %c0_73 = arith.constant 0 : index
    %c0_74 = arith.constant 0 : index
    %c0_75 = arith.constant 0 : index
    %145 = vector.load %arg5[%c0_73, %c0_74, %c0_75] : memref<1x4x64xf32, #tpu.memory_space<vmem>>, vector<1x4x8xf32>
    tpu.vector_store %arg5[%c0_73, %c0_74, %c0_75], %144 {strides = array<i32>} : memref<1x4x64xf32, #tpu.memory_space<vmem>>, vector<1x4x8xf32>,
    %146 = vector.extract_strided_slice %142 {offsets = [0, 0, 1, 0], sizes = [1, 4, 1, 8], strides = [1, 1, 1, 1]} : vector<1x4x8x8xf32> to vector<1x4x1x8xf32>
    %147 = vector.shape_cast %146 : vector<1x4x1x8xf32> to vector<1x4x8xf32>
    %c0_76 = arith.constant 0 : index
    %c0_77 = arith.constant 0 : index
    %c8_78 = arith.constant 8 : index
    %148 = vector.load %arg5[%c0_76, %c0_77, %c8_78] : memref<1x4x64xf32, #tpu.memory_space<vmem>>, vector<1x4x8xf32>
    tpu.vector_store %arg5[%c0_76, %c0_77, %c8_78], %147 {strides = array<i32>} : memref<1x4x64xf32, #tpu.memory_space<vmem>>, vector<1x4x8xf32>,
    %149 = vector.extract_strided_slice %142 {offsets = [0, 0, 2, 0], sizes = [1, 4, 1, 8], strides = [1, 1, 1, 1]} : vector<1x4x8x8xf32> to vector<1x4x1x8xf32>
    %150 = vector.shape_cast %149 : vector<1x4x1x8xf32> to vector<1x4x8xf32>
    %c0_79 = arith.constant 0 : index
    %c0_80 = arith.constant 0 : index
    %c16_81 = arith.constant 16 : index
    %151 = vector.load %arg5[%c0_79, %c0_80, %c16_81] : memref<1x4x64xf32, #tpu.memory_space<vmem>>, vector<1x4x8xf32>
    tpu.vector_store %arg5[%c0_79, %c0_80, %c16_81], %150 {strides = array<i32>} : memref<1x4x64xf32, #tpu.memory_space<vmem>>, vector<1x4x8xf32>,
    %152 = vector.extract_strided_slice %142 {offsets = [0, 0, 3, 0], sizes = [1, 4, 1, 8], strides = [1, 1, 1, 1]} : vector<1x4x8x8xf32> to vector<1x4x1x8xf32>
    %153 = vector.shape_cast %152 : vector<1x4x1x8xf32> to vector<1x4x8xf32>
    %c0_82 = arith.constant 0 : index
    %c0_83 = arith.constant 0 : index
    %c24_84 = arith.constant 24 : index
    %154 = vector.load %arg5[%c0_82, %c0_83, %c24_84] : memref<1x4x64xf32, #tpu.memory_space<vmem>>, vector<1x4x8xf32>
    tpu.vector_store %arg5[%c0_82, %c0_83, %c24_84], %153 {strides = array<i32>} : memref<1x4x64xf32, #tpu.memory_space<vmem>>, vector<1x4x8xf32>,
    %155 = vector.extract_strided_slice %142 {offsets = [0, 0, 4, 0], sizes = [1, 4, 1, 8], strides = [1, 1, 1, 1]} : vector<1x4x8x8xf32> to vector<1x4x1x8xf32>
    %156 = vector.shape_cast %155 : vector<1x4x1x8xf32> to vector<1x4x8xf32>
    %c0_85 = arith.constant 0 : index
    %c0_86 = arith.constant 0 : index
    %c32 = arith.constant 32 : index
    %157 = vector.load %arg5[%c0_85, %c0_86, %c32] : memref<1x4x64xf32, #tpu.memory_space<vmem>>, vector<1x4x8xf32>
    tpu.vector_store %arg5[%c0_85, %c0_86, %c32], %156 {strides = array<i32>} : memref<1x4x64xf32, #tpu.memory_space<vmem>>, vector<1x4x8xf32>,
    %158 = vector.extract_strided_slice %142 {offsets = [0, 0, 5, 0], sizes = [1, 4, 1, 8], strides = [1, 1, 1, 1]} : vector<1x4x8x8xf32> to vector<1x4x1x8xf32>
    %159 = vector.shape_cast %158 : vector<1x4x1x8xf32> to vector<1x4x8xf32>
    %c0_87 = arith.constant 0 : index
    %c0_88 = arith.constant 0 : index
    %c40 = arith.constant 40 : index
    %160 = vector.load %arg5[%c0_87, %c0_88, %c40] : memref<1x4x64xf32, #tpu.memory_space<vmem>>, vector<1x4x8xf32>
    tpu.vector_store %arg5[%c0_87, %c0_88, %c40], %159 {strides = array<i32>} : memref<1x4x64xf32, #tpu.memory_space<vmem>>, vector<1x4x8xf32>,
    %161 = vector.extract_strided_slice %142 {offsets = [0, 0, 6, 0], sizes = [1, 4, 1, 8], strides = [1, 1, 1, 1]} : vector<1x4x8x8xf32> to vector<1x4x1x8xf32>
    %162 = vector.shape_cast %161 : vector<1x4x1x8xf32> to vector<1x4x8xf32>
    %c0_89 = arith.constant 0 : index
    %c0_90 = arith.constant 0 : index
    %c48 = arith.constant 48 : index
    %163 = vector.load %arg5[%c0_89, %c0_90, %c48] : memref<1x4x64xf32, #tpu.memory_space<vmem>>, vector<1x4x8xf32>
    tpu.vector_store %arg5[%c0_89, %c0_90, %c48], %162 {strides = array<i32>} : memref<1x4x64xf32, #tpu.memory_space<vmem>>, vector<1x4x8xf32>,
    %164 = vector.extract_strided_slice %142 {offsets = [0, 0, 7, 0], sizes = [1, 4, 1, 8], strides = [1, 1, 1, 1]} : vector<1x4x8x8xf32> to vector<1x4x1x8xf32>
    %165 = vector.shape_cast %164 : vector<1x4x1x8xf32> to vector<1x4x8xf32>
    %c0_91 = arith.constant 0 : index
    %c0_92 = arith.constant 0 : index
    %c56_93 = arith.constant 56 : index
    %166 = vector.load %arg5[%c0_91, %c0_92, %c56_93] : memref<1x4x64xf32, #tpu.memory_space<vmem>>, vector<1x4x8xf32>
    tpu.vector_store %arg5[%c0_91, %c0_92, %c56_93], %165 {strides = array<i32>} : memref<1x4x64xf32, #tpu.memory_space<vmem>>, vector<1x4x8xf32>,
    %c0_94 = arith.constant 0 : index
    %c0_95 = arith.constant 0 : index
    %c0_96 = arith.constant 0 : index
    %167 = vector.load %arg5[%c0_94, %c0_95, %c0_96] : memref<1x4x64xf32, #tpu.memory_space<vmem>>, vector<1x4x64xf32>
    %168 = vector.shape_cast %167 : vector<1x4x64xf32> to vector<4x64xf32>
    %c368 = arith.constant 368 : index
    %c0_97 = arith.constant 0 : index
    %169 = vector.load %arg2[%c368, %c0_97] : memref<504x128xf32, #tpu.memory_space<vmem>>, vector<64x64xf32>
    %cst_98 = arith.constant dense<0.000000e+00> : vector<4x64xf32>
    %170 = tpu.matmul %168, %169, %cst_98 {dimension_numbers = #tpu.dot_dimension_numbers<[1], [0], [0], [1], [0, 0, 1, 1], [], []>} : vector<4x64xf32>, vector<64x64xf32>, vector<4x64xf32> -> vector<4x64xf32>
    %171 = vector.shape_cast %170 : vector<4x64xf32> to vector<1x4x64xf32>
    %c432 = arith.constant 432 : index
    %c0_99 = arith.constant 0 : index
    %172 = vector.load %arg2[%c432, %c0_99] : memref<504x128xf32, #tpu.memory_space<vmem>>, vector<1x64xf32>
    %c440 = arith.constant 440 : index
    %c0_100 = arith.constant 0 : index
    %173 = vector.load %arg2[%c440, %c0_100] : memref<504x128xf32, #tpu.memory_space<vmem>>, vector<1x64xf32>
    %174 = vector.shape_cast %172 : vector<1x64xf32> to vector<1x1x64xf32>
    %175 = vector.broadcast %174 : vector<1x1x64xf32> to vector<1x4x64xf32>
    %176 = arith.mulf %171, %175 : vector<1x4x64xf32>
    %cst_101 = arith.constant dense<0.000000e+00> : vector<1x4xf32>
    %177 = vector.multi_reduction <add>, %176, %cst_101 [2] : vector<1x4x64xf32> to vector<1x4xf32>
    %178 = vector.shape_cast %173 : vector<1x64xf32> to vector<1x1x64xf32>
    %179 = vector.broadcast %178 : vector<1x1x64xf32> to vector<1x4x64xf32>
    %180 = arith.mulf %171, %179 : vector<1x4x64xf32>
    %cst_102 = arith.constant dense<0.000000e+00> : vector<1x4xf32>
    %181 = vector.multi_reduction <add>, %180, %cst_102 [2] : vector<1x4x64xf32> to vector<1x4xf32>
    %182 = vector.shape_cast %181 : vector<1x4xf32> to vector<1x4x1xf32>
    %183 = vector.shape_cast %177 : vector<1x4xf32> to vector<1x1x4xf32>
    %184 = vector.broadcast %182 : vector<1x4x1xf32> to vector<1x4x4xf32>
    %185 = vector.broadcast %183 : vector<1x1x4xf32> to vector<1x4x4xf32>
    %186 = arith.addf %184, %185 : vector<1x4x4xf32>
    %cst_103 = arith.constant 0.000000e+00 : f32
    %187 = vector.broadcast %cst_103 : f32 to vector<1x4x4xf32>
    %188 = arith.cmpf ogt, %186, %187 : vector<1x4x4xf32>
    %cst_104 = arith.constant 2.000000e-01 : f32
    %189 = vector.broadcast %cst_104 : f32 to vector<1x4x4xf32>
    %190 = arith.mulf %189, %186 : vector<1x4x4xf32>
    %191 = arith.select %188, %186, %190 : vector<1x4x4xi1>, vector<1x4x4xf32>
    %192 = tpu.iota {dimensions = array<i32: 0>} : vector<4x4xi32>
    %193 = tpu.iota {dimensions = array<i32: 1>} : vector<4x4xi32>
    %194 = arith.cmpi eq, %192, %193 : vector<4x4xi32>
    %195 = vector.shape_cast %194 : vector<4x4xi1> to vector<1x4x4xi1>
    %cst_105 = arith.constant -1.000000e+30 : f32
    %196 = vector.broadcast %cst_105 : f32 to vector<1x4x4xf32>
    %197 = arith.select %195, %196, %191 : vector<1x4x4xi1>, vector<1x4x4xf32>
    %cst_106 = arith.constant dense<0xFF800000> : vector<1x4xf32>
    %198 = vector.multi_reduction <maximumf>, %197, %cst_106 [2] : vector<1x4x4xf32> to vector<1x4xf32>
    %199 = vector.shape_cast %198 : vector<1x4xf32> to vector<1x4x1xf32>
    %200 = vector.broadcast %199 : vector<1x4x1xf32> to vector<1x4x4xf32>
    %201 = arith.subf %197, %200 : vector<1x4x4xf32>
    %202 = math.exp %201 : vector<1x4x4xf32>
    %cst_107 = arith.constant dense<0.000000e+00> : vector<1x4xf32>
    %203 = vector.multi_reduction <add>, %202, %cst_107 [2] : vector<1x4x4xf32> to vector<1x4xf32>
    %204 = vector.shape_cast %203 : vector<1x4xf32> to vector<1x4x1xf32>
    %205 = vector.broadcast %204 : vector<1x4x1xf32> to vector<1x4x4xf32>
    %206 = arith.divf %202, %205 : vector<1x4x4xf32>
    %cst_108 = arith.constant 0.000000e+00 : f32
    %207 = vector.broadcast %cst_108 : f32 to vector<1x4x64xf32>
    %208 = vector.extract_strided_slice %206 {offsets = [0, 0, 0], sizes = [1, 4, 1], strides = [1, 1, 1]} : vector<1x4x4xf32> to vector<1x4x1xf32>
    %209 = vector.extract_strided_slice %171 {offsets = [0, 0, 0], sizes = [1, 1, 64], strides = [1, 1, 1]} : vector<1x4x64xf32> to vector<1x1x64xf32>
    %210 = vector.broadcast %208 : vector<1x4x1xf32> to vector<1x4x64xf32>
    %211 = vector.broadcast %209 : vector<1x1x64xf32> to vector<1x4x64xf32>
    %212 = arith.mulf %210, %211 : vector<1x4x64xf32>
    %213 = arith.addf %207, %212 : vector<1x4x64xf32>
    %214 = vector.extract_strided_slice %206 {offsets = [0, 0, 1], sizes = [1, 4, 1], strides = [1, 1, 1]} : vector<1x4x4xf32> to vector<1x4x1xf32>
    %215 = vector.extract_strided_slice %171 {offsets = [0, 1, 0], sizes = [1, 1, 64], strides = [1, 1, 1]} : vector<1x4x64xf32> to vector<1x1x64xf32>
    %216 = vector.broadcast %214 : vector<1x4x1xf32> to vector<1x4x64xf32>
    %217 = vector.broadcast %215 : vector<1x1x64xf32> to vector<1x4x64xf32>
    %218 = arith.mulf %216, %217 : vector<1x4x64xf32>
    %219 = arith.addf %213, %218 : vector<1x4x64xf32>
    %220 = vector.extract_strided_slice %206 {offsets = [0, 0, 2], sizes = [1, 4, 1], strides = [1, 1, 1]} : vector<1x4x4xf32> to vector<1x4x1xf32>
    %221 = vector.extract_strided_slice %171 {offsets = [0, 2, 0], sizes = [1, 1, 64], strides = [1, 1, 1]} : vector<1x4x64xf32> to vector<1x1x64xf32>
    %222 = vector.broadcast %220 : vector<1x4x1xf32> to vector<1x4x64xf32>
    %223 = vector.broadcast %221 : vector<1x1x64xf32> to vector<1x4x64xf32>
    %224 = arith.mulf %222, %223 : vector<1x4x64xf32>
    %225 = arith.addf %219, %224 : vector<1x4x64xf32>
    %226 = vector.extract_strided_slice %206 {offsets = [0, 0, 3], sizes = [1, 4, 1], strides = [1, 1, 1]} : vector<1x4x4xf32> to vector<1x4x1xf32>
    %227 = vector.extract_strided_slice %171 {offsets = [0, 3, 0], sizes = [1, 1, 64], strides = [1, 1, 1]} : vector<1x4x64xf32> to vector<1x1x64xf32>
    %228 = vector.broadcast %226 : vector<1x4x1xf32> to vector<1x4x64xf32>
    %229 = vector.broadcast %227 : vector<1x1x64xf32> to vector<1x4x64xf32>
    %230 = arith.mulf %228, %229 : vector<1x4x64xf32>
    %231 = arith.addf %225, %230 : vector<1x4x64xf32>
    %c0_109 = arith.constant 0 : index
    %c0_110 = arith.constant 0 : index
    %c0_111 = arith.constant 0 : index
    %232 = vector.load %arg3[%c0_109, %c0_110, %c0_111] : memref<1x4x232xf32, #tpu.memory_space<vmem>>, vector<1x4x64xf32>
    tpu.vector_store %arg3[%c0_109, %c0_110, %c0_111], %231 {strides = array<i32>} : memref<1x4x232xf32, #tpu.memory_space<vmem>>, vector<1x4x64xf32>,
    %233 = vector.extract_strided_slice %0 {offsets = [0, 0, 0, 0], sizes = [1, 1, 7, 8], strides = [1, 1, 1, 1]} : vector<1x4x8x8xf32> to vector<1x1x7x8xf32>
    %234 = vector.shape_cast %233 : vector<1x1x7x8xf32> to vector<1x7x8xf32>
    %c0_112 = arith.constant 0 : index
    %c0_113 = arith.constant 0 : index
    %c0_114 = arith.constant 0 : index
    %c0_115 = arith.constant 0 : index
    %c0_116 = arith.constant 0 : index
    %235 = vector.load %arg4[%c0_112, %c0_113, %c0_114, %c0_115, %c0_116] : memref<1x7x2x6x8xf32, #tpu.memory_space<vmem>>, vector<1x7x1x1x8xf32>
    %236 = vector.shape_cast %235 : vector<1x7x1x1x8xf32> to vector<1x7x8xf32>
    %237 = vector.shape_cast %234 : vector<1x7x8xf32> to vector<1x7x1x1x8xf32>
    tpu.vector_store %arg4[%c0_112, %c0_113, %c0_114, %c0_115, %c0_116], %237 {strides = array<i32>} : memref<1x7x2x6x8xf32, #tpu.memory_space<vmem>>, vector<1x7x1x1x8xf32>,
    %238 = vector.extract_strided_slice %0 {offsets = [0, 1, 0, 0], sizes = [1, 1, 7, 8], strides = [1, 1, 1, 1]} : vector<1x4x8x8xf32> to vector<1x1x7x8xf32>
    %239 = vector.shape_cast %238 : vector<1x1x7x8xf32> to vector<1x7x8xf32>
    %c0_117 = arith.constant 0 : index
    %c0_118 = arith.constant 0 : index
    %c0_119 = arith.constant 0 : index
    %c1 = arith.constant 1 : index
    %c0_120 = arith.constant 0 : index
    %240 = vector.load %arg4[%c0_117, %c0_118, %c0_119, %c1, %c0_120] : memref<1x7x2x6x8xf32, #tpu.memory_space<vmem>>, vector<1x7x1x1x8xf32>
    %241 = vector.shape_cast %240 : vector<1x7x1x1x8xf32> to vector<1x7x8xf32>
    %242 = vector.shape_cast %239 : vector<1x7x8xf32> to vector<1x7x1x1x8xf32>
    tpu.vector_store %arg4[%c0_117, %c0_118, %c0_119, %c1, %c0_120], %242 {strides = array<i32>} : memref<1x7x2x6x8xf32, #tpu.memory_space<vmem>>, vector<1x7x1x1x8xf32>,
    %243 = vector.extract_strided_slice %0 {offsets = [0, 2, 0, 0], sizes = [1, 1, 7, 8], strides = [1, 1, 1, 1]} : vector<1x4x8x8xf32> to vector<1x1x7x8xf32>
    %244 = vector.shape_cast %243 : vector<1x1x7x8xf32> to vector<1x7x8xf32>
    %c0_121 = arith.constant 0 : index
    %c0_122 = arith.constant 0 : index
    %c1_123 = arith.constant 1 : index
    %c0_124 = arith.constant 0 : index
    %c0_125 = arith.constant 0 : index
    %245 = vector.load %arg4[%c0_121, %c0_122, %c1_123, %c0_124, %c0_125] : memref<1x7x2x6x8xf32, #tpu.memory_space<vmem>>, vector<1x7x1x1x8xf32>
    %246 = vector.shape_cast %245 : vector<1x7x1x1x8xf32> to vector<1x7x8xf32>
    %247 = vector.shape_cast %244 : vector<1x7x8xf32> to vector<1x7x1x1x8xf32>
    tpu.vector_store %arg4[%c0_121, %c0_122, %c1_123, %c0_124, %c0_125], %247 {strides = array<i32>} : memref<1x7x2x6x8xf32, #tpu.memory_space<vmem>>, vector<1x7x1x1x8xf32>,
    %248 = vector.extract_strided_slice %0 {offsets = [0, 3, 0, 0], sizes = [1, 1, 7, 8], strides = [1, 1, 1, 1]} : vector<1x4x8x8xf32> to vector<1x1x7x8xf32>
    %249 = vector.shape_cast %248 : vector<1x1x7x8xf32> to vector<1x7x8xf32>
    %c0_126 = arith.constant 0 : index
    %c0_127 = arith.constant 0 : index
    %c1_128 = arith.constant 1 : index
    %c1_129 = arith.constant 1 : index
    %c0_130 = arith.constant 0 : index
    %250 = vector.load %arg4[%c0_126, %c0_127, %c1_128, %c1_129, %c0_130] : memref<1x7x2x6x8xf32, #tpu.memory_space<vmem>>, vector<1x7x1x1x8xf32>
    %251 = vector.shape_cast %250 : vector<1x7x1x1x8xf32> to vector<1x7x8xf32>
    %252 = vector.shape_cast %249 : vector<1x7x8xf32> to vector<1x7x1x1x8xf32>
    tpu.vector_store %arg4[%c0_126, %c0_127, %c1_128, %c1_129, %c0_130], %252 {strides = array<i32>} : memref<1x7x2x6x8xf32, #tpu.memory_space<vmem>>, vector<1x7x1x1x8xf32>,
    %253 = vector.extract_strided_slice %0 {offsets = [0, 0, 1, 0], sizes = [1, 1, 7, 8], strides = [1, 1, 1, 1]} : vector<1x4x8x8xf32> to vector<1x1x7x8xf32>
    %254 = vector.shape_cast %253 : vector<1x1x7x8xf32> to vector<1x7x8xf32>
    %c0_131 = arith.constant 0 : index
    %c0_132 = arith.constant 0 : index
    %c0_133 = arith.constant 0 : index
    %c2 = arith.constant 2 : index
    %c0_134 = arith.constant 0 : index
    %255 = vector.load %arg4[%c0_131, %c0_132, %c0_133, %c2, %c0_134] : memref<1x7x2x6x8xf32, #tpu.memory_space<vmem>>, vector<1x7x1x1x8xf32>
    %256 = vector.shape_cast %255 : vector<1x7x1x1x8xf32> to vector<1x7x8xf32>
    %257 = vector.shape_cast %254 : vector<1x7x8xf32> to vector<1x7x1x1x8xf32>
    tpu.vector_store %arg4[%c0_131, %c0_132, %c0_133, %c2, %c0_134], %257 {strides = array<i32>} : memref<1x7x2x6x8xf32, #tpu.memory_space<vmem>>, vector<1x7x1x1x8xf32>,
    %258 = vector.extract_strided_slice %0 {offsets = [0, 1, 1, 0], sizes = [1, 1, 7, 8], strides = [1, 1, 1, 1]} : vector<1x4x8x8xf32> to vector<1x1x7x8xf32>
    %259 = vector.shape_cast %258 : vector<1x1x7x8xf32> to vector<1x7x8xf32>
    %c0_135 = arith.constant 0 : index
    %c0_136 = arith.constant 0 : index
    %c0_137 = arith.constant 0 : index
    %c3 = arith.constant 3 : index
    %c0_138 = arith.constant 0 : index
    %260 = vector.load %arg4[%c0_135, %c0_136, %c0_137, %c3, %c0_138] : memref<1x7x2x6x8xf32, #tpu.memory_space<vmem>>, vector<1x7x1x1x8xf32>
    %261 = vector.shape_cast %260 : vector<1x7x1x1x8xf32> to vector<1x7x8xf32>
    %262 = vector.shape_cast %259 : vector<1x7x8xf32> to vector<1x7x1x1x8xf32>
    tpu.vector_store %arg4[%c0_135, %c0_136, %c0_137, %c3, %c0_138], %262 {strides = array<i32>} : memref<1x7x2x6x8xf32, #tpu.memory_space<vmem>>, vector<1x7x1x1x8xf32>,
    %263 = vector.extract_strided_slice %0 {offsets = [0, 2, 1, 0], sizes = [1, 1, 7, 8], strides = [1, 1, 1, 1]} : vector<1x4x8x8xf32> to vector<1x1x7x8xf32>
    %264 = vector.shape_cast %263 : vector<1x1x7x8xf32> to vector<1x7x8xf32>
    %c0_139 = arith.constant 0 : index
    %c0_140 = arith.constant 0 : index
    %c1_141 = arith.constant 1 : index
    %c2_142 = arith.constant 2 : index
    %c0_143 = arith.constant 0 : index
    %265 = vector.load %arg4[%c0_139, %c0_140, %c1_141, %c2_142, %c0_143] : memref<1x7x2x6x8xf32, #tpu.memory_space<vmem>>, vector<1x7x1x1x8xf32>
    %266 = vector.shape_cast %265 : vector<1x7x1x1x8xf32> to vector<1x7x8xf32>
    %267 = vector.shape_cast %264 : vector<1x7x8xf32> to vector<1x7x1x1x8xf32>
    tpu.vector_store %arg4[%c0_139, %c0_140, %c1_141, %c2_142, %c0_143], %267 {strides = array<i32>} : memref<1x7x2x6x8xf32, #tpu.memory_space<vmem>>, vector<1x7x1x1x8xf32>,
    %268 = vector.extract_strided_slice %0 {offsets = [0, 3, 1, 0], sizes = [1, 1, 7, 8], strides = [1, 1, 1, 1]} : vector<1x4x8x8xf32> to vector<1x1x7x8xf32>
    %269 = vector.shape_cast %268 : vector<1x1x7x8xf32> to vector<1x7x8xf32>
    %c0_144 = arith.constant 0 : index
    %c0_145 = arith.constant 0 : index
    %c1_146 = arith.constant 1 : index
    %c3_147 = arith.constant 3 : index
    %c0_148 = arith.constant 0 : index
    %270 = vector.load %arg4[%c0_144, %c0_145, %c1_146, %c3_147, %c0_148] : memref<1x7x2x6x8xf32, #tpu.memory_space<vmem>>, vector<1x7x1x1x8xf32>
    %271 = vector.shape_cast %270 : vector<1x7x1x1x8xf32> to vector<1x7x8xf32>
    %272 = vector.shape_cast %269 : vector<1x7x8xf32> to vector<1x7x1x1x8xf32>
    tpu.vector_store %arg4[%c0_144, %c0_145, %c1_146, %c3_147, %c0_148], %272 {strides = array<i32>} : memref<1x7x2x6x8xf32, #tpu.memory_space<vmem>>, vector<1x7x1x1x8xf32>,
    %273 = vector.extract_strided_slice %0 {offsets = [0, 0, 2, 0], sizes = [1, 1, 6, 8], strides = [1, 1, 1, 1]} : vector<1x4x8x8xf32> to vector<1x1x6x8xf32>
    %274 = vector.shape_cast %273 : vector<1x1x6x8xf32> to vector<1x6x8xf32>
    %c0_149 = arith.constant 0 : index
    %c0_150 = arith.constant 0 : index
    %c0_151 = arith.constant 0 : index
    %c4 = arith.constant 4 : index
    %c0_152 = arith.constant 0 : index
    %275 = vector.load %arg4[%c0_149, %c0_150, %c0_151, %c4, %c0_152] : memref<1x7x2x6x8xf32, #tpu.memory_space<vmem>>, vector<1x6x1x1x8xf32>
    %276 = vector.shape_cast %275 : vector<1x6x1x1x8xf32> to vector<1x6x8xf32>
    %277 = vector.shape_cast %274 : vector<1x6x8xf32> to vector<1x6x1x1x8xf32>
    tpu.vector_store %arg4[%c0_149, %c0_150, %c0_151, %c4, %c0_152], %277 {strides = array<i32>} : memref<1x7x2x6x8xf32, #tpu.memory_space<vmem>>, vector<1x6x1x1x8xf32>,
    %278 = vector.extract_strided_slice %0 {offsets = [0, 1, 2, 0], sizes = [1, 1, 6, 8], strides = [1, 1, 1, 1]} : vector<1x4x8x8xf32> to vector<1x1x6x8xf32>
    %279 = vector.shape_cast %278 : vector<1x1x6x8xf32> to vector<1x6x8xf32>
    %c0_153 = arith.constant 0 : index
    %c0_154 = arith.constant 0 : index
    %c0_155 = arith.constant 0 : index
    %c5 = arith.constant 5 : index
    %c0_156 = arith.constant 0 : index
    %280 = vector.load %arg4[%c0_153, %c0_154, %c0_155, %c5, %c0_156] : memref<1x7x2x6x8xf32, #tpu.memory_space<vmem>>, vector<1x6x1x1x8xf32>
    %281 = vector.shape_cast %280 : vector<1x6x1x1x8xf32> to vector<1x6x8xf32>
    %282 = vector.shape_cast %279 : vector<1x6x8xf32> to vector<1x6x1x1x8xf32>
    tpu.vector_store %arg4[%c0_153, %c0_154, %c0_155, %c5, %c0_156], %282 {strides = array<i32>} : memref<1x7x2x6x8xf32, #tpu.memory_space<vmem>>, vector<1x6x1x1x8xf32>,
    %283 = vector.extract_strided_slice %0 {offsets = [0, 2, 2, 0], sizes = [1, 1, 6, 8], strides = [1, 1, 1, 1]} : vector<1x4x8x8xf32> to vector<1x1x6x8xf32>
    %284 = vector.shape_cast %283 : vector<1x1x6x8xf32> to vector<1x6x8xf32>
    %c0_157 = arith.constant 0 : index
    %c0_158 = arith.constant 0 : index
    %c1_159 = arith.constant 1 : index
    %c4_160 = arith.constant 4 : index
    %c0_161 = arith.constant 0 : index
    %285 = vector.load %arg4[%c0_157, %c0_158, %c1_159, %c4_160, %c0_161] : memref<1x7x2x6x8xf32, #tpu.memory_space<vmem>>, vector<1x6x1x1x8xf32>
    %286 = vector.shape_cast %285 : vector<1x6x1x1x8xf32> to vector<1x6x8xf32>
    %287 = vector.shape_cast %284 : vector<1x6x8xf32> to vector<1x6x1x1x8xf32>
    tpu.vector_store %arg4[%c0_157, %c0_158, %c1_159, %c4_160, %c0_161], %287 {strides = array<i32>} : memref<1x7x2x6x8xf32, #tpu.memory_space<vmem>>, vector<1x6x1x1x8xf32>,
    %288 = vector.extract_strided_slice %0 {offsets = [0, 3, 2, 0], sizes = [1, 1, 6, 8], strides = [1, 1, 1, 1]} : vector<1x4x8x8xf32> to vector<1x1x6x8xf32>
    %289 = vector.shape_cast %288 : vector<1x1x6x8xf32> to vector<1x6x8xf32>
    %c0_162 = arith.constant 0 : index
    %c0_163 = arith.constant 0 : index
    %c1_164 = arith.constant 1 : index
    %c5_165 = arith.constant 5 : index
    %c0_166 = arith.constant 0 : index
    %290 = vector.load %arg4[%c0_162, %c0_163, %c1_164, %c5_165, %c0_166] : memref<1x7x2x6x8xf32, #tpu.memory_space<vmem>>, vector<1x6x1x1x8xf32>
    %291 = vector.shape_cast %290 : vector<1x6x1x1x8xf32> to vector<1x6x8xf32>
    %292 = vector.shape_cast %289 : vector<1x6x8xf32> to vector<1x6x1x1x8xf32>
    tpu.vector_store %arg4[%c0_162, %c0_163, %c1_164, %c5_165, %c0_166], %292 {strides = array<i32>} : memref<1x7x2x6x8xf32, #tpu.memory_space<vmem>>, vector<1x6x1x1x8xf32>,
    %cst_167 = arith.constant 0.000000e+00 : f32
    %293 = vector.broadcast %cst_167 : f32 to vector<1x1x2x2x8xf32>
    %c0_168 = arith.constant 0 : index
    %c6 = arith.constant 6 : index
    %c0_169 = arith.constant 0 : index
    %c4_170 = arith.constant 4 : index
    %c0_171 = arith.constant 0 : index
    %294 = vector.load %arg4[%c0_168, %c6, %c0_169, %c4_170, %c0_171] : memref<1x7x2x6x8xf32, #tpu.memory_space<vmem>>, vector<1x1x2x2x8xf32>
    tpu.vector_store %arg4[%c0_168, %c6, %c0_169, %c4_170, %c0_171], %293 {strides = array<i32>} : memref<1x7x2x6x8xf32, #tpu.memory_space<vmem>>, vector<1x1x2x2x8xf32>,
    %c0_172 = arith.constant 0 : index
    %c0_173 = arith.constant 0 : index
    %c0_174 = arith.constant 0 : index
    %c0_175 = arith.constant 0 : index
    %c0_176 = arith.constant 0 : index
    %295 = vector.load %arg4[%c0_172, %c0_173, %c0_174, %c0_175, %c0_176] : memref<1x7x2x6x8xf32, #tpu.memory_space<vmem>>, vector<1x7x2x6x8xf32>
    %296 = vector.shape_cast %295 : vector<1x7x2x6x8xf32> to vector<14x6x8xf32>
    %297 = vector.shape_cast %296 : vector<14x6x8xf32> to vector<84x8xf32>
    %c448 = arith.constant 448 : index
    %c0_177 = arith.constant 0 : index
    %298 = vector.load %arg2[%c448, %c0_177] : memref<504x128xf32, #tpu.memory_space<vmem>>, vector<8x16xf32>
    %cst_178 = arith.constant dense<0.000000e+00> : vector<84x16xf32>
    %299 = tpu.matmul %297, %298, %cst_178 {dimension_numbers = #tpu.dot_dimension_numbers<[1], [0], [0], [1], [0, 0, 1, 1], [], []>} : vector<84x8xf32>, vector<8x16xf32>, vector<84x16xf32> -> vector<84x16xf32>
    %300 = vector.shape_cast %299 : vector<84x16xf32> to vector<14x6x16xf32>
    %c456 = arith.constant 456 : index
    %c0_179 = arith.constant 0 : index
    %301 = vector.load %arg2[%c456, %c0_179] : memref<504x128xf32, #tpu.memory_space<vmem>>, vector<1x16xf32>
    %c464 = arith.constant 464 : index
    %c0_180 = arith.constant 0 : index
    %302 = vector.load %arg2[%c464, %c0_180] : memref<504x128xf32, #tpu.memory_space<vmem>>, vector<1x16xf32>
    %303 = vector.shape_cast %301 : vector<1x16xf32> to vector<1x1x16xf32>
    %304 = vector.broadcast %303 : vector<1x1x16xf32> to vector<14x6x16xf32>
    %305 = arith.mulf %300, %304 : vector<14x6x16xf32>
    %cst_181 = arith.constant dense<0.000000e+00> : vector<14x6xf32>
    %306 = vector.multi_reduction <add>, %305, %cst_181 [2] : vector<14x6x16xf32> to vector<14x6xf32>
    %307 = vector.shape_cast %302 : vector<1x16xf32> to vector<1x1x16xf32>
    %308 = vector.broadcast %307 : vector<1x1x16xf32> to vector<14x6x16xf32>
    %309 = arith.mulf %300, %308 : vector<14x6x16xf32>
    %cst_182 = arith.constant dense<0.000000e+00> : vector<14x6xf32>
    %310 = vector.multi_reduction <add>, %309, %cst_182 [2] : vector<14x6x16xf32> to vector<14x6xf32>
    %311 = vector.shape_cast %310 : vector<14x6xf32> to vector<14x6x1xf32>
    %312 = vector.shape_cast %306 : vector<14x6xf32> to vector<14x1x6xf32>
    %313 = vector.broadcast %311 : vector<14x6x1xf32> to vector<14x6x6xf32>
    %314 = vector.broadcast %312 : vector<14x1x6xf32> to vector<14x6x6xf32>
    %315 = arith.addf %313, %314 : vector<14x6x6xf32>
    %cst_183 = arith.constant 0.000000e+00 : f32
    %316 = vector.broadcast %cst_183 : f32 to vector<14x6x6xf32>
    %317 = arith.cmpf ogt, %315, %316 : vector<14x6x6xf32>
    %cst_184 = arith.constant 2.000000e-01 : f32
    %318 = vector.broadcast %cst_184 : f32 to vector<14x6x6xf32>
    %319 = arith.mulf %318, %315 : vector<14x6x6xf32>
    %320 = arith.select %317, %315, %319 : vector<14x6x6xi1>, vector<14x6x6xf32>
    %cst_185 = arith.constant dense<0xFF800000> : vector<14x6xf32>
    %321 = vector.multi_reduction <maximumf>, %320, %cst_185 [2] : vector<14x6x6xf32> to vector<14x6xf32>
    %322 = vector.shape_cast %321 : vector<14x6xf32> to vector<14x6x1xf32>
    %323 = vector.broadcast %322 : vector<14x6x1xf32> to vector<14x6x6xf32>
    %324 = arith.subf %320, %323 : vector<14x6x6xf32>
    %325 = math.exp %324 : vector<14x6x6xf32>
    %cst_186 = arith.constant dense<0.000000e+00> : vector<14x6xf32>
    %326 = vector.multi_reduction <add>, %325, %cst_186 [2] : vector<14x6x6xf32> to vector<14x6xf32>
    %327 = vector.shape_cast %326 : vector<14x6xf32> to vector<14x6x1xf32>
    %328 = vector.broadcast %327 : vector<14x6x1xf32> to vector<14x6x6xf32>
    %329 = arith.divf %325, %328 : vector<14x6x6xf32>
    %cst_187 = arith.constant 0.000000e+00 : f32
    %330 = vector.broadcast %cst_187 : f32 to vector<14x6x16xf32>
    %331 = vector.extract_strided_slice %329 {offsets = [0, 0, 0], sizes = [14, 6, 1], strides = [1, 1, 1]} : vector<14x6x6xf32> to vector<14x6x1xf32>
    %332 = vector.extract_strided_slice %300 {offsets = [0, 0, 0], sizes = [14, 1, 16], strides = [1, 1, 1]} : vector<14x6x16xf32> to vector<14x1x16xf32>
    %333 = vector.broadcast %331 : vector<14x6x1xf32> to vector<14x6x16xf32>
    %334 = vector.broadcast %332 : vector<14x1x16xf32> to vector<14x6x16xf32>
    %335 = arith.mulf %333, %334 : vector<14x6x16xf32>
    %336 = arith.addf %330, %335 : vector<14x6x16xf32>
    %337 = vector.extract_strided_slice %329 {offsets = [0, 0, 1], sizes = [14, 6, 1], strides = [1, 1, 1]} : vector<14x6x6xf32> to vector<14x6x1xf32>
    %338 = vector.extract_strided_slice %300 {offsets = [0, 1, 0], sizes = [14, 1, 16], strides = [1, 1, 1]} : vector<14x6x16xf32> to vector<14x1x16xf32>
    %339 = vector.broadcast %337 : vector<14x6x1xf32> to vector<14x6x16xf32>
    %340 = vector.broadcast %338 : vector<14x1x16xf32> to vector<14x6x16xf32>
    %341 = arith.mulf %339, %340 : vector<14x6x16xf32>
    %342 = arith.addf %336, %341 : vector<14x6x16xf32>
    %343 = vector.extract_strided_slice %329 {offsets = [0, 0, 2], sizes = [14, 6, 1], strides = [1, 1, 1]} : vector<14x6x6xf32> to vector<14x6x1xf32>
    %344 = vector.extract_strided_slice %300 {offsets = [0, 2, 0], sizes = [14, 1, 16], strides = [1, 1, 1]} : vector<14x6x16xf32> to vector<14x1x16xf32>
    %345 = vector.broadcast %343 : vector<14x6x1xf32> to vector<14x6x16xf32>
    %346 = vector.broadcast %344 : vector<14x1x16xf32> to vector<14x6x16xf32>
    %347 = arith.mulf %345, %346 : vector<14x6x16xf32>
    %348 = arith.addf %342, %347 : vector<14x6x16xf32>
    %349 = vector.extract_strided_slice %329 {offsets = [0, 0, 3], sizes = [14, 6, 1], strides = [1, 1, 1]} : vector<14x6x6xf32> to vector<14x6x1xf32>
    %350 = vector.extract_strided_slice %300 {offsets = [0, 3, 0], sizes = [14, 1, 16], strides = [1, 1, 1]} : vector<14x6x16xf32> to vector<14x1x16xf32>
    %351 = vector.broadcast %349 : vector<14x6x1xf32> to vector<14x6x16xf32>
    %352 = vector.broadcast %350 : vector<14x1x16xf32> to vector<14x6x16xf32>
    %353 = arith.mulf %351, %352 : vector<14x6x16xf32>
    %354 = arith.addf %348, %353 : vector<14x6x16xf32>
    %355 = vector.extract_strided_slice %329 {offsets = [0, 0, 4], sizes = [14, 6, 1], strides = [1, 1, 1]} : vector<14x6x6xf32> to vector<14x6x1xf32>
    %356 = vector.extract_strided_slice %300 {offsets = [0, 4, 0], sizes = [14, 1, 16], strides = [1, 1, 1]} : vector<14x6x16xf32> to vector<14x1x16xf32>
    %357 = vector.broadcast %355 : vector<14x6x1xf32> to vector<14x6x16xf32>
    %358 = vector.broadcast %356 : vector<14x1x16xf32> to vector<14x6x16xf32>
    %359 = arith.mulf %357, %358 : vector<14x6x16xf32>
    %360 = arith.addf %354, %359 : vector<14x6x16xf32>
    %361 = vector.extract_strided_slice %329 {offsets = [0, 0, 5], sizes = [14, 6, 1], strides = [1, 1, 1]} : vector<14x6x6xf32> to vector<14x6x1xf32>
    %362 = vector.extract_strided_slice %300 {offsets = [0, 5, 0], sizes = [14, 1, 16], strides = [1, 1, 1]} : vector<14x6x16xf32> to vector<14x1x16xf32>
    %363 = vector.broadcast %361 : vector<14x6x1xf32> to vector<14x6x16xf32>
    %364 = vector.broadcast %362 : vector<14x1x16xf32> to vector<14x6x16xf32>
    %365 = arith.mulf %363, %364 : vector<14x6x16xf32>
    %366 = arith.addf %360, %365 : vector<14x6x16xf32>
    %cst_188 = arith.constant 0.000000e+00 : f32
    %367 = vector.broadcast %cst_188 : f32 to vector<14x6x16xf32>
    %368 = arith.cmpf ogt, %366, %367 : vector<14x6x16xf32>
    %369 = math.exp %366 : vector<14x6x16xf32>
    %cst_189 = arith.constant 1.000000e+00 : f32
    %370 = vector.broadcast %cst_189 : f32 to vector<14x6x16xf32>
    %371 = arith.subf %369, %370 : vector<14x6x16xf32>
    %372 = arith.select %368, %366, %371 : vector<14x6x16xi1>, vector<14x6x16xf32>
    %373 = vector.shape_cast %372 : vector<14x6x16xf32> to vector<84x16xf32>
    %c472 = arith.constant 472 : index
    %c0_190 = arith.constant 0 : index
    %374 = vector.load %arg2[%c472, %c0_190] : memref<504x128xf32, #tpu.memory_space<vmem>>, vector<16x8xf32>
    %cst_191 = arith.constant dense<0.000000e+00> : vector<84x8xf32>
    %375 = tpu.matmul %373, %374, %cst_191 {dimension_numbers = #tpu.dot_dimension_numbers<[1], [0], [0], [1], [0, 0, 1, 1], [], []>} : vector<84x16xf32>, vector<16x8xf32>, vector<84x8xf32> -> vector<84x8xf32>
    %376 = vector.shape_cast %375 : vector<84x8xf32> to vector<14x6x8xf32>
    %c488 = arith.constant 488 : index
    %c0_192 = arith.constant 0 : index
    %377 = vector.load %arg2[%c488, %c0_192] : memref<504x128xf32, #tpu.memory_space<vmem>>, vector<1x8xf32>
    %c496 = arith.constant 496 : index
    %c0_193 = arith.constant 0 : index
    %378 = vector.load %arg2[%c496, %c0_193] : memref<504x128xf32, #tpu.memory_space<vmem>>, vector<1x8xf32>
    %379 = vector.shape_cast %377 : vector<1x8xf32> to vector<1x1x8xf32>
    %380 = vector.broadcast %379 : vector<1x1x8xf32> to vector<14x6x8xf32>
    %381 = arith.mulf %376, %380 : vector<14x6x8xf32>
    %cst_194 = arith.constant dense<0.000000e+00> : vector<14x6xf32>
    %382 = vector.multi_reduction <add>, %381, %cst_194 [2] : vector<14x6x8xf32> to vector<14x6xf32>
    %383 = vector.shape_cast %378 : vector<1x8xf32> to vector<1x1x8xf32>
    %384 = vector.broadcast %383 : vector<1x1x8xf32> to vector<14x6x8xf32>
    %385 = arith.mulf %376, %384 : vector<14x6x8xf32>
    %cst_195 = arith.constant dense<0.000000e+00> : vector<14x6xf32>
    %386 = vector.multi_reduction <add>, %385, %cst_195 [2] : vector<14x6x8xf32> to vector<14x6xf32>
    %387 = vector.shape_cast %386 : vector<14x6xf32> to vector<14x6x1xf32>
    %388 = vector.shape_cast %382 : vector<14x6xf32> to vector<14x1x6xf32>
    %389 = vector.broadcast %387 : vector<14x6x1xf32> to vector<14x6x6xf32>
    %390 = vector.broadcast %388 : vector<14x1x6xf32> to vector<14x6x6xf32>
    %391 = arith.addf %389, %390 : vector<14x6x6xf32>
    %cst_196 = arith.constant 0.000000e+00 : f32
    %392 = vector.broadcast %cst_196 : f32 to vector<14x6x6xf32>
    %393 = arith.cmpf ogt, %391, %392 : vector<14x6x6xf32>
    %cst_197 = arith.constant 2.000000e-01 : f32
    %394 = vector.broadcast %cst_197 : f32 to vector<14x6x6xf32>
    %395 = arith.mulf %394, %391 : vector<14x6x6xf32>
    %396 = arith.select %393, %391, %395 : vector<14x6x6xi1>, vector<14x6x6xf32>
    %cst_198 = arith.constant dense<0xFF800000> : vector<14x6xf32>
    %397 = vector.multi_reduction <maximumf>, %396, %cst_198 [2] : vector<14x6x6xf32> to vector<14x6xf32>
    %398 = vector.shape_cast %397 : vector<14x6xf32> to vector<14x6x1xf32>
    %399 = vector.broadcast %398 : vector<14x6x1xf32> to vector<14x6x6xf32>
    %400 = arith.subf %396, %399 : vector<14x6x6xf32>
    %401 = math.exp %400 : vector<14x6x6xf32>
    %cst_199 = arith.constant dense<0.000000e+00> : vector<14x6xf32>
    %402 = vector.multi_reduction <add>, %401, %cst_199 [2] : vector<14x6x6xf32> to vector<14x6xf32>
    %403 = vector.shape_cast %402 : vector<14x6xf32> to vector<14x6x1xf32>
    %404 = vector.broadcast %403 : vector<14x6x1xf32> to vector<14x6x6xf32>
    %405 = arith.divf %401, %404 : vector<14x6x6xf32>
    %cst_200 = arith.constant 0.000000e+00 : f32
    %406 = vector.broadcast %cst_200 : f32 to vector<14x6x8xf32>
    %407 = vector.extract_strided_slice %405 {offsets = [0, 0, 0], sizes = [14, 6, 1], strides = [1, 1, 1]} : vector<14x6x6xf32> to vector<14x6x1xf32>
    %408 = vector.extract_strided_slice %376 {offsets = [0, 0, 0], sizes = [14, 1, 8], strides = [1, 1, 1]} : vector<14x6x8xf32> to vector<14x1x8xf32>
    %409 = vector.broadcast %407 : vector<14x6x1xf32> to vector<14x6x8xf32>
    %410 = vector.broadcast %408 : vector<14x1x8xf32> to vector<14x6x8xf32>
    %411 = arith.mulf %409, %410 : vector<14x6x8xf32>
    %412 = arith.addf %406, %411 : vector<14x6x8xf32>
    %413 = vector.extract_strided_slice %405 {offsets = [0, 0, 1], sizes = [14, 6, 1], strides = [1, 1, 1]} : vector<14x6x6xf32> to vector<14x6x1xf32>
    %414 = vector.extract_strided_slice %376 {offsets = [0, 1, 0], sizes = [14, 1, 8], strides = [1, 1, 1]} : vector<14x6x8xf32> to vector<14x1x8xf32>
    %415 = vector.broadcast %413 : vector<14x6x1xf32> to vector<14x6x8xf32>
    %416 = vector.broadcast %414 : vector<14x1x8xf32> to vector<14x6x8xf32>
    %417 = arith.mulf %415, %416 : vector<14x6x8xf32>
    %418 = arith.addf %412, %417 : vector<14x6x8xf32>
    %419 = vector.extract_strided_slice %405 {offsets = [0, 0, 2], sizes = [14, 6, 1], strides = [1, 1, 1]} : vector<14x6x6xf32> to vector<14x6x1xf32>
    %420 = vector.extract_strided_slice %376 {offsets = [0, 2, 0], sizes = [14, 1, 8], strides = [1, 1, 1]} : vector<14x6x8xf32> to vector<14x1x8xf32>
    %421 = vector.broadcast %419 : vector<14x6x1xf32> to vector<14x6x8xf32>
    %422 = vector.broadcast %420 : vector<14x1x8xf32> to vector<14x6x8xf32>
    %423 = arith.mulf %421, %422 : vector<14x6x8xf32>
    %424 = arith.addf %418, %423 : vector<14x6x8xf32>
    %425 = vector.extract_strided_slice %405 {offsets = [0, 0, 3], sizes = [14, 6, 1], strides = [1, 1, 1]} : vector<14x6x6xf32> to vector<14x6x1xf32>
    %426 = vector.extract_strided_slice %376 {offsets = [0, 3, 0], sizes = [14, 1, 8], strides = [1, 1, 1]} : vector<14x6x8xf32> to vector<14x1x8xf32>
    %427 = vector.broadcast %425 : vector<14x6x1xf32> to vector<14x6x8xf32>
    %428 = vector.broadcast %426 : vector<14x1x8xf32> to vector<14x6x8xf32>
    %429 = arith.mulf %427, %428 : vector<14x6x8xf32>
    %430 = arith.addf %424, %429 : vector<14x6x8xf32>
    %431 = vector.extract_strided_slice %405 {offsets = [0, 0, 4], sizes = [14, 6, 1], strides = [1, 1, 1]} : vector<14x6x6xf32> to vector<14x6x1xf32>
    %432 = vector.extract_strided_slice %376 {offsets = [0, 4, 0], sizes = [14, 1, 8], strides = [1, 1, 1]} : vector<14x6x8xf32> to vector<14x1x8xf32>
    %433 = vector.broadcast %431 : vector<14x6x1xf32> to vector<14x6x8xf32>
    %434 = vector.broadcast %432 : vector<14x1x8xf32> to vector<14x6x8xf32>
    %435 = arith.mulf %433, %434 : vector<14x6x8xf32>
    %436 = arith.addf %430, %435 : vector<14x6x8xf32>
    %437 = vector.extract_strided_slice %405 {offsets = [0, 0, 5], sizes = [14, 6, 1], strides = [1, 1, 1]} : vector<14x6x6xf32> to vector<14x6x1xf32>
    %438 = vector.extract_strided_slice %376 {offsets = [0, 5, 0], sizes = [14, 1, 8], strides = [1, 1, 1]} : vector<14x6x8xf32> to vector<14x1x8xf32>
    %439 = vector.broadcast %437 : vector<14x6x1xf32> to vector<14x6x8xf32>
    %440 = vector.broadcast %438 : vector<14x1x8xf32> to vector<14x6x8xf32>
    %441 = arith.mulf %439, %440 : vector<14x6x8xf32>
    %442 = arith.addf %436, %441 : vector<14x6x8xf32>
    %443 = vector.shape_cast %442 : vector<14x6x8xf32> to vector<1x7x2x6x8xf32>
    %444 = vector.extract_strided_slice %443 {offsets = [0, 0, 0, 0, 0], sizes = [1, 1, 2, 6, 8], strides = [1, 1, 1, 1, 1]} : vector<1x7x2x6x8xf32> to vector<1x1x2x6x8xf32>
    %445 = vector.shape_cast %444 : vector<1x1x2x6x8xf32> to vector<1x2x6x8xf32>
    %446 = vector.extract_strided_slice %445 {offsets = [0, 0, 0, 0], sizes = [1, 2, 2, 8], strides = [1, 1, 1, 1]} : vector<1x2x6x8xf32> to vector<1x2x2x8xf32>
    %447 = vector.shape_cast %446 : vector<1x2x2x8xf32> to vector<1x4x8xf32>
    %c0_201 = arith.constant 0 : index
    %c0_202 = arith.constant 0 : index
    %c64 = arith.constant 64 : index
    %448 = vector.load %arg3[%c0_201, %c0_202, %c64] : memref<1x4x232xf32, #tpu.memory_space<vmem>>, vector<1x4x8xf32>
    tpu.vector_store %arg3[%c0_201, %c0_202, %c64], %447 {strides = array<i32>} : memref<1x4x232xf32, #tpu.memory_space<vmem>>, vector<1x4x8xf32>,
    %449 = vector.extract_strided_slice %445 {offsets = [0, 0, 2, 0], sizes = [1, 2, 2, 8], strides = [1, 1, 1, 1]} : vector<1x2x6x8xf32> to vector<1x2x2x8xf32>
    %450 = vector.shape_cast %449 : vector<1x2x2x8xf32> to vector<1x4x8xf32>
    %c0_203 = arith.constant 0 : index
    %c0_204 = arith.constant 0 : index
    %c72 = arith.constant 72 : index
    %451 = vector.load %arg3[%c0_203, %c0_204, %c72] : memref<1x4x232xf32, #tpu.memory_space<vmem>>, vector<1x4x8xf32>
    tpu.vector_store %arg3[%c0_203, %c0_204, %c72], %450 {strides = array<i32>} : memref<1x4x232xf32, #tpu.memory_space<vmem>>, vector<1x4x8xf32>,
    %452 = vector.extract_strided_slice %445 {offsets = [0, 0, 4, 0], sizes = [1, 2, 2, 8], strides = [1, 1, 1, 1]} : vector<1x2x6x8xf32> to vector<1x2x2x8xf32>
    %453 = vector.shape_cast %452 : vector<1x2x2x8xf32> to vector<1x4x8xf32>
    %c0_205 = arith.constant 0 : index
    %c0_206 = arith.constant 0 : index
    %c80 = arith.constant 80 : index
    %454 = vector.load %arg3[%c0_205, %c0_206, %c80] : memref<1x4x232xf32, #tpu.memory_space<vmem>>, vector<1x4x8xf32>
    tpu.vector_store %arg3[%c0_205, %c0_206, %c80], %453 {strides = array<i32>} : memref<1x4x232xf32, #tpu.memory_space<vmem>>, vector<1x4x8xf32>,
    %455 = vector.extract_strided_slice %443 {offsets = [0, 1, 0, 0, 0], sizes = [1, 1, 2, 6, 8], strides = [1, 1, 1, 1, 1]} : vector<1x7x2x6x8xf32> to vector<1x1x2x6x8xf32>
    %456 = vector.shape_cast %455 : vector<1x1x2x6x8xf32> to vector<1x2x6x8xf32>
    %457 = vector.extract_strided_slice %456 {offsets = [0, 0, 0, 0], sizes = [1, 2, 2, 8], strides = [1, 1, 1, 1]} : vector<1x2x6x8xf32> to vector<1x2x2x8xf32>
    %458 = vector.shape_cast %457 : vector<1x2x2x8xf32> to vector<1x4x8xf32>
    %c0_207 = arith.constant 0 : index
    %c0_208 = arith.constant 0 : index
    %c88_209 = arith.constant 88 : index
    %459 = vector.load %arg3[%c0_207, %c0_208, %c88_209] : memref<1x4x232xf32, #tpu.memory_space<vmem>>, vector<1x4x8xf32>
    tpu.vector_store %arg3[%c0_207, %c0_208, %c88_209], %458 {strides = array<i32>} : memref<1x4x232xf32, #tpu.memory_space<vmem>>, vector<1x4x8xf32>,
    %460 = vector.extract_strided_slice %456 {offsets = [0, 0, 2, 0], sizes = [1, 2, 2, 8], strides = [1, 1, 1, 1]} : vector<1x2x6x8xf32> to vector<1x2x2x8xf32>
    %461 = vector.shape_cast %460 : vector<1x2x2x8xf32> to vector<1x4x8xf32>
    %c0_210 = arith.constant 0 : index
    %c0_211 = arith.constant 0 : index
    %c96_212 = arith.constant 96 : index
    %462 = vector.load %arg3[%c0_210, %c0_211, %c96_212] : memref<1x4x232xf32, #tpu.memory_space<vmem>>, vector<1x4x8xf32>
    tpu.vector_store %arg3[%c0_210, %c0_211, %c96_212], %461 {strides = array<i32>} : memref<1x4x232xf32, #tpu.memory_space<vmem>>, vector<1x4x8xf32>,
    %463 = vector.extract_strided_slice %456 {offsets = [0, 0, 4, 0], sizes = [1, 2, 2, 8], strides = [1, 1, 1, 1]} : vector<1x2x6x8xf32> to vector<1x2x2x8xf32>
    %464 = vector.shape_cast %463 : vector<1x2x2x8xf32> to vector<1x4x8xf32>
    %c0_213 = arith.constant 0 : index
    %c0_214 = arith.constant 0 : index
    %c104_215 = arith.constant 104 : index
    %465 = vector.load %arg3[%c0_213, %c0_214, %c104_215] : memref<1x4x232xf32, #tpu.memory_space<vmem>>, vector<1x4x8xf32>
    tpu.vector_store %arg3[%c0_213, %c0_214, %c104_215], %464 {strides = array<i32>} : memref<1x4x232xf32, #tpu.memory_space<vmem>>, vector<1x4x8xf32>,
    %466 = vector.extract_strided_slice %443 {offsets = [0, 2, 0, 0, 0], sizes = [1, 1, 2, 6, 8], strides = [1, 1, 1, 1, 1]} : vector<1x7x2x6x8xf32> to vector<1x1x2x6x8xf32>
    %467 = vector.shape_cast %466 : vector<1x1x2x6x8xf32> to vector<1x2x6x8xf32>
    %468 = vector.extract_strided_slice %467 {offsets = [0, 0, 0, 0], sizes = [1, 2, 2, 8], strides = [1, 1, 1, 1]} : vector<1x2x6x8xf32> to vector<1x2x2x8xf32>
    %469 = vector.shape_cast %468 : vector<1x2x2x8xf32> to vector<1x4x8xf32>
    %c0_216 = arith.constant 0 : index
    %c0_217 = arith.constant 0 : index
    %c112_218 = arith.constant 112 : index
    %470 = vector.load %arg3[%c0_216, %c0_217, %c112_218] : memref<1x4x232xf32, #tpu.memory_space<vmem>>, vector<1x4x8xf32>
    tpu.vector_store %arg3[%c0_216, %c0_217, %c112_218], %469 {strides = array<i32>} : memref<1x4x232xf32, #tpu.memory_space<vmem>>, vector<1x4x8xf32>,
    %471 = vector.extract_strided_slice %467 {offsets = [0, 0, 2, 0], sizes = [1, 2, 2, 8], strides = [1, 1, 1, 1]} : vector<1x2x6x8xf32> to vector<1x2x2x8xf32>
    %472 = vector.shape_cast %471 : vector<1x2x2x8xf32> to vector<1x4x8xf32>
    %c0_219 = arith.constant 0 : index
    %c0_220 = arith.constant 0 : index
    %c120 = arith.constant 120 : index
    %473 = vector.load %arg3[%c0_219, %c0_220, %c120] : memref<1x4x232xf32, #tpu.memory_space<vmem>>, vector<1x4x8xf32>
    tpu.vector_store %arg3[%c0_219, %c0_220, %c120], %472 {strides = array<i32>} : memref<1x4x232xf32, #tpu.memory_space<vmem>>, vector<1x4x8xf32>,
    %474 = vector.extract_strided_slice %467 {offsets = [0, 0, 4, 0], sizes = [1, 2, 2, 8], strides = [1, 1, 1, 1]} : vector<1x2x6x8xf32> to vector<1x2x2x8xf32>
    %475 = vector.shape_cast %474 : vector<1x2x2x8xf32> to vector<1x4x8xf32>
    %c0_221 = arith.constant 0 : index
    %c0_222 = arith.constant 0 : index
    %c128 = arith.constant 128 : index
    %476 = vector.load %arg3[%c0_221, %c0_222, %c128] : memref<1x4x232xf32, #tpu.memory_space<vmem>>, vector<1x4x8xf32>
    tpu.vector_store %arg3[%c0_221, %c0_222, %c128], %475 {strides = array<i32>} : memref<1x4x232xf32, #tpu.memory_space<vmem>>, vector<1x4x8xf32>,
    %477 = vector.extract_strided_slice %443 {offsets = [0, 3, 0, 0, 0], sizes = [1, 1, 2, 6, 8], strides = [1, 1, 1, 1, 1]} : vector<1x7x2x6x8xf32> to vector<1x1x2x6x8xf32>
    %478 = vector.shape_cast %477 : vector<1x1x2x6x8xf32> to vector<1x2x6x8xf32>
    %479 = vector.extract_strided_slice %478 {offsets = [0, 0, 0, 0], sizes = [1, 2, 2, 8], strides = [1, 1, 1, 1]} : vector<1x2x6x8xf32> to vector<1x2x2x8xf32>
    %480 = vector.shape_cast %479 : vector<1x2x2x8xf32> to vector<1x4x8xf32>
    %c0_223 = arith.constant 0 : index
    %c0_224 = arith.constant 0 : index
    %c136 = arith.constant 136 : index
    %481 = vector.load %arg3[%c0_223, %c0_224, %c136] : memref<1x4x232xf32, #tpu.memory_space<vmem>>, vector<1x4x8xf32>
    tpu.vector_store %arg3[%c0_223, %c0_224, %c136], %480 {strides = array<i32>} : memref<1x4x232xf32, #tpu.memory_space<vmem>>, vector<1x4x8xf32>,
    %482 = vector.extract_strided_slice %478 {offsets = [0, 0, 2, 0], sizes = [1, 2, 2, 8], strides = [1, 1, 1, 1]} : vector<1x2x6x8xf32> to vector<1x2x2x8xf32>
    %483 = vector.shape_cast %482 : vector<1x2x2x8xf32> to vector<1x4x8xf32>
    %c0_225 = arith.constant 0 : index
    %c0_226 = arith.constant 0 : index
    %c144_227 = arith.constant 144 : index
    %484 = vector.load %arg3[%c0_225, %c0_226, %c144_227] : memref<1x4x232xf32, #tpu.memory_space<vmem>>, vector<1x4x8xf32>
    tpu.vector_store %arg3[%c0_225, %c0_226, %c144_227], %483 {strides = array<i32>} : memref<1x4x232xf32, #tpu.memory_space<vmem>>, vector<1x4x8xf32>,
    %485 = vector.extract_strided_slice %478 {offsets = [0, 0, 4, 0], sizes = [1, 2, 2, 8], strides = [1, 1, 1, 1]} : vector<1x2x6x8xf32> to vector<1x2x2x8xf32>
    %486 = vector.shape_cast %485 : vector<1x2x2x8xf32> to vector<1x4x8xf32>
    %c0_228 = arith.constant 0 : index
    %c0_229 = arith.constant 0 : index
    %c152 = arith.constant 152 : index
    %487 = vector.load %arg3[%c0_228, %c0_229, %c152] : memref<1x4x232xf32, #tpu.memory_space<vmem>>, vector<1x4x8xf32>
    tpu.vector_store %arg3[%c0_228, %c0_229, %c152], %486 {strides = array<i32>} : memref<1x4x232xf32, #tpu.memory_space<vmem>>, vector<1x4x8xf32>,
    %488 = vector.extract_strided_slice %443 {offsets = [0, 4, 0, 0, 0], sizes = [1, 1, 2, 6, 8], strides = [1, 1, 1, 1, 1]} : vector<1x7x2x6x8xf32> to vector<1x1x2x6x8xf32>
    %489 = vector.shape_cast %488 : vector<1x1x2x6x8xf32> to vector<1x2x6x8xf32>
    %490 = vector.extract_strided_slice %489 {offsets = [0, 0, 0, 0], sizes = [1, 2, 2, 8], strides = [1, 1, 1, 1]} : vector<1x2x6x8xf32> to vector<1x2x2x8xf32>
    %491 = vector.shape_cast %490 : vector<1x2x2x8xf32> to vector<1x4x8xf32>
    %c0_230 = arith.constant 0 : index
    %c0_231 = arith.constant 0 : index
    %c160 = arith.constant 160 : index
    %492 = vector.load %arg3[%c0_230, %c0_231, %c160] : memref<1x4x232xf32, #tpu.memory_space<vmem>>, vector<1x4x8xf32>
    tpu.vector_store %arg3[%c0_230, %c0_231, %c160], %491 {strides = array<i32>} : memref<1x4x232xf32, #tpu.memory_space<vmem>>, vector<1x4x8xf32>,
    %493 = vector.extract_strided_slice %489 {offsets = [0, 0, 2, 0], sizes = [1, 2, 2, 8], strides = [1, 1, 1, 1]} : vector<1x2x6x8xf32> to vector<1x2x2x8xf32>
    %494 = vector.shape_cast %493 : vector<1x2x2x8xf32> to vector<1x4x8xf32>
    %c0_232 = arith.constant 0 : index
    %c0_233 = arith.constant 0 : index
    %c168 = arith.constant 168 : index
    %495 = vector.load %arg3[%c0_232, %c0_233, %c168] : memref<1x4x232xf32, #tpu.memory_space<vmem>>, vector<1x4x8xf32>
    tpu.vector_store %arg3[%c0_232, %c0_233, %c168], %494 {strides = array<i32>} : memref<1x4x232xf32, #tpu.memory_space<vmem>>, vector<1x4x8xf32>,
    %496 = vector.extract_strided_slice %489 {offsets = [0, 0, 4, 0], sizes = [1, 2, 2, 8], strides = [1, 1, 1, 1]} : vector<1x2x6x8xf32> to vector<1x2x2x8xf32>
    %497 = vector.shape_cast %496 : vector<1x2x2x8xf32> to vector<1x4x8xf32>
    %c0_234 = arith.constant 0 : index
    %c0_235 = arith.constant 0 : index
    %c176_236 = arith.constant 176 : index
    %498 = vector.load %arg3[%c0_234, %c0_235, %c176_236] : memref<1x4x232xf32, #tpu.memory_space<vmem>>, vector<1x4x8xf32>
    tpu.vector_store %arg3[%c0_234, %c0_235, %c176_236], %497 {strides = array<i32>} : memref<1x4x232xf32, #tpu.memory_space<vmem>>, vector<1x4x8xf32>,
    %499 = vector.extract_strided_slice %443 {offsets = [0, 5, 0, 0, 0], sizes = [1, 1, 2, 6, 8], strides = [1, 1, 1, 1, 1]} : vector<1x7x2x6x8xf32> to vector<1x1x2x6x8xf32>
    %500 = vector.shape_cast %499 : vector<1x1x2x6x8xf32> to vector<1x2x6x8xf32>
    %501 = vector.extract_strided_slice %500 {offsets = [0, 0, 0, 0], sizes = [1, 2, 2, 8], strides = [1, 1, 1, 1]} : vector<1x2x6x8xf32> to vector<1x2x2x8xf32>
    %502 = vector.shape_cast %501 : vector<1x2x2x8xf32> to vector<1x4x8xf32>
    %c0_237 = arith.constant 0 : index
    %c0_238 = arith.constant 0 : index
    %c184_239 = arith.constant 184 : index
    %503 = vector.load %arg3[%c0_237, %c0_238, %c184_239] : memref<1x4x232xf32, #tpu.memory_space<vmem>>, vector<1x4x8xf32>
    tpu.vector_store %arg3[%c0_237, %c0_238, %c184_239], %502 {strides = array<i32>} : memref<1x4x232xf32, #tpu.memory_space<vmem>>, vector<1x4x8xf32>,
    %504 = vector.extract_strided_slice %500 {offsets = [0, 0, 2, 0], sizes = [1, 2, 2, 8], strides = [1, 1, 1, 1]} : vector<1x2x6x8xf32> to vector<1x2x2x8xf32>
    %505 = vector.shape_cast %504 : vector<1x2x2x8xf32> to vector<1x4x8xf32>
    %c0_240 = arith.constant 0 : index
    %c0_241 = arith.constant 0 : index
    %c192 = arith.constant 192 : index
    %506 = vector.load %arg3[%c0_240, %c0_241, %c192] : memref<1x4x232xf32, #tpu.memory_space<vmem>>, vector<1x4x8xf32>
    tpu.vector_store %arg3[%c0_240, %c0_241, %c192], %505 {strides = array<i32>} : memref<1x4x232xf32, #tpu.memory_space<vmem>>, vector<1x4x8xf32>,
    %507 = vector.extract_strided_slice %500 {offsets = [0, 0, 4, 0], sizes = [1, 2, 2, 8], strides = [1, 1, 1, 1]} : vector<1x2x6x8xf32> to vector<1x2x2x8xf32>
    %508 = vector.shape_cast %507 : vector<1x2x2x8xf32> to vector<1x4x8xf32>
    %c0_242 = arith.constant 0 : index
    %c0_243 = arith.constant 0 : index
    %c200_244 = arith.constant 200 : index
    %509 = vector.load %arg3[%c0_242, %c0_243, %c200_244] : memref<1x4x232xf32, #tpu.memory_space<vmem>>, vector<1x4x8xf32>
    tpu.vector_store %arg3[%c0_242, %c0_243, %c200_244], %508 {strides = array<i32>} : memref<1x4x232xf32, #tpu.memory_space<vmem>>, vector<1x4x8xf32>,
    %510 = vector.extract_strided_slice %443 {offsets = [0, 6, 0, 0, 0], sizes = [1, 1, 2, 6, 8], strides = [1, 1, 1, 1, 1]} : vector<1x7x2x6x8xf32> to vector<1x1x2x6x8xf32>
    %511 = vector.shape_cast %510 : vector<1x1x2x6x8xf32> to vector<1x2x6x8xf32>
    %512 = vector.extract_strided_slice %511 {offsets = [0, 0, 0, 0], sizes = [1, 2, 2, 8], strides = [1, 1, 1, 1]} : vector<1x2x6x8xf32> to vector<1x2x2x8xf32>
    %513 = vector.shape_cast %512 : vector<1x2x2x8xf32> to vector<1x4x8xf32>
    %c0_245 = arith.constant 0 : index
    %c0_246 = arith.constant 0 : index
    %c208 = arith.constant 208 : index
    %514 = vector.load %arg3[%c0_245, %c0_246, %c208] : memref<1x4x232xf32, #tpu.memory_space<vmem>>, vector<1x4x8xf32>
    tpu.vector_store %arg3[%c0_245, %c0_246, %c208], %513 {strides = array<i32>} : memref<1x4x232xf32, #tpu.memory_space<vmem>>, vector<1x4x8xf32>,
    %515 = vector.extract_strided_slice %511 {offsets = [0, 0, 2, 0], sizes = [1, 2, 2, 8], strides = [1, 1, 1, 1]} : vector<1x2x6x8xf32> to vector<1x2x2x8xf32>
    %516 = vector.shape_cast %515 : vector<1x2x2x8xf32> to vector<1x4x8xf32>
    %c0_247 = arith.constant 0 : index
    %c0_248 = arith.constant 0 : index
    %c216_249 = arith.constant 216 : index
    %517 = vector.load %arg3[%c0_247, %c0_248, %c216_249] : memref<1x4x232xf32, #tpu.memory_space<vmem>>, vector<1x4x8xf32>
    tpu.vector_store %arg3[%c0_247, %c0_248, %c216_249], %516 {strides = array<i32>} : memref<1x4x232xf32, #tpu.memory_space<vmem>>, vector<1x4x8xf32>,
    %518 = vector.extract_strided_slice %511 {offsets = [0, 0, 4, 0], sizes = [1, 2, 2, 8], strides = [1, 1, 1, 1]} : vector<1x2x6x8xf32> to vector<1x2x2x8xf32>
    %519 = vector.shape_cast %518 : vector<1x2x2x8xf32> to vector<1x4x8xf32>
    %c0_250 = arith.constant 0 : index
    %c0_251 = arith.constant 0 : index
    %c224_252 = arith.constant 224 : index
    %520 = vector.load %arg3[%c0_250, %c0_251, %c224_252] : memref<1x4x232xf32, #tpu.memory_space<vmem>>, vector<1x4x8xf32>
    tpu.vector_store %arg3[%c0_250, %c0_251, %c224_252], %519 {strides = array<i32>} : memref<1x4x232xf32, #tpu.memory_space<vmem>>, vector<1x4x8xf32>,
    return
  }
  func.func @transform_0(%arg0: i32) -> (i32, i32, i32, i32) {
    %c0_i32 = arith.constant 0 : i32
    %c0_i32_0 = arith.constant 0 : i32
    %c0_i32_1 = arith.constant 0 : i32
    %c0_i32_2 = arith.constant 0 : i32
    return %arg0, %c0_i32, %c0_i32_0, %c0_i32_1 : i32, i32, i32, i32
  }
  func.func @transform_1(%arg0: i32) -> (i32, i32) {
    %c0_i32 = arith.constant 0 : i32
    %c0_i32_0 = arith.constant 0 : i32
    %c0_i32_1 = arith.constant 0 : i32
    return %c0_i32, %c0_i32_0 : i32, i32
  }
  func.func @transform_2(%arg0: i32) -> (i32, i32, i32) {
    %c0_i32 = arith.constant 0 : i32
    %c0_i32_0 = arith.constant 0 : i32
    %c0_i32_1 = arith.constant 0 : i32
    return %arg0, %c0_i32, %c0_i32_0 : i32, i32, i32
  }
}

</mosaic_0001>

<llo_original>
// kernel: past_encoder_forward.1
$region0: #{past_encoder_forward.1}
  #allocation0 [shape = 'u32[]', space=smem, size = 0x4, offset = 0x4, fixed_abs, tag = 'smem constant byte address 0x4 - core index']
  #allocation1 [shape = 'u32[144,128]{1,0:T(1,128)}', space=vmem, size = 0x12000, scoped, tag = 'internal scratch']
  #allocation2 [shape = 'f32[1,7,2,6,8]{4,3,2,1,0:T(8,128)}', space=vmem, size = 0xe000, scoped, tag = 'scratch operand']
  #allocation3 [shape = 'f32[1,4,64]{2,1,0:T(4,128)}', space=vmem, size = 0x800, scoped, tag = 'scratch operand']
  %s0 = inlined_call_operand.hbm [shape: f32[2,4,8,8], index: 0, kind: input, shape index: {}]
  %s1 = inlined_call_operand.hbm [shape: f32[504,128], index: 1, kind: input, shape index: {}]
  %s2 = inlined_call_operand.vmem [shape: f32[2,4,232], index: 2, kind: output, shape index: {}]
  %s3 = sld [smem:[#allocation0]]
  $region49: #{past_encoder_forward.1} parent=0
    _
  %s5 = ssub.s32 1, %s3
  %s6 = scalar_select 0, %s5, %s3
  $region1: #{past_encoder_forward.1} parent=0
    #allocation4 [shape = 'u8[32768]{0}', space=vmem, size = 0x8000, scoped, tag = 'input window, operand 0']
    #allocation5 [shape = 's32[2]{0}', space=sflag, size = 0x8, scoped, tag = 'scoped memory for past_encoder_forward.1']
    #allocation6 [shape = 'u8[258048]{0}', space=vmem, size = 0x3f000, scoped, tag = 'input window, operand 1, single buffered']
    #allocation7 [shape = 's32[1]{0}', space=sflag, size = 0x4, scoped, tag = 'scoped memory for past_encoder_forward.1']
    %7 = vsyncpa [#allocation5], 0
    %s8 = scalar_lea.sflag [#allocation5], 1
    %9 = vsyncpa %s8, 0
    %10 = vsyncpa [#allocation7], 0
    loop: start=0, step=1, limit=4
    $region2: #{past_encoder_forward.1} parent=1 // loop_pre_header
      _
    $region3: #{past_encoder_forward.1} parent=1 // loop_header
      %s12 = sphi 0, %s16
      %p13 = scmp.ge.s32.totalorder %s12, 4
      %s22 = sphi 0, %s24
      %s25 = sphi 0, %s22
      %s26 = sphi 0, %s25
      %s42 = sphi 0, %s26
      %s46 = sphi 0, %s46
      %s48 = sphi 0, %s46
      %s49 = sphi 0, %s48
      %s63 = sphi 0, %s49
      %s69 = sphi 0, %s71
      %s72 = sphi 0, %s69
      %s73 = sphi 0, %s72
      %s89 = sphi 0, %s73
    $region4: #{past_encoder_forward.1} parent=1 // loop_header_branch
      %15 = sbr.rel (%p13) target = $region8
    $region5: #{past_encoder_forward.1} parent=1 // loop_body
      %s17 = ssub.s32 %s12, 1
      %s18 = ssub.s32 %s12, 2
      %s19 = sadd.s32 %s12, 1
      %s20 = ssub.s32 %s12, %s19
      %p21 = scmp.eq.s32.totalorder %s20, 0
      %s23 = sadd.s32 %s22, 1
      %s24 = scalar_select %p21, %s22, %s23
      %p27 = pneg %p21
      %p28 = scmp.eq.s32.totalorder %s12, 1
      %p29 = por %p27, %p28
      %p30 = scmp.ne.s32.totalorder %s22, %s25
      %p31 = scmp.eq.s32.totalorder %s12, 0
      %p32 = por %p30, %p31
      %p33 = scmp.ne.s32.totalorder %s22, %s25
      %p34 = scmp.eq.s32.totalorder %s17, 1
      %p35 = por %p33, %p34
      %p36 = scmp.ne.s32.totalorder %s25, %s26
      %p37 = scmp.eq.s32.totalorder %s17, 0
      %p38 = por %p36, %p37
      %p39 = scmp.ne.s32.totalorder %s25, %s26
      %p40 = scmp.eq.s32.totalorder %s18, 1
      %p41 = por %p39, %p40
      %p43 = scmp.ne.s32.totalorder %s26, %s42
      %p44 = scmp.eq.s32.totalorder %s18, 0
      %p45 = por %p43, %p44
      %s47 = sadd.s32 %s46, 1
      %p50 = scmp.eq.s32.totalorder %s12, 1
      %p51 = scmp.ne.s32.totalorder %s46, %s48
      %p52 = scmp.eq.s32.totalorder %s12, 0
      %p53 = por %p51, %p52
      %p54 = scmp.ne.s32.totalorder %s46, %s48
      %p55 = scmp.eq.s32.totalorder %s17, 1
      %p56 = por %p54, %p55
      %p57 = scmp.ne.s32.totalorder %s48, %s49
      %p58 = scmp.eq.s32.totalorder %s17, 0
      %p59 = por %p57, %p58
      %p60 = scmp.ne.s32.totalorder %s48, %s49
      %p61 = scmp.eq.s32.totalorder %s18, 1
      %p62 = por %p60, %p61
      %p64 = scmp.ne.s32.totalorder %s49, %s63
      %p65 = scmp.eq.s32.totalorder %s18, 0
      %p66 = por %p64, %p65
      %s67 = ssub.s32 %s12, %s19
      %p68 = scmp.eq.s32.totalorder %s67, 0
      %s70 = sadd.s32 %s69, 1
      %s71 = scalar_select %p68, %s69, %s70
      %p74 = pneg %p68
      %p75 = scmp.eq.s32.totalorder %s12, 1
      %p76 = por %p74, %p75
      %p77 = scmp.ne.s32.totalorder %s69, %s72
      %p78 = scmp.eq.s32.totalorder %s12, 0
      %p79 = por %p77, %p78
      %p80 = scmp.ne.s32.totalorder %s69, %s72
      %p81 = scmp.eq.s32.totalorder %s17, 1
      %p82 = por %p80, %p81
      %p83 = scmp.ne.s32.totalorder %s72, %s73
      %p84 = scmp.eq.s32.totalorder %s17, 0
      %p85 = por %p83, %p84
      %p86 = scmp.ne.s32.totalorder %s72, %s73
      %p87 = scmp.eq.s32.totalorder %s18, 1
      %p88 = por %p86, %p87
      %p90 = scmp.ne.s32.totalorder %s73, %s89
      %p91 = scmp.eq.s32.totalorder %s18, 0
      %p92 = por %p90, %p91
      %p93 = scmp.le.s32.totalorder 1, %s12
      %p94 = scmp.lt.s32.totalorder %s12, 3
      %p95 = pnand %p93, %p94
      %p96 = pneg %p95
      // Predicated region
      $region9: #{past_encoder_forward.1} parent=5 // pred_check
        _
      $region10: #{past_encoder_forward.1} parent=5 // pred_check_branch
        %98 = sbr.rel (%p95) target = $region12
      $region11: #{past_encoder_forward.1} parent=5 // pred_region
        %s99 = ssub.s32 %s12, 1
        // Predicated region
        $region13: #{past_encoder_forward.1} parent=11 // pred_check
          %p100 = pneg %p59
        $region14: #{past_encoder_forward.1} parent=11 // pred_check_branch
          %102 = sbr.rel (%p100) target = $region16
        $region15: #{past_encoder_forward.1} parent=11 // pred_region
          %s104 = ssub.s32 8064, 8064
          %105 = vsyncadd [#allocation7], %s104
          %s106 = sshll.u32 [#allocation6], 4
          %s107 = int_to_ptr.vmem [resolvable:$true] %s106
          %112 = dma.hbm_to_vmem [thread:$0]  %s1, 8064, %s107, [#allocation7], 128, 128, 8
        $region16: #{past_encoder_forward.1} parent=11 // pred_fallthru
          _
      $region12: #{past_encoder_forward.1} parent=5 // pred_fallthru
        _
      %p113 = scmp.lt.s32.totalorder %s12, 2
      // Predicated region
      $region17: #{past_encoder_forward.1} parent=5 // pred_check
        %p114 = pneg %p113
      $region18: #{past_encoder_forward.1} parent=5 // pred_check_branch
        %116 = sbr.rel (%p114) target = $region20
      $region19: #{past_encoder_forward.1} parent=5 // pred_region
        // Predicated region
        $region21: #{past_encoder_forward.1} parent=19 // pred_check
          %p117 = pneg %p32
        $region22: #{past_encoder_forward.1} parent=19 // pred_check_branch
          %119 = sbr.rel (%p117) target = $region24
        $region23: #{past_encoder_forward.1} parent=19 // pred_region
          %s120 = sand.u32 %s22, 1
          %s121 = scalar_lea.sflag [#allocation5], %s120
          %s122 = sand.u32 %s22, 1
          %s123 = smul.addr %s122, 32
          %s124 = scalar_lea.vmem [#allocation4], %s123
          %s126 = ssub.s32 512, 512
          %127 = vsyncadd %s121, %s126
          %s128 = smul.addr %s12, 4
          %s129 = smul.addr %s128, 128
          %s130 = scalar_lea.hbm %s0, %s129
          %s131 = sshll.u32 %s124, 4
          %s132 = int_to_ptr.vmem [resolvable:$true] %s131
          %137 = dma.hbm_to_vmem [thread:$0]  %s130, 512, %s132, %s121, 128, 128, 8
        $region24: #{past_encoder_forward.1} parent=19 // pred_fallthru
          _
      $region20: #{past_encoder_forward.1} parent=5 // pred_fallthru
        _
      %p138 = scmp.le.s32.totalorder 1, %s12
      %p139 = scmp.lt.s32.totalorder %s12, 3
      %p140 = pnand %p138, %p139
      %p141 = pneg %p140
      // Predicated region
      $region25: #{past_encoder_forward.1} parent=5 // pred_check
        _
      $region26: #{past_encoder_forward.1} parent=5 // pred_check_branch
        %143 = sbr.rel (%p140) target = $region28
      $region27: #{past_encoder_forward.1} parent=5 // pred_region
        %s144 = ssub.s32 %s12, 1
        %s145 = sand.u32 %s25, 1
        %s146 = scalar_lea.sflag [#allocation5], %s145
        %s147 = sand.u32 %s25, 1
        %s148 = smul.addr %s147, 32
        %s149 = scalar_lea.vmem [#allocation4], %s148
        // Predicated region
        $region29: #{past_encoder_forward.1} parent=27 // pred_check
          %p150 = pneg %p38
        $region30: #{past_encoder_forward.1} parent=27 // pred_check_branch
          %152 = sbr.rel (%p150) target = $region32
        $region31: #{past_encoder_forward.1} parent=27 // pred_region
          %153 = dma.done %s146, 512
        $region32: #{past_encoder_forward.1} parent=27 // pred_fallthru
          _
        // Predicated region
        $region33: #{past_encoder_forward.1} parent=27 // pred_check
          %p154 = pneg %p59
        $region34: #{past_encoder_forward.1} parent=27 // pred_check_branch
          %156 = sbr.rel (%p154) target = $region36
        $region35: #{past_encoder_forward.1} parent=27 // pred_region
          %157 = dma.done [#allocation7], 8064
        $region36: #{past_encoder_forward.1} parent=27 // pred_fallthru
          _
        %s158 = sand.u32 %s25, 1
        %s159 = scalar_lea.sflag [#allocation5], %s158
        %s160 = sand.u32 %s25, 1
        %s161 = smul.addr %s160, 32
        %s162 = scalar_lea.vmem [#allocation4], %s161
        %p163 = pneg %p38
        %p164 = pneg %p35
        %p165 = pneg %p59
        %p166 = pneg %p56
        %p167 = pneg %p85
        %p168 = pneg %p82
        %p169 = scmp.lt.s32.totalorder %s17, 1
        %s170 = scalar_select %p169, %s17, 1
        %s171 = smul.addr %s170, 2
        %s172 = smul.addr %s171, 4
        %s173 = scalar_lea.vmem %s2, %s172
        %p174 = scmp.lt.s32.totalorder %s17, 1
        %s175 = scalar_select %p174, %s17, 1
        %s176 = smul.addr %s175, 2
        %s177 = smul.addr %s176, 4
        %s178 = scalar_lea.vmem %s2, %s177
        %v179 = vld [vmem:[%s149] sm:$0xff]
        %v180 = vld [vmem:[%s149 + $0x8] sm:$0xff]
        %v181 = vld [vmem:[%s149 + $0x10] sm:$0xff]
        %v182 = vld [vmem:[%s149 + $0x18] sm:$0xff]
        %v183 = vlaneseq
        %v184 = vshrl.u32 %v183, 7
        %v185 = vadd.s32 %v184, 8
        %v186 = vadd.s32 %v184, 16
        %v187 = vadd.s32 %v184, 24
        %v188 = vlaneseq
        %v189 = vand.u32 %v188, 127
        %vm190 = vcmp.lt.s32.totalorder %v184, 0
        %v191 = vsub.s32 0, %v184
        %v192 = vsel %vm190, %v191, %v184
        %v193 = vshrl.u32 %v192, 3
        %v194 = vand.u32 %v192, 7
        %v195 = vsub.s32 0, %v194
        %v196 = vsel %vm190, %v195, %v194
        %vm197 = vcmp.lt.s32.totalorder %v185, 0
        %v198 = vsub.s32 0, %v185
        %v199 = vsel %vm197, %v198, %v185
        %v200 = vshrl.u32 %v199, 3
        %v201 = vand.u32 %v199, 7
        %v202 = vsub.s32 0, %v201
        %v203 = vsel %vm197, %v202, %v201
        %vm204 = vcmp.lt.s32.totalorder %v186, 0
        %v205 = vsub.s32 0, %v186
        %v206 = vsel %vm204, %v205, %v186
        %v207 = vshrl.u32 %v206, 3
        %v208 = vand.u32 %v206, 7
        %v209 = vsub.s32 0, %v208
        %v210 = vsel %vm204, %v209, %v208
        %vm211 = vcmp.lt.s32.totalorder %v187, 0
        %v212 = vsub.s32 0, %v187
        %v213 = vsel %vm211, %v212, %v187
        %v214 = vshrl.u32 %v213, 3
        %v215 = vand.u32 %v213, 7
        %v216 = vsub.s32 0, %v215
        %v217 = vsel %vm211, %v216, %v215
        %vm218 = vcmp.ne.s32.totalorder %v196, 0
        %vm219 = vcmp.ne.s32.totalorder %v203, 0
        %vm220 = vcmp.ne.s32.totalorder %v210, 0
        %vm221 = vcmp.ne.s32.totalorder %v217, 0
        %vm222 = vcmp.lt.s32.totalorder %v196, 0
        %vm223 = vcmp.lt.s32.totalorder %v203, 0
        %vm224 = vcmp.lt.s32.totalorder %v210, 0
        %vm225 = vcmp.lt.s32.totalorder %v217, 0
        %vm226 = vmand %vm222, %vm218
        %vm227 = vmand %vm223, %vm219
        %vm228 = vmand %vm224, %vm220
        %vm229 = vmand %vm225, %vm221
        %v230 = vadd.s32 %v196, 8
        %v231 = vadd.s32 %v203, 8
        %v232 = vadd.s32 %v210, 8
        %v233 = vadd.s32 %v217, 8
        %v234 = vsel %vm226, %v230, %v196
        %v235 = vsel %vm227, %v231, %v203
        %v236 = vsel %vm228, %v232, %v210
        %v237 = vsel %vm229, %v233, %v217
        %v238 = vsub.s32 %v184, 1
        %v239 = vsub.s32 %v185, 1
        %v240 = vsub.s32 %v186, 1
        %v241 = vsub.s32 %v187, 1
        %vm242 = vcmp.eq.s32.totalorder %v189, %v238
        %vm243 = vcmp.eq.s32.totalorder %v189, %v239
        %vm244 = vcmp.eq.s32.totalorder %v189, %v240
        %vm245 = vcmp.eq.s32.totalorder %v189, %v241
        %vm246 = vcmp.ge.s32.totalorder %v234, 1
        %vm247 = vcmp.ge.s32.totalorder %v235, 1
        %vm248 = vcmp.ge.s32.totalorder %v236, 1
        %vm249 = vcmp.ge.s32.totalorder %v237, 1
        %vm250 = vmand %vm242, %vm246
        %vm251 = vmand %vm243, %vm247
        %vm252 = vmand %vm244, %vm248
        %vm253 = vmand %vm245, %vm249
        %v254 = vsel %vm250, 1.0, 0.0
        %v255 = vsel %vm251, 1.0, 0.0
        %v256 = vsel %vm252, 1.0, 0.0
        %v257 = vsel %vm253, 1.0, 0.0
        %v258 = vsub.s32 %v184, 2
        %v259 = vsub.s32 %v185, 2
        %v260 = vsub.s32 %v186, 2
        %v261 = vsub.s32 %v187, 2
        %vm262 = vcmp.eq.s32.totalorder %v189, %v258
        %vm263 = vcmp.eq.s32.totalorder %v189, %v259
        %vm264 = vcmp.eq.s32.totalorder %v189, %v260
        %vm265 = vcmp.eq.s32.totalorder %v189, %v261
        %vm266 = vcmp.ge.s32.totalorder %v234, 2
        %vm267 = vcmp.ge.s32.totalorder %v235, 2
        %vm268 = vcmp.ge.s32.totalorder %v236, 2
        %vm269 = vcmp.ge.s32.totalorder %v237, 2
        %vm270 = vmand %vm262, %vm266
        %vm271 = vmand %vm263, %vm267
        %vm272 = vmand %vm264, %vm268
        %vm273 = vmand %vm265, %vm269
        %v274 = vsel %vm270, 1.0, 0.0
        %v275 = vsel %vm271, 1.0, 0.0
        %v276 = vsel %vm272, 1.0, 0.0
        %v277 = vsel %vm273, 1.0, 0.0
        %v278 = vsub.s32 %v184, 4
        %v279 = vsub.s32 %v185, 4
        %v280 = vsub.s32 %v186, 4
        %v281 = vsub.s32 %v187, 4
        %vm282 = vcmp.eq.s32.totalorder %v189, %v278
        %vm283 = vcmp.eq.s32.totalorder %v189, %v279
        %vm284 = vcmp.eq.s32.totalorder %v189, %v280
        %vm285 = vcmp.eq.s32.totalorder %v189, %v281
        %vm286 = vcmp.ge.s32.totalorder %v234, 4
        %vm287 = vcmp.ge.s32.totalorder %v235, 4
        %vm288 = vcmp.ge.s32.totalorder %v236, 4
        %vm289 = vcmp.ge.s32.totalorder %v237, 4
        %vm290 = vmand %vm282, %vm286
        %vm291 = vmand %vm283, %vm287
        %vm292 = vmand %vm284, %vm288
        %vm293 = vmand %vm285, %vm289
        %v294 = vsel %vm290, 1.0, 0.0
        %v295 = vsel %vm291, 1.0, 0.0
        %v296 = vsel %vm292, 1.0, 0.0
        %v297 = vsel %vm293, 1.0, 0.0
        %v298 = vld [vmem:[#allocation6] sm:$0xff]
        %v299 = vld [vmem:[#allocation6 + $0x8] sm:$0xff]
        %v300 = vld [vmem:[#allocation6 + $0x10] sm:$0x1]
        %vm301 = vcmask 261120
        %v303 = vsel %vm301, %v254, 0
        %v306 = vsel %vm301, %v255, 0
        %v309 = vsel %vm301, %v256, 0
        %v312 = vsel %vm301, %v257, 0
        %314 = vmatprep.subr.mxu0 0.0
        %315 = vmatpush1.msra.mxu0 %v179
        %316 = vmatprep.subr.mxu0 0.0
        %317 = vmatpush1.msra.mxu0 %v180
        %318 = vmatprep.subr.mxu0 0.0
        %319 = vmatpush1.msra.mxu0 %v181
        %320 = vmatprep.subr.mxu0 0.0
        %321 = vmatpush1.msra.mxu0 %v182
        %322 = vmatprep.subr.mxu0 0.0
        %323 = vmatpush1.msra.mxu0 0.0
        %324 = vmatprep.subr.mxu0 0.0
        %325 = vmatpush1.msra.mxu0 0.0
        %326 = vmatprep.subr.mxu0 0.0
        %327 = vmatpush1.msra.mxu0 0.0
        %328 = vmatprep.subr.mxu0 0.0
        %329 = vmatpush1.msra.mxu0 0.0
        %330 = vmatprep.subr.mxu0 0.0
        %331 = vmatpush1.msra.mxu0 0.0
        %332 = vmatprep.subr.mxu0 0.0
        %333 = vmatpush1.msra.mxu0 0.0
        %334 = vmatprep.subr.mxu0 0.0
        %335 = vmatpush1.msra.mxu0 0.0
        %336 = vmatprep.subr.mxu0 0.0
        %337 = vmatpush1.msra.mxu0 0.0
        %338 = vmatprep.subr.mxu0 0.0
        %339 = vmatpush1.msra.mxu0 0.0
        %340 = vmatprep.subr.mxu0 0.0
        %341 = vmatpush1.msra.mxu0 0.0
        %342 = vmatprep.subr.mxu0 0.0
        %343 = vmatpush1.msra.mxu0 0.0
        %344 = vmatprep.subr.mxu0 0.0
        %345 = vmatpush1.msra.mxu0 0.0
        %346 = vmatprep.subr.mxu0 0.0
        %347 = vmatpush1.msra.mxu0 0.0
        %348 = vmatprep.subr.mxu0 0.0
        %349 = vmatpush1.msra.mxu0 0.0
        %350 = vmatprep.subr.mxu0 0.0
        %351 = vmatpush1.msra.mxu0 0.0
        %352 = vmatprep.subr.mxu0 0.0
        %353 = vmatpush1.msra.mxu0 0.0
        %354 = vmatprep.subr.mxu0 0.0
        %355 = vmatpush1.msra.mxu0 0.0
        %356 = vmatprep.subr.mxu0 0.0
        %357 = vmatpush1.msra.mxu0 0.0
        %358 = vmatprep.subr.mxu0 0.0
        %359 = vmatpush1.msra.mxu0 0.0
        %360 = vmatprep.subr.mxu0 0.0
        %361 = vmatpush1.msra.mxu0 0.0
        %362 = vmatprep.subr.mxu0 0.0
        %363 = vmatpush1.msra.mxu0 0.0
        %364 = vmatprep.subr.mxu0 0.0
        %365 = vmatpush1.msra.mxu0 0.0
        %366 = vmatprep.subr.mxu0 0.0
        %367 = vmatpush1.msra.mxu0 0.0
        %368 = vmatprep.subr.mxu0 0.0
        %369 = vmatpush1.msra.mxu0 0.0
        %370 = vmatprep.subr.mxu0 0.0
        %371 = vmatpush1.msra.mxu0 0.0
        %372 = vmatprep.subr.mxu0 0.0
        %373 = vmatpush1.msra.mxu0 0.0
        %374 = vmatprep.subr.mxu0 0.0
        %375 = vmatpush1.msra.mxu0 0.0
        %376 = vmatprep.subr.mxu0 0.0
        %377 = vmatpush1.msra.mxu0 0.0
        %378 = vmatprep.mubr.f32.mxu0 0.0
        %379 = vmatmul.mubr.f32.gmra.mrb[0].mxu0 %v303
        %v380 = vpop.f32.mrb[0].mxu0
        %v381 = vadd.f32 0.0, %v380
        %v382 = vpop.f32.mrb[0].mxu0
        %383 = vmatprep.mubr.f32.mxu0 0.0
        %384 = vmatmul.mubr.f32.gmra.mrb[0].mxu0 %v306
        %v385 = vpop.f32.mrb[0].mxu0
        %v386 = vadd.f32 0.0, %v385
        %v387 = vpop.f32.mrb[0].mxu0
        %388 = vmatprep.mubr.f32.mxu0 0.0
        %389 = vmatmul.mubr.f32.gmra.mrb[0].mxu0 %v309
        %v390 = vpop.f32.mrb[0].mxu0
        %v391 = vadd.f32 0.0, %v390
        %v392 = vpop.f32.mrb[0].mxu0
        %393 = vmatprep.mubr.f32.mxu0 0.0
        %394 = vmatmul.mubr.f32.gmra.mrb[0].mxu0 %v312
        %v395 = vpop.f32.mrb[0].mxu0
        %v396 = vadd.f32 0.0, %v395
        %v397 = vpop.f32.mrb[0].mxu0
        %398 = vdwg.mxu0
        %vm399 = vcmask 64512
        %v401 = vsel %vm399, %v179, 0
        %v404 = vsel %vm399, %v180, 0
        %v407 = vsel %vm399, %v181, 0
        %v410 = vsel %vm399, %v182, 0
        %412 = vmatprep.subr.mxu0 0.0
        %413 = vmatpush1.msra.mxu0 %v299
        %414 = vmatprep.subr.mxu0 0.0
        %415 = vmatpush1.msra.mxu0 0.0
        %416 = vmatprep.subr.mxu0 0.0
        %417 = vmatpush1.msra.mxu0 0.0
        %418 = vmatprep.subr.mxu0 0.0
        %419 = vmatpush1.msra.mxu0 0.0
        %420 = vmatprep.subr.mxu0 0.0
        %421 = vmatpush1.msra.mxu0 0.0
        %422 = vmatprep.subr.mxu0 0.0
        %423 = vmatpush1.msra.mxu0 0.0
        %424 = vmatprep.subr.mxu0 0.0
        %425 = vmatpush1.msra.mxu0 0.0
        %426 = vmatprep.subr.mxu0 0.0
        %427 = vmatpush1.msra.mxu0 0.0
        %428 = vmatprep.subr.mxu0 0.0
        %429 = vmatpush1.msra.mxu0 0.0
        %430 = vmatprep.subr.mxu0 0.0
        %431 = vmatpush1.msra.mxu0 0.0
        %432 = vmatprep.subr.mxu0 0.0
        %433 = vmatpush1.msra.mxu0 0.0
        %434 = vmatprep.subr.mxu0 0.0
        %435 = vmatpush1.msra.mxu0 0.0
        %436 = vmatprep.subr.mxu0 0.0
        %437 = vmatpush1.msra.mxu0 0.0
        %438 = vmatprep.subr.mxu0 0.0
        %439 = vmatpush1.msra.mxu0 0.0
        %440 = vmatprep.subr.mxu0 0.0
        %441 = vmatpush1.msra.mxu0 0.0
        %442 = vmatprep.subr.mxu0 0.0
        %443 = vmatpush1.msra.mxu0 0.0
        %444 = vmatprep.subr.mxu0 0.0
        %445 = vmatpush1.msra.mxu0 0.0
        %446 = vmatprep.subr.mxu0 0.0
        %447 = vmatpush1.msra.mxu0 0.0
        %448 = vmatprep.subr.mxu0 0.0
        %449 = vmatpush1.msra.mxu0 0.0
        %450 = vmatprep.subr.mxu0 0.0
        %451 = vmatpush1.msra.mxu0 0.0
        %452 = vmatprep.subr.mxu0 0.0
        %453 = vmatpush1.msra.mxu0 0.0
        %454 = vmatprep.subr.mxu0 0.0
        %455 = vmatpush1.msra.mxu0 0.0
        %456 = vmatprep.subr.mxu0 0.0
        %457 = vmatpush1.msra.mxu0 0.0
        %458 = vmatprep.subr.mxu0 0.0
        %459 = vmatpush1.msra.mxu0 0.0
        %460 = vmatprep.subr.mxu0 0.0
        %461 = vmatpush1.msra.mxu0 0.0
        %462 = vmatprep.subr.mxu0 0.0
        %463 = vmatpush1.msra.mxu0 0.0
        %464 = vmatprep.subr.mxu0 0.0
        %465 = vmatpush1.msra.mxu0 0.0
        %466 = vmatprep.subr.mxu0 0.0
        %467 = vmatpush1.msra.mxu0 0.0
        %468 = vmatprep.subr.mxu0 0.0
        %469 = vmatpush1.msra.mxu0 0.0
        %470 = vmatprep.subr.mxu0 0.0
        %471 = vmatpush1.msra.mxu0 0.0
        %472 = vmatprep.subr.mxu0 0.0
        %473 = vmatpush1.msra.mxu0 0.0
        %474 = vmatprep.subr.mxu0 0.0
        %475 = vmatpush1.msra.mxu0 0.0
        %476 = vmatprep.mubr.f32.mxu0 0.0
        %477 = vmatmul.mubr.f32.gmra.mrb[0].mxu0 %v401
        %v478 = vpop.f32.mrb[0].mxu0
        %v479 = vadd.f32 0.0, %v478
        %v480 = vpop.f32.mrb[0].mxu0
        %481 = vmatprep.mubr.f32.mxu0 0.0
        %482 = vmatmul.mubr.f32.gmra.mrb[0].mxu0 %v404
        %v483 = vpop.f32.mrb[0].mxu0
        %v484 = vadd.f32 0.0, %v483
        %v485 = vpop.f32.mrb[0].mxu0
        %486 = vmatprep.mubr.f32.mxu0 0.0
        %487 = vmatmul.mubr.f32.gmra.mrb[0].mxu0 %v407
        %v488 = vpop.f32.mrb[0].mxu0
        %v489 = vadd.f32 0.0, %v488
        %v490 = vpop.f32.mrb[0].mxu0
        %491 = vmatprep.mubr.f32.mxu0 0.0
        %492 = vmatmul.mubr.f32.gmra.mrb[0].mxu0 %v410
        %v493 = vpop.f32.mrb[0].mxu0
        %v494 = vadd.f32 0.0, %v493
        %v495 = vpop.f32.mrb[0].mxu0
        %496 = vdwg.mxu0
        %v498 = vsel %vm399, %v381, 0
        %v501 = vsel %vm399, %v386, 0
        %v504 = vsel %vm399, %v391, 0
        %v507 = vsel %vm399, %v396, 0
        %509 = vmatprep.subr.mxu0 0.0
        %510 = vmatpush1.msra.mxu0 %v298
        %511 = vmatprep.subr.mxu0 0.0
        %512 = vmatpush1.msra.mxu0 0.0
        %513 = vmatprep.subr.mxu0 0.0
        %514 = vmatpush1.msra.mxu0 0.0
        %515 = vmatprep.subr.mxu0 0.0
        %516 = vmatpush1.msra.mxu0 0.0
        %517 = vmatprep.subr.mxu0 0.0
        %518 = vmatpush1.msra.mxu0 0.0
        %519 = vmatprep.subr.mxu0 0.0
        %520 = vmatpush1.msra.mxu0 0.0
        %521 = vmatprep.subr.mxu0 0.0
        %522 = vmatpush1.msra.mxu0 0.0
        %523 = vmatprep.subr.mxu0 0.0
        %524 = vmatpush1.msra.mxu0 0.0
        %525 = vmatprep.subr.mxu0 0.0
        %526 = vmatpush1.msra.mxu0 0.0
        %527 = vmatprep.subr.mxu0 0.0
        %528 = vmatpush1.msra.mxu0 0.0
        %529 = vmatprep.subr.mxu0 0.0
        %530 = vmatpush1.msra.mxu0 0.0
        %531 = vmatprep.subr.mxu0 0.0
        %532 = vmatpush1.msra.mxu0 0.0
        %533 = vmatprep.subr.mxu0 0.0
        %534 = vmatpush1.msra.mxu0 0.0
        %535 = vmatprep.subr.mxu0 0.0
        %536 = vmatpush1.msra.mxu0 0.0
        %537 = vmatprep.subr.mxu0 0.0
        %538 = vmatpush1.msra.mxu0 0.0
        %539 = vmatprep.subr.mxu0 0.0
        %540 = vmatpush1.msra.mxu0 0.0
        %541 = vmatprep.subr.mxu0 0.0
        %542 = vmatpush1.msra.mxu0 0.0
        %543 = vmatprep.subr.mxu0 0.0
        %544 = vmatpush1.msra.mxu0 0.0
        %545 = vmatprep.subr.mxu0 0.0
        %546 = vmatpush1.msra.mxu0 0.0
        %547 = vmatprep.subr.mxu0 0.0
        %548 = vmatpush1.msra.mxu0 0.0
        %549 = vmatprep.subr.mxu0 0.0
        %550 = vmatpush1.msra.mxu0 0.0
        %551 = vmatprep.subr.mxu0 0.0
        %552 = vmatpush1.msra.mxu0 0.0
        %553 = vmatprep.subr.mxu0 0.0
        %554 = vmatpush1.msra.mxu0 0.0
        %555 = vmatprep.subr.mxu0 0.0
        %556 = vmatpush1.msra.mxu0 0.0
        %557 = vmatprep.subr.mxu0 0.0
        %558 = vmatpush1.msra.mxu0 0.0
        %559 = vmatprep.subr.mxu0 0.0
        %560 = vmatpush1.msra.mxu0 0.0
        %561 = vmatprep.subr.mxu0 0.0
        %562 = vmatpush1.msra.mxu0 0.0
        %563 = vmatprep.subr.mxu0 0.0
        %564 = vmatpush1.msra.mxu0 0.0
        %565 = vmatprep.subr.mxu0 0.0
        %566 = vmatpush1.msra.mxu0 0.0
        %567 = vmatprep.subr.mxu0 0.0
        %568 = vmatpush1.msra.mxu0 0.0
        %569 = vmatprep.subr.mxu0 0.0
        %570 = vmatpush1.msra.mxu0 0.0
        %571 = vmatprep.subr.mxu0 0.0
        %572 = vmatpush1.msra.mxu0 0.0
        %573 = vmatprep.mubr.f32.mxu0 0.0
        %574 = vmatmul.mubr.f32.gmra.mrb[0].mxu0 %v498
        %v575 = vpop.f32.mrb[0].mxu0
        %v576 = vadd.f32 %v479, %v575
        %v577 = vpop.f32.mrb[0].mxu0
        %578 = vmatprep.mubr.f32.mxu0 0.0
        %579 = vmatmul.mubr.f32.gmra.mrb[0].mxu0 %v501
        %v580 = vpop.f32.mrb[0].mxu0
        %v581 = vadd.f32 %v484, %v580
        %v582 = vpop.f32.mrb[0].mxu0
        %583 = vmatprep.mubr.f32.mxu0 0.0
        %584 = vmatmul.mubr.f32.gmra.mrb[0].mxu0 %v504
        %v585 = vpop.f32.mrb[0].mxu0
        %v586 = vadd.f32 %v489, %v585
        %v587 = vpop.f32.mrb[0].mxu0
        %588 = vmatprep.mubr.f32.mxu0 0.0
        %589 = vmatmul.mubr.f32.gmra.mrb[0].mxu0 %v507
        %v590 = vpop.f32.mrb[0].mxu0
        %v591 = vadd.f32 %v494, %v590
        %v592 = vpop.f32.mrb[0].mxu0
        %593 = vdwg.mxu0
        %v594 = vlaneseq
        %v595 = vshrl.u32 %v594, 7
        %v596 = vsub.s32 0, %v595
        %v597 = vrot.slane %v300, %v596
        %v598 = vadd.f32 %v576, %v597
        %v599 = vadd.f32 %v581, %v597
        %v600 = vadd.f32 %v586, %v597
        %v601 = vadd.f32 %v591, %v597
        %v602 = vmax.f32 %v598, 0.0
        %v603 = vmax.f32 %v599, 0.0
        %v604 = vmax.f32 %v600, 0.0
        %v605 = vmax.f32 %v601, 0.0
        %v606 = vld [vmem:[#allocation6 + $0x18] sm:$0xff]
        %v607 = vld [vmem:[#allocation6 + $0x20] sm:$0xff]
        %v608 = vld [vmem:[#allocation6 + $0x28] sm:$0xff]
        %v609 = vld [vmem:[#allocation6 + $0x30] sm:$0xff]
        %v610 = vld [vmem:[#allocation6 + $0x38] sm:$0xff]
        %v611 = vld [vmem:[#allocation6 + $0x40] sm:$0xff]
        %v612 = vld [vmem:[#allocation6 + $0x48] sm:$0xff]
        %v613 = vld [vmem:[#allocation6 + $0x50] sm:$0xff]
        %v614 = vld [vmem:[#allocation6 + $0x58] sm:$0x1]
        %615 = vmatprep.subr.mxu0 0.0
        %616 = vmatpush1.msra.mxu0 %v602
        %617 = vmatprep.subr.mxu0 0.0
        %618 = vmatpush1.msra.mxu0 %v603
        %619 = vmatprep.subr.mxu0 0.0
        %620 = vmatpush1.msra.mxu0 %v604
        %621 = vmatprep.subr.mxu0 0.0
        %622 = vmatpush1.msra.mxu0 %v605
        %623 = vmatprep.subr.mxu0 0.0
        %624 = vmatpush1.msra.mxu0 0.0
        %625 = vmatprep.subr.mxu0 0.0
        %626 = vmatpush1.msra.mxu0 0.0
        %627 = vmatprep.subr.mxu0 0.0
        %628 = vmatpush1.msra.mxu0 0.0
        %629 = vmatprep.subr.mxu0 0.0
        %630 = vmatpush1.msra.mxu0 0.0
        %631 = vmatprep.subr.mxu0 0.0
        %632 = vmatpush1.msra.mxu0 0.0
        %633 = vmatprep.subr.mxu0 0.0
        %634 = vmatpush1.msra.mxu0 0.0
        %635 = vmatprep.subr.mxu0 0.0
        %636 = vmatpush1.msra.mxu0 0.0
        %637 = vmatprep.subr.mxu0 0.0
        %638 = vmatpush1.msra.mxu0 0.0
        %639 = vmatprep.subr.mxu0 0.0
        %640 = vmatpush1.msra.mxu0 0.0
        %641 = vmatprep.subr.mxu0 0.0
        %642 = vmatpush1.msra.mxu0 0.0
        %643 = vmatprep.subr.mxu0 0.0
        %644 = vmatpush1.msra.mxu0 0.0
        %645 = vmatprep.subr.mxu0 0.0
        %646 = vmatpush1.msra.mxu0 0.0
        %647 = vmatprep.subr.mxu0 0.0
        %648 = vmatpush1.msra.mxu0 0.0
        %649 = vmatprep.subr.mxu0 0.0
        %650 = vmatpush1.msra.mxu0 0.0
        %651 = vmatprep.subr.mxu0 0.0
        %652 = vmatpush1.msra.mxu0 0.0
        %653 = vmatprep.subr.mxu0 0.0
        %654 = vmatpush1.msra.mxu0 0.0
        %655 = vmatprep.subr.mxu0 0.0
        %656 = vmatpush1.msra.mxu0 0.0
        %657 = vmatprep.subr.mxu0 0.0
        %658 = vmatpush1.msra.mxu0 0.0
        %659 = vmatprep.subr.mxu0 0.0
        %660 = vmatpush1.msra.mxu0 0.0
        %661 = vmatprep.subr.mxu0 0.0
        %662 = vmatpush1.msra.mxu0 0.0
        %663 = vmatprep.subr.mxu0 0.0
        %664 = vmatpush1.msra.mxu0 0.0
        %665 = vmatprep.subr.mxu0 0.0
        %666 = vmatpush1.msra.mxu0 0.0
        %667 = vmatprep.subr.mxu0 0.0
        %668 = vmatpush1.msra.mxu0 0.0
        %669 = vmatprep.subr.mxu0 0.0
        %670 = vmatpush1.msra.mxu0 0.0
        %671 = vmatprep.subr.mxu0 0.0
        %672 = vmatpush1.msra.mxu0 0.0
        %673 = vmatprep.subr.mxu0 0.0
        %674 = vmatpush1.msra.mxu0 0.0
        %675 = vmatprep.subr.mxu0 0.0
        %676 = vmatpush1.msra.mxu0 0.0
        %677 = vmatprep.subr.mxu0 0.0
        %678 = vmatpush1.msra.mxu0 0.0
        %679 = vmatprep.mubr.f32.mxu0 0.0
        %680 = vmatmul.mubr.f32.gmra.mrb[0].mxu0 %v303
        %v681 = vpop.f32.mrb[0].mxu0
        %v682 = vadd.f32 0.0, %v681
        %v683 = vpop.f32.mrb[0].mxu0
        %684 = vmatprep.mubr.f32.mxu0 0.0
        %685 = vmatmul.mubr.f32.gmra.mrb[0].mxu0 %v306
        %v686 = vpop.f32.mrb[0].mxu0
        %v687 = vadd.f32 0.0, %v686
        %v688 = vpop.f32.mrb[0].mxu0
        %689 = vmatprep.mubr.f32.mxu0 0.0
        %690 = vmatmul.mubr.f32.gmra.mrb[0].mxu0 %v309
        %v691 = vpop.f32.mrb[0].mxu0
        %v692 = vadd.f32 0.0, %v691
        %v693 = vpop.f32.mrb[0].mxu0
        %694 = vmatprep.mubr.f32.mxu0 0.0
        %695 = vmatmul.mubr.f32.gmra.mrb[0].mxu0 %v312
        %v696 = vpop.f32.mrb[0].mxu0
        %v697 = vadd.f32 0.0, %v696
        %v698 = vpop.f32.mrb[0].mxu0
        %699 = vdwg.mxu0
        %v701 = vsel %vm301, %v602, 0
        %v704 = vsel %vm301, %v603, 0
        %v707 = vsel %vm301, %v604, 0
        %v710 = vsel %vm301, %v605, 0
        %712 = vmatprep.subr.mxu0 0.0
        %713 = vmatpush1.msra.mxu0 %v610
        %714 = vmatprep.subr.mxu0 0.0
        %715 = vmatpush1.msra.mxu0 %v611
        %716 = vmatprep.subr.mxu0 0.0
        %717 = vmatpush1.msra.mxu0 %v612
        %718 = vmatprep.subr.mxu0 0.0
        %719 = vmatpush1.msra.mxu0 %v613
        %720 = vmatprep.subr.mxu0 0.0
        %721 = vmatpush1.msra.mxu0 0.0
        %722 = vmatprep.subr.mxu0 0.0
        %723 = vmatpush1.msra.mxu0 0.0
        %724 = vmatprep.subr.mxu0 0.0
        %725 = vmatpush1.msra.mxu0 0.0
        %726 = vmatprep.subr.mxu0 0.0
        %727 = vmatpush1.msra.mxu0 0.0
        %728 = vmatprep.subr.mxu0 0.0
        %729 = vmatpush1.msra.mxu0 0.0
        %730 = vmatprep.subr.mxu0 0.0
        %731 = vmatpush1.msra.mxu0 0.0
        %732 = vmatprep.subr.mxu0 0.0
        %733 = vmatpush1.msra.mxu0 0.0
        %734 = vmatprep.subr.mxu0 0.0
        %735 = vmatpush1.msra.mxu0 0.0
        %736 = vmatprep.subr.mxu0 0.0
        %737 = vmatpush1.msra.mxu0 0.0
        %738 = vmatprep.subr.mxu0 0.0
        %739 = vmatpush1.msra.mxu0 0.0
        %740 = vmatprep.subr.mxu0 0.0
        %741 = vmatpush1.msra.mxu0 0.0
        %742 = vmatprep.subr.mxu0 0.0
        %743 = vmatpush1.msra.mxu0 0.0
        %744 = vmatprep.subr.mxu0 0.0
        %745 = vmatpush1.msra.mxu0 0.0
        %746 = vmatprep.subr.mxu0 0.0
        %747 = vmatpush1.msra.mxu0 0.0
        %748 = vmatprep.subr.mxu0 0.0
        %749 = vmatpush1.msra.mxu0 0.0
        %750 = vmatprep.subr.mxu0 0.0
        %751 = vmatpush1.msra.mxu0 0.0
        %752 = vmatprep.subr.mxu0 0.0
        %753 = vmatpush1.msra.mxu0 0.0
        %754 = vmatprep.subr.mxu0 0.0
        %755 = vmatpush1.msra.mxu0 0.0
        %756 = vmatprep.subr.mxu0 0.0
        %757 = vmatpush1.msra.mxu0 0.0
        %758 = vmatprep.subr.mxu0 0.0
        %759 = vmatpush1.msra.mxu0 0.0
        %760 = vmatprep.subr.mxu0 0.0
        %761 = vmatpush1.msra.mxu0 0.0
        %762 = vmatprep.subr.mxu0 0.0
        %763 = vmatpush1.msra.mxu0 0.0
        %764 = vmatprep.subr.mxu0 0.0
        %765 = vmatpush1.msra.mxu0 0.0
        %766 = vmatprep.subr.mxu0 0.0
        %767 = vmatpush1.msra.mxu0 0.0
        %768 = vmatprep.subr.mxu0 0.0
        %769 = vmatpush1.msra.mxu0 0.0
        %770 = vmatprep.subr.mxu0 0.0
        %771 = vmatpush1.msra.mxu0 0.0
        %772 = vmatprep.subr.mxu0 0.0
        %773 = vmatpush1.msra.mxu0 0.0
        %774 = vmatprep.subr.mxu0 0.0
        %775 = vmatpush1.msra.mxu0 0.0
        %776 = vmatprep.mubr.f32.mxu0 0.0
        %777 = vmatmul.mubr.f32.gmra.mrb[0].mxu0 %v701
        %v778 = vpop.f32.mrb[0].mxu0
        %v779 = vadd.f32 0.0, %v778
        %v780 = vpop.f32.mrb[0].mxu0
        %781 = vmatprep.mubr.f32.mxu0 0.0
        %782 = vmatmul.mubr.f32.gmra.mrb[0].mxu0 %v704
        %v783 = vpop.f32.mrb[0].mxu0
        %v784 = vadd.f32 0.0, %v783
        %v785 = vpop.f32.mrb[0].mxu0
        %786 = vmatprep.mubr.f32.mxu0 0.0
        %787 = vmatmul.mubr.f32.gmra.mrb[0].mxu0 %v707
        %v788 = vpop.f32.mrb[0].mxu0
        %v789 = vadd.f32 0.0, %v788
        %v790 = vpop.f32.mrb[0].mxu0
        %791 = vmatprep.mubr.f32.mxu0 0.0
        %792 = vmatmul.mubr.f32.gmra.mrb[0].mxu0 %v710
        %v793 = vpop.f32.mrb[0].mxu0
        %v794 = vadd.f32 0.0, %v793
        %v795 = vpop.f32.mrb[0].mxu0
        %796 = vdwg.mxu0
        %v798 = vsel %vm301, %v682, 0
        %v801 = vsel %vm301, %v687, 0
        %v804 = vsel %vm301, %v692, 0
        %v807 = vsel %vm301, %v697, 0
        %809 = vmatprep.subr.mxu0 0.0
        %810 = vmatpush1.msra.mxu0 %v606
        %811 = vmatprep.subr.mxu0 0.0
        %812 = vmatpush1.msra.mxu0 %v607
        %813 = vmatprep.subr.mxu0 0.0
        %814 = vmatpush1.msra.mxu0 %v608
        %815 = vmatprep.subr.mxu0 0.0
        %816 = vmatpush1.msra.mxu0 %v609
        %817 = vmatprep.subr.mxu0 0.0
        %818 = vmatpush1.msra.mxu0 0.0
        %819 = vmatprep.subr.mxu0 0.0
        %820 = vmatpush1.msra.mxu0 0.0
        %821 = vmatprep.subr.mxu0 0.0
        %822 = vmatpush1.msra.mxu0 0.0
        %823 = vmatprep.subr.mxu0 0.0
        %824 = vmatpush1.msra.mxu0 0.0
        %825 = vmatprep.subr.mxu0 0.0
        %826 = vmatpush1.msra.mxu0 0.0
        %827 = vmatprep.subr.mxu0 0.0
        %828 = vmatpush1.msra.mxu0 0.0
        %829 = vmatprep.subr.mxu0 0.0
        %830 = vmatpush1.msra.mxu0 0.0
        %831 = vmatprep.subr.mxu0 0.0
        %832 = vmatpush1.msra.mxu0 0.0
        %833 = vmatprep.subr.mxu0 0.0
        %834 = vmatpush1.msra.mxu0 0.0
        %835 = vmatprep.subr.mxu0 0.0
        %836 = vmatpush1.msra.mxu0 0.0
        %837 = vmatprep.subr.mxu0 0.0
        %838 = vmatpush1.msra.mxu0 0.0
        %839 = vmatprep.subr.mxu0 0.0
        %840 = vmatpush1.msra.mxu0 0.0
        %841 = vmatprep.subr.mxu0 0.0
        %842 = vmatpush1.msra.mxu0 0.0
        %843 = vmatprep.subr.mxu0 0.0
        %844 = vmatpush1.msra.mxu0 0.0
        %845 = vmatprep.subr.mxu0 0.0
        %846 = vmatpush1.msra.mxu0 0.0
        %847 = vmatprep.subr.mxu0 0.0
        %848 = vmatpush1.msra.mxu0 0.0
        %849 = vmatprep.subr.mxu0 0.0
        %850 = vmatpush1.msra.mxu0 0.0
        %851 = vmatprep.subr.mxu0 0.0
        %852 = vmatpush1.msra.mxu0 0.0
        %853 = vmatprep.subr.mxu0 0.0
        %854 = vmatpush1.msra.mxu0 0.0
        %855 = vmatprep.subr.mxu0 0.0
        %856 = vmatpush1.msra.mxu0 0.0
        %857 = vmatprep.subr.mxu0 0.0
        %858 = vmatpush1.msra.mxu0 0.0
        %859 = vmatprep.subr.mxu0 0.0
        %860 = vmatpush1.msra.mxu0 0.0
        %861 = vmatprep.subr.mxu0 0.0
        %862 = vmatpush1.msra.mxu0 0.0
        %863 = vmatprep.subr.mxu0 0.0
        %864 = vmatpush1.msra.mxu0 0.0
        %865 = vmatprep.subr.mxu0 0.0
        %866 = vmatpush1.msra.mxu0 0.0
        %867 = vmatprep.subr.mxu0 0.0
        %868 = vmatpush1.msra.mxu0 0.0
        %869 = vmatprep.subr.mxu0 0.0
        %870 = vmatpush1.msra.mxu0 0.0
        %871 = vmatprep.subr.mxu0 0.0
        %872 = vmatpush1.msra.mxu0 0.0
        %873 = vmatprep.mubr.f32.mxu0 0.0
        %874 = vmatmul.mubr.f32.gmra.mrb[0].mxu0 %v798
        %v875 = vpop.f32.mrb[0].mxu0
        %v876 = vadd.f32 %v779, %v875
        %v877 = vpop.f32.mrb[0].mxu0
        %878 = vmatprep.mubr.f32.mxu0 0.0
        %879 = vmatmul.mubr.f32.gmra.mrb[0].mxu0 %v801
        %v880 = vpop.f32.mrb[0].mxu0
        %v881 = vadd.f32 %v784, %v880
        %v882 = vpop.f32.mrb[0].mxu0
        %883 = vmatprep.mubr.f32.mxu0 0.0
        %884 = vmatmul.mubr.f32.gmra.mrb[0].mxu0 %v804
        %v885 = vpop.f32.mrb[0].mxu0
        %v886 = vadd.f32 %v789, %v885
        %v887 = vpop.f32.mrb[0].mxu0
        %888 = vmatprep.mubr.f32.mxu0 0.0
        %889 = vmatmul.mubr.f32.gmra.mrb[0].mxu0 %v807
        %v890 = vpop.f32.mrb[0].mxu0
        %v891 = vadd.f32 %v794, %v890
        %v892 = vpop.f32.mrb[0].mxu0
        %893 = vdwg.mxu0
        %v894 = vlaneseq
        %v895 = vshrl.u32 %v894, 7
        %v896 = vsub.s32 0, %v895
        %v897 = vrot.slane %v614, %v896
        %v898 = vadd.f32 %v876, %v897
        %v899 = vadd.f32 %v881, %v897
        %v900 = vadd.f32 %v886, %v897
        %v901 = vadd.f32 %v891, %v897
        %v902 = vmax.f32 %v898, 0.0
        %v903 = vmax.f32 %v899, 0.0
        %v904 = vmax.f32 %v900, 0.0
        %v905 = vmax.f32 %v901, 0.0
        %v906 = vld [vmem:[#allocation6 + $0x60] sm:$0xff]
        %v907 = vld [vmem:[#allocation6 + $0x68] sm:$0x1]
        %v908 = vlaneseq
        %v909 = vshrl.u32 %v908, 7
        %v910 = vsub.s32 0, %v909
        %v911 = vrot.slane %v907, %v910
        %912 = vmatprep.subr.mxu0 0.0
        %913 = vmatpush1.msra.mxu0 %v906
        %914 = vmatprep.subr.mxu0 0.0
        %915 = vmatpush1.msra.mxu0 0.0
        %916 = vmatprep.subr.mxu0 0.0
        %917 = vmatpush1.msra.mxu0 0.0
        %918 = vmatprep.subr.mxu0 0.0
        %919 = vmatpush1.msra.mxu0 0.0
        %920 = vmatprep.subr.mxu0 0.0
        %921 = vmatpush1.msra.mxu0 0.0
        %922 = vmatprep.subr.mxu0 0.0
        %923 = vmatpush1.msra.mxu0 0.0
        %924 = vmatprep.subr.mxu0 0.0
        %925 = vmatpush1.msra.mxu0 0.0
        %926 = vmatprep.subr.mxu0 0.0
        %927 = vmatpush1.msra.mxu0 0.0
        %928 = vmatprep.subr.mxu0 0.0
        %929 = vmatpush1.msra.mxu0 0.0
        %930 = vmatprep.subr.mxu0 0.0
        %931 = vmatpush1.msra.mxu0 0.0
        %932 = vmatprep.subr.mxu0 0.0
        %933 = vmatpush1.msra.mxu0 0.0
        %934 = vmatprep.subr.mxu0 0.0
        %935 = vmatpush1.msra.mxu0 0.0
        %936 = vmatprep.subr.mxu0 0.0
        %937 = vmatpush1.msra.mxu0 0.0
        %938 = vmatprep.subr.mxu0 0.0
        %939 = vmatpush1.msra.mxu0 0.0
        %940 = vmatprep.subr.mxu0 0.0
        %941 = vmatpush1.msra.mxu0 0.0
        %942 = vmatprep.subr.mxu0 0.0
        %943 = vmatpush1.msra.mxu0 0.0
        %944 = vmatprep.subr.mxu0 0.0
        %945 = vmatpush1.msra.mxu0 0.0
        %946 = vmatprep.subr.mxu0 0.0
        %947 = vmatpush1.msra.mxu0 0.0
        %948 = vmatprep.subr.mxu0 0.0
        %949 = vmatpush1.msra.mxu0 0.0
        %950 = vmatprep.subr.mxu0 0.0
        %951 = vmatpush1.msra.mxu0 0.0
        %952 = vmatprep.subr.mxu0 0.0
        %953 = vmatpush1.msra.mxu0 0.0
        %954 = vmatprep.subr.mxu0 0.0
        %955 = vmatpush1.msra.mxu0 0.0
        %956 = vmatprep.subr.mxu0 0.0
        %957 = vmatpush1.msra.mxu0 0.0
        %958 = vmatprep.subr.mxu0 0.0
        %959 = vmatpush1.msra.mxu0 0.0
        %960 = vmatprep.subr.mxu0 0.0
        %961 = vmatpush1.msra.mxu0 0.0
        %962 = vmatprep.subr.mxu0 0.0
        %963 = vmatpush1.msra.mxu0 0.0
        %964 = vmatprep.subr.mxu0 0.0
        %965 = vmatpush1.msra.mxu0 0.0
        %966 = vmatprep.subr.mxu0 0.0
        %967 = vmatpush1.msra.mxu0 0.0
        %968 = vmatprep.subr.mxu0 0.0
        %969 = vmatpush1.msra.mxu0 0.0
        %970 = vmatprep.subr.mxu0 0.0
        %971 = vmatpush1.msra.mxu0 0.0
        %972 = vmatprep.subr.mxu0 0.0
        %973 = vmatpush1.msra.mxu0 0.0
        %974 = vmatprep.subr.mxu0 0.0
        %975 = vmatpush1.msra.mxu0 0.0
        %976 = vmatprep.mubr.f32.mxu0 0.0
        %977 = vmatmul.mubr.f32.gmra.mrb[0].mxu0 %v401
        %v978 = vpop.f32.mrb[0].mxu0
        %v979 = vadd.f32 %v911, %v978
        %v980 = vpop.f32.mrb[0].mxu0
        %981 = vmatprep.mubr.f32.mxu0 0.0
        %982 = vmatmul.mubr.f32.gmra.mrb[0].mxu0 %v404
        %v983 = vpop.f32.mrb[0].mxu0
        %v984 = vadd.f32 %v911, %v983
        %v985 = vpop.f32.mrb[0].mxu0
        %986 = vmatprep.mubr.f32.mxu0 0.0
        %987 = vmatmul.mubr.f32.gmra.mrb[0].mxu0 %v407
        %v988 = vpop.f32.mrb[0].mxu0
        %v989 = vadd.f32 %v911, %v988
        %v990 = vpop.f32.mrb[0].mxu0
        %991 = vmatprep.mubr.f32.mxu0 0.0
        %992 = vmatmul.mubr.f32.gmra.mrb[0].mxu0 %v410
        %v993 = vpop.f32.mrb[0].mxu0
        %v994 = vadd.f32 %v911, %v993
        %v995 = vpop.f32.mrb[0].mxu0
        %996 = vdwg.mxu0
        %v997 = vadd.f32 %v902, %v979
        %v998 = vadd.f32 %v903, %v984
        %v999 = vadd.f32 %v904, %v989
        %v1000 = vadd.f32 %v905, %v994
        %v1001 = vmax.f32 %v997, 0.0
        %v1002 = vmax.f32 %v998, 0.0
        %v1003 = vmax.f32 %v999, 0.0
        %v1004 = vmax.f32 %v1000, 0.0
        %v1005 = vld [vmem:[#allocation6 + $0x70] sm:$0xff]
        %v1006 = vld [vmem:[#allocation6 + $0x78] sm:$0xff]
        %v1007 = vld [vmem:[#allocation6 + $0x80] sm:$0xff]
        %v1008 = vld [vmem:[#allocation6 + $0x88] sm:$0xff]
        %v1009 = vld [vmem:[#allocation6 + $0x90] sm:$0xff]
        %v1010 = vld [vmem:[#allocation6 + $0x98] sm:$0xff]
        %v1011 = vld [vmem:[#allocation6 + $0xa0] sm:$0xff]
        %v1012 = vld [vmem:[#allocation6 + $0xa8] sm:$0xff]
        %v1013 = vld [vmem:[#allocation6 + $0xb0] sm:$0x1]
        %v1015 = vsel %vm301, %v274, 0
        %v1018 = vsel %vm301, %v275, 0
        %v1021 = vsel %vm301, %v276, 0
        %v1024 = vsel %vm301, %v277, 0
        %1026 = vmatprep.subr.mxu0 0.0
        %1027 = vmatpush1.msra.mxu0 %v1001
        %1028 = vmatprep.subr.mxu0 0.0
        %1029 = vmatpush1.msra.mxu0 %v1002
        %1030 = vmatprep.subr.mxu0 0.0
        %1031 = vmatpush1.msra.mxu0 %v1003
        %1032 = vmatprep.subr.mxu0 0.0
        %1033 = vmatpush1.msra.mxu0 %v1004
        %1034 = vmatprep.subr.mxu0 0.0
        %1035 = vmatpush1.msra.mxu0 0.0
        %1036 = vmatprep.subr.mxu0 0.0
        %1037 = vmatpush1.msra.mxu0 0.0
        %1038 = vmatprep.subr.mxu0 0.0
        %1039 = vmatpush1.msra.mxu0 0.0
        %1040 = vmatprep.subr.mxu0 0.0
        %1041 = vmatpush1.msra.mxu0 0.0
        %1042 = vmatprep.subr.mxu0 0.0
        %1043 = vmatpush1.msra.mxu0 0.0
        %1044 = vmatprep.subr.mxu0 0.0
        %1045 = vmatpush1.msra.mxu0 0.0
        %1046 = vmatprep.subr.mxu0 0.0
        %1047 = vmatpush1.msra.mxu0 0.0
        %1048 = vmatprep.subr.mxu0 0.0
        %1049 = vmatpush1.msra.mxu0 0.0
        %1050 = vmatprep.subr.mxu0 0.0
        %1051 = vmatpush1.msra.mxu0 0.0
        %1052 = vmatprep.subr.mxu0 0.0
        %1053 = vmatpush1.msra.mxu0 0.0
        %1054 = vmatprep.subr.mxu0 0.0
        %1055 = vmatpush1.msra.mxu0 0.0
        %1056 = vmatprep.subr.mxu0 0.0
        %1057 = vmatpush1.msra.mxu0 0.0
        %1058 = vmatprep.subr.mxu0 0.0
        %1059 = vmatpush1.msra.mxu0 0.0
        %1060 = vmatprep.subr.mxu0 0.0
        %1061 = vmatpush1.msra.mxu0 0.0
        %1062 = vmatprep.subr.mxu0 0.0
        %1063 = vmatpush1.msra.mxu0 0.0
        %1064 = vmatprep.subr.mxu0 0.0
        %1065 = vmatpush1.msra.mxu0 0.0
        %1066 = vmatprep.subr.mxu0 0.0
        %1067 = vmatpush1.msra.mxu0 0.0
        %1068 = vmatprep.subr.mxu0 0.0
        %1069 = vmatpush1.msra.mxu0 0.0
        %1070 = vmatprep.subr.mxu0 0.0
        %1071 = vmatpush1.msra.mxu0 0.0
        %1072 = vmatprep.subr.mxu0 0.0
        %1073 = vmatpush1.msra.mxu0 0.0
        %1074 = vmatprep.subr.mxu0 0.0
        %1075 = vmatpush1.msra.mxu0 0.0
        %1076 = vmatprep.subr.mxu0 0.0
        %1077 = vmatpush1.msra.mxu0 0.0
        %1078 = vmatprep.subr.mxu0 0.0
        %1079 = vmatpush1.msra.mxu0 0.0
        %1080 = vmatprep.subr.mxu0 0.0
        %1081 = vmatpush1.msra.mxu0 0.0
        %1082 = vmatprep.subr.mxu0 0.0
        %1083 = vmatpush1.msra.mxu0 0.0
        %1084 = vmatprep.subr.mxu0 0.0
        %1085 = vmatpush1.msra.mxu0 0.0
        %1086 = vmatprep.subr.mxu0 0.0
        %1087 = vmatpush1.msra.mxu0 0.0
        %1088 = vmatprep.subr.mxu0 0.0
        %1089 = vmatpush1.msra.mxu0 0.0
        %1090 = vmatprep.mubr.f32.mxu0 0.0
        %1091 = vmatmul.mubr.f32.gmra.mrb[0].mxu0 %v1015
        %v1092 = vpop.f32.mrb[0].mxu0
        %v1093 = vadd.f32 0.0, %v1092
        %v1094 = vpop.f32.mrb[0].mxu0
        %1095 = vmatprep.mubr.f32.mxu0 0.0
        %1096 = vmatmul.mubr.f32.gmra.mrb[0].mxu0 %v1018
        %v1097 = vpop.f32.mrb[0].mxu0
        %v1098 = vadd.f32 0.0, %v1097
        %v1099 = vpop.f32.mrb[0].mxu0
        %1100 = vmatprep.mubr.f32.mxu0 0.0
        %1101 = vmatmul.mubr.f32.gmra.mrb[0].mxu0 %v1021
        %v1102 = vpop.f32.mrb[0].mxu0
        %v1103 = vadd.f32 0.0, %v1102
        %v1104 = vpop.f32.mrb[0].mxu0
        %1105 = vmatprep.mubr.f32.mxu0 0.0
        %1106 = vmatmul.mubr.f32.gmra.mrb[0].mxu0 %v1024
        %v1107 = vpop.f32.mrb[0].mxu0
        %v1108 = vadd.f32 0.0, %v1107
        %v1109 = vpop.f32.mrb[0].mxu0
        %1110 = vdwg.mxu0
        %v1112 = vsel %vm301, %v1001, 0
        %v1115 = vsel %vm301, %v1002, 0
        %v1118 = vsel %vm301, %v1003, 0
        %v1121 = vsel %vm301, %v1004, 0
        %1123 = vmatprep.subr.mxu0 0.0
        %1124 = vmatpush1.msra.mxu0 %v1009
        %1125 = vmatprep.subr.mxu0 0.0
        %1126 = vmatpush1.msra.mxu0 %v1010
        %1127 = vmatprep.subr.mxu0 0.0
        %1128 = vmatpush1.msra.mxu0 %v1011
        %1129 = vmatprep.subr.mxu0 0.0
        %1130 = vmatpush1.msra.mxu0 %v1012
        %1131 = vmatprep.subr.mxu0 0.0
        %1132 = vmatpush1.msra.mxu0 0.0
        %1133 = vmatprep.subr.mxu0 0.0
        %1134 = vmatpush1.msra.mxu0 0.0
        %1135 = vmatprep.subr.mxu0 0.0
        %1136 = vmatpush1.msra.mxu0 0.0
        %1137 = vmatprep.subr.mxu0 0.0
        %1138 = vmatpush1.msra.mxu0 0.0
        %1139 = vmatprep.subr.mxu0 0.0
        %1140 = vmatpush1.msra.mxu0 0.0
        %1141 = vmatprep.subr.mxu0 0.0
        %1142 = vmatpush1.msra.mxu0 0.0
        %1143 = vmatprep.subr.mxu0 0.0
        %1144 = vmatpush1.msra.mxu0 0.0
        %1145 = vmatprep.subr.mxu0 0.0
        %1146 = vmatpush1.msra.mxu0 0.0
        %1147 = vmatprep.subr.mxu0 0.0
        %1148 = vmatpush1.msra.mxu0 0.0
        %1149 = vmatprep.subr.mxu0 0.0
        %1150 = vmatpush1.msra.mxu0 0.0
        %1151 = vmatprep.subr.mxu0 0.0
        %1152 = vmatpush1.msra.mxu0 0.0
        %1153 = vmatprep.subr.mxu0 0.0
        %1154 = vmatpush1.msra.mxu0 0.0
        %1155 = vmatprep.subr.mxu0 0.0
        %1156 = vmatpush1.msra.mxu0 0.0
        %1157 = vmatprep.subr.mxu0 0.0
        %1158 = vmatpush1.msra.mxu0 0.0
        %1159 = vmatprep.subr.mxu0 0.0
        %1160 = vmatpush1.msra.mxu0 0.0
        %1161 = vmatprep.subr.mxu0 0.0
        %1162 = vmatpush1.msra.mxu0 0.0
        %1163 = vmatprep.subr.mxu0 0.0
        %1164 = vmatpush1.msra.mxu0 0.0
        %1165 = vmatprep.subr.mxu0 0.0
        %1166 = vmatpush1.msra.mxu0 0.0
        %1167 = vmatprep.subr.mxu0 0.0
        %1168 = vmatpush1.msra.mxu0 0.0
        %1169 = vmatprep.subr.mxu0 0.0
        %1170 = vmatpush1.msra.mxu0 0.0
        %1171 = vmatprep.subr.mxu0 0.0
        %1172 = vmatpush1.msra.mxu0 0.0
        %1173 = vmatprep.subr.mxu0 0.0
        %1174 = vmatpush1.msra.mxu0 0.0
        %1175 = vmatprep.subr.mxu0 0.0
        %1176 = vmatpush1.msra.mxu0 0.0
        %1177 = vmatprep.subr.mxu0 0.0
        %1178 = vmatpush1.msra.mxu0 0.0
        %1179 = vmatprep.subr.mxu0 0.0
        %1180 = vmatpush1.msra.mxu0 0.0
        %1181 = vmatprep.subr.mxu0 0.0
        %1182 = vmatpush1.msra.mxu0 0.0
        %1183 = vmatprep.subr.mxu0 0.0
        %1184 = vmatpush1.msra.mxu0 0.0
        %1185 = vmatprep.subr.mxu0 0.0
        %1186 = vmatpush1.msra.mxu0 0.0
        %1187 = vmatprep.mubr.f32.mxu0 0.0
        %1188 = vmatmul.mubr.f32.gmra.mrb[0].mxu0 %v1112
        %v1189 = vpop.f32.mrb[0].mxu0
        %v1190 = vadd.f32 0.0, %v1189
        %v1191 = vpop.f32.mrb[0].mxu0
        %1192 = vmatprep.mubr.f32.mxu0 0.0
        %1193 = vmatmul.mubr.f32.gmra.mrb[0].mxu0 %v1115
        %v1194 = vpop.f32.mrb[0].mxu0
        %v1195 = vadd.f32 0.0, %v1194
        %v1196 = vpop.f32.mrb[0].mxu0
        %1197 = vmatprep.mubr.f32.mxu0 0.0
        %1198 = vmatmul.mubr.f32.gmra.mrb[0].mxu0 %v1118
        %v1199 = vpop.f32.mrb[0].mxu0
        %v1200 = vadd.f32 0.0, %v1199
        %v1201 = vpop.f32.mrb[0].mxu0
        %1202 = vmatprep.mubr.f32.mxu0 0.0
        %1203 = vmatmul.mubr.f32.gmra.mrb[0].mxu0 %v1121
        %v1204 = vpop.f32.mrb[0].mxu0
        %v1205 = vadd.f32 0.0, %v1204
        %v1206 = vpop.f32.mrb[0].mxu0
        %1207 = vdwg.mxu0
        %v1209 = vsel %vm301, %v1093, 0
        %v1212 = vsel %vm301, %v1098, 0
        %v1215 = vsel %vm301, %v1103, 0
        %v1218 = vsel %vm301, %v1108, 0
        %1220 = vmatprep.subr.mxu0 0.0
        %1221 = vmatpush1.msra.mxu0 %v1005
        %1222 = vmatprep.subr.mxu0 0.0
        %1223 = vmatpush1.msra.mxu0 %v1006
        %1224 = vmatprep.subr.mxu0 0.0
        %1225 = vmatpush1.msra.mxu0 %v1007
        %1226 = vmatprep.subr.mxu0 0.0
        %1227 = vmatpush1.msra.mxu0 %v1008
        %1228 = vmatprep.subr.mxu0 0.0
        %1229 = vmatpush1.msra.mxu0 0.0
        %1230 = vmatprep.subr.mxu0 0.0
        %1231 = vmatpush1.msra.mxu0 0.0
        %1232 = vmatprep.subr.mxu0 0.0
        %1233 = vmatpush1.msra.mxu0 0.0
        %1234 = vmatprep.subr.mxu0 0.0
        %1235 = vmatpush1.msra.mxu0 0.0
        %1236 = vmatprep.subr.mxu0 0.0
        %1237 = vmatpush1.msra.mxu0 0.0
        %1238 = vmatprep.subr.mxu0 0.0
        %1239 = vmatpush1.msra.mxu0 0.0
        %1240 = vmatprep.subr.mxu0 0.0
        %1241 = vmatpush1.msra.mxu0 0.0
        %1242 = vmatprep.subr.mxu0 0.0
        %1243 = vmatpush1.msra.mxu0 0.0
        %1244 = vmatprep.subr.mxu0 0.0
        %1245 = vmatpush1.msra.mxu0 0.0
        %1246 = vmatprep.subr.mxu0 0.0
        %1247 = vmatpush1.msra.mxu0 0.0
        %1248 = vmatprep.subr.mxu0 0.0
        %1249 = vmatpush1.msra.mxu0 0.0
        %1250 = vmatprep.subr.mxu0 0.0
        %1251 = vmatpush1.msra.mxu0 0.0
        %1252 = vmatprep.subr.mxu0 0.0
        %1253 = vmatpush1.msra.mxu0 0.0
        %1254 = vmatprep.subr.mxu0 0.0
        %1255 = vmatpush1.msra.mxu0 0.0
        %1256 = vmatprep.subr.mxu0 0.0
        %1257 = vmatpush1.msra.mxu0 0.0
        %1258 = vmatprep.subr.mxu0 0.0
        %1259 = vmatpush1.msra.mxu0 0.0
        %1260 = vmatprep.subr.mxu0 0.0
        %1261 = vmatpush1.msra.mxu0 0.0
        %1262 = vmatprep.subr.mxu0 0.0
        %1263 = vmatpush1.msra.mxu0 0.0
        %1264 = vmatprep.subr.mxu0 0.0
        %1265 = vmatpush1.msra.mxu0 0.0
        %1266 = vmatprep.subr.mxu0 0.0
        %1267 = vmatpush1.msra.mxu0 0.0
        %1268 = vmatprep.subr.mxu0 0.0
        %1269 = vmatpush1.msra.mxu0 0.0
        %1270 = vmatprep.subr.mxu0 0.0
        %1271 = vmatpush1.msra.mxu0 0.0
        %1272 = vmatprep.subr.mxu0 0.0
        %1273 = vmatpush1.msra.mxu0 0.0
        %1274 = vmatprep.subr.mxu0 0.0
        %1275 = vmatpush1.msra.mxu0 0.0
        %1276 = vmatprep.subr.mxu0 0.0
        %1277 = vmatpush1.msra.mxu0 0.0
        %1278 = vmatprep.subr.mxu0 0.0
        %1279 = vmatpush1.msra.mxu0 0.0
        %1280 = vmatprep.subr.mxu0 0.0
        %1281 = vmatpush1.msra.mxu0 0.0
        %1282 = vmatprep.subr.mxu0 0.0
        %1283 = vmatpush1.msra.mxu0 0.0
        %1284 = vmatprep.mubr.f32.mxu0 0.0
        %1285 = vmatmul.mubr.f32.gmra.mrb[0].mxu0 %v1209
        %v1286 = vpop.f32.mrb[0].mxu0
        %v1287 = vadd.f32 %v1190, %v1286
        %v1288 = vpop.f32.mrb[0].mxu0
        %1289 = vmatprep.mubr.f32.mxu0 0.0
        %1290 = vmatmul.mubr.f32.gmra.mrb[0].mxu0 %v1212
        %v1291 = vpop.f32.mrb[0].mxu0
        %v1292 = vadd.f32 %v1195, %v1291
        %v1293 = vpop.f32.mrb[0].mxu0
        %1294 = vmatprep.mubr.f32.mxu0 0.0
        %1295 = vmatmul.mubr.f32.gmra.mrb[0].mxu0 %v1215
        %v1296 = vpop.f32.mrb[0].mxu0
        %v1297 = vadd.f32 %v1200, %v1296
        %v1298 = vpop.f32.mrb[0].mxu0
        %1299 = vmatprep.mubr.f32.mxu0 0.0
        %1300 = vmatmul.mubr.f32.gmra.mrb[0].mxu0 %v1218
        %v1301 = vpop.f32.mrb[0].mxu0
        %v1302 = vadd.f32 %v1205, %v1301
        %v1303 = vpop.f32.mrb[0].mxu0
        %1304 = vdwg.mxu0
        %v1305 = vlaneseq
        %v1306 = vshrl.u32 %v1305, 7
        %v1307 = vsub.s32 0, %v1306
        %v1308 = vrot.slane %v1013, %v1307
        %v1309 = vadd.f32 %v1287, %v1308
        %v1310 = vadd.f32 %v1292, %v1308
        %v1311 = vadd.f32 %v1297, %v1308
        %v1312 = vadd.f32 %v1302, %v1308
        %v1313 = vmax.f32 %v1309, 0.0
        %v1314 = vmax.f32 %v1310, 0.0
        %v1315 = vmax.f32 %v1311, 0.0
        %v1316 = vmax.f32 %v1312, 0.0
        %v1317 = vld [vmem:[#allocation6 + $0xb8] sm:$0xff]
        %v1318 = vld [vmem:[#allocation6 + $0xc0] sm:$0xff]
        %v1319 = vld [vmem:[#allocation6 + $0xc8] sm:$0xff]
        %v1320 = vld [vmem:[#allocation6 + $0xd0] sm:$0xff]
        %v1321 = vld [vmem:[#allocation6 + $0xd8] sm:$0x1]
        %1322 = vmatprep.subr.mxu0 0.0
        %1323 = vmatpush1.msra.mxu0 %v1313
        %1324 = vmatprep.subr.mxu0 0.0
        %1325 = vmatpush1.msra.mxu0 %v1314
        %1326 = vmatprep.subr.mxu0 0.0
        %1327 = vmatpush1.msra.mxu0 %v1315
        %1328 = vmatprep.subr.mxu0 0.0
        %1329 = vmatpush1.msra.mxu0 %v1316
        %1330 = vmatprep.subr.mxu0 0.0
        %1331 = vmatpush1.msra.mxu0 0.0
        %1332 = vmatprep.subr.mxu0 0.0
        %1333 = vmatpush1.msra.mxu0 0.0
        %1334 = vmatprep.subr.mxu0 0.0
        %1335 = vmatpush1.msra.mxu0 0.0
        %1336 = vmatprep.subr.mxu0 0.0
        %1337 = vmatpush1.msra.mxu0 0.0
        %1338 = vmatprep.subr.mxu0 0.0
        %1339 = vmatpush1.msra.mxu0 0.0
        %1340 = vmatprep.subr.mxu0 0.0
        %1341 = vmatpush1.msra.mxu0 0.0
        %1342 = vmatprep.subr.mxu0 0.0
        %1343 = vmatpush1.msra.mxu0 0.0
        %1344 = vmatprep.subr.mxu0 0.0
        %1345 = vmatpush1.msra.mxu0 0.0
        %1346 = vmatprep.subr.mxu0 0.0
        %1347 = vmatpush1.msra.mxu0 0.0
        %1348 = vmatprep.subr.mxu0 0.0
        %1349 = vmatpush1.msra.mxu0 0.0
        %1350 = vmatprep.subr.mxu0 0.0
        %1351 = vmatpush1.msra.mxu0 0.0
        %1352 = vmatprep.subr.mxu0 0.0
        %1353 = vmatpush1.msra.mxu0 0.0
        %1354 = vmatprep.subr.mxu0 0.0
        %1355 = vmatpush1.msra.mxu0 0.0
        %1356 = vmatprep.subr.mxu0 0.0
        %1357 = vmatpush1.msra.mxu0 0.0
        %1358 = vmatprep.subr.mxu0 0.0
        %1359 = vmatpush1.msra.mxu0 0.0
        %1360 = vmatprep.subr.mxu0 0.0
        %1361 = vmatpush1.msra.mxu0 0.0
        %1362 = vmatprep.subr.mxu0 0.0
        %1363 = vmatpush1.msra.mxu0 0.0
        %1364 = vmatprep.subr.mxu0 0.0
        %1365 = vmatpush1.msra.mxu0 0.0
        %1366 = vmatprep.subr.mxu0 0.0
        %1367 = vmatpush1.msra.mxu0 0.0
        %1368 = vmatprep.subr.mxu0 0.0
        %1369 = vmatpush1.msra.mxu0 0.0
        %1370 = vmatprep.subr.mxu0 0.0
        %1371 = vmatpush1.msra.mxu0 0.0
        %1372 = vmatprep.subr.mxu0 0.0
        %1373 = vmatpush1.msra.mxu0 0.0
        %1374 = vmatprep.subr.mxu0 0.0
        %1375 = vmatpush1.msra.mxu0 0.0
        %1376 = vmatprep.subr.mxu0 0.0
        %1377 = vmatpush1.msra.mxu0 0.0
        %1378 = vmatprep.subr.mxu0 0.0
        %1379 = vmatpush1.msra.mxu0 0.0
        %1380 = vmatprep.subr.mxu0 0.0
        %1381 = vmatpush1.msra.mxu0 0.0
        %1382 = vmatprep.subr.mxu0 0.0
        %1383 = vmatpush1.msra.mxu0 0.0
        %1384 = vmatprep.subr.mxu0 0.0
        %1385 = vmatpush1.msra.mxu0 0.0
        %1386 = vmatprep.mubr.f32.mxu0 0.0
        %1387 = vmatmul.mubr.f32.gmra.mrb[0].mxu0 %v1015
        %v1388 = vpop.f32.mrb[0].mxu0
        %v1389 = vadd.f32 0.0, %v1388
        %v1390 = vpop.f32.mrb[0].mxu0
        %1391 = vmatprep.mubr.f32.mxu0 0.0
        %1392 = vmatmul.mubr.f32.gmra.mrb[0].mxu0 %v1018
        %v1393 = vpop.f32.mrb[0].mxu0
        %v1394 = vadd.f32 0.0, %v1393
        %v1395 = vpop.f32.mrb[0].mxu0
        %1396 = vmatprep.mubr.f32.mxu0 0.0
        %1397 = vmatmul.mubr.f32.gmra.mrb[0].mxu0 %v1021
        %v1398 = vpop.f32.mrb[0].mxu0
        %v1399 = vadd.f32 0.0, %v1398
        %v1400 = vpop.f32.mrb[0].mxu0
        %1401 = vmatprep.mubr.f32.mxu0 0.0
        %1402 = vmatmul.mubr.f32.gmra.mrb[0].mxu0 %v1024
        %v1403 = vpop.f32.mrb[0].mxu0
        %v1404 = vadd.f32 0.0, %v1403
        %v1405 = vpop.f32.mrb[0].mxu0
        %1406 = vdwg.mxu0
        %vm1407 = vcmask 130048
        %v1409 = vsel %vm1407, %v1313, 0
        %v1412 = vsel %vm1407, %v1314, 0
        %v1415 = vsel %vm1407, %v1315, 0
        %v1418 = vsel %vm1407, %v1316, 0
        %1420 = vmatprep.subr.mxu0 0.0
        %1421 = vmatpush1.msra.mxu0 %v1319
        %1422 = vmatprep.subr.mxu0 0.0
        %1423 = vmatpush1.msra.mxu0 %v1320
        %1424 = vmatprep.subr.mxu0 0.0
        %1425 = vmatpush1.msra.mxu0 0.0
        %1426 = vmatprep.subr.mxu0 0.0
        %1427 = vmatpush1.msra.mxu0 0.0
        %1428 = vmatprep.subr.mxu0 0.0
        %1429 = vmatpush1.msra.mxu0 0.0
        %1430 = vmatprep.subr.mxu0 0.0
        %1431 = vmatpush1.msra.mxu0 0.0
        %1432 = vmatprep.subr.mxu0 0.0
        %1433 = vmatpush1.msra.mxu0 0.0
        %1434 = vmatprep.subr.mxu0 0.0
        %1435 = vmatpush1.msra.mxu0 0.0
        %1436 = vmatprep.subr.mxu0 0.0
        %1437 = vmatpush1.msra.mxu0 0.0
        %1438 = vmatprep.subr.mxu0 0.0
        %1439 = vmatpush1.msra.mxu0 0.0
        %1440 = vmatprep.subr.mxu0 0.0
        %1441 = vmatpush1.msra.mxu0 0.0
        %1442 = vmatprep.subr.mxu0 0.0
        %1443 = vmatpush1.msra.mxu0 0.0
        %1444 = vmatprep.subr.mxu0 0.0
        %1445 = vmatpush1.msra.mxu0 0.0
        %1446 = vmatprep.subr.mxu0 0.0
        %1447 = vmatpush1.msra.mxu0 0.0
        %1448 = vmatprep.subr.mxu0 0.0
        %1449 = vmatpush1.msra.mxu0 0.0
        %1450 = vmatprep.subr.mxu0 0.0
        %1451 = vmatpush1.msra.mxu0 0.0
        %1452 = vmatprep.subr.mxu0 0.0
        %1453 = vmatpush1.msra.mxu0 0.0
        %1454 = vmatprep.subr.mxu0 0.0
        %1455 = vmatpush1.msra.mxu0 0.0
        %1456 = vmatprep.subr.mxu0 0.0
        %1457 = vmatpush1.msra.mxu0 0.0
        %1458 = vmatprep.subr.mxu0 0.0
        %1459 = vmatpush1.msra.mxu0 0.0
        %1460 = vmatprep.subr.mxu0 0.0
        %1461 = vmatpush1.msra.mxu0 0.0
        %1462 = vmatprep.subr.mxu0 0.0
        %1463 = vmatpush1.msra.mxu0 0.0
        %1464 = vmatprep.subr.mxu0 0.0
        %1465 = vmatpush1.msra.mxu0 0.0
        %1466 = vmatprep.subr.mxu0 0.0
        %1467 = vmatpush1.msra.mxu0 0.0
        %1468 = vmatprep.subr.mxu0 0.0
        %1469 = vmatpush1.msra.mxu0 0.0
        %1470 = vmatprep.subr.mxu0 0.0
        %1471 = vmatpush1.msra.mxu0 0.0
        %1472 = vmatprep.subr.mxu0 0.0
        %1473 = vmatpush1.msra.mxu0 0.0
        %1474 = vmatprep.subr.mxu0 0.0
        %1475 = vmatpush1.msra.mxu0 0.0
        %1476 = vmatprep.subr.mxu0 0.0
        %1477 = vmatpush1.msra.mxu0 0.0
        %1478 = vmatprep.subr.mxu0 0.0
        %1479 = vmatpush1.msra.mxu0 0.0
        %1480 = vmatprep.subr.mxu0 0.0
        %1481 = vmatpush1.msra.mxu0 0.0
        %1482 = vmatprep.subr.mxu0 0.0
        %1483 = vmatpush1.msra.mxu0 0.0
        %1484 = vmatprep.mubr.f32.mxu0 0.0
        %1485 = vmatmul.mubr.f32.gmra.mrb[0].mxu0 %v1409
        %v1486 = vpop.f32.mrb[0].mxu0
        %v1487 = vadd.f32 0.0, %v1486
        %v1488 = vpop.f32.mrb[0].mxu0
        %1489 = vmatprep.mubr.f32.mxu0 0.0
        %1490 = vmatmul.mubr.f32.gmra.mrb[0].mxu0 %v1412
        %v1491 = vpop.f32.mrb[0].mxu0
        %v1492 = vadd.f32 0.0, %v1491
        %v1493 = vpop.f32.mrb[0].mxu0
        %1494 = vmatprep.mubr.f32.mxu0 0.0
        %1495 = vmatmul.mubr.f32.gmra.mrb[0].mxu0 %v1415
        %v1496 = vpop.f32.mrb[0].mxu0
        %v1497 = vadd.f32 0.0, %v1496
        %v1498 = vpop.f32.mrb[0].mxu0
        %1499 = vmatprep.mubr.f32.mxu0 0.0
        %1500 = vmatmul.mubr.f32.gmra.mrb[0].mxu0 %v1418
        %v1501 = vpop.f32.mrb[0].mxu0
        %v1502 = vadd.f32 0.0, %v1501
        %v1503 = vpop.f32.mrb[0].mxu0
        %1504 = vdwg.mxu0
        %v1506 = vsel %vm1407, %v1389, 0
        %v1509 = vsel %vm1407, %v1394, 0
        %v1512 = vsel %vm1407, %v1399, 0
        %v1515 = vsel %vm1407, %v1404, 0
        %1517 = vmatprep.subr.mxu0 0.0
        %1518 = vmatpush1.msra.mxu0 %v1317
        %1519 = vmatprep.subr.mxu0 0.0
        %1520 = vmatpush1.msra.mxu0 %v1318
        %1521 = vmatprep.subr.mxu0 0.0
        %1522 = vmatpush1.msra.mxu0 0.0
        %1523 = vmatprep.subr.mxu0 0.0
        %1524 = vmatpush1.msra.mxu0 0.0
        %1525 = vmatprep.subr.mxu0 0.0
        %1526 = vmatpush1.msra.mxu0 0.0
        %1527 = vmatprep.subr.mxu0 0.0
        %1528 = vmatpush1.msra.mxu0 0.0
        %1529 = vmatprep.subr.mxu0 0.0
        %1530 = vmatpush1.msra.mxu0 0.0
        %1531 = vmatprep.subr.mxu0 0.0
        %1532 = vmatpush1.msra.mxu0 0.0
        %1533 = vmatprep.subr.mxu0 0.0
        %1534 = vmatpush1.msra.mxu0 0.0
        %1535 = vmatprep.subr.mxu0 0.0
        %1536 = vmatpush1.msra.mxu0 0.0
        %1537 = vmatprep.subr.mxu0 0.0
        %1538 = vmatpush1.msra.mxu0 0.0
        %1539 = vmatprep.subr.mxu0 0.0
        %1540 = vmatpush1.msra.mxu0 0.0
        %1541 = vmatprep.subr.mxu0 0.0
        %1542 = vmatpush1.msra.mxu0 0.0
        %1543 = vmatprep.subr.mxu0 0.0
        %1544 = vmatpush1.msra.mxu0 0.0
        %1545 = vmatprep.subr.mxu0 0.0
        %1546 = vmatpush1.msra.mxu0 0.0
        %1547 = vmatprep.subr.mxu0 0.0
        %1548 = vmatpush1.msra.mxu0 0.0
        %1549 = vmatprep.subr.mxu0 0.0
        %1550 = vmatpush1.msra.mxu0 0.0
        %1551 = vmatprep.subr.mxu0 0.0
        %1552 = vmatpush1.msra.mxu0 0.0
        %1553 = vmatprep.subr.mxu0 0.0
        %1554 = vmatpush1.msra.mxu0 0.0
        %1555 = vmatprep.subr.mxu0 0.0
        %1556 = vmatpush1.msra.mxu0 0.0
        %1557 = vmatprep.subr.mxu0 0.0
        %1558 = vmatpush1.msra.mxu0 0.0
        %1559 = vmatprep.subr.mxu0 0.0
        %1560 = vmatpush1.msra.mxu0 0.0
        %1561 = vmatprep.subr.mxu0 0.0
        %1562 = vmatpush1.msra.mxu0 0.0
        %1563 = vmatprep.subr.mxu0 0.0
        %1564 = vmatpush1.msra.mxu0 0.0
        %1565 = vmatprep.subr.mxu0 0.0
        %1566 = vmatpush1.msra.mxu0 0.0
        %1567 = vmatprep.subr.mxu0 0.0
        %1568 = vmatpush1.msra.mxu0 0.0
        %1569 = vmatprep.subr.mxu0 0.0
        %1570 = vmatpush1.msra.mxu0 0.0
        %1571 = vmatprep.subr.mxu0 0.0
        %1572 = vmatpush1.msra.mxu0 0.0
        %1573 = vmatprep.subr.mxu0 0.0
        %1574 = vmatpush1.msra.mxu0 0.0
        %1575 = vmatprep.subr.mxu0 0.0
        %1576 = vmatpush1.msra.mxu0 0.0
        %1577 = vmatprep.subr.mxu0 0.0
        %1578 = vmatpush1.msra.mxu0 0.0
        %1579 = vmatprep.subr.mxu0 0.0
        %1580 = vmatpush1.msra.mxu0 0.0
        %1581 = vmatprep.mubr.f32.mxu0 0.0
        %1582 = vmatmul.mubr.f32.gmra.mrb[0].mxu0 %v1506
        %v1583 = vpop.f32.mrb[0].mxu0
        %v1584 = vadd.f32 %v1487, %v1583
        %v1585 = vpop.f32.mrb[0].mxu0
        %1586 = vmatprep.mubr.f32.mxu0 0.0
        %1587 = vmatmul.mubr.f32.gmra.mrb[0].mxu0 %v1509
        %v1588 = vpop.f32.mrb[0].mxu0
        %v1589 = vadd.f32 %v1492, %v1588
        %v1590 = vpop.f32.mrb[0].mxu0
        %1591 = vmatprep.mubr.f32.mxu0 0.0
        %1592 = vmatmul.mubr.f32.gmra.mrb[0].mxu0 %v1512
        %v1593 = vpop.f32.mrb[0].mxu0
        %v1594 = vadd.f32 %v1497, %v1593
        %v1595 = vpop.f32.mrb[0].mxu0
        %1596 = vmatprep.mubr.f32.mxu0 0.0
        %1597 = vmatmul.mubr.f32.gmra.mrb[0].mxu0 %v1515
        %v1598 = vpop.f32.mrb[0].mxu0
        %v1599 = vadd.f32 %v1502, %v1598
        %v1600 = vpop.f32.mrb[0].mxu0
        %1601 = vdwg.mxu0
        %v1602 = vlaneseq
        %v1603 = vshrl.u32 %v1602, 7
        %v1604 = vsub.s32 0, %v1603
        %v1605 = vrot.slane %v1321, %v1604
        %v1606 = vadd.f32 %v1584, %v1605
        %v1607 = vadd.f32 %v1589, %v1605
        %v1608 = vadd.f32 %v1594, %v1605
        %v1609 = vadd.f32 %v1599, %v1605
        %v1610 = vmax.f32 %v1606, 0.0
        %v1611 = vmax.f32 %v1607, 0.0
        %v1612 = vmax.f32 %v1608, 0.0
        %v1613 = vmax.f32 %v1609, 0.0
        %v1614 = vld [vmem:[#allocation6 + $0xe0] sm:$0xff]
        %v1615 = vld [vmem:[#allocation6 + $0xe8] sm:$0xff]
        %v1616 = vld [vmem:[#allocation6 + $0xf0] sm:$0xff]
        %v1617 = vld [vmem:[#allocation6 + $0xf8] sm:$0xff]
        %v1618 = vld [vmem:[#allocation6 + $0x100] sm:$0x1]
        %v1619 = vlaneseq
        %v1620 = vshrl.u32 %v1619, 7
        %v1621 = vsub.s32 0, %v1620
        %v1622 = vrot.slane %v1618, %v1621
        %1623 = vmatprep.subr.mxu0 0.0
        %1624 = vmatpush1.msra.mxu0 %v1614
        %1625 = vmatprep.subr.mxu0 0.0
        %1626 = vmatpush1.msra.mxu0 %v1615
        %1627 = vmatprep.subr.mxu0 0.0
        %1628 = vmatpush1.msra.mxu0 %v1616
        %1629 = vmatprep.subr.mxu0 0.0
        %1630 = vmatpush1.msra.mxu0 %v1617
        %1631 = vmatprep.subr.mxu0 0.0
        %1632 = vmatpush1.msra.mxu0 0.0
        %1633 = vmatprep.subr.mxu0 0.0
        %1634 = vmatpush1.msra.mxu0 0.0
        %1635 = vmatprep.subr.mxu0 0.0
        %1636 = vmatpush1.msra.mxu0 0.0
        %1637 = vmatprep.subr.mxu0 0.0
        %1638 = vmatpush1.msra.mxu0 0.0
        %1639 = vmatprep.subr.mxu0 0.0
        %1640 = vmatpush1.msra.mxu0 0.0
        %1641 = vmatprep.subr.mxu0 0.0
        %1642 = vmatpush1.msra.mxu0 0.0
        %1643 = vmatprep.subr.mxu0 0.0
        %1644 = vmatpush1.msra.mxu0 0.0
        %1645 = vmatprep.subr.mxu0 0.0
        %1646 = vmatpush1.msra.mxu0 0.0
        %1647 = vmatprep.subr.mxu0 0.0
        %1648 = vmatpush1.msra.mxu0 0.0
        %1649 = vmatprep.subr.mxu0 0.0
        %1650 = vmatpush1.msra.mxu0 0.0
        %1651 = vmatprep.subr.mxu0 0.0
        %1652 = vmatpush1.msra.mxu0 0.0
        %1653 = vmatprep.subr.mxu0 0.0
        %1654 = vmatpush1.msra.mxu0 0.0
        %1655 = vmatprep.subr.mxu0 0.0
        %1656 = vmatpush1.msra.mxu0 0.0
        %1657 = vmatprep.subr.mxu0 0.0
        %1658 = vmatpush1.msra.mxu0 0.0
        %1659 = vmatprep.subr.mxu0 0.0
        %1660 = vmatpush1.msra.mxu0 0.0
        %1661 = vmatprep.subr.mxu0 0.0
        %1662 = vmatpush1.msra.mxu0 0.0
        %1663 = vmatprep.subr.mxu0 0.0
        %1664 = vmatpush1.msra.mxu0 0.0
        %1665 = vmatprep.subr.mxu0 0.0
        %1666 = vmatpush1.msra.mxu0 0.0
        %1667 = vmatprep.subr.mxu0 0.0
        %1668 = vmatpush1.msra.mxu0 0.0
        %1669 = vmatprep.subr.mxu0 0.0
        %1670 = vmatpush1.msra.mxu0 0.0
        %1671 = vmatprep.subr.mxu0 0.0
        %1672 = vmatpush1.msra.mxu0 0.0
        %1673 = vmatprep.subr.mxu0 0.0
        %1674 = vmatpush1.msra.mxu0 0.0
        %1675 = vmatprep.subr.mxu0 0.0
        %1676 = vmatpush1.msra.mxu0 0.0
        %1677 = vmatprep.subr.mxu0 0.0
        %1678 = vmatpush1.msra.mxu0 0.0
        %1679 = vmatprep.subr.mxu0 0.0
        %1680 = vmatpush1.msra.mxu0 0.0
        %1681 = vmatprep.subr.mxu0 0.0
        %1682 = vmatpush1.msra.mxu0 0.0
        %1683 = vmatprep.subr.mxu0 0.0
        %1684 = vmatpush1.msra.mxu0 0.0
        %1685 = vmatprep.subr.mxu0 0.0
        %1686 = vmatpush1.msra.mxu0 0.0
        %1687 = vmatprep.mubr.f32.mxu0 0.0
        %1688 = vmatmul.mubr.f32.gmra.mrb[0].mxu0 %v1112
        %v1689 = vpop.f32.mrb[0].mxu0
        %v1690 = vadd.f32 %v1622, %v1689
        %v1691 = vpop.f32.mrb[0].mxu0
        %1692 = vmatprep.mubr.f32.mxu0 0.0
        %1693 = vmatmul.mubr.f32.gmra.mrb[0].mxu0 %v1115
        %v1694 = vpop.f32.mrb[0].mxu0
        %v1695 = vadd.f32 %v1622, %v1694
        %v1696 = vpop.f32.mrb[0].mxu0
        %1697 = vmatprep.mubr.f32.mxu0 0.0
        %1698 = vmatmul.mubr.f32.gmra.mrb[0].mxu0 %v1118
        %v1699 = vpop.f32.mrb[0].mxu0
        %v1700 = vadd.f32 %v1622, %v1699
        %v1701 = vpop.f32.mrb[0].mxu0
        %1702 = vmatprep.mubr.f32.mxu0 0.0
        %1703 = vmatmul.mubr.f32.gmra.mrb[0].mxu0 %v1121
        %v1704 = vpop.f32.mrb[0].mxu0
        %v1705 = vadd.f32 %v1622, %v1704
        %v1706 = vpop.f32.mrb[0].mxu0
        %1707 = vdwg.mxu0
        %v1708 = vadd.f32 %v1610, %v1690
        %v1709 = vadd.f32 %v1611, %v1695
        %v1710 = vadd.f32 %v1612, %v1700
        %v1711 = vadd.f32 %v1613, %v1705
        %v1712 = vmax.f32 %v1708, 0.0
        %v1713 = vmax.f32 %v1709, 0.0
        %v1714 = vmax.f32 %v1710, 0.0
        %v1715 = vmax.f32 %v1711, 0.0
        %v1716 = vld [vmem:[#allocation6 + $0x108] sm:$0xff]
        %v1717 = vld [vmem:[#allocation6 + $0x110] sm:$0xff]
        %v1718 = vld [vmem:[#allocation6 + $0x118] sm:$0xff]
        %v1719 = vld [vmem:[#allocation6 + $0x120] sm:$0xff]
        %v1720 = vld [vmem:[#allocation6 + $0x128] sm:$0x1]
        %v1722 = vsel %vm301, %v294, 0
        %v1725 = vsel %vm301, %v295, 0
        %v1728 = vsel %vm301, %v296, 0
        %v1731 = vsel %vm301, %v297, 0
        %1733 = vmatprep.subr.mxu0 0.0
        %1734 = vmatpush1.msra.mxu0 %v1712
        %1735 = vmatprep.subr.mxu0 0.0
        %1736 = vmatpush1.msra.mxu0 %v1713
        %1737 = vmatprep.subr.mxu0 0.0
        %1738 = vmatpush1.msra.mxu0 %v1714
        %1739 = vmatprep.subr.mxu0 0.0
        %1740 = vmatpush1.msra.mxu0 %v1715
        %1741 = vmatprep.subr.mxu0 0.0
        %1742 = vmatpush1.msra.mxu0 0.0
        %1743 = vmatprep.subr.mxu0 0.0
        %1744 = vmatpush1.msra.mxu0 0.0
        %1745 = vmatprep.subr.mxu0 0.0
        %1746 = vmatpush1.msra.mxu0 0.0
        %1747 = vmatprep.subr.mxu0 0.0
        %1748 = vmatpush1.msra.mxu0 0.0
        %1749 = vmatprep.subr.mxu0 0.0
        %1750 = vmatpush1.msra.mxu0 0.0
        %1751 = vmatprep.subr.mxu0 0.0
        %1752 = vmatpush1.msra.mxu0 0.0
        %1753 = vmatprep.subr.mxu0 0.0
        %1754 = vmatpush1.msra.mxu0 0.0
        %1755 = vmatprep.subr.mxu0 0.0
        %1756 = vmatpush1.msra.mxu0 0.0
        %1757 = vmatprep.subr.mxu0 0.0
        %1758 = vmatpush1.msra.mxu0 0.0
        %1759 = vmatprep.subr.mxu0 0.0
        %1760 = vmatpush1.msra.mxu0 0.0
        %1761 = vmatprep.subr.mxu0 0.0
        %1762 = vmatpush1.msra.mxu0 0.0
        %1763 = vmatprep.subr.mxu0 0.0
        %1764 = vmatpush1.msra.mxu0 0.0
        %1765 = vmatprep.subr.mxu0 0.0
        %1766 = vmatpush1.msra.mxu0 0.0
        %1767 = vmatprep.subr.mxu0 0.0
        %1768 = vmatpush1.msra.mxu0 0.0
        %1769 = vmatprep.subr.mxu0 0.0
        %1770 = vmatpush1.msra.mxu0 0.0
        %1771 = vmatprep.subr.mxu0 0.0
        %1772 = vmatpush1.msra.mxu0 0.0
        %1773 = vmatprep.subr.mxu0 0.0
        %1774 = vmatpush1.msra.mxu0 0.0
        %1775 = vmatprep.subr.mxu0 0.0
        %1776 = vmatpush1.msra.mxu0 0.0
        %1777 = vmatprep.subr.mxu0 0.0
        %1778 = vmatpush1.msra.mxu0 0.0
        %1779 = vmatprep.subr.mxu0 0.0
        %1780 = vmatpush1.msra.mxu0 0.0
        %1781 = vmatprep.subr.mxu0 0.0
        %1782 = vmatpush1.msra.mxu0 0.0
        %1783 = vmatprep.subr.mxu0 0.0
        %1784 = vmatpush1.msra.mxu0 0.0
        %1785 = vmatprep.subr.mxu0 0.0
        %1786 = vmatpush1.msra.mxu0 0.0
        %1787 = vmatprep.subr.mxu0 0.0
        %1788 = vmatpush1.msra.mxu0 0.0
        %1789 = vmatprep.subr.mxu0 0.0
        %1790 = vmatpush1.msra.mxu0 0.0
        %1791 = vmatprep.subr.mxu0 0.0
        %1792 = vmatpush1.msra.mxu0 0.0
        %1793 = vmatprep.subr.mxu0 0.0
        %1794 = vmatpush1.msra.mxu0 0.0
        %1795 = vmatprep.subr.mxu0 0.0
        %1796 = vmatpush1.msra.mxu0 0.0
        %1797 = vmatprep.mubr.f32.mxu0 0.0
        %1798 = vmatmul.mubr.f32.gmra.mrb[0].mxu0 %v1722
        %v1799 = vpop.f32.mrb[0].mxu0
        %v1800 = vadd.f32 0.0, %v1799
        %v1801 = vpop.f32.mrb[0].mxu0
        %1802 = vmatprep.mubr.f32.mxu0 0.0
        %1803 = vmatmul.mubr.f32.gmra.mrb[0].mxu0 %v1725
        %v1804 = vpop.f32.mrb[0].mxu0
        %v1805 = vadd.f32 0.0, %v1804
        %v1806 = vpop.f32.mrb[0].mxu0
        %1807 = vmatprep.mubr.f32.mxu0 0.0
        %1808 = vmatmul.mubr.f32.gmra.mrb[0].mxu0 %v1728
        %v1809 = vpop.f32.mrb[0].mxu0
        %v1810 = vadd.f32 0.0, %v1809
        %v1811 = vpop.f32.mrb[0].mxu0
        %1812 = vmatprep.mubr.f32.mxu0 0.0
        %1813 = vmatmul.mubr.f32.gmra.mrb[0].mxu0 %v1731
        %v1814 = vpop.f32.mrb[0].mxu0
        %v1815 = vadd.f32 0.0, %v1814
        %v1816 = vpop.f32.mrb[0].mxu0
        %1817 = vdwg.mxu0
        %v1819 = vsel %vm1407, %v1712, 0
        %v1822 = vsel %vm1407, %v1713, 0
        %v1825 = vsel %vm1407, %v1714, 0
        %v1828 = vsel %vm1407, %v1715, 0
        %1830 = vmatprep.subr.mxu0 0.0
        %1831 = vmatpush1.msra.mxu0 %v1718
        %1832 = vmatprep.subr.mxu0 0.0
        %1833 = vmatpush1.msra.mxu0 %v1719
        %1834 = vmatprep.subr.mxu0 0.0
        %1835 = vmatpush1.msra.mxu0 0.0
        %1836 = vmatprep.subr.mxu0 0.0
        %1837 = vmatpush1.msra.mxu0 0.0
        %1838 = vmatprep.subr.mxu0 0.0
        %1839 = vmatpush1.msra.mxu0 0.0
        %1840 = vmatprep.subr.mxu0 0.0
        %1841 = vmatpush1.msra.mxu0 0.0
        %1842 = vmatprep.subr.mxu0 0.0
        %1843 = vmatpush1.msra.mxu0 0.0
        %1844 = vmatprep.subr.mxu0 0.0
        %1845 = vmatpush1.msra.mxu0 0.0
        %1846 = vmatprep.subr.mxu0 0.0
        %1847 = vmatpush1.msra.mxu0 0.0
        %1848 = vmatprep.subr.mxu0 0.0
        %1849 = vmatpush1.msra.mxu0 0.0
        %1850 = vmatprep.subr.mxu0 0.0
        %1851 = vmatpush1.msra.mxu0 0.0
        %1852 = vmatprep.subr.mxu0 0.0
        %1853 = vmatpush1.msra.mxu0 0.0
        %1854 = vmatprep.subr.mxu0 0.0
        %1855 = vmatpush1.msra.mxu0 0.0
        %1856 = vmatprep.subr.mxu0 0.0
        %1857 = vmatpush1.msra.mxu0 0.0
        %1858 = vmatprep.subr.mxu0 0.0
        %1859 = vmatpush1.msra.mxu0 0.0
        %1860 = vmatprep.subr.mxu0 0.0
        %1861 = vmatpush1.msra.mxu0 0.0
        %1862 = vmatprep.subr.mxu0 0.0
        %1863 = vmatpush1.msra.mxu0 0.0
        %1864 = vmatprep.subr.mxu0 0.0
        %1865 = vmatpush1.msra.mxu0 0.0
        %1866 = vmatprep.subr.mxu0 0.0
        %1867 = vmatpush1.msra.mxu0 0.0
        %1868 = vmatprep.subr.mxu0 0.0
        %1869 = vmatpush1.msra.mxu0 0.0
        %1870 = vmatprep.subr.mxu0 0.0
        %1871 = vmatpush1.msra.mxu0 0.0
        %1872 = vmatprep.subr.mxu0 0.0
        %1873 = vmatpush1.msra.mxu0 0.0
        %1874 = vmatprep.subr.mxu0 0.0
        %1875 = vmatpush1.msra.mxu0 0.0
        %1876 = vmatprep.subr.mxu0 0.0
        %1877 = vmatpush1.msra.mxu0 0.0
        %1878 = vmatprep.subr.mxu0 0.0
        %1879 = vmatpush1.msra.mxu0 0.0
        %1880 = vmatprep.subr.mxu0 0.0
        %1881 = vmatpush1.msra.mxu0 0.0
        %1882 = vmatprep.subr.mxu0 0.0
        %1883 = vmatpush1.msra.mxu0 0.0
        %1884 = vmatprep.subr.mxu0 0.0
        %1885 = vmatpush1.msra.mxu0 0.0
        %1886 = vmatprep.subr.mxu0 0.0
        %1887 = vmatpush1.msra.mxu0 0.0
        %1888 = vmatprep.subr.mxu0 0.0
        %1889 = vmatpush1.msra.mxu0 0.0
        %1890 = vmatprep.subr.mxu0 0.0
        %1891 = vmatpush1.msra.mxu0 0.0
        %1892 = vmatprep.subr.mxu0 0.0
        %1893 = vmatpush1.msra.mxu0 0.0
        %1894 = vmatprep.mubr.f32.mxu0 0.0
        %1895 = vmatmul.mubr.f32.gmra.mrb[0].mxu0 %v1819
        %v1896 = vpop.f32.mrb[0].mxu0
        %v1897 = vadd.f32 0.0, %v1896
        %v1898 = vpop.f32.mrb[0].mxu0
        %1899 = vmatprep.mubr.f32.mxu0 0.0
        %1900 = vmatmul.mubr.f32.gmra.mrb[0].mxu0 %v1822
        %v1901 = vpop.f32.mrb[0].mxu0
        %v1902 = vadd.f32 0.0, %v1901
        %v1903 = vpop.f32.mrb[0].mxu0
        %1904 = vmatprep.mubr.f32.mxu0 0.0
        %1905 = vmatmul.mubr.f32.gmra.mrb[0].mxu0 %v1825
        %v1906 = vpop.f32.mrb[0].mxu0
        %v1907 = vadd.f32 0.0, %v1906
        %v1908 = vpop.f32.mrb[0].mxu0
        %1909 = vmatprep.mubr.f32.mxu0 0.0
        %1910 = vmatmul.mubr.f32.gmra.mrb[0].mxu0 %v1828
        %v1911 = vpop.f32.mrb[0].mxu0
        %v1912 = vadd.f32 0.0, %v1911
        %v1913 = vpop.f32.mrb[0].mxu0
        %1914 = vdwg.mxu0
        %v1916 = vsel %vm1407, %v1800, 0
        %v1919 = vsel %vm1407, %v1805, 0
        %v1922 = vsel %vm1407, %v1810, 0
        %v1925 = vsel %vm1407, %v1815, 0
        %1927 = vmatprep.subr.mxu0 0.0
        %1928 = vmatpush1.msra.mxu0 %v1716
        %1929 = vmatprep.subr.mxu0 0.0
        %1930 = vmatpush1.msra.mxu0 %v1717
        %1931 = vmatprep.subr.mxu0 0.0
        %1932 = vmatpush1.msra.mxu0 0.0
        %1933 = vmatprep.subr.mxu0 0.0
        %1934 = vmatpush1.msra.mxu0 0.0
        %1935 = vmatprep.subr.mxu0 0.0
        %1936 = vmatpush1.msra.mxu0 0.0
        %1937 = vmatprep.subr.mxu0 0.0
        %1938 = vmatpush1.msra.mxu0 0.0
        %1939 = vmatprep.subr.mxu0 0.0
        %1940 = vmatpush1.msra.mxu0 0.0
        %1941 = vmatprep.subr.mxu0 0.0
        %1942 = vmatpush1.msra.mxu0 0.0
        %1943 = vmatprep.subr.mxu0 0.0
        %1944 = vmatpush1.msra.mxu0 0.0
        %1945 = vmatprep.subr.mxu0 0.0
        %1946 = vmatpush1.msra.mxu0 0.0
        %1947 = vmatprep.subr.mxu0 0.0
        %1948 = vmatpush1.msra.mxu0 0.0
        %1949 = vmatprep.subr.mxu0 0.0
        %1950 = vmatpush1.msra.mxu0 0.0
        %1951 = vmatprep.subr.mxu0 0.0
        %1952 = vmatpush1.msra.mxu0 0.0
        %1953 = vmatprep.subr.mxu0 0.0
        %1954 = vmatpush1.msra.mxu0 0.0
        %1955 = vmatprep.subr.mxu0 0.0
        %1956 = vmatpush1.msra.mxu0 0.0
        %1957 = vmatprep.subr.mxu0 0.0
        %1958 = vmatpush1.msra.mxu0 0.0
        %1959 = vmatprep.subr.mxu0 0.0
        %1960 = vmatpush1.msra.mxu0 0.0
        %1961 = vmatprep.subr.mxu0 0.0
        %1962 = vmatpush1.msra.mxu0 0.0
        %1963 = vmatprep.subr.mxu0 0.0
        %1964 = vmatpush1.msra.mxu0 0.0
        %1965 = vmatprep.subr.mxu0 0.0
        %1966 = vmatpush1.msra.mxu0 0.0
        %1967 = vmatprep.subr.mxu0 0.0
        %1968 = vmatpush1.msra.mxu0 0.0
        %1969 = vmatprep.subr.mxu0 0.0
        %1970 = vmatpush1.msra.mxu0 0.0
        %1971 = vmatprep.subr.mxu0 0.0
        %1972 = vmatpush1.msra.mxu0 0.0
        %1973 = vmatprep.subr.mxu0 0.0
        %1974 = vmatpush1.msra.mxu0 0.0
        %1975 = vmatprep.subr.mxu0 0.0
        %1976 = vmatpush1.msra.mxu0 0.0
        %1977 = vmatprep.subr.mxu0 0.0
        %1978 = vmatpush1.msra.mxu0 0.0
        %1979 = vmatprep.subr.mxu0 0.0
        %1980 = vmatpush1.msra.mxu0 0.0
        %1981 = vmatprep.subr.mxu0 0.0
        %1982 = vmatpush1.msra.mxu0 0.0
        %1983 = vmatprep.subr.mxu0 0.0
        %1984 = vmatpush1.msra.mxu0 0.0
        %1985 = vmatprep.subr.mxu0 0.0
        %1986 = vmatpush1.msra.mxu0 0.0
        %1987 = vmatprep.subr.mxu0 0.0
        %1988 = vmatpush1.msra.mxu0 0.0
        %1989 = vmatprep.subr.mxu0 0.0
        %1990 = vmatpush1.msra.mxu0 0.0
        %1991 = vmatprep.mubr.f32.mxu0 0.0
        %1992 = vmatmul.mubr.f32.gmra.mrb[0].mxu0 %v1916
        %v1993 = vpop.f32.mrb[0].mxu0
        %v1994 = vadd.f32 %v1897, %v1993
        %v1995 = vpop.f32.mrb[0].mxu0
        %1996 = vmatprep.mubr.f32.mxu0 0.0
        %1997 = vmatmul.mubr.f32.gmra.mrb[0].mxu0 %v1919
        %v1998 = vpop.f32.mrb[0].mxu0
        %v1999 = vadd.f32 %v1902, %v1998
        %v2000 = vpop.f32.mrb[0].mxu0
        %2001 = vmatprep.mubr.f32.mxu0 0.0
        %2002 = vmatmul.mubr.f32.gmra.mrb[0].mxu0 %v1922
        %v2003 = vpop.f32.mrb[0].mxu0
        %v2004 = vadd.f32 %v1907, %v2003
        %v2005 = vpop.f32.mrb[0].mxu0
        %2006 = vmatprep.mubr.f32.mxu0 0.0
        %2007 = vmatmul.mubr.f32.gmra.mrb[0].mxu0 %v1925
        %v2008 = vpop.f32.mrb[0].mxu0
        %v2009 = vadd.f32 %v1912, %v2008
        %v2010 = vpop.f32.mrb[0].mxu0
        %2011 = vdwg.mxu0
        %v2012 = vlaneseq
        %v2013 = vshrl.u32 %v2012, 7
        %v2014 = vsub.s32 0, %v2013
        %v2015 = vrot.slane %v1720, %v2014
        %v2016 = vadd.f32 %v1994, %v2015
        %v2017 = vadd.f32 %v1999, %v2015
        %v2018 = vadd.f32 %v2004, %v2015
        %v2019 = vadd.f32 %v2009, %v2015
        %v2020 = vmax.f32 %v2016, 0.0
        %v2021 = vmax.f32 %v2017, 0.0
        %v2022 = vmax.f32 %v2018, 0.0
        %v2023 = vmax.f32 %v2019, 0.0
        %v2024 = vld [vmem:[#allocation6 + $0x130] sm:$0xff]
        %v2025 = vld [vmem:[#allocation6 + $0x138] sm:$0xff]
        %v2026 = vld [vmem:[#allocation6 + $0x140] sm:$0x1]
        %2027 = vmatprep.subr.mxu0 0.0
        %2028 = vmatpush1.msra.mxu0 %v2020
        %2029 = vmatprep.subr.mxu0 0.0
        %2030 = vmatpush1.msra.mxu0 %v2021
        %2031 = vmatprep.subr.mxu0 0.0
        %2032 = vmatpush1.msra.mxu0 %v2022
        %2033 = vmatprep.subr.mxu0 0.0
        %2034 = vmatpush1.msra.mxu0 %v2023
        %2035 = vmatprep.subr.mxu0 0.0
        %2036 = vmatpush1.msra.mxu0 0.0
        %2037 = vmatprep.subr.mxu0 0.0
        %2038 = vmatpush1.msra.mxu0 0.0
        %2039 = vmatprep.subr.mxu0 0.0
        %2040 = vmatpush1.msra.mxu0 0.0
        %2041 = vmatprep.subr.mxu0 0.0
        %2042 = vmatpush1.msra.mxu0 0.0
        %2043 = vmatprep.subr.mxu0 0.0
        %2044 = vmatpush1.msra.mxu0 0.0
        %2045 = vmatprep.subr.mxu0 0.0
        %2046 = vmatpush1.msra.mxu0 0.0
        %2047 = vmatprep.subr.mxu0 0.0
        %2048 = vmatpush1.msra.mxu0 0.0
        %2049 = vmatprep.subr.mxu0 0.0
        %2050 = vmatpush1.msra.mxu0 0.0
        %2051 = vmatprep.subr.mxu0 0.0
        %2052 = vmatpush1.msra.mxu0 0.0
        %2053 = vmatprep.subr.mxu0 0.0
        %2054 = vmatpush1.msra.mxu0 0.0
        %2055 = vmatprep.subr.mxu0 0.0
        %2056 = vmatpush1.msra.mxu0 0.0
        %2057 = vmatprep.subr.mxu0 0.0
        %2058 = vmatpush1.msra.mxu0 0.0
        %2059 = vmatprep.subr.mxu0 0.0
        %2060 = vmatpush1.msra.mxu0 0.0
        %2061 = vmatprep.subr.mxu0 0.0
        %2062 = vmatpush1.msra.mxu0 0.0
        %2063 = vmatprep.subr.mxu0 0.0
        %2064 = vmatpush1.msra.mxu0 0.0
        %2065 = vmatprep.subr.mxu0 0.0
        %2066 = vmatpush1.msra.mxu0 0.0
        %2067 = vmatprep.subr.mxu0 0.0
        %2068 = vmatpush1.msra.mxu0 0.0
        %2069 = vmatprep.subr.mxu0 0.0
        %2070 = vmatpush1.msra.mxu0 0.0
        %2071 = vmatprep.subr.mxu0 0.0
        %2072 = vmatpush1.msra.mxu0 0.0
        %2073 = vmatprep.subr.mxu0 0.0
        %2074 = vmatpush1.msra.mxu0 0.0
        %2075 = vmatprep.subr.mxu0 0.0
        %2076 = vmatpush1.msra.mxu0 0.0
        %2077 = vmatprep.subr.mxu0 0.0
        %2078 = vmatpush1.msra.mxu0 0.0
        %2079 = vmatprep.subr.mxu0 0.0
        %2080 = vmatpush1.msra.mxu0 0.0
        %2081 = vmatprep.subr.mxu0 0.0
        %2082 = vmatpush1.msra.mxu0 0.0
        %2083 = vmatprep.subr.mxu0 0.0
        %2084 = vmatpush1.msra.mxu0 0.0
        %2085 = vmatprep.subr.mxu0 0.0
        %2086 = vmatpush1.msra.mxu0 0.0
        %2087 = vmatprep.subr.mxu0 0.0
        %2088 = vmatpush1.msra.mxu0 0.0
        %2089 = vmatprep.subr.mxu0 0.0
        %2090 = vmatpush1.msra.mxu0 0.0
        %2091 = vmatprep.mubr.f32.mxu0 0.0
        %2092 = vmatmul.mubr.f32.gmra.mrb[0].mxu0 %v1722
        %v2093 = vpop.f32.mrb[0].mxu0
        %v2094 = vadd.f32 0.0, %v2093
        %v2095 = vpop.f32.mrb[0].mxu0
        %2096 = vmatprep.mubr.f32.mxu0 0.0
        %2097 = vmatmul.mubr.f32.gmra.mrb[0].mxu0 %v1725
        %v2098 = vpop.f32.mrb[0].mxu0
        %v2099 = vadd.f32 0.0, %v2098
        %v2100 = vpop.f32.mrb[0].mxu0
        %2101 = vmatprep.mubr.f32.mxu0 0.0
        %2102 = vmatmul.mubr.f32.gmra.mrb[0].mxu0 %v1728
        %v2103 = vpop.f32.mrb[0].mxu0
        %v2104 = vadd.f32 0.0, %v2103
        %v2105 = vpop.f32.mrb[0].mxu0
        %2106 = vmatprep.mubr.f32.mxu0 0.0
        %2107 = vmatmul.mubr.f32.gmra.mrb[0].mxu0 %v1731
        %v2108 = vpop.f32.mrb[0].mxu0
        %v2109 = vadd.f32 0.0, %v2108
        %v2110 = vpop.f32.mrb[0].mxu0
        %2111 = vdwg.mxu0
        %v2113 = vsel %vm399, %v2020, 0
        %v2116 = vsel %vm399, %v2021, 0
        %v2119 = vsel %vm399, %v2022, 0
        %v2122 = vsel %vm399, %v2023, 0
        %2124 = vmatprep.subr.mxu0 0.0
        %2125 = vmatpush1.msra.mxu0 %v2025
        %2126 = vmatprep.subr.mxu0 0.0
        %2127 = vmatpush1.msra.mxu0 0.0
        %2128 = vmatprep.subr.mxu0 0.0
        %2129 = vmatpush1.msra.mxu0 0.0
        %2130 = vmatprep.subr.mxu0 0.0
        %2131 = vmatpush1.msra.mxu0 0.0
        %2132 = vmatprep.subr.mxu0 0.0
        %2133 = vmatpush1.msra.mxu0 0.0
        %2134 = vmatprep.subr.mxu0 0.0
        %2135 = vmatpush1.msra.mxu0 0.0
        %2136 = vmatprep.subr.mxu0 0.0
        %2137 = vmatpush1.msra.mxu0 0.0
        %2138 = vmatprep.subr.mxu0 0.0
        %2139 = vmatpush1.msra.mxu0 0.0
        %2140 = vmatprep.subr.mxu0 0.0
        %2141 = vmatpush1.msra.mxu0 0.0
        %2142 = vmatprep.subr.mxu0 0.0
        %2143 = vmatpush1.msra.mxu0 0.0
        %2144 = vmatprep.subr.mxu0 0.0
        %2145 = vmatpush1.msra.mxu0 0.0
        %2146 = vmatprep.subr.mxu0 0.0
        %2147 = vmatpush1.msra.mxu0 0.0
        %2148 = vmatprep.subr.mxu0 0.0
        %2149 = vmatpush1.msra.mxu0 0.0
        %2150 = vmatprep.subr.mxu0 0.0
        %2151 = vmatpush1.msra.mxu0 0.0
        %2152 = vmatprep.subr.mxu0 0.0
        %2153 = vmatpush1.msra.mxu0 0.0
        %2154 = vmatprep.subr.mxu0 0.0
        %2155 = vmatpush1.msra.mxu0 0.0
        %2156 = vmatprep.subr.mxu0 0.0
        %2157 = vmatpush1.msra.mxu0 0.0
        %2158 = vmatprep.subr.mxu0 0.0
        %2159 = vmatpush1.msra.mxu0 0.0
        %2160 = vmatprep.subr.mxu0 0.0
        %2161 = vmatpush1.msra.mxu0 0.0
        %2162 = vmatprep.subr.mxu0 0.0
        %2163 = vmatpush1.msra.mxu0 0.0
        %2164 = vmatprep.subr.mxu0 0.0
        %2165 = vmatpush1.msra.mxu0 0.0
        %2166 = vmatprep.subr.mxu0 0.0
        %2167 = vmatpush1.msra.mxu0 0.0
        %2168 = vmatprep.subr.mxu0 0.0
        %2169 = vmatpush1.msra.mxu0 0.0
        %2170 = vmatprep.subr.mxu0 0.0
        %2171 = vmatpush1.msra.mxu0 0.0
        %2172 = vmatprep.subr.mxu0 0.0
        %2173 = vmatpush1.msra.mxu0 0.0
        %2174 = vmatprep.subr.mxu0 0.0
        %2175 = vmatpush1.msra.mxu0 0.0
        %2176 = vmatprep.subr.mxu0 0.0
        %2177 = vmatpush1.msra.mxu0 0.0
        %2178 = vmatprep.subr.mxu0 0.0
        %2179 = vmatpush1.msra.mxu0 0.0
        %2180 = vmatprep.subr.mxu0 0.0
        %2181 = vmatpush1.msra.mxu0 0.0
        %2182 = vmatprep.subr.mxu0 0.0
        %2183 = vmatpush1.msra.mxu0 0.0
        %2184 = vmatprep.subr.mxu0 0.0
        %2185 = vmatpush1.msra.mxu0 0.0
        %2186 = vmatprep.subr.mxu0 0.0
        %2187 = vmatpush1.msra.mxu0 0.0
        %2188 = vmatprep.mubr.f32.mxu0 0.0
        %2189 = vmatmul.mubr.f32.gmra.mrb[0].mxu0 %v2113
        %v2190 = vpop.f32.mrb[0].mxu0
        %v2191 = vadd.f32 0.0, %v2190
        %v2192 = vpop.f32.mrb[0].mxu0
        %2193 = vmatprep.mubr.f32.mxu0 0.0
        %2194 = vmatmul.mubr.f32.gmra.mrb[0].mxu0 %v2116
        %v2195 = vpop.f32.mrb[0].mxu0
        %v2196 = vadd.f32 0.0, %v2195
        %v2197 = vpop.f32.mrb[0].mxu0
        %2198 = vmatprep.mubr.f32.mxu0 0.0
        %2199 = vmatmul.mubr.f32.gmra.mrb[0].mxu0 %v2119
        %v2200 = vpop.f32.mrb[0].mxu0
        %v2201 = vadd.f32 0.0, %v2200
        %v2202 = vpop.f32.mrb[0].mxu0
        %2203 = vmatprep.mubr.f32.mxu0 0.0
        %2204 = vmatmul.mubr.f32.gmra.mrb[0].mxu0 %v2122
        %v2205 = vpop.f32.mrb[0].mxu0
        %v2206 = vadd.f32 0.0, %v2205
        %v2207 = vpop.f32.mrb[0].mxu0
        %2208 = vdwg.mxu0
        %v2210 = vsel %vm399, %v2094, 0
        %v2213 = vsel %vm399, %v2099, 0
        %v2216 = vsel %vm399, %v2104, 0
        %v2219 = vsel %vm399, %v2109, 0
        %2221 = vmatprep.subr.mxu0 0.0
        %2222 = vmatpush1.msra.mxu0 %v2024
        %2223 = vmatprep.subr.mxu0 0.0
        %2224 = vmatpush1.msra.mxu0 0.0
        %2225 = vmatprep.subr.mxu0 0.0
        %2226 = vmatpush1.msra.mxu0 0.0
        %2227 = vmatprep.subr.mxu0 0.0
        %2228 = vmatpush1.msra.mxu0 0.0
        %2229 = vmatprep.subr.mxu0 0.0
        %2230 = vmatpush1.msra.mxu0 0.0
        %2231 = vmatprep.subr.mxu0 0.0
        %2232 = vmatpush1.msra.mxu0 0.0
        %2233 = vmatprep.subr.mxu0 0.0
        %2234 = vmatpush1.msra.mxu0 0.0
        %2235 = vmatprep.subr.mxu0 0.0
        %2236 = vmatpush1.msra.mxu0 0.0
        %2237 = vmatprep.subr.mxu0 0.0
        %2238 = vmatpush1.msra.mxu0 0.0
        %2239 = vmatprep.subr.mxu0 0.0
        %2240 = vmatpush1.msra.mxu0 0.0
        %2241 = vmatprep.subr.mxu0 0.0
        %2242 = vmatpush1.msra.mxu0 0.0
        %2243 = vmatprep.subr.mxu0 0.0
        %2244 = vmatpush1.msra.mxu0 0.0
        %2245 = vmatprep.subr.mxu0 0.0
        %2246 = vmatpush1.msra.mxu0 0.0
        %2247 = vmatprep.subr.mxu0 0.0
        %2248 = vmatpush1.msra.mxu0 0.0
        %2249 = vmatprep.subr.mxu0 0.0
        %2250 = vmatpush1.msra.mxu0 0.0
        %2251 = vmatprep.subr.mxu0 0.0
        %2252 = vmatpush1.msra.mxu0 0.0
        %2253 = vmatprep.subr.mxu0 0.0
        %2254 = vmatpush1.msra.mxu0 0.0
        %2255 = vmatprep.subr.mxu0 0.0
        %2256 = vmatpush1.msra.mxu0 0.0
        %2257 = vmatprep.subr.mxu0 0.0
        %2258 = vmatpush1.msra.mxu0 0.0
        %2259 = vmatprep.subr.mxu0 0.0
        %2260 = vmatpush1.msra.mxu0 0.0
        %2261 = vmatprep.subr.mxu0 0.0
        %2262 = vmatpush1.msra.mxu0 0.0
        %2263 = vmatprep.subr.mxu0 0.0
        %2264 = vmatpush1.msra.mxu0 0.0
        %2265 = vmatprep.subr.mxu0 0.0
        %2266 = vmatpush1.msra.mxu0 0.0
        %2267 = vmatprep.subr.mxu0 0.0
        %2268 = vmatpush1.msra.mxu0 0.0
        %2269 = vmatprep.subr.mxu0 0.0
        %2270 = vmatpush1.msra.mxu0 0.0
        %2271 = vmatprep.subr.mxu0 0.0
        %2272 = vmatpush1.msra.mxu0 0.0
        %2273 = vmatprep.subr.mxu0 0.0
        %2274 = vmatpush1.msra.mxu0 0.0
        %2275 = vmatprep.subr.mxu0 0.0
        %2276 = vmatpush1.msra.mxu0 0.0
        %2277 = vmatprep.subr.mxu0 0.0
        %2278 = vmatpush1.msra.mxu0 0.0
        %2279 = vmatprep.subr.mxu0 0.0
        %2280 = vmatpush1.msra.mxu0 0.0
        %2281 = vmatprep.subr.mxu0 0.0
        %2282 = vmatpush1.msra.mxu0 0.0
        %2283 = vmatprep.subr.mxu0 0.0
        %2284 = vmatpush1.msra.mxu0 0.0
        %2285 = vmatprep.mubr.f32.mxu0 0.0
        %2286 = vmatmul.mubr.f32.gmra.mrb[0].mxu0 %v2210
        %v2287 = vpop.f32.mrb[0].mxu0
        %v2288 = vadd.f32 %v2191, %v2287
        %v2289 = vpop.f32.mrb[0].mxu0
        %2290 = vmatprep.mubr.f32.mxu0 0.0
        %2291 = vmatmul.mubr.f32.gmra.mrb[0].mxu0 %v2213
        %v2292 = vpop.f32.mrb[0].mxu0
        %v2293 = vadd.f32 %v2196, %v2292
        %v2294 = vpop.f32.mrb[0].mxu0
        %2295 = vmatprep.mubr.f32.mxu0 0.0
        %2296 = vmatmul.mubr.f32.gmra.mrb[0].mxu0 %v2216
        %v2297 = vpop.f32.mrb[0].mxu0
        %v2298 = vadd.f32 %v2201, %v2297
        %v2299 = vpop.f32.mrb[0].mxu0
        %2300 = vmatprep.mubr.f32.mxu0 0.0
        %2301 = vmatmul.mubr.f32.gmra.mrb[0].mxu0 %v2219
        %v2302 = vpop.f32.mrb[0].mxu0
        %v2303 = vadd.f32 %v2206, %v2302
        %v2304 = vpop.f32.mrb[0].mxu0
        %2305 = vdwg.mxu0
        %v2306 = vlaneseq
        %v2307 = vshrl.u32 %v2306, 7
        %v2308 = vsub.s32 0, %v2307
        %v2309 = vrot.slane %v2026, %v2308
        %v2310 = vadd.f32 %v2288, %v2309
        %v2311 = vadd.f32 %v2293, %v2309
        %v2312 = vadd.f32 %v2298, %v2309
        %v2313 = vadd.f32 %v2303, %v2309
        %v2314 = vmax.f32 %v2310, 0.0
        %v2315 = vmax.f32 %v2311, 0.0
        %v2316 = vmax.f32 %v2312, 0.0
        %v2317 = vmax.f32 %v2313, 0.0
        %v2318 = vld [vmem:[#allocation6 + $0x148] sm:$0xff]
        %v2319 = vld [vmem:[#allocation6 + $0x150] sm:$0xff]
        %v2320 = vld [vmem:[#allocation6 + $0x158] sm:$0x1]
        %v2321 = vlaneseq
        %v2322 = vshrl.u32 %v2321, 7
        %v2323 = vsub.s32 0, %v2322
        %v2324 = vrot.slane %v2320, %v2323
        %2325 = vmatprep.subr.mxu0 0.0
        %2326 = vmatpush1.msra.mxu0 %v2318
        %2327 = vmatprep.subr.mxu0 0.0
        %2328 = vmatpush1.msra.mxu0 %v2319
        %2329 = vmatprep.subr.mxu0 0.0
        %2330 = vmatpush1.msra.mxu0 0.0
        %2331 = vmatprep.subr.mxu0 0.0
        %2332 = vmatpush1.msra.mxu0 0.0
        %2333 = vmatprep.subr.mxu0 0.0
        %2334 = vmatpush1.msra.mxu0 0.0
        %2335 = vmatprep.subr.mxu0 0.0
        %2336 = vmatpush1.msra.mxu0 0.0
        %2337 = vmatprep.subr.mxu0 0.0
        %2338 = vmatpush1.msra.mxu0 0.0
        %2339 = vmatprep.subr.mxu0 0.0
        %2340 = vmatpush1.msra.mxu0 0.0
        %2341 = vmatprep.subr.mxu0 0.0
        %2342 = vmatpush1.msra.mxu0 0.0
        %2343 = vmatprep.subr.mxu0 0.0
        %2344 = vmatpush1.msra.mxu0 0.0
        %2345 = vmatprep.subr.mxu0 0.0
        %2346 = vmatpush1.msra.mxu0 0.0
        %2347 = vmatprep.subr.mxu0 0.0
        %2348 = vmatpush1.msra.mxu0 0.0
        %2349 = vmatprep.subr.mxu0 0.0
        %2350 = vmatpush1.msra.mxu0 0.0
        %2351 = vmatprep.subr.mxu0 0.0
        %2352 = vmatpush1.msra.mxu0 0.0
        %2353 = vmatprep.subr.mxu0 0.0
        %2354 = vmatpush1.msra.mxu0 0.0
        %2355 = vmatprep.subr.mxu0 0.0
        %2356 = vmatpush1.msra.mxu0 0.0
        %2357 = vmatprep.subr.mxu0 0.0
        %2358 = vmatpush1.msra.mxu0 0.0
        %2359 = vmatprep.subr.mxu0 0.0
        %2360 = vmatpush1.msra.mxu0 0.0
        %2361 = vmatprep.subr.mxu0 0.0
        %2362 = vmatpush1.msra.mxu0 0.0
        %2363 = vmatprep.subr.mxu0 0.0
        %2364 = vmatpush1.msra.mxu0 0.0
        %2365 = vmatprep.subr.mxu0 0.0
        %2366 = vmatpush1.msra.mxu0 0.0
        %2367 = vmatprep.subr.mxu0 0.0
        %2368 = vmatpush1.msra.mxu0 0.0
        %2369 = vmatprep.subr.mxu0 0.0
        %2370 = vmatpush1.msra.mxu0 0.0
        %2371 = vmatprep.subr.mxu0 0.0
        %2372 = vmatpush1.msra.mxu0 0.0
        %2373 = vmatprep.subr.mxu0 0.0
        %2374 = vmatpush1.msra.mxu0 0.0
        %2375 = vmatprep.subr.mxu0 0.0
        %2376 = vmatpush1.msra.mxu0 0.0
        %2377 = vmatprep.subr.mxu0 0.0
        %2378 = vmatpush1.msra.mxu0 0.0
        %2379 = vmatprep.subr.mxu0 0.0
        %2380 = vmatpush1.msra.mxu0 0.0
        %2381 = vmatprep.subr.mxu0 0.0
        %2382 = vmatpush1.msra.mxu0 0.0
        %2383 = vmatprep.subr.mxu0 0.0
        %2384 = vmatpush1.msra.mxu0 0.0
        %2385 = vmatprep.subr.mxu0 0.0
        %2386 = vmatpush1.msra.mxu0 0.0
        %2387 = vmatprep.subr.mxu0 0.0
        %2388 = vmatpush1.msra.mxu0 0.0
        %2389 = vmatprep.mubr.f32.mxu0 0.0
        %2390 = vmatmul.mubr.f32.gmra.mrb[0].mxu0 %v1819
        %v2391 = vpop.f32.mrb[0].mxu0
        %v2392 = vadd.f32 %v2324, %v2391
        %v2393 = vpop.f32.mrb[0].mxu0
        %2394 = vmatprep.mubr.f32.mxu0 0.0
        %2395 = vmatmul.mubr.f32.gmra.mrb[0].mxu0 %v1822
        %v2396 = vpop.f32.mrb[0].mxu0
        %v2397 = vadd.f32 %v2324, %v2396
        %v2398 = vpop.f32.mrb[0].mxu0
        %2399 = vmatprep.mubr.f32.mxu0 0.0
        %2400 = vmatmul.mubr.f32.gmra.mrb[0].mxu0 %v1825
        %v2401 = vpop.f32.mrb[0].mxu0
        %v2402 = vadd.f32 %v2324, %v2401
        %v2403 = vpop.f32.mrb[0].mxu0
        %2404 = vmatprep.mubr.f32.mxu0 0.0
        %2405 = vmatmul.mubr.f32.gmra.mrb[0].mxu0 %v1828
        %v2406 = vpop.f32.mrb[0].mxu0
        %v2407 = vadd.f32 %v2324, %v2406
        %v2408 = vpop.f32.mrb[0].mxu0
        %2409 = vdwg.mxu0
        %v2410 = vadd.f32 %v2314, %v2392
        %v2411 = vadd.f32 %v2315, %v2397
        %v2412 = vadd.f32 %v2316, %v2402
        %v2413 = vadd.f32 %v2317, %v2407
        %v2414 = vmax.f32 %v2410, 0.0
        %v2415 = vmax.f32 %v2411, 0.0
        %v2416 = vmax.f32 %v2412, 0.0
        %v2417 = vmax.f32 %v2413, 0.0
        %v2418 = vld [vmem:[#allocation6 + $0x160] sm:$0xff]
        %v2419 = vld [vmem:[#allocation6 + $0x168] sm:$0x1]
        %v2420 = vlaneseq
        %v2421 = vshrl.u32 %v2420, 7
        %v2422 = vsub.s32 0, %v2421
        %v2423 = vrot.slane %v2419, %v2422
        %v2425 = vsel %vm399, %v2414, 0
        %v2428 = vsel %vm399, %v2415, 0
        %v2431 = vsel %vm399, %v2416, 0
        %v2434 = vsel %vm399, %v2417, 0
        %2436 = vmatprep.subr.mxu0 0.0
        %2437 = vmatpush1.msra.mxu0 %v2418
        %2438 = vmatprep.subr.mxu0 0.0
        %2439 = vmatpush1.msra.mxu0 0.0
        %2440 = vmatprep.subr.mxu0 0.0
        %2441 = vmatpush1.msra.mxu0 0.0
        %2442 = vmatprep.subr.mxu0 0.0
        %2443 = vmatpush1.msra.mxu0 0.0
        %2444 = vmatprep.subr.mxu0 0.0
        %2445 = vmatpush1.msra.mxu0 0.0
        %2446 = vmatprep.subr.mxu0 0.0
        %2447 = vmatpush1.msra.mxu0 0.0
        %2448 = vmatprep.subr.mxu0 0.0
        %2449 = vmatpush1.msra.mxu0 0.0
        %2450 = vmatprep.subr.mxu0 0.0
        %2451 = vmatpush1.msra.mxu0 0.0
        %2452 = vmatprep.subr.mxu0 0.0
        %2453 = vmatpush1.msra.mxu0 0.0
        %2454 = vmatprep.subr.mxu0 0.0
        %2455 = vmatpush1.msra.mxu0 0.0
        %2456 = vmatprep.subr.mxu0 0.0
        %2457 = vmatpush1.msra.mxu0 0.0
        %2458 = vmatprep.subr.mxu0 0.0
        %2459 = vmatpush1.msra.mxu0 0.0
        %2460 = vmatprep.subr.mxu0 0.0
        %2461 = vmatpush1.msra.mxu0 0.0
        %2462 = vmatprep.subr.mxu0 0.0
        %2463 = vmatpush1.msra.mxu0 0.0
        %2464 = vmatprep.subr.mxu0 0.0
        %2465 = vmatpush1.msra.mxu0 0.0
        %2466 = vmatprep.subr.mxu0 0.0
        %2467 = vmatpush1.msra.mxu0 0.0
        %2468 = vmatprep.subr.mxu0 0.0
        %2469 = vmatpush1.msra.mxu0 0.0
        %2470 = vmatprep.subr.mxu0 0.0
        %2471 = vmatpush1.msra.mxu0 0.0
        %2472 = vmatprep.subr.mxu0 0.0
        %2473 = vmatpush1.msra.mxu0 0.0
        %2474 = vmatprep.subr.mxu0 0.0
        %2475 = vmatpush1.msra.mxu0 0.0
        %2476 = vmatprep.subr.mxu0 0.0
        %2477 = vmatpush1.msra.mxu0 0.0
        %2478 = vmatprep.subr.mxu0 0.0
        %2479 = vmatpush1.msra.mxu0 0.0
        %2480 = vmatprep.subr.mxu0 0.0
        %2481 = vmatpush1.msra.mxu0 0.0
        %2482 = vmatprep.subr.mxu0 0.0
        %2483 = vmatpush1.msra.mxu0 0.0
        %2484 = vmatprep.subr.mxu0 0.0
        %2485 = vmatpush1.msra.mxu0 0.0
        %2486 = vmatprep.subr.mxu0 0.0
        %2487 = vmatpush1.msra.mxu0 0.0
        %2488 = vmatprep.subr.mxu0 0.0
        %2489 = vmatpush1.msra.mxu0 0.0
        %2490 = vmatprep.subr.mxu0 0.0
        %2491 = vmatpush1.msra.mxu0 0.0
        %2492 = vmatprep.subr.mxu0 0.0
        %2493 = vmatpush1.msra.mxu0 0.0
        %2494 = vmatprep.subr.mxu0 0.0
        %2495 = vmatpush1.msra.mxu0 0.0
        %2496 = vmatprep.subr.mxu0 0.0
        %2497 = vmatpush1.msra.mxu0 0.0
        %2498 = vmatprep.subr.mxu0 0.0
        %2499 = vmatpush1.msra.mxu0 0.0
        %2500 = vmatprep.mubr.f32.mxu0 0.0
        %2501 = vmatmul.mubr.f32.gmra.mrb[0].mxu0 %v2425
        %v2502 = vpop.f32.mrb[0].mxu0
        %v2503 = vadd.f32 %v2423, %v2502
        %v2504 = vpop.f32.mrb[0].mxu0
        %2505 = vmatprep.mubr.f32.mxu0 0.0
        %2506 = vmatmul.mubr.f32.gmra.mrb[0].mxu0 %v2428
        %v2507 = vpop.f32.mrb[0].mxu0
        %v2508 = vadd.f32 %v2423, %v2507
        %v2509 = vpop.f32.mrb[0].mxu0
        %2510 = vmatprep.mubr.f32.mxu0 0.0
        %2511 = vmatmul.mubr.f32.gmra.mrb[0].mxu0 %v2431
        %v2512 = vpop.f32.mrb[0].mxu0
        %v2513 = vadd.f32 %v2423, %v2512
        %v2514 = vpop.f32.mrb[0].mxu0
        %2515 = vmatprep.mubr.f32.mxu0 0.0
        %2516 = vmatmul.mubr.f32.gmra.mrb[0].mxu0 %v2434
        %v2517 = vpop.f32.mrb[0].mxu0
        %v2518 = vadd.f32 %v2423, %v2517
        %v2519 = vpop.f32.mrb[0].mxu0
        %2520 = vdwg.mxu0
        %v2525 = vrot.slane %v2508, 7
        %vm2526 = vcmask 1041409
        %v2527 = vsel %vm2526, %v2525, %v2503
        %v2528 = vrot.slane %v2513, 6
        %vm2529 = vcmask 1042434
        %v2530 = vsel %vm2529, %v2528, %v2527
        %v2531 = vrot.slane %v2518, 5
        %vm2532 = vcmask 1043459
        %v2533 = vsel %vm2532, %v2531, %v2530
        %vm2535 = vcmask 60416
        %2536 = vst.msk [vmem:[#allocation3] sm:$0xf] %vm2535, %v2533
        %v2537 = vsel %vm2529, %v2525, %v2503
        %v2538 = vsel %vm2532, %v2528, %v2537
        %vm2539 = vcmask 1044484
        %v2540 = vsel %vm2539, %v2531, %v2538
        %2541 = vrot.lane.b32.xlu0 %v2540, 8
        %v2542 = vpop.permute.xlu0 %2541
        %vm2544 = vcmask 127041
        %2545 = vst.msk [vmem:[#allocation3 - $0x1] sm:$0x1e] %vm2544, %v2542
        %v2546 = vsel %vm2532, %v2525, %v2503
        %v2547 = vsel %vm2539, %v2528, %v2546
        %vm2548 = vcmask 1045509
        %v2549 = vsel %vm2548, %v2531, %v2547
        %2550 = vrot.lane.b32.xlu0 %v2549, 16
        %v2551 = vpop.permute.xlu0 %2550
        %vm2553 = vcmask 193666
        %2554 = vst.msk [vmem:[#allocation3 - $0x2] sm:$0x3c] %vm2553, %v2551
        %v2555 = vsel %vm2539, %v2525, %v2503
        %v2556 = vsel %vm2548, %v2528, %v2555
        %vm2557 = vcmask 1046534
        %v2558 = vsel %vm2557, %v2531, %v2556
        %2559 = vrot.lane.b32.xlu0 %v2558, 24
        %v2560 = vpop.permute.xlu0 %2559
        %vm2562 = vcmask 260291
        %2563 = vst.msk [vmem:[#allocation3 - $0x3] sm:$0x78] %vm2562, %v2560
        %v2564 = vsel %vm2548, %v2525, %v2503
        %v2565 = vsel %vm2557, %v2528, %v2564
        %vm2566 = vcmask 1047559
        %v2567 = vsel %vm2566, %v2531, %v2565
        %2568 = vrot.lane.b32.xlu0 %v2567, 32
        %v2569 = vpop.permute.xlu0 %2568
        %vm2571 = vcmask 326916
        %2572 = vst.msk [vmem:[#allocation3 - $0x4] sm:$0xf0] %vm2571, %v2569
        %v2573 = vsel %vm2557, %v2525, %v2503
        %v2574 = vsel %vm2566, %v2528, %v2573
        %2575 = vrot.lane.b32.xlu0 %v2574, 40
        %v2576 = vpop.permute.xlu0 %2575
        %2577 = vrot.lane.b32.xlu0 %v2531, 40
        %v2578 = vpop.permute.xlu0 %2577
        %vm2581 = vcmask 392517
        %2582 = vst.msk [vmem:[#allocation3 - $0x5] sm:$0xe0] %vm2581, %v2576
        %vm2583 = vcmask 385344
        %2584 = vst.msk [vmem:[#allocation3 + $0x3] sm:$0x1] %vm2583, %v2578
        %v2585 = vsel %vm2566, %v2525, %v2503
        %v2586 = vsel %vm2526, %v2531, %v2528
        %2587 = vrot.lane.b32.xlu0 %v2585, 48
        %v2588 = vpop.permute.xlu0 %2587
        %2589 = vrot.lane.b32.xlu0 %v2586, 48
        %v2590 = vpop.permute.xlu0 %2589
        %vm2593 = vcmask 458118
        %2594 = vst.msk [vmem:[#allocation3 - $0x6] sm:$0xc0] %vm2593, %v2588
        %vm2595 = vcmask 451968
        %2596 = vst.msk [vmem:[#allocation3 + $0x2] sm:$0x3] %vm2595, %v2590
        %v2597 = vsel %vm2526, %v2528, %v2525
        %v2598 = vsel %vm2529, %v2531, %v2597
        %2599 = vrot.lane.b32.xlu0 %v2503, 56
        %v2600 = vpop.permute.xlu0 %2599
        %2601 = vrot.lane.b32.xlu0 %v2598, 56
        %v2602 = vpop.permute.xlu0 %2601
        %vm2605 = vcmask 523719
        %2606 = vst.msk [vmem:[#allocation3 - $0x7] sm:$0x80] %vm2605, %v2600
        %vm2607 = vcmask 518592
        %2608 = vst.msk [vmem:[#allocation3 + $0x1] sm:$0x7] %vm2607, %v2602
        %v2609 = vld [vmem:[#allocation3] sm:$0xf]
        %v2610 = vld [vmem:[#allocation6 + $0x170] sm:$0xff]
        %v2611 = vld [vmem:[#allocation6 + $0x178] sm:$0xff]
        %v2612 = vld [vmem:[#allocation6 + $0x180] sm:$0xff]
        %v2613 = vld [vmem:[#allocation6 + $0x188] sm:$0xff]
        %v2614 = vld [vmem:[#allocation6 + $0x190] sm:$0xff]
        %v2615 = vld [vmem:[#allocation6 + $0x198] sm:$0xff]
        %v2616 = vld [vmem:[#allocation6 + $0x1a0] sm:$0xff]
        %v2617 = vld [vmem:[#allocation6 + $0x1a8] sm:$0xff]
        %vm2618 = vcmask 523264
        %v2620 = vsel %vm2618, %v2609, 0
        %2622 = vmatprep.subr.mxu0 0.0
        %2623 = vmatpush1.msra.mxu0 %v2610
        %2624 = vmatprep.subr.mxu0 0.0
        %2625 = vmatpush1.msra.mxu0 %v2611
        %2626 = vmatprep.subr.mxu0 0.0
        %2627 = vmatpush1.msra.mxu0 %v2612
        %2628 = vmatprep.subr.mxu0 0.0
        %2629 = vmatpush1.msra.mxu0 %v2613
        %2630 = vmatprep.subr.mxu0 0.0
        %2631 = vmatpush1.msra.mxu0 %v2614
        %2632 = vmatprep.subr.mxu0 0.0
        %2633 = vmatpush1.msra.mxu0 %v2615
        %2634 = vmatprep.subr.mxu0 0.0
        %2635 = vmatpush1.msra.mxu0 %v2616
        %2636 = vmatprep.subr.mxu0 0.0
        %2637 = vmatpush1.msra.mxu0 %v2617
        %2638 = vmatprep.subr.mxu0 0.0
        %2639 = vmatpush1.msra.mxu0 0.0
        %2640 = vmatprep.subr.mxu0 0.0
        %2641 = vmatpush1.msra.mxu0 0.0
        %2642 = vmatprep.subr.mxu0 0.0
        %2643 = vmatpush1.msra.mxu0 0.0
        %2644 = vmatprep.subr.mxu0 0.0
        %2645 = vmatpush1.msra.mxu0 0.0
        %2646 = vmatprep.subr.mxu0 0.0
        %2647 = vmatpush1.msra.mxu0 0.0
        %2648 = vmatprep.subr.mxu0 0.0
        %2649 = vmatpush1.msra.mxu0 0.0
        %2650 = vmatprep.subr.mxu0 0.0
        %2651 = vmatpush1.msra.mxu0 0.0
        %2652 = vmatprep.subr.mxu0 0.0
        %2653 = vmatpush1.msra.mxu0 0.0
        %2654 = vmatprep.subr.mxu0 0.0
        %2655 = vmatpush1.msra.mxu0 0.0
        %2656 = vmatprep.subr.mxu0 0.0
        %2657 = vmatpush1.msra.mxu0 0.0
        %2658 = vmatprep.subr.mxu0 0.0
        %2659 = vmatpush1.msra.mxu0 0.0
        %2660 = vmatprep.subr.mxu0 0.0
        %2661 = vmatpush1.msra.mxu0 0.0
        %2662 = vmatprep.subr.mxu0 0.0
        %2663 = vmatpush1.msra.mxu0 0.0
        %2664 = vmatprep.subr.mxu0 0.0
        %2665 = vmatpush1.msra.mxu0 0.0
        %2666 = vmatprep.subr.mxu0 0.0
        %2667 = vmatpush1.msra.mxu0 0.0
        %2668 = vmatprep.subr.mxu0 0.0
        %2669 = vmatpush1.msra.mxu0 0.0
        %2670 = vmatprep.subr.mxu0 0.0
        %2671 = vmatpush1.msra.mxu0 0.0
        %2672 = vmatprep.subr.mxu0 0.0
        %2673 = vmatpush1.msra.mxu0 0.0
        %2674 = vmatprep.subr.mxu0 0.0
        %2675 = vmatpush1.msra.mxu0 0.0
        %2676 = vmatprep.subr.mxu0 0.0
        %2677 = vmatpush1.msra.mxu0 0.0
        %2678 = vmatprep.subr.mxu0 0.0
        %2679 = vmatpush1.msra.mxu0 0.0
        %2680 = vmatprep.subr.mxu0 0.0
        %2681 = vmatpush1.msra.mxu0 0.0
        %2682 = vmatprep.subr.mxu0 0.0
        %2683 = vmatpush1.msra.mxu0 0.0
        %2684 = vmatprep.subr.mxu0 0.0
        %2685 = vmatpush1.msra.mxu0 0.0
        %2686 = vmatprep.mubr.f32.mxu0 0.0
        %2687 = vmatmul.mubr.f32.gmra.mrb[0].mxu0 %v2620
        %v2688 = vpop.f32.mrb[0].mxu0
        %v2689 = vadd.f32 0.0, %v2688
        %v2690 = vpop.f32.mrb[0].mxu0
        %2691 = vdwg.mxu0
        %v2692 = vld [vmem:[#allocation6 + $0x1b0] sm:$0x1]
        %v2693 = vld [vmem:[#allocation6 + $0x1b8] sm:$0x1]
        %v2694 = vlaneseq
        %v2695 = vshrl.u32 %v2694, 7
        %v2696 = vsub.s32 0, %v2695
        %v2697 = vrot.slane %v2692, %v2696
        %v2698 = vmul.f32 %v2689, %v2697
        %vm2699 = vcmask 519168
        %v2700 = vsel %vm2699, %v2698, 0.0
        %2701 = vadd.xlane.f32.xlu0 %v2700
        %v2702 = vpop.xlane.xlu0 %2701
        %v2703 = vlaneseq
        %v2704 = vshrl.u32 %v2703, 7
        %v2705 = vsub.s32 0, %v2704
        %v2706 = vrot.slane %v2693, %v2705
        %v2707 = vmul.f32 %v2689, %v2706
        %v2708 = vsel %vm2699, %v2707, 0.0
        %2709 = vadd.xlane.f32.xlu0 %v2708
        %v2710 = vpop.xlane.xlu0 %2709
        %v2712 = vlaneseq
        %v2713 = vshrl.u32 %v2712, 7
        %v2714 = vsub.s32 %v189, %v2713
        %v2715 = vrot.slane %v2702, %v2714
        %v2716 = vsel %vm2529, %v2715, %v2715
        %v2717 = vsel %vm2532, %v2715, %v2716
        %v2719 = vadd.f32 %v2710, %v2717
        %vm2720 = vcmp.gt.f32.partialorder %v2719, 0.0
        %v2721 = vmul.f32 %v2719, 0.2
        %v2722 = vsel %vm2720, %v2719, %v2721
        %vm2723 = vcmp.eq.s32.totalorder %v184, %v189
        %v2724 = vsel %vm2723, -1e+30, %v2722
        %vm2725 = vcmask 27648
        %v2726 = vsel %vm2725, %v2724, -inf
        %2727 = vmax.xlane.f32.xlu0 %v2726
        %v2728 = vpop.xlane.xlu0 %2727
        %v2729 = vsub.f32 %v2724, %v2728
        %v2730 = vmul.f32 %v2729, 1.442695
        %v2731 = vpow.pop %v2730
        %v2732 = vsel %vm2725, %v2731, 0.0
        %2733 = vadd.xlane.f32.xlu0 %v2732
        %v2734 = vpop.xlane.xlu0 %2733
        %v2735 = vrcp.pop %v2734
        %v2736 = vmul.f32 %v2731, %v2735
        %2738 = vset.pattern.permute.xlu0 0
        %2739 = vperm.xlu0 %2738, %v2736
        %v2740 = vpop.permute.xlu0 %2739
        %v2742 = vlaneseq
        %v2743 = vshrl.u32 %v2742, 7
        %v2744 = vsub.s32 0, %v2743
        %v2745 = vrot.slane %v2689, %v2744
        %v2746 = vmul.f32 %v2740, %v2745
        %v2747 = vadd.f32 %v2746, 0.0
        %2748 = vset.pattern.permute.xlu0 1
        %2749 = vperm.xlu0 %2748, %v2736
        %v2750 = vpop.permute.xlu0 %2749
        %v2752 = vlaneseq
        %v2753 = vshrl.u32 %v2752, 7
        %v2754 = vsub.s32 1, %v2753
        %v2755 = vrot.slane %v2689, %v2754
        %v2756 = vmul.f32 %v2750, %v2755
        %v2757 = vadd.f32 %v2747, %v2756
        %2758 = vset.pattern.permute.xlu0 2
        %2759 = vperm.xlu0 %2758, %v2736
        %v2760 = vpop.permute.xlu0 %2759
        %v2762 = vlaneseq
        %v2763 = vshrl.u32 %v2762, 7
        %v2764 = vsub.s32 2, %v2763
        %v2765 = vrot.slane %v2689, %v2764
        %v2766 = vmul.f32 %v2760, %v2765
        %v2767 = vadd.f32 %v2757, %v2766
        %2768 = vset.pattern.permute.xlu0 3
        %2769 = vperm.xlu0 %2768, %v2736
        %v2770 = vpop.permute.xlu0 %2769
        %v2772 = vlaneseq
        %v2773 = vshrl.u32 %v2772, 7
        %v2774 = vsub.s32 3, %v2773
        %v2775 = vrot.slane %v2689, %v2774
        %v2776 = vmul.f32 %v2770, %v2775
        %v2777 = vadd.f32 %v2767, %v2776
        %2778 = vst.msk [vmem:[%s178] sm:$0xf] %vm2699, %v2777
        %v2779 = vcombine.high %v179, %v179
        %v2781 = vunpack.c.l.s4 1966171168
        %v2782 = vunpack.c.0.s8 %v2781
        %v2783 = vlaneseq
        %v2784 = vshrl.u32 %v2783, 7
        %v2785 = vsub.s32 %v2782, %v2784
        %v2786 = vrot.slane %v179, %v2785
        %v2788 = vunpack.c.l.s4 1966171168
        %v2789 = vunpack.c.0.s8 %v2788
        %v2790 = vlaneseq
        %v2791 = vshrl.u32 %v2790, 7
        %v2792 = vsub.s32 %v2789, %v2791
        %v2793 = vrot.slane %v2779, %v2792
        %v2794 = vcombine.high %v2786, %v2786
        %v2795 = vcombine.high %v2793, %v2793
        %v2797 = vunpack.c.l.s4 1966171168
        %v2798 = vunpack.c.0.s8 %v2797
        %v2799 = vlaneseq
        %v2800 = vshrl.u32 %v2799, 7
        %v2801 = vsub.s32 %v2798, %v2800
        %v2802 = vrot.slane %v2786, %v2801
        %v2804 = vunpack.c.l.s4 1966171168
        %v2805 = vunpack.c.0.s8 %v2804
        %v2806 = vlaneseq
        %v2807 = vshrl.u32 %v2806, 7
        %v2808 = vsub.s32 %v2805, %v2807
        %v2809 = vrot.slane %v2793, %v2808
        %v2811 = vunpack.c.l.s4 1966171168
        %v2812 = vunpack.c.0.s8 %v2811
        %v2813 = vlaneseq
        %v2814 = vshrl.u32 %v2813, 7
        %v2815 = vsub.s32 %v2812, %v2814
        %v2816 = vrot.slane %v2794, %v2815
        %v2818 = vunpack.c.l.s4 1966171168
        %v2819 = vunpack.c.0.s8 %v2818
        %v2820 = vlaneseq
        %v2821 = vshrl.u32 %v2820, 7
        %v2822 = vsub.s32 %v2819, %v2821
        %v2823 = vrot.slane %v2795, %v2822
        %v2824 = vcombine.high %v2802, %v2802
        %v2825 = vcombine.high %v2809, %v2809
        %v2826 = vcombine.high %v2816, %v2816
        %vm2834 = vcmask 57344
        %2835 = vst.msk [vmem:[#allocation2] sm:$0x1] %vm2834, %v2802
        %2836 = vst.msk [vmem:[#allocation2 + $0x10] sm:$0x1] %vm2834, %v2816
        %2837 = vst.msk [vmem:[#allocation2 + $0x20] sm:$0x1] %vm2834, %v2824
        %2838 = vst.msk [vmem:[#allocation2 + $0x30] sm:$0x1] %vm2834, %v2826
        %2839 = vst.msk [vmem:[#allocation2 + $0x40] sm:$0x1] %vm2834, %v2809
        %2840 = vst.msk [vmem:[#allocation2 + $0x50] sm:$0x1] %vm2834, %v2823
        %2841 = vst.msk [vmem:[#allocation2 + $0x60] sm:$0x1] %vm2834, %v2825
        %v2842 = vcombine.high %v180, %v180
        %v2844 = vunpack.c.l.s4 1966171168
        %v2845 = vunpack.c.0.s8 %v2844
        %v2846 = vlaneseq
        %v2847 = vshrl.u32 %v2846, 7
        %v2848 = vsub.s32 %v2845, %v2847
        %v2849 = vrot.slane %v180, %v2848
        %v2851 = vunpack.c.l.s4 1966171168
        %v2852 = vunpack.c.0.s8 %v2851
        %v2853 = vlaneseq
        %v2854 = vshrl.u32 %v2853, 7
        %v2855 = vsub.s32 %v2852, %v2854
        %v2856 = vrot.slane %v2842, %v2855
        %v2857 = vcombine.high %v2849, %v2849
        %v2858 = vcombine.high %v2856, %v2856
        %v2860 = vunpack.c.l.s4 1966171168
        %v2861 = vunpack.c.0.s8 %v2860
        %v2862 = vlaneseq
        %v2863 = vshrl.u32 %v2862, 7
        %v2864 = vsub.s32 %v2861, %v2863
        %v2865 = vrot.slane %v2849, %v2864
        %v2867 = vunpack.c.l.s4 1966171168
        %v2868 = vunpack.c.0.s8 %v2867
        %v2869 = vlaneseq
        %v2870 = vshrl.u32 %v2869, 7
        %v2871 = vsub.s32 %v2868, %v2870
        %v2872 = vrot.slane %v2856, %v2871
        %v2874 = vunpack.c.l.s4 1966171168
        %v2875 = vunpack.c.0.s8 %v2874
        %v2876 = vlaneseq
        %v2877 = vshrl.u32 %v2876, 7
        %v2878 = vsub.s32 %v2875, %v2877
        %v2879 = vrot.slane %v2857, %v2878
        %v2881 = vunpack.c.l.s4 1966171168
        %v2882 = vunpack.c.0.s8 %v2881
        %v2883 = vlaneseq
        %v2884 = vshrl.u32 %v2883, 7
        %v2885 = vsub.s32 %v2882, %v2884
        %v2886 = vrot.slane %v2858, %v2885
        %v2887 = vcombine.high %v2865, %v2865
        %v2888 = vcombine.high %v2872, %v2872
        %v2889 = vcombine.high %v2879, %v2879
        %2897 = vst.msk [vmem:[#allocation2 + $0x1] sm:$0x1] %vm2834, %v2865
        %2898 = vst.msk [vmem:[#allocation2 + $0x11] sm:$0x1] %vm2834, %v2879
        %2899 = vst.msk [vmem:[#allocation2 + $0x21] sm:$0x1] %vm2834, %v2887
        %2900 = vst.msk [vmem:[#allocation2 + $0x31] sm:$0x1] %vm2834, %v2889
        %2901 = vst.msk [vmem:[#allocation2 + $0x41] sm:$0x1] %vm2834, %v2872
        %2902 = vst.msk [vmem:[#allocation2 + $0x51] sm:$0x1] %vm2834, %v2886
        %2903 = vst.msk [vmem:[#allocation2 + $0x61] sm:$0x1] %vm2834, %v2888
        %v2904 = vcombine.high %v181, %v181
        %v2906 = vunpack.c.l.s4 1966171168
        %v2907 = vunpack.c.0.s8 %v2906
        %v2908 = vlaneseq
        %v2909 = vshrl.u32 %v2908, 7
        %v2910 = vsub.s32 %v2907, %v2909
        %v2911 = vrot.slane %v181, %v2910
        %v2913 = vunpack.c.l.s4 1966171168
        %v2914 = vunpack.c.0.s8 %v2913
        %v2915 = vlaneseq
        %v2916 = vshrl.u32 %v2915, 7
        %v2917 = vsub.s32 %v2914, %v2916
        %v2918 = vrot.slane %v2904, %v2917
        %v2919 = vcombine.high %v2911, %v2911
        %v2920 = vcombine.high %v2918, %v2918
        %v2922 = vunpack.c.l.s4 1966171168
        %v2923 = vunpack.c.0.s8 %v2922
        %v2924 = vlaneseq
        %v2925 = vshrl.u32 %v2924, 7
        %v2926 = vsub.s32 %v2923, %v2925
        %v2927 = vrot.slane %v2911, %v2926
        %v2929 = vunpack.c.l.s4 1966171168
        %v2930 = vunpack.c.0.s8 %v2929
        %v2931 = vlaneseq
        %v2932 = vshrl.u32 %v2931, 7
        %v2933 = vsub.s32 %v2930, %v2932
        %v2934 = vrot.slane %v2918, %v2933
        %v2936 = vunpack.c.l.s4 1966171168
        %v2937 = vunpack.c.0.s8 %v2936
        %v2938 = vlaneseq
        %v2939 = vshrl.u32 %v2938, 7
        %v2940 = vsub.s32 %v2937, %v2939
        %v2941 = vrot.slane %v2919, %v2940
        %v2943 = vunpack.c.l.s4 1966171168
        %v2944 = vunpack.c.0.s8 %v2943
        %v2945 = vlaneseq
        %v2946 = vshrl.u32 %v2945, 7
        %v2947 = vsub.s32 %v2944, %v2946
        %v2948 = vrot.slane %v2920, %v2947
        %v2949 = vcombine.high %v2927, %v2927
        %v2950 = vcombine.high %v2934, %v2934
        %v2951 = vcombine.high %v2941, %v2941
        %s2959 = scalar_lea.vmem [#allocation2], 8
        %2960 = vst.msk [vmem:[%s2959] sm:$0x1] %vm2834, %v2927
        %2961 = vst.msk [vmem:[%s2959 + $0x10] sm:$0x1] %vm2834, %v2941
        %2962 = vst.msk [vmem:[%s2959 + $0x20] sm:$0x1] %vm2834, %v2949
        %2963 = vst.msk [vmem:[%s2959 + $0x30] sm:$0x1] %vm2834, %v2951
        %2964 = vst.msk [vmem:[%s2959 + $0x40] sm:$0x1] %vm2834, %v2934
        %2965 = vst.msk [vmem:[%s2959 + $0x50] sm:$0x1] %vm2834, %v2948
        %2966 = vst.msk [vmem:[%s2959 + $0x60] sm:$0x1] %vm2834, %v2950
        %v2967 = vcombine.high %v182, %v182
        %v2969 = vunpack.c.l.s4 1966171168
        %v2970 = vunpack.c.0.s8 %v2969
        %v2971 = vlaneseq
        %v2972 = vshrl.u32 %v2971, 7
        %v2973 = vsub.s32 %v2970, %v2972
        %v2974 = vrot.slane %v182, %v2973
        %v2976 = vunpack.c.l.s4 1966171168
        %v2977 = vunpack.c.0.s8 %v2976
        %v2978 = vlaneseq
        %v2979 = vshrl.u32 %v2978, 7
        %v2980 = vsub.s32 %v2977, %v2979
        %v2981 = vrot.slane %v2967, %v2980
        %v2982 = vcombine.high %v2974, %v2974
        %v2983 = vcombine.high %v2981, %v2981
        %v2985 = vunpack.c.l.s4 1966171168
        %v2986 = vunpack.c.0.s8 %v2985
        %v2987 = vlaneseq
        %v2988 = vshrl.u32 %v2987, 7
        %v2989 = vsub.s32 %v2986, %v2988
        %v2990 = vrot.slane %v2974, %v2989
        %v2992 = vunpack.c.l.s4 1966171168
        %v2993 = vunpack.c.0.s8 %v2992
        %v2994 = vlaneseq
        %v2995 = vshrl.u32 %v2994, 7
        %v2996 = vsub.s32 %v2993, %v2995
        %v2997 = vrot.slane %v2981, %v2996
        %v2999 = vunpack.c.l.s4 1966171168
        %v3000 = vunpack.c.0.s8 %v2999
        %v3001 = vlaneseq
        %v3002 = vshrl.u32 %v3001, 7
        %v3003 = vsub.s32 %v3000, %v3002
        %v3004 = vrot.slane %v2982, %v3003
        %v3006 = vunpack.c.l.s4 1966171168
        %v3007 = vunpack.c.0.s8 %v3006
        %v3008 = vlaneseq
        %v3009 = vshrl.u32 %v3008, 7
        %v3010 = vsub.s32 %v3007, %v3009
        %v3011 = vrot.slane %v2983, %v3010
        %v3012 = vcombine.high %v2990, %v2990
        %v3013 = vcombine.high %v2997, %v2997
        %v3014 = vcombine.high %v3004, %v3004
        %3022 = vst.msk [vmem:[%s2959 + $0x1] sm:$0x1] %vm2834, %v2990
        %3023 = vst.msk [vmem:[%s2959 + $0x11] sm:$0x1] %vm2834, %v3004
        %3024 = vst.msk [vmem:[%s2959 + $0x21] sm:$0x1] %vm2834, %v3012
        %3025 = vst.msk [vmem:[%s2959 + $0x31] sm:$0x1] %vm2834, %v3014
        %3026 = vst.msk [vmem:[%s2959 + $0x41] sm:$0x1] %vm2834, %v2997
        %3027 = vst.msk [vmem:[%s2959 + $0x51] sm:$0x1] %vm2834, %v3011
        %3028 = vst.msk [vmem:[%s2959 + $0x61] sm:$0x1] %vm2834, %v3013
        %v3029 = vcombine.high %v2823, %v2823
        %3031 = vst.msk [vmem:[#allocation2 + $0x2] sm:$0x1] %vm2834, %v2816
        %3032 = vst.msk [vmem:[#allocation2 + $0x12] sm:$0x1] %vm2834, %v2824
        %3033 = vst.msk [vmem:[#allocation2 + $0x22] sm:$0x1] %vm2834, %v2826
        %3034 = vst.msk [vmem:[#allocation2 + $0x32] sm:$0x1] %vm2834, %v2809
        %3035 = vst.msk [vmem:[#allocation2 + $0x42] sm:$0x1] %vm2834, %v2823
        %3036 = vst.msk [vmem:[#allocation2 + $0x52] sm:$0x1] %vm2834, %v2825
        %3037 = vst.msk [vmem:[#allocation2 + $0x62] sm:$0x1] %vm2834, %v3029
        %v3038 = vcombine.high %v2886, %v2886
        %3040 = vst.msk [vmem:[#allocation2 + $0x3] sm:$0x1] %vm2834, %v2879
        %3041 = vst.msk [vmem:[#allocation2 + $0x13] sm:$0x1] %vm2834, %v2887
        %3042 = vst.msk [vmem:[#allocation2 + $0x23] sm:$0x1] %vm2834, %v2889
        %3043 = vst.msk [vmem:[#allocation2 + $0x33] sm:$0x1] %vm2834, %v2872
        %3044 = vst.msk [vmem:[#allocation2 + $0x43] sm:$0x1] %vm2834, %v2886
        %3045 = vst.msk [vmem:[#allocation2 + $0x53] sm:$0x1] %vm2834, %v2888
        %3046 = vst.msk [vmem:[#allocation2 + $0x63] sm:$0x1] %vm2834, %v3038
        %v3047 = vcombine.high %v2948, %v2948
        %3049 = vst.msk [vmem:[%s2959 + $0x2] sm:$0x1] %vm2834, %v2941
        %3050 = vst.msk [vmem:[%s2959 + $0x12] sm:$0x1] %vm2834, %v2949
        %3051 = vst.msk [vmem:[%s2959 + $0x22] sm:$0x1] %vm2834, %v2951
        %3052 = vst.msk [vmem:[%s2959 + $0x32] sm:$0x1] %vm2834, %v2934
        %3053 = vst.msk [vmem:[%s2959 + $0x42] sm:$0x1] %vm2834, %v2948
        %3054 = vst.msk [vmem:[%s2959 + $0x52] sm:$0x1] %vm2834, %v2950
        %3055 = vst.msk [vmem:[%s2959 + $0x62] sm:$0x1] %vm2834, %v3047
        %v3056 = vcombine.high %v3011, %v3011
        %3058 = vst.msk [vmem:[%s2959 + $0x3] sm:$0x1] %vm2834, %v3004
        %3059 = vst.msk [vmem:[%s2959 + $0x13] sm:$0x1] %vm2834, %v3012
        %3060 = vst.msk [vmem:[%s2959 + $0x23] sm:$0x1] %vm2834, %v3014
        %3061 = vst.msk [vmem:[%s2959 + $0x33] sm:$0x1] %vm2834, %v2997
        %3062 = vst.msk [vmem:[%s2959 + $0x43] sm:$0x1] %vm2834, %v3011
        %3063 = vst.msk [vmem:[%s2959 + $0x53] sm:$0x1] %vm2834, %v3013
        %3064 = vst.msk [vmem:[%s2959 + $0x63] sm:$0x1] %vm2834, %v3056
        %3065 = vst.msk [vmem:[#allocation2 + $0x4] sm:$0x1] %vm2834, %v2824
        %3066 = vst.msk [vmem:[#allocation2 + $0x14] sm:$0x1] %vm2834, %v2826
        %3067 = vst.msk [vmem:[#allocation2 + $0x24] sm:$0x1] %vm2834, %v2809
        %3068 = vst.msk [vmem:[#allocation2 + $0x34] sm:$0x1] %vm2834, %v2823
        %3069 = vst.msk [vmem:[#allocation2 + $0x44] sm:$0x1] %vm2834, %v2825
        %3070 = vst.msk [vmem:[#allocation2 + $0x54] sm:$0x1] %vm2834, %v3029
        %3071 = vst.msk [vmem:[#allocation2 + $0x5] sm:$0x1] %vm2834, %v2887
        %3072 = vst.msk [vmem:[#allocation2 + $0x15] sm:$0x1] %vm2834, %v2889
        %3073 = vst.msk [vmem:[#allocation2 + $0x25] sm:$0x1] %vm2834, %v2872
        %3074 = vst.msk [vmem:[#allocation2 + $0x35] sm:$0x1] %vm2834, %v2886
        %3075 = vst.msk [vmem:[#allocation2 + $0x45] sm:$0x1] %vm2834, %v2888
        %3076 = vst.msk [vmem:[#allocation2 + $0x55] sm:$0x1] %vm2834, %v3038
        %3077 = vst.msk [vmem:[%s2959 + $0x4] sm:$0x1] %vm2834, %v2949
        %3078 = vst.msk [vmem:[%s2959 + $0x14] sm:$0x1] %vm2834, %v2951
        %3079 = vst.msk [vmem:[%s2959 + $0x24] sm:$0x1] %vm2834, %v2934
        %3080 = vst.msk [vmem:[%s2959 + $0x34] sm:$0x1] %vm2834, %v2948
        %3081 = vst.msk [vmem:[%s2959 + $0x44] sm:$0x1] %vm2834, %v2950
        %3082 = vst.msk [vmem:[%s2959 + $0x54] sm:$0x1] %vm2834, %v3047
        %3083 = vst.msk [vmem:[%s2959 + $0x5] sm:$0x1] %vm2834, %v3012
        %3084 = vst.msk [vmem:[%s2959 + $0x15] sm:$0x1] %vm2834, %v3014
        %3085 = vst.msk [vmem:[%s2959 + $0x25] sm:$0x1] %vm2834, %v2997
        %3086 = vst.msk [vmem:[%s2959 + $0x35] sm:$0x1] %vm2834, %v3011
        %3087 = vst.msk [vmem:[%s2959 + $0x45] sm:$0x1] %vm2834, %v3013
        %3088 = vst.msk [vmem:[%s2959 + $0x55] sm:$0x1] %vm2834, %v3056
        %s3089 = scalar_lea.vmem [#allocation2], 96
        %vm3090 = vcmask 58368
        %3091 = vst.msk [vmem:[%s3089 + $0x4] sm:$0x3] %vm3090, 0.0
        %3092 = vst.msk [vmem:[%s3089 + $0xc] sm:$0x3] %vm3090, 0.0
        %v3093 = vld [vmem:[#allocation2] sm:$0x3f]
        %v3094 = vld [vmem:[#allocation2 + $0x8] sm:$0x3f]
        %v3095 = vld [vmem:[#allocation2 + $0x10] sm:$0x3f]
        %v3096 = vld [vmem:[#allocation2 + $0x18] sm:$0x3f]
        %v3097 = vld [vmem:[#allocation2 + $0x20] sm:$0x3f]
        %v3098 = vld [vmem:[#allocation2 + $0x28] sm:$0x3f]
        %v3099 = vld [vmem:[#allocation2 + $0x30] sm:$0x3f]
        %v3100 = vld [vmem:[#allocation2 + $0x38] sm:$0x3f]
        %v3101 = vld [vmem:[#allocation2 + $0x40] sm:$0x3f]
        %v3102 = vld [vmem:[#allocation2 + $0x48] sm:$0x3f]
        %v3103 = vld [vmem:[#allocation2 + $0x50] sm:$0x3f]
        %v3104 = vld [vmem:[#allocation2 + $0x58] sm:$0x3f]
        %v3105 = vld [vmem:[#allocation2 + $0x60] sm:$0x3f]
        %v3106 = vld [vmem:[#allocation2 + $0x68] sm:$0x3f]
        %v3121 = vcombine.high %v3093, %v3093
        %v3123 = vunpack.c.l.s4 1983009808
        %v3124 = vunpack.c.0.s8 %v3123
        %v3125 = vlaneseq
        %v3126 = vshrl.u32 %v3125, 7
        %v3127 = vsub.s32 %v3124, %v3126
        %v3128 = vrot.slane %v3093, %v3127
        %v3130 = vunpack.c.l.s4 1983009808
        %v3131 = vunpack.c.0.s8 %v3130
        %v3132 = vlaneseq
        %v3133 = vshrl.u32 %v3132, 7
        %v3134 = vsub.s32 %v3131, %v3133
        %v3135 = vrot.slane %v3121, %v3134
        %v3136 = vcombine.high %v3128, %v3128
        %v3137 = vcombine.high %v3094, %v3094
        %v3139 = vunpack.c.l.s4 1983009808
        %v3140 = vunpack.c.0.s8 %v3139
        %v3141 = vlaneseq
        %v3142 = vshrl.u32 %v3141, 7
        %v3143 = vsub.s32 %v3140, %v3142
        %v3144 = vrot.slane %v3094, %v3143
        %v3146 = vunpack.c.l.s4 1983009808
        %v3147 = vunpack.c.0.s8 %v3146
        %v3148 = vlaneseq
        %v3149 = vshrl.u32 %v3148, 7
        %v3150 = vsub.s32 %v3147, %v3149
        %v3151 = vrot.slane %v3137, %v3150
        %v3152 = vcombine.high %v3144, %v3144
        %v3153 = vcombine.high %v3095, %v3095
        %v3155 = vunpack.c.l.s4 1983009808
        %v3156 = vunpack.c.0.s8 %v3155
        %v3157 = vlaneseq
        %v3158 = vshrl.u32 %v3157, 7
        %v3159 = vsub.s32 %v3156, %v3158
        %v3160 = vrot.slane %v3095, %v3159
        %v3162 = vunpack.c.l.s4 1983009808
        %v3163 = vunpack.c.0.s8 %v3162
        %v3164 = vlaneseq
        %v3165 = vshrl.u32 %v3164, 7
        %v3166 = vsub.s32 %v3163, %v3165
        %v3167 = vrot.slane %v3153, %v3166
        %v3168 = vcombine.high %v3160, %v3160
        %v3169 = vcombine.high %v3096, %v3096
        %v3171 = vunpack.c.l.s4 1983009808
        %v3172 = vunpack.c.0.s8 %v3171
        %v3173 = vlaneseq
        %v3174 = vshrl.u32 %v3173, 7
        %v3175 = vsub.s32 %v3172, %v3174
        %v3176 = vrot.slane %v3096, %v3175
        %v3178 = vunpack.c.l.s4 1983009808
        %v3179 = vunpack.c.0.s8 %v3178
        %v3180 = vlaneseq
        %v3181 = vshrl.u32 %v3180, 7
        %v3182 = vsub.s32 %v3179, %v3181
        %v3183 = vrot.slane %v3169, %v3182
        %v3184 = vcombine.high %v3176, %v3176
        %v3185 = vcombine.high %v3097, %v3097
        %v3187 = vunpack.c.l.s4 1983009808
        %v3188 = vunpack.c.0.s8 %v3187
        %v3189 = vlaneseq
        %v3190 = vshrl.u32 %v3189, 7
        %v3191 = vsub.s32 %v3188, %v3190
        %v3192 = vrot.slane %v3097, %v3191
        %v3194 = vunpack.c.l.s4 1983009808
        %v3195 = vunpack.c.0.s8 %v3194
        %v3196 = vlaneseq
        %v3197 = vshrl.u32 %v3196, 7
        %v3198 = vsub.s32 %v3195, %v3197
        %v3199 = vrot.slane %v3185, %v3198
        %v3200 = vcombine.high %v3192, %v3192
        %v3201 = vcombine.high %v3098, %v3098
        %v3203 = vunpack.c.l.s4 1983009808
        %v3204 = vunpack.c.0.s8 %v3203
        %v3205 = vlaneseq
        %v3206 = vshrl.u32 %v3205, 7
        %v3207 = vsub.s32 %v3204, %v3206
        %v3208 = vrot.slane %v3098, %v3207
        %v3210 = vunpack.c.l.s4 1983009808
        %v3211 = vunpack.c.0.s8 %v3210
        %v3212 = vlaneseq
        %v3213 = vshrl.u32 %v3212, 7
        %v3214 = vsub.s32 %v3211, %v3213
        %v3215 = vrot.slane %v3201, %v3214
        %v3216 = vcombine.high %v3208, %v3208
        %v3217 = vcombine.high %v3099, %v3099
        %v3219 = vunpack.c.l.s4 1983009808
        %v3220 = vunpack.c.0.s8 %v3219
        %v3221 = vlaneseq
        %v3222 = vshrl.u32 %v3221, 7
        %v3223 = vsub.s32 %v3220, %v3222
        %v3224 = vrot.slane %v3099, %v3223
        %v3226 = vunpack.c.l.s4 1983009808
        %v3227 = vunpack.c.0.s8 %v3226
        %v3228 = vlaneseq
        %v3229 = vshrl.u32 %v3228, 7
        %v3230 = vsub.s32 %v3227, %v3229
        %v3231 = vrot.slane %v3217, %v3230
        %v3232 = vcombine.high %v3224, %v3224
        %v3233 = vcombine.high %v3100, %v3100
        %v3235 = vunpack.c.l.s4 1983009808
        %v3236 = vunpack.c.0.s8 %v3235
        %v3237 = vlaneseq
        %v3238 = vshrl.u32 %v3237, 7
        %v3239 = vsub.s32 %v3236, %v3238
        %v3240 = vrot.slane %v3100, %v3239
        %v3242 = vunpack.c.l.s4 1983009808
        %v3243 = vunpack.c.0.s8 %v3242
        %v3244 = vlaneseq
        %v3245 = vshrl.u32 %v3244, 7
        %v3246 = vsub.s32 %v3243, %v3245
        %v3247 = vrot.slane %v3233, %v3246
        %v3248 = vcombine.high %v3240, %v3240
        %v3249 = vcombine.high %v3101, %v3101
        %v3251 = vunpack.c.l.s4 1983009808
        %v3252 = vunpack.c.0.s8 %v3251
        %v3253 = vlaneseq
        %v3254 = vshrl.u32 %v3253, 7
        %v3255 = vsub.s32 %v3252, %v3254
        %v3256 = vrot.slane %v3101, %v3255
        %v3258 = vunpack.c.l.s4 1983009808
        %v3259 = vunpack.c.0.s8 %v3258
        %v3260 = vlaneseq
        %v3261 = vshrl.u32 %v3260, 7
        %v3262 = vsub.s32 %v3259, %v3261
        %v3263 = vrot.slane %v3249, %v3262
        %v3264 = vcombine.high %v3256, %v3256
        %v3265 = vcombine.high %v3102, %v3102
        %v3267 = vunpack.c.l.s4 1983009808
        %v3268 = vunpack.c.0.s8 %v3267
        %v3269 = vlaneseq
        %v3270 = vshrl.u32 %v3269, 7
        %v3271 = vsub.s32 %v3268, %v3270
        %v3272 = vrot.slane %v3102, %v3271
        %v3274 = vunpack.c.l.s4 1983009808
        %v3275 = vunpack.c.0.s8 %v3274
        %v3276 = vlaneseq
        %v3277 = vshrl.u32 %v3276, 7
        %v3278 = vsub.s32 %v3275, %v3277
        %v3279 = vrot.slane %v3265, %v3278
        %v3280 = vcombine.high %v3272, %v3272
        %v3281 = vcombine.high %v3103, %v3103
        %v3283 = vunpack.c.l.s4 1983009808
        %v3284 = vunpack.c.0.s8 %v3283
        %v3285 = vlaneseq
        %v3286 = vshrl.u32 %v3285, 7
        %v3287 = vsub.s32 %v3284, %v3286
        %v3288 = vrot.slane %v3103, %v3287
        %v3290 = vunpack.c.l.s4 1983009808
        %v3291 = vunpack.c.0.s8 %v3290
        %v3292 = vlaneseq
        %v3293 = vshrl.u32 %v3292, 7
        %v3294 = vsub.s32 %v3291, %v3293
        %v3295 = vrot.slane %v3281, %v3294
        %v3296 = vcombine.high %v3288, %v3288
        %v3297 = vcombine.high %v3104, %v3104
        %v3299 = vunpack.c.l.s4 1983009808
        %v3300 = vunpack.c.0.s8 %v3299
        %v3301 = vlaneseq
        %v3302 = vshrl.u32 %v3301, 7
        %v3303 = vsub.s32 %v3300, %v3302
        %v3304 = vrot.slane %v3104, %v3303
        %v3306 = vunpack.c.l.s4 1983009808
        %v3307 = vunpack.c.0.s8 %v3306
        %v3308 = vlaneseq
        %v3309 = vshrl.u32 %v3308, 7
        %v3310 = vsub.s32 %v3307, %v3309
        %v3311 = vrot.slane %v3297, %v3310
        %v3312 = vcombine.high %v3304, %v3304
        %v3313 = vcombine.high %v3105, %v3105
        %v3315 = vunpack.c.l.s4 1983009808
        %v3316 = vunpack.c.0.s8 %v3315
        %v3317 = vlaneseq
        %v3318 = vshrl.u32 %v3317, 7
        %v3319 = vsub.s32 %v3316, %v3318
        %v3320 = vrot.slane %v3105, %v3319
        %v3322 = vunpack.c.l.s4 1983009808
        %v3323 = vunpack.c.0.s8 %v3322
        %v3324 = vlaneseq
        %v3325 = vshrl.u32 %v3324, 7
        %v3326 = vsub.s32 %v3323, %v3325
        %v3327 = vrot.slane %v3313, %v3326
        %v3328 = vcombine.high %v3320, %v3320
        %v3329 = vcombine.high %v3106, %v3106
        %v3331 = vunpack.c.l.s4 1983009808
        %v3332 = vunpack.c.0.s8 %v3331
        %v3333 = vlaneseq
        %v3334 = vshrl.u32 %v3333, 7
        %v3335 = vsub.s32 %v3332, %v3334
        %v3336 = vrot.slane %v3106, %v3335
        %v3338 = vunpack.c.l.s4 1983009808
        %v3339 = vunpack.c.0.s8 %v3338
        %v3340 = vlaneseq
        %v3341 = vshrl.u32 %v3340, 7
        %v3342 = vsub.s32 %v3339, %v3341
        %v3343 = vrot.slane %v3329, %v3342
        %v3344 = vcombine.high %v3336, %v3336
        %v3345 = vld [vmem:[#allocation6 + $0x1c0] sm:$0xff]
        %v3346 = vcombine.low %v3128, %v3136
        %v3347 = vcombine.low %v3135, %v3144
        %v3349 = vunpack.c.l.s4 1983009808
        %v3350 = vunpack.c.0.s8 %v3349
        %v3351 = vlaneseq
        %v3352 = vshrl.u32 %v3351, 7
        %v3353 = vsub.s32 %v3350, %v3352
        %v3354 = vrot.slane %v3346, %v3353
        %v3356 = vunpack.c.l.s4 1983009808
        %v3357 = vunpack.c.0.s8 %v3356
        %v3358 = vlaneseq
        %v3359 = vshrl.u32 %v3358, 7
        %v3360 = vsub.s32 %v3357, %v3359
        %v3361 = vrot.slane %v3347, %v3360
        %v3362 = vcombine.low %v3354, %v3361
        %v3363 = vcombine.low %v3152, %v3151
        %v3364 = vcombine.low %v3160, %v3168
        %v3366 = vunpack.c.l.s4 1983009808
        %v3367 = vunpack.c.0.s8 %v3366
        %v3368 = vlaneseq
        %v3369 = vshrl.u32 %v3368, 7
        %v3370 = vsub.s32 %v3367, %v3369
        %v3371 = vrot.slane %v3363, %v3370
        %v3373 = vunpack.c.l.s4 1983009808
        %v3374 = vunpack.c.0.s8 %v3373
        %v3375 = vlaneseq
        %v3376 = vshrl.u32 %v3375, 7
        %v3377 = vsub.s32 %v3374, %v3376
        %v3378 = vrot.slane %v3364, %v3377
        %v3379 = vcombine.low %v3371, %v3378
        %v3380 = vcombine.low %v3167, %v3176
        %v3381 = vcombine.low %v3184, %v3183
        %v3383 = vunpack.c.l.s4 1983009808
        %v3384 = vunpack.c.0.s8 %v3383
        %v3385 = vlaneseq
        %v3386 = vshrl.u32 %v3385, 7
        %v3387 = vsub.s32 %v3384, %v3386
        %v3388 = vrot.slane %v3380, %v3387
        %v3390 = vunpack.c.l.s4 1983009808
        %v3391 = vunpack.c.0.s8 %v3390
        %v3392 = vlaneseq
        %v3393 = vshrl.u32 %v3392, 7
        %v3394 = vsub.s32 %v3391, %v3393
        %v3395 = vrot.slane %v3381, %v3394
        %v3396 = vcombine.low %v3388, %v3395
        %v3397 = vcombine.low %v3192, %v3200
        %v3398 = vcombine.low %v3199, %v3208
        %v3400 = vunpack.c.l.s4 1983009808
        %v3401 = vunpack.c.0.s8 %v3400
        %v3402 = vlaneseq
        %v3403 = vshrl.u32 %v3402, 7
        %v3404 = vsub.s32 %v3401, %v3403
        %v3405 = vrot.slane %v3397, %v3404
        %v3407 = vunpack.c.l.s4 1983009808
        %v3408 = vunpack.c.0.s8 %v3407
        %v3409 = vlaneseq
        %v3410 = vshrl.u32 %v3409, 7
        %v3411 = vsub.s32 %v3408, %v3410
        %v3412 = vrot.slane %v3398, %v3411
        %v3413 = vcombine.low %v3405, %v3412
        %v3414 = vcombine.low %v3216, %v3215
        %v3415 = vcombine.low %v3224, %v3232
        %v3417 = vunpack.c.l.s4 1983009808
        %v3418 = vunpack.c.0.s8 %v3417
        %v3419 = vlaneseq
        %v3420 = vshrl.u32 %v3419, 7
        %v3421 = vsub.s32 %v3418, %v3420
        %v3422 = vrot.slane %v3414, %v3421
        %v3424 = vunpack.c.l.s4 1983009808
        %v3425 = vunpack.c.0.s8 %v3424
        %v3426 = vlaneseq
        %v3427 = vshrl.u32 %v3426, 7
        %v3428 = vsub.s32 %v3425, %v3427
        %v3429 = vrot.slane %v3415, %v3428
        %v3430 = vcombine.low %v3422, %v3429
        %v3431 = vcombine.low %v3231, %v3240
        %v3432 = vcombine.low %v3248, %v3247
        %v3434 = vunpack.c.l.s4 1983009808
        %v3435 = vunpack.c.0.s8 %v3434
        %v3436 = vlaneseq
        %v3437 = vshrl.u32 %v3436, 7
        %v3438 = vsub.s32 %v3435, %v3437
        %v3439 = vrot.slane %v3431, %v3438
        %v3441 = vunpack.c.l.s4 1983009808
        %v3442 = vunpack.c.0.s8 %v3441
        %v3443 = vlaneseq
        %v3444 = vshrl.u32 %v3443, 7
        %v3445 = vsub.s32 %v3442, %v3444
        %v3446 = vrot.slane %v3432, %v3445
        %v3447 = vcombine.low %v3439, %v3446
        %v3448 = vcombine.low %v3256, %v3264
        %v3449 = vcombine.low %v3263, %v3272
        %v3451 = vunpack.c.l.s4 1983009808
        %v3452 = vunpack.c.0.s8 %v3451
        %v3453 = vlaneseq
        %v3454 = vshrl.u32 %v3453, 7
        %v3455 = vsub.s32 %v3452, %v3454
        %v3456 = vrot.slane %v3448, %v3455
        %v3458 = vunpack.c.l.s4 1983009808
        %v3459 = vunpack.c.0.s8 %v3458
        %v3460 = vlaneseq
        %v3461 = vshrl.u32 %v3460, 7
        %v3462 = vsub.s32 %v3459, %v3461
        %v3463 = vrot.slane %v3449, %v3462
        %v3464 = vcombine.low %v3456, %v3463
        %v3465 = vcombine.low %v3280, %v3279
        %v3466 = vcombine.low %v3288, %v3296
        %v3468 = vunpack.c.l.s4 1983009808
        %v3469 = vunpack.c.0.s8 %v3468
        %v3470 = vlaneseq
        %v3471 = vshrl.u32 %v3470, 7
        %v3472 = vsub.s32 %v3469, %v3471
        %v3473 = vrot.slane %v3465, %v3472
        %v3475 = vunpack.c.l.s4 1983009808
        %v3476 = vunpack.c.0.s8 %v3475
        %v3477 = vlaneseq
        %v3478 = vshrl.u32 %v3477, 7
        %v3479 = vsub.s32 %v3476, %v3478
        %v3480 = vrot.slane %v3466, %v3479
        %v3481 = vcombine.low %v3473, %v3480
        %v3482 = vcombine.low %v3295, %v3304
        %v3483 = vcombine.low %v3312, %v3311
        %v3485 = vunpack.c.l.s4 1983009808
        %v3486 = vunpack.c.0.s8 %v3485
        %v3487 = vlaneseq
        %v3488 = vshrl.u32 %v3487, 7
        %v3489 = vsub.s32 %v3486, %v3488
        %v3490 = vrot.slane %v3482, %v3489
        %v3492 = vunpack.c.l.s4 1983009808
        %v3493 = vunpack.c.0.s8 %v3492
        %v3494 = vlaneseq
        %v3495 = vshrl.u32 %v3494, 7
        %v3496 = vsub.s32 %v3493, %v3495
        %v3497 = vrot.slane %v3483, %v3496
        %v3498 = vcombine.low %v3490, %v3497
        %v3499 = vcombine.low %v3320, %v3328
        %v3500 = vcombine.low %v3327, %v3336
        %v3502 = vunpack.c.l.s4 1983009808
        %v3503 = vunpack.c.0.s8 %v3502
        %v3504 = vlaneseq
        %v3505 = vshrl.u32 %v3504, 7
        %v3506 = vsub.s32 %v3503, %v3505
        %v3507 = vrot.slane %v3499, %v3506
        %v3509 = vunpack.c.l.s4 1983009808
        %v3510 = vunpack.c.0.s8 %v3509
        %v3511 = vlaneseq
        %v3512 = vshrl.u32 %v3511, 7
        %v3513 = vsub.s32 %v3510, %v3512
        %v3514 = vrot.slane %v3500, %v3513
        %v3515 = vcombine.low %v3507, %v3514
        %v3516 = vcombine.low %v3344, %v3343
        %v3518 = vunpack.c.l.s4 1983009808
        %v3519 = vunpack.c.0.s8 %v3518
        %v3520 = vlaneseq
        %v3521 = vshrl.u32 %v3520, 7
        %v3522 = vsub.s32 %v3519, %v3521
        %v3523 = vrot.slane %v3516, %v3522
        %v3524 = vsel %vm399, %v3362, 0
        %v3526 = vsel %vm399, %v3379, 0
        %v3528 = vsel %vm399, %v3396, 0
        %v3530 = vsel %vm399, %v3413, 0
        %v3532 = vsel %vm399, %v3430, 0
        %v3534 = vsel %vm399, %v3447, 0
        %v3536 = vsel %vm399, %v3464, 0
        %v3538 = vsel %vm399, %v3481, 0
        %v3540 = vsel %vm399, %v3498, 0
        %v3542 = vsel %vm399, %v3515, 0
        %v3544 = vsel %vm399, %v3523, 0
        %3546 = vmatprep.subr.mxu0 0.0
        %3547 = vmatpush1.msra.mxu0 %v3345
        %3548 = vmatprep.subr.mxu0 0.0
        %3549 = vmatpush1.msra.mxu0 0.0
        %3550 = vmatprep.subr.mxu0 0.0
        %3551 = vmatpush1.msra.mxu0 0.0
        %3552 = vmatprep.subr.mxu0 0.0
        %3553 = vmatpush1.msra.mxu0 0.0
        %3554 = vmatprep.subr.mxu0 0.0
        %3555 = vmatpush1.msra.mxu0 0.0
        %3556 = vmatprep.subr.mxu0 0.0
        %3557 = vmatpush1.msra.mxu0 0.0
        %3558 = vmatprep.subr.mxu0 0.0
        %3559 = vmatpush1.msra.mxu0 0.0
        %3560 = vmatprep.subr.mxu0 0.0
        %3561 = vmatpush1.msra.mxu0 0.0
        %3562 = vmatprep.subr.mxu0 0.0
        %3563 = vmatpush1.msra.mxu0 0.0
        %3564 = vmatprep.subr.mxu0 0.0
        %3565 = vmatpush1.msra.mxu0 0.0
        %3566 = vmatprep.subr.mxu0 0.0
        %3567 = vmatpush1.msra.mxu0 0.0
        %3568 = vmatprep.subr.mxu0 0.0
        %3569 = vmatpush1.msra.mxu0 0.0
        %3570 = vmatprep.subr.mxu0 0.0
        %3571 = vmatpush1.msra.mxu0 0.0
        %3572 = vmatprep.subr.mxu0 0.0
        %3573 = vmatpush1.msra.mxu0 0.0
        %3574 = vmatprep.subr.mxu0 0.0
        %3575 = vmatpush1.msra.mxu0 0.0
        %3576 = vmatprep.subr.mxu0 0.0
        %3577 = vmatpush1.msra.mxu0 0.0
        %3578 = vmatprep.subr.mxu0 0.0
        %3579 = vmatpush1.msra.mxu0 0.0
        %3580 = vmatprep.subr.mxu0 0.0
        %3581 = vmatpush1.msra.mxu0 0.0
        %3582 = vmatprep.subr.mxu0 0.0
        %3583 = vmatpush1.msra.mxu0 0.0
        %3584 = vmatprep.subr.mxu0 0.0
        %3585 = vmatpush1.msra.mxu0 0.0
        %3586 = vmatprep.subr.mxu0 0.0
        %3587 = vmatpush1.msra.mxu0 0.0
        %3588 = vmatprep.subr.mxu0 0.0
        %3589 = vmatpush1.msra.mxu0 0.0
        %3590 = vmatprep.subr.mxu0 0.0
        %3591 = vmatpush1.msra.mxu0 0.0
        %3592 = vmatprep.subr.mxu0 0.0
        %3593 = vmatpush1.msra.mxu0 0.0
        %3594 = vmatprep.subr.mxu0 0.0
        %3595 = vmatpush1.msra.mxu0 0.0
        %3596 = vmatprep.subr.mxu0 0.0
        %3597 = vmatpush1.msra.mxu0 0.0
        %3598 = vmatprep.subr.mxu0 0.0
        %3599 = vmatpush1.msra.mxu0 0.0
        %3600 = vmatprep.subr.mxu0 0.0
        %3601 = vmatpush1.msra.mxu0 0.0
        %3602 = vmatprep.subr.mxu0 0.0
        %3603 = vmatpush1.msra.mxu0 0.0
        %3604 = vmatprep.subr.mxu0 0.0
        %3605 = vmatpush1.msra.mxu0 0.0
        %3606 = vmatprep.subr.mxu0 0.0
        %3607 = vmatpush1.msra.mxu0 0.0
        %3608 = vmatprep.subr.mxu0 0.0
        %3609 = vmatpush1.msra.mxu0 0.0
        %3610 = vmatprep.mubr.f32.mxu0 0.0
        %3611 = vmatmul.mubr.f32.gmra.mrb[0].mxu0 %v3524
        %v3612 = vpop.f32.mrb[0].mxu0
        %v3613 = vadd.f32 0.0, %v3612
        %v3614 = vpop.f32.mrb[0].mxu0
        %3615 = vmatprep.mubr.f32.mxu0 0.0
        %3616 = vmatmul.mubr.f32.gmra.mrb[0].mxu0 %v3526
        %v3617 = vpop.f32.mrb[0].mxu0
        %v3618 = vadd.f32 0.0, %v3617
        %v3619 = vpop.f32.mrb[0].mxu0
        %3620 = vmatprep.mubr.f32.mxu0 0.0
        %3621 = vmatmul.mubr.f32.gmra.mrb[0].mxu0 %v3528
        %v3622 = vpop.f32.mrb[0].mxu0
        %v3623 = vadd.f32 0.0, %v3622
        %v3624 = vpop.f32.mrb[0].mxu0
        %3625 = vmatprep.mubr.f32.mxu0 0.0
        %3626 = vmatmul.mubr.f32.gmra.mrb[0].mxu0 %v3530
        %v3627 = vpop.f32.mrb[0].mxu0
        %v3628 = vadd.f32 0.0, %v3627
        %v3629 = vpop.f32.mrb[0].mxu0
        %3630 = vmatprep.mubr.f32.mxu0 0.0
        %3631 = vmatmul.mubr.f32.gmra.mrb[0].mxu0 %v3532
        %v3632 = vpop.f32.mrb[0].mxu0
        %v3633 = vadd.f32 0.0, %v3632
        %v3634 = vpop.f32.mrb[0].mxu0
        %3635 = vmatprep.mubr.f32.mxu0 0.0
        %3636 = vmatmul.mubr.f32.gmra.mrb[0].mxu0 %v3534
        %v3637 = vpop.f32.mrb[0].mxu0
        %v3638 = vadd.f32 0.0, %v3637
        %v3639 = vpop.f32.mrb[0].mxu0
        %3640 = vmatprep.mubr.f32.mxu0 0.0
        %3641 = vmatmul.mubr.f32.gmra.mrb[0].mxu0 %v3536
        %v3642 = vpop.f32.mrb[0].mxu0
        %v3643 = vadd.f32 0.0, %v3642
        %v3644 = vpop.f32.mrb[0].mxu0
        %3645 = vmatprep.mubr.f32.mxu0 0.0
        %3646 = vmatmul.mubr.f32.gmra.mrb[0].mxu0 %v3538
        %v3647 = vpop.f32.mrb[0].mxu0
        %v3648 = vadd.f32 0.0, %v3647
        %v3649 = vpop.f32.mrb[0].mxu0
        %3650 = vmatprep.mubr.f32.mxu0 0.0
        %3651 = vmatmul.mubr.f32.gmra.mrb[0].mxu0 %v3540
        %v3652 = vpop.f32.mrb[0].mxu0
        %v3653 = vadd.f32 0.0, %v3652
        %v3654 = vpop.f32.mrb[0].mxu0
        %3655 = vmatprep.mubr.f32.mxu0 0.0
        %3656 = vmatmul.mubr.f32.gmra.mrb[0].mxu0 %v3542
        %v3657 = vpop.f32.mrb[0].mxu0
        %v3658 = vadd.f32 0.0, %v3657
        %v3659 = vpop.f32.mrb[0].mxu0
        %3660 = vmatprep.mubr.f32.mxu0 0.0
        %3661 = vmatmul.mubr.f32.gmra.mrb[0].mxu0 %v3544
        %v3662 = vpop.f32.mrb[0].mxu0
        %v3663 = vadd.f32 0.0, %v3662
        %v3664 = vpop.f32.mrb[0].mxu0
        %3665 = vdwg.mxu0
        %v3677 = vcombine.high %v3613, %v3613
        %v3679 = vunpack.c.l.s4 1983009808
        %v3680 = vunpack.c.0.s8 %v3679
        %v3681 = vlaneseq
        %v3682 = vshrl.u32 %v3681, 7
        %v3683 = vsub.s32 %v3680, %v3682
        %v3684 = vrot.slane %v3613, %v3683
        %v3686 = vunpack.c.l.s4 1983009808
        %v3687 = vunpack.c.0.s8 %v3686
        %v3688 = vlaneseq
        %v3689 = vshrl.u32 %v3688, 7
        %v3690 = vsub.s32 %v3687, %v3689
        %v3691 = vrot.slane %v3677, %v3690
        %v3692 = vcombine.high %v3684, %v3684
        %v3693 = vcombine.high %v3691, %v3691
        %v3694 = vcombine.high %v3618, %v3618
        %v3696 = vunpack.c.l.s4 1983009808
        %v3697 = vunpack.c.0.s8 %v3696
        %v3698 = vlaneseq
        %v3699 = vshrl.u32 %v3698, 7
        %v3700 = vsub.s32 %v3697, %v3699
        %v3701 = vrot.slane %v3618, %v3700
        %v3703 = vunpack.c.l.s4 1983009808
        %v3704 = vunpack.c.0.s8 %v3703
        %v3705 = vlaneseq
        %v3706 = vshrl.u32 %v3705, 7
        %v3707 = vsub.s32 %v3704, %v3706
        %v3708 = vrot.slane %v3694, %v3707
        %v3709 = vcombine.high %v3701, %v3701
        %v3710 = vcombine.high %v3708, %v3708
        %v3711 = vcombine.high %v3623, %v3623
        %v3713 = vunpack.c.l.s4 1983009808
        %v3714 = vunpack.c.0.s8 %v3713
        %v3715 = vlaneseq
        %v3716 = vshrl.u32 %v3715, 7
        %v3717 = vsub.s32 %v3714, %v3716
        %v3718 = vrot.slane %v3623, %v3717
        %v3720 = vunpack.c.l.s4 1983009808
        %v3721 = vunpack.c.0.s8 %v3720
        %v3722 = vlaneseq
        %v3723 = vshrl.u32 %v3722, 7
        %v3724 = vsub.s32 %v3721, %v3723
        %v3725 = vrot.slane %v3711, %v3724
        %v3726 = vcombine.high %v3718, %v3718
        %v3727 = vcombine.high %v3725, %v3725
        %v3728 = vcombine.high %v3628, %v3628
        %v3730 = vunpack.c.l.s4 1983009808
        %v3731 = vunpack.c.0.s8 %v3730
        %v3732 = vlaneseq
        %v3733 = vshrl.u32 %v3732, 7
        %v3734 = vsub.s32 %v3731, %v3733
        %v3735 = vrot.slane %v3628, %v3734
        %v3737 = vunpack.c.l.s4 1983009808
        %v3738 = vunpack.c.0.s8 %v3737
        %v3739 = vlaneseq
        %v3740 = vshrl.u32 %v3739, 7
        %v3741 = vsub.s32 %v3738, %v3740
        %v3742 = vrot.slane %v3728, %v3741
        %v3743 = vcombine.high %v3735, %v3735
        %v3744 = vcombine.high %v3742, %v3742
        %v3745 = vcombine.high %v3633, %v3633
        %v3747 = vunpack.c.l.s4 1983009808
        %v3748 = vunpack.c.0.s8 %v3747
        %v3749 = vlaneseq
        %v3750 = vshrl.u32 %v3749, 7
        %v3751 = vsub.s32 %v3748, %v3750
        %v3752 = vrot.slane %v3633, %v3751
        %v3754 = vunpack.c.l.s4 1983009808
        %v3755 = vunpack.c.0.s8 %v3754
        %v3756 = vlaneseq
        %v3757 = vshrl.u32 %v3756, 7
        %v3758 = vsub.s32 %v3755, %v3757
        %v3759 = vrot.slane %v3745, %v3758
        %v3760 = vcombine.high %v3752, %v3752
        %v3761 = vcombine.high %v3759, %v3759
        %v3762 = vcombine.high %v3638, %v3638
        %v3764 = vunpack.c.l.s4 1983009808
        %v3765 = vunpack.c.0.s8 %v3764
        %v3766 = vlaneseq
        %v3767 = vshrl.u32 %v3766, 7
        %v3768 = vsub.s32 %v3765, %v3767
        %v3769 = vrot.slane %v3638, %v3768
        %v3771 = vunpack.c.l.s4 1983009808
        %v3772 = vunpack.c.0.s8 %v3771
        %v3773 = vlaneseq
        %v3774 = vshrl.u32 %v3773, 7
        %v3775 = vsub.s32 %v3772, %v3774
        %v3776 = vrot.slane %v3762, %v3775
        %v3777 = vcombine.high %v3769, %v3769
        %v3778 = vcombine.high %v3776, %v3776
        %v3779 = vcombine.high %v3643, %v3643
        %v3781 = vunpack.c.l.s4 1983009808
        %v3782 = vunpack.c.0.s8 %v3781
        %v3783 = vlaneseq
        %v3784 = vshrl.u32 %v3783, 7
        %v3785 = vsub.s32 %v3782, %v3784
        %v3786 = vrot.slane %v3643, %v3785
        %v3788 = vunpack.c.l.s4 1983009808
        %v3789 = vunpack.c.0.s8 %v3788
        %v3790 = vlaneseq
        %v3791 = vshrl.u32 %v3790, 7
        %v3792 = vsub.s32 %v3789, %v3791
        %v3793 = vrot.slane %v3779, %v3792
        %v3794 = vcombine.high %v3786, %v3786
        %v3795 = vcombine.high %v3793, %v3793
        %v3796 = vcombine.high %v3648, %v3648
        %v3798 = vunpack.c.l.s4 1983009808
        %v3799 = vunpack.c.0.s8 %v3798
        %v3800 = vlaneseq
        %v3801 = vshrl.u32 %v3800, 7
        %v3802 = vsub.s32 %v3799, %v3801
        %v3803 = vrot.slane %v3648, %v3802
        %v3805 = vunpack.c.l.s4 1983009808
        %v3806 = vunpack.c.0.s8 %v3805
        %v3807 = vlaneseq
        %v3808 = vshrl.u32 %v3807, 7
        %v3809 = vsub.s32 %v3806, %v3808
        %v3810 = vrot.slane %v3796, %v3809
        %v3811 = vcombine.high %v3803, %v3803
        %v3812 = vcombine.high %v3810, %v3810
        %v3813 = vcombine.high %v3653, %v3653
        %v3815 = vunpack.c.l.s4 1983009808
        %v3816 = vunpack.c.0.s8 %v3815
        %v3817 = vlaneseq
        %v3818 = vshrl.u32 %v3817, 7
        %v3819 = vsub.s32 %v3816, %v3818
        %v3820 = vrot.slane %v3653, %v3819
        %v3822 = vunpack.c.l.s4 1983009808
        %v3823 = vunpack.c.0.s8 %v3822
        %v3824 = vlaneseq
        %v3825 = vshrl.u32 %v3824, 7
        %v3826 = vsub.s32 %v3823, %v3825
        %v3827 = vrot.slane %v3813, %v3826
        %v3828 = vcombine.high %v3820, %v3820
        %v3829 = vcombine.high %v3827, %v3827
        %v3830 = vcombine.high %v3658, %v3658
        %v3832 = vunpack.c.l.s4 1983009808
        %v3833 = vunpack.c.0.s8 %v3832
        %v3834 = vlaneseq
        %v3835 = vshrl.u32 %v3834, 7
        %v3836 = vsub.s32 %v3833, %v3835
        %v3837 = vrot.slane %v3658, %v3836
        %v3839 = vunpack.c.l.s4 1983009808
        %v3840 = vunpack.c.0.s8 %v3839
        %v3841 = vlaneseq
        %v3842 = vshrl.u32 %v3841, 7
        %v3843 = vsub.s32 %v3840, %v3842
        %v3844 = vrot.slane %v3830, %v3843
        %v3845 = vcombine.high %v3837, %v3837
        %v3846 = vcombine.high %v3844, %v3844
        %v3848 = vunpack.c.l.s4 1983009808
        %v3849 = vunpack.c.0.s8 %v3848
        %v3850 = vlaneseq
        %v3851 = vshrl.u32 %v3850, 7
        %v3852 = vsub.s32 %v3849, %v3851
        %v3853 = vrot.slane %v3663, %v3852
        %v3854 = vcombine.high %v3853, %v3853
        %v3897 = vld [vmem:[#allocation6 + $0x1c8] sm:$0x1]
        %v3898 = vld [vmem:[#allocation6 + $0x1d0] sm:$0x1]
        %v3899 = vlaneseq
        %v3900 = vshrl.u32 %v3899, 7
        %v3901 = vsub.s32 0, %v3900
        %v3902 = vrot.slane %v3897, %v3901
        %v3904 = vcombine.high %v3902, %v3902
        %v3906 = vunpack.c.l.s4 1983009808
        %v3907 = vunpack.c.0.s8 %v3906
        %v3908 = vlaneseq
        %v3909 = vshrl.u32 %v3908, 7
        %v3910 = vsub.s32 %v3907, %v3909
        %v3911 = vrot.slane %v3902, %v3910
        %v3913 = vunpack.c.l.s4 1983009808
        %v3914 = vunpack.c.0.s8 %v3913
        %v3915 = vlaneseq
        %v3916 = vshrl.u32 %v3915, 7
        %v3917 = vsub.s32 %v3914, %v3916
        %v3918 = vrot.slane %v3904, %v3917
        %v3919 = vcombine.high %v3911, %v3911
        %v3923 = vmul.f32 %v3684, %v3911
        %v3924 = vmul.f32 %v3692, %v3919
        %v3925 = vmul.f32 %v3691, %v3918
        %v3926 = vmul.f32 %v3693, %v3911
        %v3927 = vmul.f32 %v3701, %v3919
        %v3928 = vmul.f32 %v3709, %v3918
        %v3929 = vmul.f32 %v3708, %v3911
        %v3930 = vmul.f32 %v3710, %v3919
        %v3931 = vmul.f32 %v3718, %v3918
        %v3932 = vmul.f32 %v3726, %v3911
        %v3933 = vmul.f32 %v3725, %v3919
        %v3934 = vmul.f32 %v3727, %v3918
        %v3935 = vmul.f32 %v3735, %v3911
        %v3936 = vmul.f32 %v3743, %v3919
        %v3937 = vmul.f32 %v3742, %v3918
        %v3938 = vmul.f32 %v3744, %v3911
        %v3939 = vmul.f32 %v3752, %v3919
        %v3940 = vmul.f32 %v3760, %v3918
        %v3941 = vmul.f32 %v3759, %v3911
        %v3942 = vmul.f32 %v3761, %v3919
        %v3943 = vmul.f32 %v3769, %v3918
        %v3944 = vmul.f32 %v3777, %v3911
        %v3945 = vmul.f32 %v3776, %v3919
        %v3946 = vmul.f32 %v3778, %v3918
        %v3947 = vmul.f32 %v3786, %v3911
        %v3948 = vmul.f32 %v3794, %v3919
        %v3949 = vmul.f32 %v3793, %v3918
        %v3950 = vmul.f32 %v3795, %v3911
        %v3951 = vmul.f32 %v3803, %v3919
        %v3952 = vmul.f32 %v3811, %v3918
        %v3953 = vmul.f32 %v3810, %v3911
        %v3954 = vmul.f32 %v3812, %v3919
        %v3955 = vmul.f32 %v3820, %v3918
        %v3956 = vmul.f32 %v3828, %v3911
        %v3957 = vmul.f32 %v3827, %v3919
        %v3958 = vmul.f32 %v3829, %v3918
        %v3959 = vmul.f32 %v3837, %v3911
        %v3960 = vmul.f32 %v3845, %v3919
        %v3961 = vmul.f32 %v3844, %v3918
        %v3962 = vmul.f32 %v3846, %v3911
        %v3963 = vmul.f32 %v3853, %v3919
        %v3964 = vmul.f32 %v3854, %v3918
        %v4007 = vcombine.low %v3923, %v3924
        %v4009 = vunpack.c.l.s4 1983009808
        %v4010 = vunpack.c.0.s8 %v4009
        %v4011 = vlaneseq
        %v4012 = vshrl.u32 %v4011, 7
        %v4013 = vsub.s32 %v4010, %v4012
        %v4014 = vrot.slane %v4007, %v4013
        %v4016 = vunpack.c.l.s4 1983009808
        %v4017 = vunpack.c.0.s8 %v4016
        %v4018 = vlaneseq
        %v4019 = vshrl.u32 %v4018, 7
        %v4020 = vsub.s32 %v4017, %v4019
        %v4021 = vrot.slane %v3925, %v4020
        %v4022 = vcombine.low %v4014, %v4021
        %v4023 = vcombine.low %v3926, %v3927
        %v4025 = vunpack.c.l.s4 1983009808
        %v4026 = vunpack.c.0.s8 %v4025
        %v4027 = vlaneseq
        %v4028 = vshrl.u32 %v4027, 7
        %v4029 = vsub.s32 %v4026, %v4028
        %v4030 = vrot.slane %v4023, %v4029
        %v4032 = vunpack.c.l.s4 1983009808
        %v4033 = vunpack.c.0.s8 %v4032
        %v4034 = vlaneseq
        %v4035 = vshrl.u32 %v4034, 7
        %v4036 = vsub.s32 %v4033, %v4035
        %v4037 = vrot.slane %v3928, %v4036
        %v4038 = vcombine.low %v4030, %v4037
        %v4039 = vcombine.low %v3929, %v3930
        %v4041 = vunpack.c.l.s4 1983009808
        %v4042 = vunpack.c.0.s8 %v4041
        %v4043 = vlaneseq
        %v4044 = vshrl.u32 %v4043, 7
        %v4045 = vsub.s32 %v4042, %v4044
        %v4046 = vrot.slane %v4039, %v4045
        %v4048 = vunpack.c.l.s4 1983009808
        %v4049 = vunpack.c.0.s8 %v4048
        %v4050 = vlaneseq
        %v4051 = vshrl.u32 %v4050, 7
        %v4052 = vsub.s32 %v4049, %v4051
        %v4053 = vrot.slane %v3931, %v4052
        %v4054 = vcombine.low %v4046, %v4053
        %v4055 = vcombine.low %v3932, %v3933
        %v4057 = vunpack.c.l.s4 1983009808
        %v4058 = vunpack.c.0.s8 %v4057
        %v4059 = vlaneseq
        %v4060 = vshrl.u32 %v4059, 7
        %v4061 = vsub.s32 %v4058, %v4060
        %v4062 = vrot.slane %v4055, %v4061
        %v4064 = vunpack.c.l.s4 1983009808
        %v4065 = vunpack.c.0.s8 %v4064
        %v4066 = vlaneseq
        %v4067 = vshrl.u32 %v4066, 7
        %v4068 = vsub.s32 %v4065, %v4067
        %v4069 = vrot.slane %v3934, %v4068
        %v4070 = vcombine.low %v4062, %v4069
        %v4071 = vcombine.low %v3935, %v3936
        %v4073 = vunpack.c.l.s4 1983009808
        %v4074 = vunpack.c.0.s8 %v4073
        %v4075 = vlaneseq
        %v4076 = vshrl.u32 %v4075, 7
        %v4077 = vsub.s32 %v4074, %v4076
        %v4078 = vrot.slane %v4071, %v4077
        %v4080 = vunpack.c.l.s4 1983009808
        %v4081 = vunpack.c.0.s8 %v4080
        %v4082 = vlaneseq
        %v4083 = vshrl.u32 %v4082, 7
        %v4084 = vsub.s32 %v4081, %v4083
        %v4085 = vrot.slane %v3937, %v4084
        %v4086 = vcombine.low %v4078, %v4085
        %v4087 = vcombine.low %v3938, %v3939
        %v4089 = vunpack.c.l.s4 1983009808
        %v4090 = vunpack.c.0.s8 %v4089
        %v4091 = vlaneseq
        %v4092 = vshrl.u32 %v4091, 7
        %v4093 = vsub.s32 %v4090, %v4092
        %v4094 = vrot.slane %v4087, %v4093
        %v4096 = vunpack.c.l.s4 1983009808
        %v4097 = vunpack.c.0.s8 %v4096
        %v4098 = vlaneseq
        %v4099 = vshrl.u32 %v4098, 7
        %v4100 = vsub.s32 %v4097, %v4099
        %v4101 = vrot.slane %v3940, %v4100
        %v4102 = vcombine.low %v4094, %v4101
        %v4103 = vcombine.low %v3941, %v3942
        %v4105 = vunpack.c.l.s4 1983009808
        %v4106 = vunpack.c.0.s8 %v4105
        %v4107 = vlaneseq
        %v4108 = vshrl.u32 %v4107, 7
        %v4109 = vsub.s32 %v4106, %v4108
        %v4110 = vrot.slane %v4103, %v4109
        %v4112 = vunpack.c.l.s4 1983009808
        %v4113 = vunpack.c.0.s8 %v4112
        %v4114 = vlaneseq
        %v4115 = vshrl.u32 %v4114, 7
        %v4116 = vsub.s32 %v4113, %v4115
        %v4117 = vrot.slane %v3943, %v4116
        %v4118 = vcombine.low %v4110, %v4117
        %v4119 = vcombine.low %v3944, %v3945
        %v4121 = vunpack.c.l.s4 1983009808
        %v4122 = vunpack.c.0.s8 %v4121
        %v4123 = vlaneseq
        %v4124 = vshrl.u32 %v4123, 7
        %v4125 = vsub.s32 %v4122, %v4124
        %v4126 = vrot.slane %v4119, %v4125
        %v4128 = vunpack.c.l.s4 1983009808
        %v4129 = vunpack.c.0.s8 %v4128
        %v4130 = vlaneseq
        %v4131 = vshrl.u32 %v4130, 7
        %v4132 = vsub.s32 %v4129, %v4131
        %v4133 = vrot.slane %v3946, %v4132
        %v4134 = vcombine.low %v4126, %v4133
        %v4135 = vcombine.low %v3947, %v3948
        %v4137 = vunpack.c.l.s4 1983009808
        %v4138 = vunpack.c.0.s8 %v4137
        %v4139 = vlaneseq
        %v4140 = vshrl.u32 %v4139, 7
        %v4141 = vsub.s32 %v4138, %v4140
        %v4142 = vrot.slane %v4135, %v4141
        %v4144 = vunpack.c.l.s4 1983009808
        %v4145 = vunpack.c.0.s8 %v4144
        %v4146 = vlaneseq
        %v4147 = vshrl.u32 %v4146, 7
        %v4148 = vsub.s32 %v4145, %v4147
        %v4149 = vrot.slane %v3949, %v4148
        %v4150 = vcombine.low %v4142, %v4149
        %v4151 = vcombine.low %v3950, %v3951
        %v4153 = vunpack.c.l.s4 1983009808
        %v4154 = vunpack.c.0.s8 %v4153
        %v4155 = vlaneseq
        %v4156 = vshrl.u32 %v4155, 7
        %v4157 = vsub.s32 %v4154, %v4156
        %v4158 = vrot.slane %v4151, %v4157
        %v4160 = vunpack.c.l.s4 1983009808
        %v4161 = vunpack.c.0.s8 %v4160
        %v4162 = vlaneseq
        %v4163 = vshrl.u32 %v4162, 7
        %v4164 = vsub.s32 %v4161, %v4163
        %v4165 = vrot.slane %v3952, %v4164
        %v4166 = vcombine.low %v4158, %v4165
        %v4167 = vcombine.low %v3953, %v3954
        %v4169 = vunpack.c.l.s4 1983009808
        %v4170 = vunpack.c.0.s8 %v4169
        %v4171 = vlaneseq
        %v4172 = vshrl.u32 %v4171, 7
        %v4173 = vsub.s32 %v4170, %v4172
        %v4174 = vrot.slane %v4167, %v4173
        %v4176 = vunpack.c.l.s4 1983009808
        %v4177 = vunpack.c.0.s8 %v4176
        %v4178 = vlaneseq
        %v4179 = vshrl.u32 %v4178, 7
        %v4180 = vsub.s32 %v4177, %v4179
        %v4181 = vrot.slane %v3955, %v4180
        %v4182 = vcombine.low %v4174, %v4181
        %v4183 = vcombine.low %v3956, %v3957
        %v4185 = vunpack.c.l.s4 1983009808
        %v4186 = vunpack.c.0.s8 %v4185
        %v4187 = vlaneseq
        %v4188 = vshrl.u32 %v4187, 7
        %v4189 = vsub.s32 %v4186, %v4188
        %v4190 = vrot.slane %v4183, %v4189
        %v4192 = vunpack.c.l.s4 1983009808
        %v4193 = vunpack.c.0.s8 %v4192
        %v4194 = vlaneseq
        %v4195 = vshrl.u32 %v4194, 7
        %v4196 = vsub.s32 %v4193, %v4195
        %v4197 = vrot.slane %v3958, %v4196
        %v4198 = vcombine.low %v4190, %v4197
        %v4199 = vcombine.low %v3959, %v3960
        %v4201 = vunpack.c.l.s4 1983009808
        %v4202 = vunpack.c.0.s8 %v4201
        %v4203 = vlaneseq
        %v4204 = vshrl.u32 %v4203, 7
        %v4205 = vsub.s32 %v4202, %v4204
        %v4206 = vrot.slane %v4199, %v4205
        %v4208 = vunpack.c.l.s4 1983009808
        %v4209 = vunpack.c.0.s8 %v4208
        %v4210 = vlaneseq
        %v4211 = vshrl.u32 %v4210, 7
        %v4212 = vsub.s32 %v4209, %v4211
        %v4213 = vrot.slane %v3961, %v4212
        %v4214 = vcombine.low %v4206, %v4213
        %v4215 = vcombine.low %v3962, %v3963
        %v4217 = vunpack.c.l.s4 1983009808
        %v4218 = vunpack.c.0.s8 %v4217
        %v4219 = vlaneseq
        %v4220 = vshrl.u32 %v4219, 7
        %v4221 = vsub.s32 %v4218, %v4220
        %v4222 = vrot.slane %v4215, %v4221
        %v4224 = vunpack.c.l.s4 1983009808
        %v4225 = vunpack.c.0.s8 %v4224
        %v4226 = vlaneseq
        %v4227 = vshrl.u32 %v4226, 7
        %v4228 = vsub.s32 %v4225, %v4227
        %v4229 = vrot.slane %v3964, %v4228
        %v4230 = vcombine.low %v4222, %v4229
        %vm4245 = vcmask 128000
        %v4246 = vsel %vm4245, %v4022, 0.0
        %4247 = vadd.xlane.f32.xlu0 %v4246
        %v4248 = vpop.xlane.xlu0 %4247
        %v4249 = vsel %vm4245, %v4038, 0.0
        %4250 = vadd.xlane.f32.xlu0 %v4249
        %v4251 = vpop.xlane.xlu0 %4250
        %v4252 = vsel %vm4245, %v4054, 0.0
        %4253 = vadd.xlane.f32.xlu0 %v4252
        %v4254 = vpop.xlane.xlu0 %4253
        %v4255 = vsel %vm4245, %v4070, 0.0
        %4256 = vadd.xlane.f32.xlu0 %v4255
        %v4257 = vpop.xlane.xlu0 %4256
        %v4258 = vsel %vm4245, %v4086, 0.0
        %4259 = vadd.xlane.f32.xlu0 %v4258
        %v4260 = vpop.xlane.xlu0 %4259
        %v4261 = vsel %vm4245, %v4102, 0.0
        %4262 = vadd.xlane.f32.xlu0 %v4261
        %v4263 = vpop.xlane.xlu0 %4262
        %v4264 = vsel %vm4245, %v4118, 0.0
        %4265 = vadd.xlane.f32.xlu0 %v4264
        %v4266 = vpop.xlane.xlu0 %4265
        %v4267 = vsel %vm4245, %v4134, 0.0
        %4268 = vadd.xlane.f32.xlu0 %v4267
        %v4269 = vpop.xlane.xlu0 %4268
        %v4270 = vsel %vm4245, %v4150, 0.0
        %4271 = vadd.xlane.f32.xlu0 %v4270
        %v4272 = vpop.xlane.xlu0 %4271
        %v4273 = vsel %vm4245, %v4166, 0.0
        %4274 = vadd.xlane.f32.xlu0 %v4273
        %v4275 = vpop.xlane.xlu0 %4274
        %v4276 = vsel %vm4245, %v4182, 0.0
        %4277 = vadd.xlane.f32.xlu0 %v4276
        %v4278 = vpop.xlane.xlu0 %4277
        %v4279 = vsel %vm4245, %v4198, 0.0
        %4280 = vadd.xlane.f32.xlu0 %v4279
        %v4281 = vpop.xlane.xlu0 %4280
        %v4282 = vsel %vm4245, %v4214, 0.0
        %4283 = vadd.xlane.f32.xlu0 %v4282
        %v4284 = vpop.xlane.xlu0 %4283
        %v4285 = vsel %vm4245, %v4230, 0.0
        %4286 = vadd.xlane.f32.xlu0 %v4285
        %v4287 = vpop.xlane.xlu0 %4286
        %v4288 = vlaneseq
        %v4289 = vshrl.u32 %v4288, 7
        %v4290 = vsub.s32 0, %v4289
        %v4291 = vrot.slane %v3898, %v4290
        %v4293 = vcombine.high %v4291, %v4291
        %v4295 = vunpack.c.l.s4 1983009808
        %v4296 = vunpack.c.0.s8 %v4295
        %v4297 = vlaneseq
        %v4298 = vshrl.u32 %v4297, 7
        %v4299 = vsub.s32 %v4296, %v4298
        %v4300 = vrot.slane %v4291, %v4299
        %v4302 = vunpack.c.l.s4 1983009808
        %v4303 = vunpack.c.0.s8 %v4302
        %v4304 = vlaneseq
        %v4305 = vshrl.u32 %v4304, 7
        %v4306 = vsub.s32 %v4303, %v4305
        %v4307 = vrot.slane %v4293, %v4306
        %v4308 = vcombine.high %v4300, %v4300
        %v4312 = vmul.f32 %v3684, %v4300
        %v4313 = vmul.f32 %v3692, %v4308
        %v4314 = vmul.f32 %v3691, %v4307
        %v4315 = vmul.f32 %v3693, %v4300
        %v4316 = vmul.f32 %v3701, %v4308
        %v4317 = vmul.f32 %v3709, %v4307
        %v4318 = vmul.f32 %v3708, %v4300
        %v4319 = vmul.f32 %v3710, %v4308
        %v4320 = vmul.f32 %v3718, %v4307
        %v4321 = vmul.f32 %v3726, %v4300
        %v4322 = vmul.f32 %v3725, %v4308
        %v4323 = vmul.f32 %v3727, %v4307
        %v4324 = vmul.f32 %v3735, %v4300
        %v4325 = vmul.f32 %v3743, %v4308
        %v4326 = vmul.f32 %v3742, %v4307
        %v4327 = vmul.f32 %v3744, %v4300
        %v4328 = vmul.f32 %v3752, %v4308
        %v4329 = vmul.f32 %v3760, %v4307
        %v4330 = vmul.f32 %v3759, %v4300
        %v4331 = vmul.f32 %v3761, %v4308
        %v4332 = vmul.f32 %v3769, %v4307
        %v4333 = vmul.f32 %v3777, %v4300
        %v4334 = vmul.f32 %v3776, %v4308
        %v4335 = vmul.f32 %v3778, %v4307
        %v4336 = vmul.f32 %v3786, %v4300
        %v4337 = vmul.f32 %v3794, %v4308
        %v4338 = vmul.f32 %v3793, %v4307
        %v4339 = vmul.f32 %v3795, %v4300
        %v4340 = vmul.f32 %v3803, %v4308
        %v4341 = vmul.f32 %v3811, %v4307
        %v4342 = vmul.f32 %v3810, %v4300
        %v4343 = vmul.f32 %v3812, %v4308
        %v4344 = vmul.f32 %v3820, %v4307
        %v4345 = vmul.f32 %v3828, %v4300
        %v4346 = vmul.f32 %v3827, %v4308
        %v4347 = vmul.f32 %v3829, %v4307
        %v4348 = vmul.f32 %v3837, %v4300
        %v4349 = vmul.f32 %v3845, %v4308
        %v4350 = vmul.f32 %v3844, %v4307
        %v4351 = vmul.f32 %v3846, %v4300
        %v4352 = vmul.f32 %v3853, %v4308
        %v4353 = vmul.f32 %v3854, %v4307
        %v4396 = vcombine.low %v4312, %v4313
        %v4398 = vunpack.c.l.s4 1983009808
        %v4399 = vunpack.c.0.s8 %v4398
        %v4400 = vlaneseq
        %v4401 = vshrl.u32 %v4400, 7
        %v4402 = vsub.s32 %v4399, %v4401
        %v4403 = vrot.slane %v4396, %v4402
        %v4405 = vunpack.c.l.s4 1983009808
        %v4406 = vunpack.c.0.s8 %v4405
        %v4407 = vlaneseq
        %v4408 = vshrl.u32 %v4407, 7
        %v4409 = vsub.s32 %v4406, %v4408
        %v4410 = vrot.slane %v4314, %v4409
        %v4411 = vcombine.low %v4403, %v4410
        %v4412 = vcombine.low %v4315, %v4316
        %v4414 = vunpack.c.l.s4 1983009808
        %v4415 = vunpack.c.0.s8 %v4414
        %v4416 = vlaneseq
        %v4417 = vshrl.u32 %v4416, 7
        %v4418 = vsub.s32 %v4415, %v4417
        %v4419 = vrot.slane %v4412, %v4418
        %v4421 = vunpack.c.l.s4 1983009808
        %v4422 = vunpack.c.0.s8 %v4421
        %v4423 = vlaneseq
        %v4424 = vshrl.u32 %v4423, 7
        %v4425 = vsub.s32 %v4422, %v4424
        %v4426 = vrot.slane %v4317, %v4425
        %v4427 = vcombine.low %v4419, %v4426
        %v4428 = vcombine.low %v4318, %v4319
        %v4430 = vunpack.c.l.s4 1983009808
        %v4431 = vunpack.c.0.s8 %v4430
        %v4432 = vlaneseq
        %v4433 = vshrl.u32 %v4432, 7
        %v4434 = vsub.s32 %v4431, %v4433
        %v4435 = vrot.slane %v4428, %v4434
        %v4437 = vunpack.c.l.s4 1983009808
        %v4438 = vunpack.c.0.s8 %v4437
        %v4439 = vlaneseq
        %v4440 = vshrl.u32 %v4439, 7
        %v4441 = vsub.s32 %v4438, %v4440
        %v4442 = vrot.slane %v4320, %v4441
        %v4443 = vcombine.low %v4435, %v4442
        %v4444 = vcombine.low %v4321, %v4322
        %v4446 = vunpack.c.l.s4 1983009808
        %v4447 = vunpack.c.0.s8 %v4446
        %v4448 = vlaneseq
        %v4449 = vshrl.u32 %v4448, 7
        %v4450 = vsub.s32 %v4447, %v4449
        %v4451 = vrot.slane %v4444, %v4450
        %v4453 = vunpack.c.l.s4 1983009808
        %v4454 = vunpack.c.0.s8 %v4453
        %v4455 = vlaneseq
        %v4456 = vshrl.u32 %v4455, 7
        %v4457 = vsub.s32 %v4454, %v4456
        %v4458 = vrot.slane %v4323, %v4457
        %v4459 = vcombine.low %v4451, %v4458
        %v4460 = vcombine.low %v4324, %v4325
        %v4462 = vunpack.c.l.s4 1983009808
        %v4463 = vunpack.c.0.s8 %v4462
        %v4464 = vlaneseq
        %v4465 = vshrl.u32 %v4464, 7
        %v4466 = vsub.s32 %v4463, %v4465
        %v4467 = vrot.slane %v4460, %v4466
        %v4469 = vunpack.c.l.s4 1983009808
        %v4470 = vunpack.c.0.s8 %v4469
        %v4471 = vlaneseq
        %v4472 = vshrl.u32 %v4471, 7
        %v4473 = vsub.s32 %v4470, %v4472
        %v4474 = vrot.slane %v4326, %v4473
        %v4475 = vcombine.low %v4467, %v4474
        %v4476 = vcombine.low %v4327, %v4328
        %v4478 = vunpack.c.l.s4 1983009808
        %v4479 = vunpack.c.0.s8 %v4478
        %v4480 = vlaneseq
        %v4481 = vshrl.u32 %v4480, 7
        %v4482 = vsub.s32 %v4479, %v4481
        %v4483 = vrot.slane %v4476, %v4482
        %v4485 = vunpack.c.l.s4 1983009808
        %v4486 = vunpack.c.0.s8 %v4485
        %v4487 = vlaneseq
        %v4488 = vshrl.u32 %v4487, 7
        %v4489 = vsub.s32 %v4486, %v4488
        %v4490 = vrot.slane %v4329, %v4489
        %v4491 = vcombine.low %v4483, %v4490
        %v4492 = vcombine.low %v4330, %v4331
        %v4494 = vunpack.c.l.s4 1983009808
        %v4495 = vunpack.c.0.s8 %v4494
        %v4496 = vlaneseq
        %v4497 = vshrl.u32 %v4496, 7
        %v4498 = vsub.s32 %v4495, %v4497
        %v4499 = vrot.slane %v4492, %v4498
        %v4501 = vunpack.c.l.s4 1983009808
        %v4502 = vunpack.c.0.s8 %v4501
        %v4503 = vlaneseq
        %v4504 = vshrl.u32 %v4503, 7
        %v4505 = vsub.s32 %v4502, %v4504
        %v4506 = vrot.slane %v4332, %v4505
        %v4507 = vcombine.low %v4499, %v4506
        %v4508 = vcombine.low %v4333, %v4334
        %v4510 = vunpack.c.l.s4 1983009808
        %v4511 = vunpack.c.0.s8 %v4510
        %v4512 = vlaneseq
        %v4513 = vshrl.u32 %v4512, 7
        %v4514 = vsub.s32 %v4511, %v4513
        %v4515 = vrot.slane %v4508, %v4514
        %v4517 = vunpack.c.l.s4 1983009808
        %v4518 = vunpack.c.0.s8 %v4517
        %v4519 = vlaneseq
        %v4520 = vshrl.u32 %v4519, 7
        %v4521 = vsub.s32 %v4518, %v4520
        %v4522 = vrot.slane %v4335, %v4521
        %v4523 = vcombine.low %v4515, %v4522
        %v4524 = vcombine.low %v4336, %v4337
        %v4526 = vunpack.c.l.s4 1983009808
        %v4527 = vunpack.c.0.s8 %v4526
        %v4528 = vlaneseq
        %v4529 = vshrl.u32 %v4528, 7
        %v4530 = vsub.s32 %v4527, %v4529
        %v4531 = vrot.slane %v4524, %v4530
        %v4533 = vunpack.c.l.s4 1983009808
        %v4534 = vunpack.c.0.s8 %v4533
        %v4535 = vlaneseq
        %v4536 = vshrl.u32 %v4535, 7
        %v4537 = vsub.s32 %v4534, %v4536
        %v4538 = vrot.slane %v4338, %v4537
        %v4539 = vcombine.low %v4531, %v4538
        %v4540 = vcombine.low %v4339, %v4340
        %v4542 = vunpack.c.l.s4 1983009808
        %v4543 = vunpack.c.0.s8 %v4542
        %v4544 = vlaneseq
        %v4545 = vshrl.u32 %v4544, 7
        %v4546 = vsub.s32 %v4543, %v4545
        %v4547 = vrot.slane %v4540, %v4546
        %v4549 = vunpack.c.l.s4 1983009808
        %v4550 = vunpack.c.0.s8 %v4549
        %v4551 = vlaneseq
        %v4552 = vshrl.u32 %v4551, 7
        %v4553 = vsub.s32 %v4550, %v4552
        %v4554 = vrot.slane %v4341, %v4553
        %v4555 = vcombine.low %v4547, %v4554
        %v4556 = vcombine.low %v4342, %v4343
        %v4558 = vunpack.c.l.s4 1983009808
        %v4559 = vunpack.c.0.s8 %v4558
        %v4560 = vlaneseq
        %v4561 = vshrl.u32 %v4560, 7
        %v4562 = vsub.s32 %v4559, %v4561
        %v4563 = vrot.slane %v4556, %v4562
        %v4565 = vunpack.c.l.s4 1983009808
        %v4566 = vunpack.c.0.s8 %v4565
        %v4567 = vlaneseq
        %v4568 = vshrl.u32 %v4567, 7
        %v4569 = vsub.s32 %v4566, %v4568
        %v4570 = vrot.slane %v4344, %v4569
        %v4571 = vcombine.low %v4563, %v4570
        %v4572 = vcombine.low %v4345, %v4346
        %v4574 = vunpack.c.l.s4 1983009808
        %v4575 = vunpack.c.0.s8 %v4574
        %v4576 = vlaneseq
        %v4577 = vshrl.u32 %v4576, 7
        %v4578 = vsub.s32 %v4575, %v4577
        %v4579 = vrot.slane %v4572, %v4578
        %v4581 = vunpack.c.l.s4 1983009808
        %v4582 = vunpack.c.0.s8 %v4581
        %v4583 = vlaneseq
        %v4584 = vshrl.u32 %v4583, 7
        %v4585 = vsub.s32 %v4582, %v4584
        %v4586 = vrot.slane %v4347, %v4585
        %v4587 = vcombine.low %v4579, %v4586
        %v4588 = vcombine.low %v4348, %v4349
        %v4590 = vunpack.c.l.s4 1983009808
        %v4591 = vunpack.c.0.s8 %v4590
        %v4592 = vlaneseq
        %v4593 = vshrl.u32 %v4592, 7
        %v4594 = vsub.s32 %v4591, %v4593
        %v4595 = vrot.slane %v4588, %v4594
        %v4597 = vunpack.c.l.s4 1983009808
        %v4598 = vunpack.c.0.s8 %v4597
        %v4599 = vlaneseq
        %v4600 = vshrl.u32 %v4599, 7
        %v4601 = vsub.s32 %v4598, %v4600
        %v4602 = vrot.slane %v4350, %v4601
        %v4603 = vcombine.low %v4595, %v4602
        %v4604 = vcombine.low %v4351, %v4352
        %v4606 = vunpack.c.l.s4 1983009808
        %v4607 = vunpack.c.0.s8 %v4606
        %v4608 = vlaneseq
        %v4609 = vshrl.u32 %v4608, 7
        %v4610 = vsub.s32 %v4607, %v4609
        %v4611 = vrot.slane %v4604, %v4610
        %v4613 = vunpack.c.l.s4 1983009808
        %v4614 = vunpack.c.0.s8 %v4613
        %v4615 = vlaneseq
        %v4616 = vshrl.u32 %v4615, 7
        %v4617 = vsub.s32 %v4614, %v4616
        %v4618 = vrot.slane %v4353, %v4617
        %v4619 = vcombine.low %v4611, %v4618
        %v4634 = vsel %vm4245, %v4411, 0.0
        %4635 = vadd.xlane.f32.xlu0 %v4634
        %v4636 = vpop.xlane.xlu0 %4635
        %v4637 = vsel %vm4245, %v4427, 0.0
        %4638 = vadd.xlane.f32.xlu0 %v4637
        %v4639 = vpop.xlane.xlu0 %4638
        %v4640 = vsel %vm4245, %v4443, 0.0
        %4641 = vadd.xlane.f32.xlu0 %v4640
        %v4642 = vpop.xlane.xlu0 %4641
        %v4643 = vsel %vm4245, %v4459, 0.0
        %4644 = vadd.xlane.f32.xlu0 %v4643
        %v4645 = vpop.xlane.xlu0 %4644
        %v4646 = vsel %vm4245, %v4475, 0.0
        %4647 = vadd.xlane.f32.xlu0 %v4646
        %v4648 = vpop.xlane.xlu0 %4647
        %v4649 = vsel %vm4245, %v4491, 0.0
        %4650 = vadd.xlane.f32.xlu0 %v4649
        %v4651 = vpop.xlane.xlu0 %4650
        %v4652 = vsel %vm4245, %v4507, 0.0
        %4653 = vadd.xlane.f32.xlu0 %v4652
        %v4654 = vpop.xlane.xlu0 %4653
        %v4655 = vsel %vm4245, %v4523, 0.0
        %4656 = vadd.xlane.f32.xlu0 %v4655
        %v4657 = vpop.xlane.xlu0 %4656
        %v4658 = vsel %vm4245, %v4539, 0.0
        %4659 = vadd.xlane.f32.xlu0 %v4658
        %v4660 = vpop.xlane.xlu0 %4659
        %v4661 = vsel %vm4245, %v4555, 0.0
        %4662 = vadd.xlane.f32.xlu0 %v4661
        %v4663 = vpop.xlane.xlu0 %4662
        %v4664 = vsel %vm4245, %v4571, 0.0
        %4665 = vadd.xlane.f32.xlu0 %v4664
        %v4666 = vpop.xlane.xlu0 %4665
        %v4667 = vsel %vm4245, %v4587, 0.0
        %4668 = vadd.xlane.f32.xlu0 %v4667
        %v4669 = vpop.xlane.xlu0 %4668
        %v4670 = vsel %vm4245, %v4603, 0.0
        %4671 = vadd.xlane.f32.xlu0 %v4670
        %v4672 = vpop.xlane.xlu0 %4671
        %v4673 = vsel %vm4245, %v4619, 0.0
        %4674 = vadd.xlane.f32.xlu0 %v4673
        %v4675 = vpop.xlane.xlu0 %4674
        %v4690 = vlaneseq
        %v4691 = vshrl.u32 %v4690, 7
        %v4692 = vsub.s32 %v189, %v4691
        %v4693 = vrot.slane %v4248, %v4692
        %v4694 = vlaneseq
        %v4695 = vshrl.u32 %v4694, 7
        %v4696 = vsub.s32 %v189, %v4695
        %v4697 = vrot.slane %v4251, %v4696
        %v4698 = vlaneseq
        %v4699 = vshrl.u32 %v4698, 7
        %v4700 = vsub.s32 %v189, %v4699
        %v4701 = vrot.slane %v4254, %v4700
        %v4702 = vlaneseq
        %v4703 = vshrl.u32 %v4702, 7
        %v4704 = vsub.s32 %v189, %v4703
        %v4705 = vrot.slane %v4257, %v4704
        %v4706 = vlaneseq
        %v4707 = vshrl.u32 %v4706, 7
        %v4708 = vsub.s32 %v189, %v4707
        %v4709 = vrot.slane %v4260, %v4708
        %v4710 = vlaneseq
        %v4711 = vshrl.u32 %v4710, 7
        %v4712 = vsub.s32 %v189, %v4711
        %v4713 = vrot.slane %v4263, %v4712
        %v4714 = vlaneseq
        %v4715 = vshrl.u32 %v4714, 7
        %v4716 = vsub.s32 %v189, %v4715
        %v4717 = vrot.slane %v4266, %v4716
        %v4718 = vlaneseq
        %v4719 = vshrl.u32 %v4718, 7
        %v4720 = vsub.s32 %v189, %v4719
        %v4721 = vrot.slane %v4269, %v4720
        %v4722 = vlaneseq
        %v4723 = vshrl.u32 %v4722, 7
        %v4724 = vsub.s32 %v189, %v4723
        %v4725 = vrot.slane %v4272, %v4724
        %v4726 = vlaneseq
        %v4727 = vshrl.u32 %v4726, 7
        %v4728 = vsub.s32 %v189, %v4727
        %v4729 = vrot.slane %v4275, %v4728
        %v4730 = vlaneseq
        %v4731 = vshrl.u32 %v4730, 7
        %v4732 = vsub.s32 %v189, %v4731
        %v4733 = vrot.slane %v4278, %v4732
        %v4734 = vlaneseq
        %v4735 = vshrl.u32 %v4734, 7
        %v4736 = vsub.s32 %v189, %v4735
        %v4737 = vrot.slane %v4281, %v4736
        %v4738 = vlaneseq
        %v4739 = vshrl.u32 %v4738, 7
        %v4740 = vsub.s32 %v189, %v4739
        %v4741 = vrot.slane %v4284, %v4740
        %v4742 = vlaneseq
        %v4743 = vshrl.u32 %v4742, 7
        %v4744 = vsub.s32 %v189, %v4743
        %v4745 = vrot.slane %v4287, %v4744
        %v4746 = vsel %vm2529, %v4693, %v4693
        %v4747 = vsel %vm2532, %v4693, %v4746
        %v4748 = vsel %vm2539, %v4693, %v4747
        %v4749 = vsel %vm2548, %v4693, %v4748
        %v4750 = vsel %vm2529, %v4697, %v4697
        %v4751 = vsel %vm2532, %v4697, %v4750
        %v4752 = vsel %vm2539, %v4697, %v4751
        %v4753 = vsel %vm2548, %v4697, %v4752
        %v4754 = vsel %vm2529, %v4701, %v4701
        %v4755 = vsel %vm2532, %v4701, %v4754
        %v4756 = vsel %vm2539, %v4701, %v4755
        %v4757 = vsel %vm2548, %v4701, %v4756
        %v4758 = vsel %vm2529, %v4705, %v4705
        %v4759 = vsel %vm2532, %v4705, %v4758
        %v4760 = vsel %vm2539, %v4705, %v4759
        %v4761 = vsel %vm2548, %v4705, %v4760
        %v4762 = vsel %vm2529, %v4709, %v4709
        %v4763 = vsel %vm2532, %v4709, %v4762
        %v4764 = vsel %vm2539, %v4709, %v4763
        %v4765 = vsel %vm2548, %v4709, %v4764
        %v4766 = vsel %vm2529, %v4713, %v4713
        %v4767 = vsel %vm2532, %v4713, %v4766
        %v4768 = vsel %vm2539, %v4713, %v4767
        %v4769 = vsel %vm2548, %v4713, %v4768
        %v4770 = vsel %vm2529, %v4717, %v4717
        %v4771 = vsel %vm2532, %v4717, %v4770
        %v4772 = vsel %vm2539, %v4717, %v4771
        %v4773 = vsel %vm2548, %v4717, %v4772
        %v4774 = vsel %vm2529, %v4721, %v4721
        %v4775 = vsel %vm2532, %v4721, %v4774
        %v4776 = vsel %vm2539, %v4721, %v4775
        %v4777 = vsel %vm2548, %v4721, %v4776
        %v4778 = vsel %vm2529, %v4725, %v4725
        %v4779 = vsel %vm2532, %v4725, %v4778
        %v4780 = vsel %vm2539, %v4725, %v4779
        %v4781 = vsel %vm2548, %v4725, %v4780
        %v4782 = vsel %vm2529, %v4729, %v4729
        %v4783 = vsel %vm2532, %v4729, %v4782
        %v4784 = vsel %vm2539, %v4729, %v4783
        %v4785 = vsel %vm2548, %v4729, %v4784
        %v4786 = vsel %vm2529, %v4733, %v4733
        %v4787 = vsel %vm2532, %v4733, %v4786
        %v4788 = vsel %vm2539, %v4733, %v4787
        %v4789 = vsel %vm2548, %v4733, %v4788
        %v4790 = vsel %vm2529, %v4737, %v4737
        %v4791 = vsel %vm2532, %v4737, %v4790
        %v4792 = vsel %vm2539, %v4737, %v4791
        %v4793 = vsel %vm2548, %v4737, %v4792
        %v4794 = vsel %vm2529, %v4741, %v4741
        %v4795 = vsel %vm2532, %v4741, %v4794
        %v4796 = vsel %vm2539, %v4741, %v4795
        %v4797 = vsel %vm2548, %v4741, %v4796
        %v4798 = vsel %vm2529, %v4745, %v4745
        %v4799 = vsel %vm2532, %v4745, %v4798
        %v4800 = vsel %vm2539, %v4745, %v4799
        %v4801 = vsel %vm2548, %v4745, %v4800
        %v4816 = vadd.f32 %v4636, %v4749
        %v4817 = vadd.f32 %v4639, %v4753
        %v4818 = vadd.f32 %v4642, %v4757
        %v4819 = vadd.f32 %v4645, %v4761
        %v4820 = vadd.f32 %v4648, %v4765
        %v4821 = vadd.f32 %v4651, %v4769
        %v4822 = vadd.f32 %v4654, %v4773
        %v4823 = vadd.f32 %v4657, %v4777
        %v4824 = vadd.f32 %v4660, %v4781
        %v4825 = vadd.f32 %v4663, %v4785
        %v4826 = vadd.f32 %v4666, %v4789
        %v4827 = vadd.f32 %v4669, %v4793
        %v4828 = vadd.f32 %v4672, %v4797
        %v4829 = vadd.f32 %v4675, %v4801
        %vm4830 = vcmp.gt.f32.partialorder %v4816, 0.0
        %vm4831 = vcmp.gt.f32.partialorder %v4817, 0.0
        %vm4832 = vcmp.gt.f32.partialorder %v4818, 0.0
        %vm4833 = vcmp.gt.f32.partialorder %v4819, 0.0
        %vm4834 = vcmp.gt.f32.partialorder %v4820, 0.0
        %vm4835 = vcmp.gt.f32.partialorder %v4821, 0.0
        %vm4836 = vcmp.gt.f32.partialorder %v4822, 0.0
        %vm4837 = vcmp.gt.f32.partialorder %v4823, 0.0
        %vm4838 = vcmp.gt.f32.partialorder %v4824, 0.0
        %vm4839 = vcmp.gt.f32.partialorder %v4825, 0.0
        %vm4840 = vcmp.gt.f32.partialorder %v4826, 0.0
        %vm4841 = vcmp.gt.f32.partialorder %v4827, 0.0
        %vm4842 = vcmp.gt.f32.partialorder %v4828, 0.0
        %vm4843 = vcmp.gt.f32.partialorder %v4829, 0.0
        %v4844 = vmul.f32 %v4816, 0.2
        %v4845 = vmul.f32 %v4817, 0.2
        %v4846 = vmul.f32 %v4818, 0.2
        %v4847 = vmul.f32 %v4819, 0.2
        %v4848 = vmul.f32 %v4820, 0.2
        %v4849 = vmul.f32 %v4821, 0.2
        %v4850 = vmul.f32 %v4822, 0.2
        %v4851 = vmul.f32 %v4823, 0.2
        %v4852 = vmul.f32 %v4824, 0.2
        %v4853 = vmul.f32 %v4825, 0.2
        %v4854 = vmul.f32 %v4826, 0.2
        %v4855 = vmul.f32 %v4827, 0.2
        %v4856 = vmul.f32 %v4828, 0.2
        %v4857 = vmul.f32 %v4829, 0.2
        %v4858 = vsel %vm4830, %v4816, %v4844
        %v4859 = vsel %vm4831, %v4817, %v4845
        %v4860 = vsel %vm4832, %v4818, %v4846
        %v4861 = vsel %vm4833, %v4819, %v4847
        %v4862 = vsel %vm4834, %v4820, %v4848
        %v4863 = vsel %vm4835, %v4821, %v4849
        %v4864 = vsel %vm4836, %v4822, %v4850
        %v4865 = vsel %vm4837, %v4823, %v4851
        %v4866 = vsel %vm4838, %v4824, %v4852
        %v4867 = vsel %vm4839, %v4825, %v4853
        %v4868 = vsel %vm4840, %v4826, %v4854
        %v4869 = vsel %vm4841, %v4827, %v4855
        %v4870 = vsel %vm4842, %v4828, %v4856
        %v4871 = vsel %vm4843, %v4829, %v4857
        %vm4872 = vcmask 46080
        %v4873 = vsel %vm4872, %v4858, -inf
        %4874 = vmax.xlane.f32.xlu0 %v4873
        %v4875 = vpop.xlane.xlu0 %4874
        %v4876 = vsel %vm4872, %v4859, -inf
        %4877 = vmax.xlane.f32.xlu0 %v4876
        %v4878 = vpop.xlane.xlu0 %4877
        %v4879 = vsel %vm4872, %v4860, -inf
        %4880 = vmax.xlane.f32.xlu0 %v4879
        %v4881 = vpop.xlane.xlu0 %4880
        %v4882 = vsel %vm4872, %v4861, -inf
        %4883 = vmax.xlane.f32.xlu0 %v4882
        %v4884 = vpop.xlane.xlu0 %4883
        %v4885 = vsel %vm4872, %v4862, -inf
        %4886 = vmax.xlane.f32.xlu0 %v4885
        %v4887 = vpop.xlane.xlu0 %4886
        %v4888 = vsel %vm4872, %v4863, -inf
        %4889 = vmax.xlane.f32.xlu0 %v4888
        %v4890 = vpop.xlane.xlu0 %4889
        %v4891 = vsel %vm4872, %v4864, -inf
        %4892 = vmax.xlane.f32.xlu0 %v4891
        %v4893 = vpop.xlane.xlu0 %4892
        %v4894 = vsel %vm4872, %v4865, -inf
        %4895 = vmax.xlane.f32.xlu0 %v4894
        %v4896 = vpop.xlane.xlu0 %4895
        %v4897 = vsel %vm4872, %v4866, -inf
        %4898 = vmax.xlane.f32.xlu0 %v4897
        %v4899 = vpop.xlane.xlu0 %4898
        %v4900 = vsel %vm4872, %v4867, -inf
        %4901 = vmax.xlane.f32.xlu0 %v4900
        %v4902 = vpop.xlane.xlu0 %4901
        %v4903 = vsel %vm4872, %v4868, -inf
        %4904 = vmax.xlane.f32.xlu0 %v4903
        %v4905 = vpop.xlane.xlu0 %4904
        %v4906 = vsel %vm4872, %v4869, -inf
        %4907 = vmax.xlane.f32.xlu0 %v4906
        %v4908 = vpop.xlane.xlu0 %4907
        %v4909 = vsel %vm4872, %v4870, -inf
        %4910 = vmax.xlane.f32.xlu0 %v4909
        %v4911 = vpop.xlane.xlu0 %4910
        %v4912 = vsel %vm4872, %v4871, -inf
        %4913 = vmax.xlane.f32.xlu0 %v4912
        %v4914 = vpop.xlane.xlu0 %4913
        %v4915 = vsub.f32 %v4858, %v4875
        %v4916 = vsub.f32 %v4859, %v4878
        %v4917 = vsub.f32 %v4860, %v4881
        %v4918 = vsub.f32 %v4861, %v4884
        %v4919 = vsub.f32 %v4862, %v4887
        %v4920 = vsub.f32 %v4863, %v4890
        %v4921 = vsub.f32 %v4864, %v4893
        %v4922 = vsub.f32 %v4865, %v4896
        %v4923 = vsub.f32 %v4866, %v4899
        %v4924 = vsub.f32 %v4867, %v4902
        %v4925 = vsub.f32 %v4868, %v4905
        %v4926 = vsub.f32 %v4869, %v4908
        %v4927 = vsub.f32 %v4870, %v4911
        %v4928 = vsub.f32 %v4871, %v4914
        %v4929 = vmul.f32 %v4915, 1.442695
        %v4930 = vpow.pop %v4929
        %v4931 = vmul.f32 %v4916, 1.442695
        %v4932 = vpow.pop %v4931
        %v4933 = vmul.f32 %v4917, 1.442695
        %v4934 = vpow.pop %v4933
        %v4935 = vmul.f32 %v4918, 1.442695
        %v4936 = vpow.pop %v4935
        %v4937 = vmul.f32 %v4919, 1.442695
        %v4938 = vpow.pop %v4937
        %v4939 = vmul.f32 %v4920, 1.442695
        %v4940 = vpow.pop %v4939
        %v4941 = vmul.f32 %v4921, 1.442695
        %v4942 = vpow.pop %v4941
        %v4943 = vmul.f32 %v4922, 1.442695
        %v4944 = vpow.pop %v4943
        %v4945 = vmul.f32 %v4923, 1.442695
        %v4946 = vpow.pop %v4945
        %v4947 = vmul.f32 %v4924, 1.442695
        %v4948 = vpow.pop %v4947
        %v4949 = vmul.f32 %v4925, 1.442695
        %v4950 = vpow.pop %v4949
        %v4951 = vmul.f32 %v4926, 1.442695
        %v4952 = vpow.pop %v4951
        %v4953 = vmul.f32 %v4927, 1.442695
        %v4954 = vpow.pop %v4953
        %v4955 = vmul.f32 %v4928, 1.442695
        %v4956 = vpow.pop %v4955
        %v4957 = vsel %vm4872, %v4930, 0.0
        %4958 = vadd.xlane.f32.xlu0 %v4957
        %v4959 = vpop.xlane.xlu0 %4958
        %v4960 = vsel %vm4872, %v4932, 0.0
        %4961 = vadd.xlane.f32.xlu0 %v4960
        %v4962 = vpop.xlane.xlu0 %4961
        %v4963 = vsel %vm4872, %v4934, 0.0
        %4964 = vadd.xlane.f32.xlu0 %v4963
        %v4965 = vpop.xlane.xlu0 %4964
        %v4966 = vsel %vm4872, %v4936, 0.0
        %4967 = vadd.xlane.f32.xlu0 %v4966
        %v4968 = vpop.xlane.xlu0 %4967
        %v4969 = vsel %vm4872, %v4938, 0.0
        %4970 = vadd.xlane.f32.xlu0 %v4969
        %v4971 = vpop.xlane.xlu0 %4970
        %v4972 = vsel %vm4872, %v4940, 0.0
        %4973 = vadd.xlane.f32.xlu0 %v4972
        %v4974 = vpop.xlane.xlu0 %4973
        %v4975 = vsel %vm4872, %v4942, 0.0
        %4976 = vadd.xlane.f32.xlu0 %v4975
        %v4977 = vpop.xlane.xlu0 %4976
        %v4978 = vsel %vm4872, %v4944, 0.0
        %4979 = vadd.xlane.f32.xlu0 %v4978
        %v4980 = vpop.xlane.xlu0 %4979
        %v4981 = vsel %vm4872, %v4946, 0.0
        %4982 = vadd.xlane.f32.xlu0 %v4981
        %v4983 = vpop.xlane.xlu0 %4982
        %v4984 = vsel %vm4872, %v4948, 0.0
        %4985 = vadd.xlane.f32.xlu0 %v4984
        %v4986 = vpop.xlane.xlu0 %4985
        %v4987 = vsel %vm4872, %v4950, 0.0
        %4988 = vadd.xlane.f32.xlu0 %v4987
        %v4989 = vpop.xlane.xlu0 %4988
        %v4990 = vsel %vm4872, %v4952, 0.0
        %4991 = vadd.xlane.f32.xlu0 %v4990
        %v4992 = vpop.xlane.xlu0 %4991
        %v4993 = vsel %vm4872, %v4954, 0.0
        %4994 = vadd.xlane.f32.xlu0 %v4993
        %v4995 = vpop.xlane.xlu0 %4994
        %v4996 = vsel %vm4872, %v4956, 0.0
        %4997 = vadd.xlane.f32.xlu0 %v4996
        %v4998 = vpop.xlane.xlu0 %4997
        %v4999 = vrcp.pop %v4959
        %v5000 = vmul.f32 %v4930, %v4999
        %v5001 = vrcp.pop %v4962
        %v5002 = vmul.f32 %v4932, %v5001
        %v5003 = vrcp.pop %v4965
        %v5004 = vmul.f32 %v4934, %v5003
        %v5005 = vrcp.pop %v4968
        %v5006 = vmul.f32 %v4936, %v5005
        %v5007 = vrcp.pop %v4971
        %v5008 = vmul.f32 %v4938, %v5007
        %v5009 = vrcp.pop %v4974
        %v5010 = vmul.f32 %v4940, %v5009
        %v5011 = vrcp.pop %v4977
        %v5012 = vmul.f32 %v4942, %v5011
        %v5013 = vrcp.pop %v4980
        %v5014 = vmul.f32 %v4944, %v5013
        %v5015 = vrcp.pop %v4983
        %v5016 = vmul.f32 %v4946, %v5015
        %v5017 = vrcp.pop %v4986
        %v5018 = vmul.f32 %v4948, %v5017
        %v5019 = vrcp.pop %v4989
        %v5020 = vmul.f32 %v4950, %v5019
        %v5021 = vrcp.pop %v4992
        %v5022 = vmul.f32 %v4952, %v5021
        %v5023 = vrcp.pop %v4995
        %v5024 = vmul.f32 %v4954, %v5023
        %v5025 = vrcp.pop %v4998
        %v5026 = vmul.f32 %v4956, %v5025
        %5028 = vset.pattern.permute.xlu0 0
        %5029 = vperm.xlu0 %5028, %v5000
        %v5030 = vpop.permute.xlu0 %5029
        %5033 = vset.pattern.permute.xlu0 0
        %5034 = vperm.xlu0 %5033, %v5002
        %v5035 = vpop.permute.xlu0 %5034
        %5038 = vset.pattern.permute.xlu0 0
        %5039 = vperm.xlu0 %5038, %v5004
        %v5040 = vpop.permute.xlu0 %5039
        %5043 = vset.pattern.permute.xlu0 0
        %5044 = vperm.xlu0 %5043, %v5006
        %v5045 = vpop.permute.xlu0 %5044
        %5048 = vset.pattern.permute.xlu0 0
        %5049 = vperm.xlu0 %5048, %v5008
        %v5050 = vpop.permute.xlu0 %5049
        %5053 = vset.pattern.permute.xlu0 0
        %5054 = vperm.xlu0 %5053, %v5010
        %v5055 = vpop.permute.xlu0 %5054
        %5058 = vset.pattern.permute.xlu0 0
        %5059 = vperm.xlu0 %5058, %v5012
        %v5060 = vpop.permute.xlu0 %5059
        %5063 = vset.pattern.permute.xlu0 0
        %5064 = vperm.xlu0 %5063, %v5014
        %v5065 = vpop.permute.xlu0 %5064
        %5068 = vset.pattern.permute.xlu0 0
        %5069 = vperm.xlu0 %5068, %v5016
        %v5070 = vpop.permute.xlu0 %5069
        %5073 = vset.pattern.permute.xlu0 0
        %5074 = vperm.xlu0 %5073, %v5018
        %v5075 = vpop.permute.xlu0 %5074
        %5078 = vset.pattern.permute.xlu0 0
        %5079 = vperm.xlu0 %5078, %v5020
        %v5080 = vpop.permute.xlu0 %5079
        %5083 = vset.pattern.permute.xlu0 0
        %5084 = vperm.xlu0 %5083, %v5022
        %v5085 = vpop.permute.xlu0 %5084
        %5088 = vset.pattern.permute.xlu0 0
        %5089 = vperm.xlu0 %5088, %v5024
        %v5090 = vpop.permute.xlu0 %5089
        %5093 = vset.pattern.permute.xlu0 0
        %5094 = vperm.xlu0 %5093, %v5026
        %v5095 = vpop.permute.xlu0 %5094
        %v5097 = vlaneseq
        %v5098 = vshrl.u32 %v5097, 7
        %v5099 = vsub.s32 0, %v5098
        %v5100 = vrot.slane %v3684, %v5099
        %v5101 = vlaneseq
        %v5102 = vshrl.u32 %v5101, 7
        %v5103 = vsub.s32 0, %v5102
        %v5104 = vrot.slane %v3693, %v5103
        %v5105 = vlaneseq
        %v5106 = vshrl.u32 %v5105, 7
        %v5107 = vsub.s32 0, %v5106
        %v5108 = vrot.slane %v3708, %v5107
        %v5109 = vlaneseq
        %v5110 = vshrl.u32 %v5109, 7
        %v5111 = vsub.s32 0, %v5110
        %v5112 = vrot.slane %v3726, %v5111
        %v5113 = vlaneseq
        %v5114 = vshrl.u32 %v5113, 7
        %v5115 = vsub.s32 0, %v5114
        %v5116 = vrot.slane %v3735, %v5115
        %v5117 = vlaneseq
        %v5118 = vshrl.u32 %v5117, 7
        %v5119 = vsub.s32 0, %v5118
        %v5120 = vrot.slane %v3744, %v5119
        %v5121 = vlaneseq
        %v5122 = vshrl.u32 %v5121, 7
        %v5123 = vsub.s32 0, %v5122
        %v5124 = vrot.slane %v3759, %v5123
        %v5125 = vlaneseq
        %v5126 = vshrl.u32 %v5125, 7
        %v5127 = vsub.s32 0, %v5126
        %v5128 = vrot.slane %v3777, %v5127
        %v5129 = vlaneseq
        %v5130 = vshrl.u32 %v5129, 7
        %v5131 = vsub.s32 0, %v5130
        %v5132 = vrot.slane %v3786, %v5131
        %v5133 = vlaneseq
        %v5134 = vshrl.u32 %v5133, 7
        %v5135 = vsub.s32 0, %v5134
        %v5136 = vrot.slane %v3795, %v5135
        %v5137 = vlaneseq
        %v5138 = vshrl.u32 %v5137, 7
        %v5139 = vsub.s32 0, %v5138
        %v5140 = vrot.slane %v3810, %v5139
        %v5141 = vlaneseq
        %v5142 = vshrl.u32 %v5141, 7
        %v5143 = vsub.s32 0, %v5142
        %v5144 = vrot.slane %v3828, %v5143
        %v5145 = vlaneseq
        %v5146 = vshrl.u32 %v5145, 7
        %v5147 = vsub.s32 0, %v5146
        %v5148 = vrot.slane %v3837, %v5147
        %v5149 = vlaneseq
        %v5150 = vshrl.u32 %v5149, 7
        %v5151 = vsub.s32 0, %v5150
        %v5152 = vrot.slane %v3846, %v5151
        %v5153 = vmul.f32 %v5030, %v5100
        %v5154 = vmul.f32 %v5035, %v5104
        %v5155 = vmul.f32 %v5040, %v5108
        %v5156 = vmul.f32 %v5045, %v5112
        %v5157 = vmul.f32 %v5050, %v5116
        %v5158 = vmul.f32 %v5055, %v5120
        %v5159 = vmul.f32 %v5060, %v5124
        %v5160 = vmul.f32 %v5065, %v5128
        %v5161 = vmul.f32 %v5070, %v5132
        %v5162 = vmul.f32 %v5075, %v5136
        %v5163 = vmul.f32 %v5080, %v5140
        %v5164 = vmul.f32 %v5085, %v5144
        %v5165 = vmul.f32 %v5090, %v5148
        %v5166 = vmul.f32 %v5095, %v5152
        %v5167 = vadd.f32 %v5153, 0.0
        %v5168 = vadd.f32 %v5154, 0.0
        %v5169 = vadd.f32 %v5155, 0.0
        %v5170 = vadd.f32 %v5156, 0.0
        %v5171 = vadd.f32 %v5157, 0.0
        %v5172 = vadd.f32 %v5158, 0.0
        %v5173 = vadd.f32 %v5159, 0.0
        %v5174 = vadd.f32 %v5160, 0.0
        %v5175 = vadd.f32 %v5161, 0.0
        %v5176 = vadd.f32 %v5162, 0.0
        %v5177 = vadd.f32 %v5163, 0.0
        %v5178 = vadd.f32 %v5164, 0.0
        %v5179 = vadd.f32 %v5165, 0.0
        %v5180 = vadd.f32 %v5166, 0.0
        %5181 = vset.pattern.permute.xlu0 1
        %5182 = vperm.xlu0 %5181, %v5000
        %v5183 = vpop.permute.xlu0 %5182
        %5185 = vset.pattern.permute.xlu0 1
        %5186 = vperm.xlu0 %5185, %v5002
        %v5187 = vpop.permute.xlu0 %5186
        %5189 = vset.pattern.permute.xlu0 1
        %5190 = vperm.xlu0 %5189, %v5004
        %v5191 = vpop.permute.xlu0 %5190
        %5193 = vset.pattern.permute.xlu0 1
        %5194 = vperm.xlu0 %5193, %v5006
        %v5195 = vpop.permute.xlu0 %5194
        %5197 = vset.pattern.permute.xlu0 1
        %5198 = vperm.xlu0 %5197, %v5008
        %v5199 = vpop.permute.xlu0 %5198
        %5201 = vset.pattern.permute.xlu0 1
        %5202 = vperm.xlu0 %5201, %v5010
        %v5203 = vpop.permute.xlu0 %5202
        %5205 = vset.pattern.permute.xlu0 1
        %5206 = vperm.xlu0 %5205, %v5012
        %v5207 = vpop.permute.xlu0 %5206
        %5209 = vset.pattern.permute.xlu0 1
        %5210 = vperm.xlu0 %5209, %v5014
        %v5211 = vpop.permute.xlu0 %5210
        %5213 = vset.pattern.permute.xlu0 1
        %5214 = vperm.xlu0 %5213, %v5016
        %v5215 = vpop.permute.xlu0 %5214
        %5217 = vset.pattern.permute.xlu0 1
        %5218 = vperm.xlu0 %5217, %v5018
        %v5219 = vpop.permute.xlu0 %5218
        %5221 = vset.pattern.permute.xlu0 1
        %5222 = vperm.xlu0 %5221, %v5020
        %v5223 = vpop.permute.xlu0 %5222
        %5225 = vset.pattern.permute.xlu0 1
        %5226 = vperm.xlu0 %5225, %v5022
        %v5227 = vpop.permute.xlu0 %5226
        %5229 = vset.pattern.permute.xlu0 1
        %5230 = vperm.xlu0 %5229, %v5024
        %v5231 = vpop.permute.xlu0 %5230
        %5233 = vset.pattern.permute.xlu0 1
        %5234 = vperm.xlu0 %5233, %v5026
        %v5235 = vpop.permute.xlu0 %5234
        %v5237 = vlaneseq
        %v5238 = vshrl.u32 %v5237, 7
        %v5239 = vsub.s32 1, %v5238
        %v5240 = vrot.slane %v3684, %v5239
        %v5241 = vlaneseq
        %v5242 = vshrl.u32 %v5241, 7
        %v5243 = vsub.s32 1, %v5242
        %v5244 = vrot.slane %v3693, %v5243
        %v5245 = vlaneseq
        %v5246 = vshrl.u32 %v5245, 7
        %v5247 = vsub.s32 1, %v5246
        %v5248 = vrot.slane %v3708, %v5247
        %v5249 = vlaneseq
        %v5250 = vshrl.u32 %v5249, 7
        %v5251 = vsub.s32 1, %v5250
        %v5252 = vrot.slane %v3726, %v5251
        %v5253 = vlaneseq
        %v5254 = vshrl.u32 %v5253, 7
        %v5255 = vsub.s32 1, %v5254
        %v5256 = vrot.slane %v3735, %v5255
        %v5257 = vlaneseq
        %v5258 = vshrl.u32 %v5257, 7
        %v5259 = vsub.s32 1, %v5258
        %v5260 = vrot.slane %v3744, %v5259
        %v5261 = vlaneseq
        %v5262 = vshrl.u32 %v5261, 7
        %v5263 = vsub.s32 1, %v5262
        %v5264 = vrot.slane %v3759, %v5263
        %v5265 = vlaneseq
        %v5266 = vshrl.u32 %v5265, 7
        %v5267 = vsub.s32 1, %v5266
        %v5268 = vrot.slane %v3777, %v5267
        %v5269 = vlaneseq
        %v5270 = vshrl.u32 %v5269, 7
        %v5271 = vsub.s32 1, %v5270
        %v5272 = vrot.slane %v3786, %v5271
        %v5273 = vlaneseq
        %v5274 = vshrl.u32 %v5273, 7
        %v5275 = vsub.s32 1, %v5274
        %v5276 = vrot.slane %v3795, %v5275
        %v5277 = vlaneseq
        %v5278 = vshrl.u32 %v5277, 7
        %v5279 = vsub.s32 1, %v5278
        %v5280 = vrot.slane %v3810, %v5279
        %v5281 = vlaneseq
        %v5282 = vshrl.u32 %v5281, 7
        %v5283 = vsub.s32 1, %v5282
        %v5284 = vrot.slane %v3828, %v5283
        %v5285 = vlaneseq
        %v5286 = vshrl.u32 %v5285, 7
        %v5287 = vsub.s32 1, %v5286
        %v5288 = vrot.slane %v3837, %v5287
        %v5289 = vlaneseq
        %v5290 = vshrl.u32 %v5289, 7
        %v5291 = vsub.s32 1, %v5290
        %v5292 = vrot.slane %v3846, %v5291
        %v5293 = vmul.f32 %v5183, %v5240
        %v5294 = vmul.f32 %v5187, %v5244
        %v5295 = vmul.f32 %v5191, %v5248
        %v5296 = vmul.f32 %v5195, %v5252
        %v5297 = vmul.f32 %v5199, %v5256
        %v5298 = vmul.f32 %v5203, %v5260
        %v5299 = vmul.f32 %v5207, %v5264
        %v5300 = vmul.f32 %v5211, %v5268
        %v5301 = vmul.f32 %v5215, %v5272
        %v5302 = vmul.f32 %v5219, %v5276
        %v5303 = vmul.f32 %v5223, %v5280
        %v5304 = vmul.f32 %v5227, %v5284
        %v5305 = vmul.f32 %v5231, %v5288
        %v5306 = vmul.f32 %v5235, %v5292
        %v5307 = vadd.f32 %v5167, %v5293
        %v5308 = vadd.f32 %v5168, %v5294
        %v5309 = vadd.f32 %v5169, %v5295
        %v5310 = vadd.f32 %v5170, %v5296
        %v5311 = vadd.f32 %v5171, %v5297
        %v5312 = vadd.f32 %v5172, %v5298
        %v5313 = vadd.f32 %v5173, %v5299
        %v5314 = vadd.f32 %v5174, %v5300
        %v5315 = vadd.f32 %v5175, %v5301
        %v5316 = vadd.f32 %v5176, %v5302
        %v5317 = vadd.f32 %v5177, %v5303
        %v5318 = vadd.f32 %v5178, %v5304
        %v5319 = vadd.f32 %v5179, %v5305
        %v5320 = vadd.f32 %v5180, %v5306
        %5321 = vset.pattern.permute.xlu0 2
        %5322 = vperm.xlu0 %5321, %v5000
        %v5323 = vpop.permute.xlu0 %5322
        %5325 = vset.pattern.permute.xlu0 2
        %5326 = vperm.xlu0 %5325, %v5002
        %v5327 = vpop.permute.xlu0 %5326
        %5329 = vset.pattern.permute.xlu0 2
        %5330 = vperm.xlu0 %5329, %v5004
        %v5331 = vpop.permute.xlu0 %5330
        %5333 = vset.pattern.permute.xlu0 2
        %5334 = vperm.xlu0 %5333, %v5006
        %v5335 = vpop.permute.xlu0 %5334
        %5337 = vset.pattern.permute.xlu0 2
        %5338 = vperm.xlu0 %5337, %v5008
        %v5339 = vpop.permute.xlu0 %5338
        %5341 = vset.pattern.permute.xlu0 2
        %5342 = vperm.xlu0 %5341, %v5010
        %v5343 = vpop.permute.xlu0 %5342
        %5345 = vset.pattern.permute.xlu0 2
        %5346 = vperm.xlu0 %5345, %v5012
        %v5347 = vpop.permute.xlu0 %5346
        %5349 = vset.pattern.permute.xlu0 2
        %5350 = vperm.xlu0 %5349, %v5014
        %v5351 = vpop.permute.xlu0 %5350
        %5353 = vset.pattern.permute.xlu0 2
        %5354 = vperm.xlu0 %5353, %v5016
        %v5355 = vpop.permute.xlu0 %5354
        %5357 = vset.pattern.permute.xlu0 2
        %5358 = vperm.xlu0 %5357, %v5018
        %v5359 = vpop.permute.xlu0 %5358
        %5361 = vset.pattern.permute.xlu0 2
        %5362 = vperm.xlu0 %5361, %v5020
        %v5363 = vpop.permute.xlu0 %5362
        %5365 = vset.pattern.permute.xlu0 2
        %5366 = vperm.xlu0 %5365, %v5022
        %v5367 = vpop.permute.xlu0 %5366
        %5369 = vset.pattern.permute.xlu0 2
        %5370 = vperm.xlu0 %5369, %v5024
        %v5371 = vpop.permute.xlu0 %5370
        %5373 = vset.pattern.permute.xlu0 2
        %5374 = vperm.xlu0 %5373, %v5026
        %v5375 = vpop.permute.xlu0 %5374
        %v5377 = vlaneseq
        %v5378 = vshrl.u32 %v5377, 7
        %v5379 = vsub.s32 0, %v5378
        %v5380 = vrot.slane %v3692, %v5379
        %v5381 = vlaneseq
        %v5382 = vshrl.u32 %v5381, 7
        %v5383 = vsub.s32 0, %v5382
        %v5384 = vrot.slane %v3701, %v5383
        %v5385 = vlaneseq
        %v5386 = vshrl.u32 %v5385, 7
        %v5387 = vsub.s32 0, %v5386
        %v5388 = vrot.slane %v3710, %v5387
        %v5389 = vlaneseq
        %v5390 = vshrl.u32 %v5389, 7
        %v5391 = vsub.s32 0, %v5390
        %v5392 = vrot.slane %v3725, %v5391
        %v5393 = vlaneseq
        %v5394 = vshrl.u32 %v5393, 7
        %v5395 = vsub.s32 0, %v5394
        %v5396 = vrot.slane %v3743, %v5395
        %v5397 = vlaneseq
        %v5398 = vshrl.u32 %v5397, 7
        %v5399 = vsub.s32 0, %v5398
        %v5400 = vrot.slane %v3752, %v5399
        %v5401 = vlaneseq
        %v5402 = vshrl.u32 %v5401, 7
        %v5403 = vsub.s32 0, %v5402
        %v5404 = vrot.slane %v3761, %v5403
        %v5405 = vlaneseq
        %v5406 = vshrl.u32 %v5405, 7
        %v5407 = vsub.s32 0, %v5406
        %v5408 = vrot.slane %v3776, %v5407
        %v5409 = vlaneseq
        %v5410 = vshrl.u32 %v5409, 7
        %v5411 = vsub.s32 0, %v5410
        %v5412 = vrot.slane %v3794, %v5411
        %v5413 = vlaneseq
        %v5414 = vshrl.u32 %v5413, 7
        %v5415 = vsub.s32 0, %v5414
        %v5416 = vrot.slane %v3803, %v5415
        %v5417 = vlaneseq
        %v5418 = vshrl.u32 %v5417, 7
        %v5419 = vsub.s32 0, %v5418
        %v5420 = vrot.slane %v3812, %v5419
        %v5421 = vlaneseq
        %v5422 = vshrl.u32 %v5421, 7
        %v5423 = vsub.s32 0, %v5422
        %v5424 = vrot.slane %v3827, %v5423
        %v5425 = vlaneseq
        %v5426 = vshrl.u32 %v5425, 7
        %v5427 = vsub.s32 0, %v5426
        %v5428 = vrot.slane %v3845, %v5427
        %v5429 = vlaneseq
        %v5430 = vshrl.u32 %v5429, 7
        %v5431 = vsub.s32 0, %v5430
        %v5432 = vrot.slane %v3853, %v5431
        %v5433 = vmul.f32 %v5323, %v5380
        %v5434 = vmul.f32 %v5327, %v5384
        %v5435 = vmul.f32 %v5331, %v5388
        %v5436 = vmul.f32 %v5335, %v5392
        %v5437 = vmul.f32 %v5339, %v5396
        %v5438 = vmul.f32 %v5343, %v5400
        %v5439 = vmul.f32 %v5347, %v5404
        %v5440 = vmul.f32 %v5351, %v5408
        %v5441 = vmul.f32 %v5355, %v5412
        %v5442 = vmul.f32 %v5359, %v5416
        %v5443 = vmul.f32 %v5363, %v5420
        %v5444 = vmul.f32 %v5367, %v5424
        %v5445 = vmul.f32 %v5371, %v5428
        %v5446 = vmul.f32 %v5375, %v5432
        %v5447 = vadd.f32 %v5307, %v5433
        %v5448 = vadd.f32 %v5308, %v5434
        %v5449 = vadd.f32 %v5309, %v5435
        %v5450 = vadd.f32 %v5310, %v5436
        %v5451 = vadd.f32 %v5311, %v5437
        %v5452 = vadd.f32 %v5312, %v5438
        %v5453 = vadd.f32 %v5313, %v5439
        %v5454 = vadd.f32 %v5314, %v5440
        %v5455 = vadd.f32 %v5315, %v5441
        %v5456 = vadd.f32 %v5316, %v5442
        %v5457 = vadd.f32 %v5317, %v5443
        %v5458 = vadd.f32 %v5318, %v5444
        %v5459 = vadd.f32 %v5319, %v5445
        %v5460 = vadd.f32 %v5320, %v5446
        %5461 = vset.pattern.permute.xlu0 3
        %5462 = vperm.xlu0 %5461, %v5000
        %v5463 = vpop.permute.xlu0 %5462
        %5465 = vset.pattern.permute.xlu0 3
        %5466 = vperm.xlu0 %5465, %v5002
        %v5467 = vpop.permute.xlu0 %5466
        %5469 = vset.pattern.permute.xlu0 3
        %5470 = vperm.xlu0 %5469, %v5004
        %v5471 = vpop.permute.xlu0 %5470
        %5473 = vset.pattern.permute.xlu0 3
        %5474 = vperm.xlu0 %5473, %v5006
        %v5475 = vpop.permute.xlu0 %5474
        %5477 = vset.pattern.permute.xlu0 3
        %5478 = vperm.xlu0 %5477, %v5008
        %v5479 = vpop.permute.xlu0 %5478
        %5481 = vset.pattern.permute.xlu0 3
        %5482 = vperm.xlu0 %5481, %v5010
        %v5483 = vpop.permute.xlu0 %5482
        %5485 = vset.pattern.permute.xlu0 3
        %5486 = vperm.xlu0 %5485, %v5012
        %v5487 = vpop.permute.xlu0 %5486
        %5489 = vset.pattern.permute.xlu0 3
        %5490 = vperm.xlu0 %5489, %v5014
        %v5491 = vpop.permute.xlu0 %5490
        %5493 = vset.pattern.permute.xlu0 3
        %5494 = vperm.xlu0 %5493, %v5016
        %v5495 = vpop.permute.xlu0 %5494
        %5497 = vset.pattern.permute.xlu0 3
        %5498 = vperm.xlu0 %5497, %v5018
        %v5499 = vpop.permute.xlu0 %5498
        %5501 = vset.pattern.permute.xlu0 3
        %5502 = vperm.xlu0 %5501, %v5020
        %v5503 = vpop.permute.xlu0 %5502
        %5505 = vset.pattern.permute.xlu0 3
        %5506 = vperm.xlu0 %5505, %v5022
        %v5507 = vpop.permute.xlu0 %5506
        %5509 = vset.pattern.permute.xlu0 3
        %5510 = vperm.xlu0 %5509, %v5024
        %v5511 = vpop.permute.xlu0 %5510
        %5513 = vset.pattern.permute.xlu0 3
        %5514 = vperm.xlu0 %5513, %v5026
        %v5515 = vpop.permute.xlu0 %5514
        %v5517 = vlaneseq
        %v5518 = vshrl.u32 %v5517, 7
        %v5519 = vsub.s32 1, %v5518
        %v5520 = vrot.slane %v3692, %v5519
        %v5521 = vlaneseq
        %v5522 = vshrl.u32 %v5521, 7
        %v5523 = vsub.s32 1, %v5522
        %v5524 = vrot.slane %v3701, %v5523
        %v5525 = vlaneseq
        %v5526 = vshrl.u32 %v5525, 7
        %v5527 = vsub.s32 1, %v5526
        %v5528 = vrot.slane %v3710, %v5527
        %v5529 = vlaneseq
        %v5530 = vshrl.u32 %v5529, 7
        %v5531 = vsub.s32 1, %v5530
        %v5532 = vrot.slane %v3725, %v5531
        %v5533 = vlaneseq
        %v5534 = vshrl.u32 %v5533, 7
        %v5535 = vsub.s32 1, %v5534
        %v5536 = vrot.slane %v3743, %v5535
        %v5537 = vlaneseq
        %v5538 = vshrl.u32 %v5537, 7
        %v5539 = vsub.s32 1, %v5538
        %v5540 = vrot.slane %v3752, %v5539
        %v5541 = vlaneseq
        %v5542 = vshrl.u32 %v5541, 7
        %v5543 = vsub.s32 1, %v5542
        %v5544 = vrot.slane %v3761, %v5543
        %v5545 = vlaneseq
        %v5546 = vshrl.u32 %v5545, 7
        %v5547 = vsub.s32 1, %v5546
        %v5548 = vrot.slane %v3776, %v5547
        %v5549 = vlaneseq
        %v5550 = vshrl.u32 %v5549, 7
        %v5551 = vsub.s32 1, %v5550
        %v5552 = vrot.slane %v3794, %v5551
        %v5553 = vlaneseq
        %v5554 = vshrl.u32 %v5553, 7
        %v5555 = vsub.s32 1, %v5554
        %v5556 = vrot.slane %v3803, %v5555
        %v5557 = vlaneseq
        %v5558 = vshrl.u32 %v5557, 7
        %v5559 = vsub.s32 1, %v5558
        %v5560 = vrot.slane %v3812, %v5559
        %v5561 = vlaneseq
        %v5562 = vshrl.u32 %v5561, 7
        %v5563 = vsub.s32 1, %v5562
        %v5564 = vrot.slane %v3827, %v5563
        %v5565 = vlaneseq
        %v5566 = vshrl.u32 %v5565, 7
        %v5567 = vsub.s32 1, %v5566
        %v5568 = vrot.slane %v3845, %v5567
        %v5569 = vlaneseq
        %v5570 = vshrl.u32 %v5569, 7
        %v5571 = vsub.s32 1, %v5570
        %v5572 = vrot.slane %v3853, %v5571
        %v5573 = vmul.f32 %v5463, %v5520
        %v5574 = vmul.f32 %v5467, %v5524
        %v5575 = vmul.f32 %v5471, %v5528
        %v5576 = vmul.f32 %v5475, %v5532
        %v5577 = vmul.f32 %v5479, %v5536
        %v5578 = vmul.f32 %v5483, %v5540
        %v5579 = vmul.f32 %v5487, %v5544
        %v5580 = vmul.f32 %v5491, %v5548
        %v5581 = vmul.f32 %v5495, %v5552
        %v5582 = vmul.f32 %v5499, %v5556
        %v5583 = vmul.f32 %v5503, %v5560
        %v5584 = vmul.f32 %v5507, %v5564
        %v5585 = vmul.f32 %v5511, %v5568
        %v5586 = vmul.f32 %v5515, %v5572
        %v5587 = vadd.f32 %v5447, %v5573
        %v5588 = vadd.f32 %v5448, %v5574
        %v5589 = vadd.f32 %v5449, %v5575
        %v5590 = vadd.f32 %v5450, %v5576
        %v5591 = vadd.f32 %v5451, %v5577
        %v5592 = vadd.f32 %v5452, %v5578
        %v5593 = vadd.f32 %v5453, %v5579
        %v5594 = vadd.f32 %v5454, %v5580
        %v5595 = vadd.f32 %v5455, %v5581
        %v5596 = vadd.f32 %v5456, %v5582
        %v5597 = vadd.f32 %v5457, %v5583
        %v5598 = vadd.f32 %v5458, %v5584
        %v5599 = vadd.f32 %v5459, %v5585
        %v5600 = vadd.f32 %v5460, %v5586
        %5601 = vset.pattern.permute.xlu0 4
        %5602 = vperm.xlu0 %5601, %v5000
        %v5603 = vpop.permute.xlu0 %5602
        %5605 = vset.pattern.permute.xlu0 4
        %5606 = vperm.xlu0 %5605, %v5002
        %v5607 = vpop.permute.xlu0 %5606
        %5609 = vset.pattern.permute.xlu0 4
        %5610 = vperm.xlu0 %5609, %v5004
        %v5611 = vpop.permute.xlu0 %5610
        %5613 = vset.pattern.permute.xlu0 4
        %5614 = vperm.xlu0 %5613, %v5006
        %v5615 = vpop.permute.xlu0 %5614
        %5617 = vset.pattern.permute.xlu0 4
        %5618 = vperm.xlu0 %5617, %v5008
        %v5619 = vpop.permute.xlu0 %5618
        %5621 = vset.pattern.permute.xlu0 4
        %5622 = vperm.xlu0 %5621, %v5010
        %v5623 = vpop.permute.xlu0 %5622
        %5625 = vset.pattern.permute.xlu0 4
        %5626 = vperm.xlu0 %5625, %v5012
        %v5627 = vpop.permute.xlu0 %5626
        %5629 = vset.pattern.permute.xlu0 4
        %5630 = vperm.xlu0 %5629, %v5014
        %v5631 = vpop.permute.xlu0 %5630
        %5633 = vset.pattern.permute.xlu0 4
        %5634 = vperm.xlu0 %5633, %v5016
        %v5635 = vpop.permute.xlu0 %5634
        %5637 = vset.pattern.permute.xlu0 4
        %5638 = vperm.xlu0 %5637, %v5018
        %v5639 = vpop.permute.xlu0 %5638
        %5641 = vset.pattern.permute.xlu0 4
        %5642 = vperm.xlu0 %5641, %v5020
        %v5643 = vpop.permute.xlu0 %5642
        %5645 = vset.pattern.permute.xlu0 4
        %5646 = vperm.xlu0 %5645, %v5022
        %v5647 = vpop.permute.xlu0 %5646
        %5649 = vset.pattern.permute.xlu0 4
        %5650 = vperm.xlu0 %5649, %v5024
        %v5651 = vpop.permute.xlu0 %5650
        %5653 = vset.pattern.permute.xlu0 4
        %5654 = vperm.xlu0 %5653, %v5026
        %v5655 = vpop.permute.xlu0 %5654
        %v5657 = vlaneseq
        %v5658 = vshrl.u32 %v5657, 7
        %v5659 = vsub.s32 0, %v5658
        %v5660 = vrot.slane %v3691, %v5659
        %v5661 = vlaneseq
        %v5662 = vshrl.u32 %v5661, 7
        %v5663 = vsub.s32 0, %v5662
        %v5664 = vrot.slane %v3709, %v5663
        %v5665 = vlaneseq
        %v5666 = vshrl.u32 %v5665, 7
        %v5667 = vsub.s32 0, %v5666
        %v5668 = vrot.slane %v3718, %v5667
        %v5669 = vlaneseq
        %v5670 = vshrl.u32 %v5669, 7
        %v5671 = vsub.s32 0, %v5670
        %v5672 = vrot.slane %v3727, %v5671
        %v5673 = vlaneseq
        %v5674 = vshrl.u32 %v5673, 7
        %v5675 = vsub.s32 0, %v5674
        %v5676 = vrot.slane %v3742, %v5675
        %v5677 = vlaneseq
        %v5678 = vshrl.u32 %v5677, 7
        %v5679 = vsub.s32 0, %v5678
        %v5680 = vrot.slane %v3760, %v5679
        %v5681 = vlaneseq
        %v5682 = vshrl.u32 %v5681, 7
        %v5683 = vsub.s32 0, %v5682
        %v5684 = vrot.slane %v3769, %v5683
        %v5685 = vlaneseq
        %v5686 = vshrl.u32 %v5685, 7
        %v5687 = vsub.s32 0, %v5686
        %v5688 = vrot.slane %v3778, %v5687
        %v5689 = vlaneseq
        %v5690 = vshrl.u32 %v5689, 7
        %v5691 = vsub.s32 0, %v5690
        %v5692 = vrot.slane %v3793, %v5691
        %v5693 = vlaneseq
        %v5694 = vshrl.u32 %v5693, 7
        %v5695 = vsub.s32 0, %v5694
        %v5696 = vrot.slane %v3811, %v5695
        %v5697 = vlaneseq
        %v5698 = vshrl.u32 %v5697, 7
        %v5699 = vsub.s32 0, %v5698
        %v5700 = vrot.slane %v3820, %v5699
        %v5701 = vlaneseq
        %v5702 = vshrl.u32 %v5701, 7
        %v5703 = vsub.s32 0, %v5702
        %v5704 = vrot.slane %v3829, %v5703
        %v5705 = vlaneseq
        %v5706 = vshrl.u32 %v5705, 7
        %v5707 = vsub.s32 0, %v5706
        %v5708 = vrot.slane %v3844, %v5707
        %v5709 = vlaneseq
        %v5710 = vshrl.u32 %v5709, 7
        %v5711 = vsub.s32 0, %v5710
        %v5712 = vrot.slane %v3854, %v5711
        %v5713 = vmul.f32 %v5603, %v5660
        %v5714 = vmul.f32 %v5607, %v5664
        %v5715 = vmul.f32 %v5611, %v5668
        %v5716 = vmul.f32 %v5615, %v5672
        %v5717 = vmul.f32 %v5619, %v5676
        %v5718 = vmul.f32 %v5623, %v5680
        %v5719 = vmul.f32 %v5627, %v5684
        %v5720 = vmul.f32 %v5631, %v5688
        %v5721 = vmul.f32 %v5635, %v5692
        %v5722 = vmul.f32 %v5639, %v5696
        %v5723 = vmul.f32 %v5643, %v5700
        %v5724 = vmul.f32 %v5647, %v5704
        %v5725 = vmul.f32 %v5651, %v5708
        %v5726 = vmul.f32 %v5655, %v5712
        %v5727 = vadd.f32 %v5587, %v5713
        %v5728 = vadd.f32 %v5588, %v5714
        %v5729 = vadd.f32 %v5589, %v5715
        %v5730 = vadd.f32 %v5590, %v5716
        %v5731 = vadd.f32 %v5591, %v5717
        %v5732 = vadd.f32 %v5592, %v5718
        %v5733 = vadd.f32 %v5593, %v5719
        %v5734 = vadd.f32 %v5594, %v5720
        %v5735 = vadd.f32 %v5595, %v5721
        %v5736 = vadd.f32 %v5596, %v5722
        %v5737 = vadd.f32 %v5597, %v5723
        %v5738 = vadd.f32 %v5598, %v5724
        %v5739 = vadd.f32 %v5599, %v5725
        %v5740 = vadd.f32 %v5600, %v5726
        %5741 = vset.pattern.permute.xlu0 5
        %5742 = vperm.xlu0 %5741, %v5000
        %v5743 = vpop.permute.xlu0 %5742
        %5745 = vset.pattern.permute.xlu0 5
        %5746 = vperm.xlu0 %5745, %v5002
        %v5747 = vpop.permute.xlu0 %5746
        %5749 = vset.pattern.permute.xlu0 5
        %5750 = vperm.xlu0 %5749, %v5004
        %v5751 = vpop.permute.xlu0 %5750
        %5753 = vset.pattern.permute.xlu0 5
        %5754 = vperm.xlu0 %5753, %v5006
        %v5755 = vpop.permute.xlu0 %5754
        %5757 = vset.pattern.permute.xlu0 5
        %5758 = vperm.xlu0 %5757, %v5008
        %v5759 = vpop.permute.xlu0 %5758
        %5761 = vset.pattern.permute.xlu0 5
        %5762 = vperm.xlu0 %5761, %v5010
        %v5763 = vpop.permute.xlu0 %5762
        %5765 = vset.pattern.permute.xlu0 5
        %5766 = vperm.xlu0 %5765, %v5012
        %v5767 = vpop.permute.xlu0 %5766
        %5769 = vset.pattern.permute.xlu0 5
        %5770 = vperm.xlu0 %5769, %v5014
        %v5771 = vpop.permute.xlu0 %5770
        %5773 = vset.pattern.permute.xlu0 5
        %5774 = vperm.xlu0 %5773, %v5016
        %v5775 = vpop.permute.xlu0 %5774
        %5777 = vset.pattern.permute.xlu0 5
        %5778 = vperm.xlu0 %5777, %v5018
        %v5779 = vpop.permute.xlu0 %5778
        %5781 = vset.pattern.permute.xlu0 5
        %5782 = vperm.xlu0 %5781, %v5020
        %v5783 = vpop.permute.xlu0 %5782
        %5785 = vset.pattern.permute.xlu0 5
        %5786 = vperm.xlu0 %5785, %v5022
        %v5787 = vpop.permute.xlu0 %5786
        %5789 = vset.pattern.permute.xlu0 5
        %5790 = vperm.xlu0 %5789, %v5024
        %v5791 = vpop.permute.xlu0 %5790
        %5793 = vset.pattern.permute.xlu0 5
        %5794 = vperm.xlu0 %5793, %v5026
        %v5795 = vpop.permute.xlu0 %5794
        %v5797 = vlaneseq
        %v5798 = vshrl.u32 %v5797, 7
        %v5799 = vsub.s32 1, %v5798
        %v5800 = vrot.slane %v3691, %v5799
        %v5801 = vlaneseq
        %v5802 = vshrl.u32 %v5801, 7
        %v5803 = vsub.s32 1, %v5802
        %v5804 = vrot.slane %v3709, %v5803
        %v5805 = vlaneseq
        %v5806 = vshrl.u32 %v5805, 7
        %v5807 = vsub.s32 1, %v5806
        %v5808 = vrot.slane %v3718, %v5807
        %v5809 = vlaneseq
        %v5810 = vshrl.u32 %v5809, 7
        %v5811 = vsub.s32 1, %v5810
        %v5812 = vrot.slane %v3727, %v5811
        %v5813 = vlaneseq
        %v5814 = vshrl.u32 %v5813, 7
        %v5815 = vsub.s32 1, %v5814
        %v5816 = vrot.slane %v3742, %v5815
        %v5817 = vlaneseq
        %v5818 = vshrl.u32 %v5817, 7
        %v5819 = vsub.s32 1, %v5818
        %v5820 = vrot.slane %v3760, %v5819
        %v5821 = vlaneseq
        %v5822 = vshrl.u32 %v5821, 7
        %v5823 = vsub.s32 1, %v5822
        %v5824 = vrot.slane %v3769, %v5823
        %v5825 = vlaneseq
        %v5826 = vshrl.u32 %v5825, 7
        %v5827 = vsub.s32 1, %v5826
        %v5828 = vrot.slane %v3778, %v5827
        %v5829 = vlaneseq
        %v5830 = vshrl.u32 %v5829, 7
        %v5831 = vsub.s32 1, %v5830
        %v5832 = vrot.slane %v3793, %v5831
        %v5833 = vlaneseq
        %v5834 = vshrl.u32 %v5833, 7
        %v5835 = vsub.s32 1, %v5834
        %v5836 = vrot.slane %v3811, %v5835
        %v5837 = vlaneseq
        %v5838 = vshrl.u32 %v5837, 7
        %v5839 = vsub.s32 1, %v5838
        %v5840 = vrot.slane %v3820, %v5839
        %v5841 = vlaneseq
        %v5842 = vshrl.u32 %v5841, 7
        %v5843 = vsub.s32 1, %v5842
        %v5844 = vrot.slane %v3829, %v5843
        %v5845 = vlaneseq
        %v5846 = vshrl.u32 %v5845, 7
        %v5847 = vsub.s32 1, %v5846
        %v5848 = vrot.slane %v3844, %v5847
        %v5849 = vlaneseq
        %v5850 = vshrl.u32 %v5849, 7
        %v5851 = vsub.s32 1, %v5850
        %v5852 = vrot.slane %v3854, %v5851
        %v5853 = vmul.f32 %v5743, %v5800
        %v5854 = vmul.f32 %v5747, %v5804
        %v5855 = vmul.f32 %v5751, %v5808
        %v5856 = vmul.f32 %v5755, %v5812
        %v5857 = vmul.f32 %v5759, %v5816
        %v5858 = vmul.f32 %v5763, %v5820
        %v5859 = vmul.f32 %v5767, %v5824
        %v5860 = vmul.f32 %v5771, %v5828
        %v5861 = vmul.f32 %v5775, %v5832
        %v5862 = vmul.f32 %v5779, %v5836
        %v5863 = vmul.f32 %v5783, %v5840
        %v5864 = vmul.f32 %v5787, %v5844
        %v5865 = vmul.f32 %v5791, %v5848
        %v5866 = vmul.f32 %v5795, %v5852
        %v5867 = vadd.f32 %v5727, %v5853
        %v5868 = vadd.f32 %v5728, %v5854
        %v5869 = vadd.f32 %v5729, %v5855
        %v5870 = vadd.f32 %v5730, %v5856
        %v5871 = vadd.f32 %v5731, %v5857
        %v5872 = vadd.f32 %v5732, %v5858
        %v5873 = vadd.f32 %v5733, %v5859
        %v5874 = vadd.f32 %v5734, %v5860
        %v5875 = vadd.f32 %v5735, %v5861
        %v5876 = vadd.f32 %v5736, %v5862
        %v5877 = vadd.f32 %v5737, %v5863
        %v5878 = vadd.f32 %v5738, %v5864
        %v5879 = vadd.f32 %v5739, %v5865
        %v5880 = vadd.f32 %v5740, %v5866
        %vm5881 = vcmp.gt.f32.partialorder %v5867, 0.0
        %vm5882 = vcmp.gt.f32.partialorder %v5868, 0.0
        %vm5883 = vcmp.gt.f32.partialorder %v5869, 0.0
        %vm5884 = vcmp.gt.f32.partialorder %v5870, 0.0
        %vm5885 = vcmp.gt.f32.partialorder %v5871, 0.0
        %vm5886 = vcmp.gt.f32.partialorder %v5872, 0.0
        %vm5887 = vcmp.gt.f32.partialorder %v5873, 0.0
        %vm5888 = vcmp.gt.f32.partialorder %v5874, 0.0
        %vm5889 = vcmp.gt.f32.partialorder %v5875, 0.0
        %vm5890 = vcmp.gt.f32.partialorder %v5876, 0.0
        %vm5891 = vcmp.gt.f32.partialorder %v5877, 0.0
        %vm5892 = vcmp.gt.f32.partialorder %v5878, 0.0
        %vm5893 = vcmp.gt.f32.partialorder %v5879, 0.0
        %vm5894 = vcmp.gt.f32.partialorder %v5880, 0.0
        %v5895 = vmul.f32 %v5867, 1.442695
        %v5896 = vpow.pop %v5895
        %v5897 = vmul.f32 %v5868, 1.442695
        %v5898 = vpow.pop %v5897
        %v5899 = vmul.f32 %v5869, 1.442695
        %v5900 = vpow.pop %v5899
        %v5901 = vmul.f32 %v5870, 1.442695
        %v5902 = vpow.pop %v5901
        %v5903 = vmul.f32 %v5871, 1.442695
        %v5904 = vpow.pop %v5903
        %v5905 = vmul.f32 %v5872, 1.442695
        %v5906 = vpow.pop %v5905
        %v5907 = vmul.f32 %v5873, 1.442695
        %v5908 = vpow.pop %v5907
        %v5909 = vmul.f32 %v5874, 1.442695
        %v5910 = vpow.pop %v5909
        %v5911 = vmul.f32 %v5875, 1.442695
        %v5912 = vpow.pop %v5911
        %v5913 = vmul.f32 %v5876, 1.442695
        %v5914 = vpow.pop %v5913
        %v5915 = vmul.f32 %v5877, 1.442695
        %v5916 = vpow.pop %v5915
        %v5917 = vmul.f32 %v5878, 1.442695
        %v5918 = vpow.pop %v5917
        %v5919 = vmul.f32 %v5879, 1.442695
        %v5920 = vpow.pop %v5919
        %v5921 = vmul.f32 %v5880, 1.442695
        %v5922 = vpow.pop %v5921
        %v5923 = vsub.f32 %v5896, 1.0
        %v5924 = vsub.f32 %v5898, 1.0
        %v5925 = vsub.f32 %v5900, 1.0
        %v5926 = vsub.f32 %v5902, 1.0
        %v5927 = vsub.f32 %v5904, 1.0
        %v5928 = vsub.f32 %v5906, 1.0
        %v5929 = vsub.f32 %v5908, 1.0
        %v5930 = vsub.f32 %v5910, 1.0
        %v5931 = vsub.f32 %v5912, 1.0
        %v5932 = vsub.f32 %v5914, 1.0
        %v5933 = vsub.f32 %v5916, 1.0
        %v5934 = vsub.f32 %v5918, 1.0
        %v5935 = vsub.f32 %v5920, 1.0
        %v5936 = vsub.f32 %v5922, 1.0
        %v5937 = vsel %vm5881, %v5867, %v5923
        %v5938 = vsel %vm5882, %v5868, %v5924
        %v5939 = vsel %vm5883, %v5869, %v5925
        %v5940 = vsel %vm5884, %v5870, %v5926
        %v5941 = vsel %vm5885, %v5871, %v5927
        %v5942 = vsel %vm5886, %v5872, %v5928
        %v5943 = vsel %vm5887, %v5873, %v5929
        %v5944 = vsel %vm5888, %v5874, %v5930
        %v5945 = vsel %vm5889, %v5875, %v5931
        %v5946 = vsel %vm5890, %v5876, %v5932
        %v5947 = vsel %vm5891, %v5877, %v5933
        %v5948 = vsel %vm5892, %v5878, %v5934
        %v5949 = vsel %vm5893, %v5879, %v5935
        %v5950 = vsel %vm5894, %v5880, %v5936
        %v5965 = vcombine.high %v5937, %v5937
        %v5967 = vunpack.c.l.s4 1983009808
        %v5968 = vunpack.c.0.s8 %v5967
        %v5969 = vlaneseq
        %v5970 = vshrl.u32 %v5969, 7
        %v5971 = vsub.s32 %v5968, %v5970
        %v5972 = vrot.slane %v5937, %v5971
        %v5974 = vunpack.c.l.s4 1983009808
        %v5975 = vunpack.c.0.s8 %v5974
        %v5976 = vlaneseq
        %v5977 = vshrl.u32 %v5976, 7
        %v5978 = vsub.s32 %v5975, %v5977
        %v5979 = vrot.slane %v5965, %v5978
        %v5980 = vcombine.high %v5972, %v5972
        %v5981 = vcombine.high %v5938, %v5938
        %v5983 = vunpack.c.l.s4 1983009808
        %v5984 = vunpack.c.0.s8 %v5983
        %v5985 = vlaneseq
        %v5986 = vshrl.u32 %v5985, 7
        %v5987 = vsub.s32 %v5984, %v5986
        %v5988 = vrot.slane %v5938, %v5987
        %v5990 = vunpack.c.l.s4 1983009808
        %v5991 = vunpack.c.0.s8 %v5990
        %v5992 = vlaneseq
        %v5993 = vshrl.u32 %v5992, 7
        %v5994 = vsub.s32 %v5991, %v5993
        %v5995 = vrot.slane %v5981, %v5994
        %v5996 = vcombine.high %v5988, %v5988
        %v5997 = vcombine.high %v5939, %v5939
        %v5999 = vunpack.c.l.s4 1983009808
        %v6000 = vunpack.c.0.s8 %v5999
        %v6001 = vlaneseq
        %v6002 = vshrl.u32 %v6001, 7
        %v6003 = vsub.s32 %v6000, %v6002
        %v6004 = vrot.slane %v5939, %v6003
        %v6006 = vunpack.c.l.s4 1983009808
        %v6007 = vunpack.c.0.s8 %v6006
        %v6008 = vlaneseq
        %v6009 = vshrl.u32 %v6008, 7
        %v6010 = vsub.s32 %v6007, %v6009
        %v6011 = vrot.slane %v5997, %v6010
        %v6012 = vcombine.high %v6004, %v6004
        %v6013 = vcombine.high %v5940, %v5940
        %v6015 = vunpack.c.l.s4 1983009808
        %v6016 = vunpack.c.0.s8 %v6015
        %v6017 = vlaneseq
        %v6018 = vshrl.u32 %v6017, 7
        %v6019 = vsub.s32 %v6016, %v6018
        %v6020 = vrot.slane %v5940, %v6019
        %v6022 = vunpack.c.l.s4 1983009808
        %v6023 = vunpack.c.0.s8 %v6022
        %v6024 = vlaneseq
        %v6025 = vshrl.u32 %v6024, 7
        %v6026 = vsub.s32 %v6023, %v6025
        %v6027 = vrot.slane %v6013, %v6026
        %v6028 = vcombine.high %v6020, %v6020
        %v6029 = vcombine.high %v5941, %v5941
        %v6031 = vunpack.c.l.s4 1983009808
        %v6032 = vunpack.c.0.s8 %v6031
        %v6033 = vlaneseq
        %v6034 = vshrl.u32 %v6033, 7
        %v6035 = vsub.s32 %v6032, %v6034
        %v6036 = vrot.slane %v5941, %v6035
        %v6038 = vunpack.c.l.s4 1983009808
        %v6039 = vunpack.c.0.s8 %v6038
        %v6040 = vlaneseq
        %v6041 = vshrl.u32 %v6040, 7
        %v6042 = vsub.s32 %v6039, %v6041
        %v6043 = vrot.slane %v6029, %v6042
        %v6044 = vcombine.high %v6036, %v6036
        %v6045 = vcombine.high %v5942, %v5942
        %v6047 = vunpack.c.l.s4 1983009808
        %v6048 = vunpack.c.0.s8 %v6047
        %v6049 = vlaneseq
        %v6050 = vshrl.u32 %v6049, 7
        %v6051 = vsub.s32 %v6048, %v6050
        %v6052 = vrot.slane %v5942, %v6051
        %v6054 = vunpack.c.l.s4 1983009808
        %v6055 = vunpack.c.0.s8 %v6054
        %v6056 = vlaneseq
        %v6057 = vshrl.u32 %v6056, 7
        %v6058 = vsub.s32 %v6055, %v6057
        %v6059 = vrot.slane %v6045, %v6058
        %v6060 = vcombine.high %v6052, %v6052
        %v6061 = vcombine.high %v5943, %v5943
        %v6063 = vunpack.c.l.s4 1983009808
        %v6064 = vunpack.c.0.s8 %v6063
        %v6065 = vlaneseq
        %v6066 = vshrl.u32 %v6065, 7
        %v6067 = vsub.s32 %v6064, %v6066
        %v6068 = vrot.slane %v5943, %v6067
        %v6070 = vunpack.c.l.s4 1983009808
        %v6071 = vunpack.c.0.s8 %v6070
        %v6072 = vlaneseq
        %v6073 = vshrl.u32 %v6072, 7
        %v6074 = vsub.s32 %v6071, %v6073
        %v6075 = vrot.slane %v6061, %v6074
        %v6076 = vcombine.high %v6068, %v6068
        %v6077 = vcombine.high %v5944, %v5944
        %v6079 = vunpack.c.l.s4 1983009808
        %v6080 = vunpack.c.0.s8 %v6079
        %v6081 = vlaneseq
        %v6082 = vshrl.u32 %v6081, 7
        %v6083 = vsub.s32 %v6080, %v6082
        %v6084 = vrot.slane %v5944, %v6083
        %v6086 = vunpack.c.l.s4 1983009808
        %v6087 = vunpack.c.0.s8 %v6086
        %v6088 = vlaneseq
        %v6089 = vshrl.u32 %v6088, 7
        %v6090 = vsub.s32 %v6087, %v6089
        %v6091 = vrot.slane %v6077, %v6090
        %v6092 = vcombine.high %v6084, %v6084
        %v6093 = vcombine.high %v5945, %v5945
        %v6095 = vunpack.c.l.s4 1983009808
        %v6096 = vunpack.c.0.s8 %v6095
        %v6097 = vlaneseq
        %v6098 = vshrl.u32 %v6097, 7
        %v6099 = vsub.s32 %v6096, %v6098
        %v6100 = vrot.slane %v5945, %v6099
        %v6102 = vunpack.c.l.s4 1983009808
        %v6103 = vunpack.c.0.s8 %v6102
        %v6104 = vlaneseq
        %v6105 = vshrl.u32 %v6104, 7
        %v6106 = vsub.s32 %v6103, %v6105
        %v6107 = vrot.slane %v6093, %v6106
        %v6108 = vcombine.high %v6100, %v6100
        %v6109 = vcombine.high %v5946, %v5946
        %v6111 = vunpack.c.l.s4 1983009808
        %v6112 = vunpack.c.0.s8 %v6111
        %v6113 = vlaneseq
        %v6114 = vshrl.u32 %v6113, 7
        %v6115 = vsub.s32 %v6112, %v6114
        %v6116 = vrot.slane %v5946, %v6115
        %v6118 = vunpack.c.l.s4 1983009808
        %v6119 = vunpack.c.0.s8 %v6118
        %v6120 = vlaneseq
        %v6121 = vshrl.u32 %v6120, 7
        %v6122 = vsub.s32 %v6119, %v6121
        %v6123 = vrot.slane %v6109, %v6122
        %v6124 = vcombine.high %v6116, %v6116
        %v6125 = vcombine.high %v5947, %v5947
        %v6127 = vunpack.c.l.s4 1983009808
        %v6128 = vunpack.c.0.s8 %v6127
        %v6129 = vlaneseq
        %v6130 = vshrl.u32 %v6129, 7
        %v6131 = vsub.s32 %v6128, %v6130
        %v6132 = vrot.slane %v5947, %v6131
        %v6134 = vunpack.c.l.s4 1983009808
        %v6135 = vunpack.c.0.s8 %v6134
        %v6136 = vlaneseq
        %v6137 = vshrl.u32 %v6136, 7
        %v6138 = vsub.s32 %v6135, %v6137
        %v6139 = vrot.slane %v6125, %v6138
        %v6140 = vcombine.high %v6132, %v6132
        %v6141 = vcombine.high %v5948, %v5948
        %v6143 = vunpack.c.l.s4 1983009808
        %v6144 = vunpack.c.0.s8 %v6143
        %v6145 = vlaneseq
        %v6146 = vshrl.u32 %v6145, 7
        %v6147 = vsub.s32 %v6144, %v6146
        %v6148 = vrot.slane %v5948, %v6147
        %v6150 = vunpack.c.l.s4 1983009808
        %v6151 = vunpack.c.0.s8 %v6150
        %v6152 = vlaneseq
        %v6153 = vshrl.u32 %v6152, 7
        %v6154 = vsub.s32 %v6151, %v6153
        %v6155 = vrot.slane %v6141, %v6154
        %v6156 = vcombine.high %v6148, %v6148
        %v6157 = vcombine.high %v5949, %v5949
        %v6159 = vunpack.c.l.s4 1983009808
        %v6160 = vunpack.c.0.s8 %v6159
        %v6161 = vlaneseq
        %v6162 = vshrl.u32 %v6161, 7
        %v6163 = vsub.s32 %v6160, %v6162
        %v6164 = vrot.slane %v5949, %v6163
        %v6166 = vunpack.c.l.s4 1983009808
        %v6167 = vunpack.c.0.s8 %v6166
        %v6168 = vlaneseq
        %v6169 = vshrl.u32 %v6168, 7
        %v6170 = vsub.s32 %v6167, %v6169
        %v6171 = vrot.slane %v6157, %v6170
        %v6172 = vcombine.high %v6164, %v6164
        %v6173 = vcombine.high %v5950, %v5950
        %v6175 = vunpack.c.l.s4 1983009808
        %v6176 = vunpack.c.0.s8 %v6175
        %v6177 = vlaneseq
        %v6178 = vshrl.u32 %v6177, 7
        %v6179 = vsub.s32 %v6176, %v6178
        %v6180 = vrot.slane %v5950, %v6179
        %v6182 = vunpack.c.l.s4 1983009808
        %v6183 = vunpack.c.0.s8 %v6182
        %v6184 = vlaneseq
        %v6185 = vshrl.u32 %v6184, 7
        %v6186 = vsub.s32 %v6183, %v6185
        %v6187 = vrot.slane %v6173, %v6186
        %v6188 = vcombine.high %v6180, %v6180
        %v6189 = vld [vmem:[#allocation6 + $0x1d8] sm:$0xff]
        %v6190 = vld [vmem:[#allocation6 + $0x1e0] sm:$0xff]
        %v6191 = vcombine.low %v5972, %v5980
        %v6192 = vcombine.low %v5979, %v5988
        %v6194 = vunpack.c.l.s4 1983009808
        %v6195 = vunpack.c.0.s8 %v6194
        %v6196 = vlaneseq
        %v6197 = vshrl.u32 %v6196, 7
        %v6198 = vsub.s32 %v6195, %v6197
        %v6199 = vrot.slane %v6191, %v6198
        %v6201 = vunpack.c.l.s4 1983009808
        %v6202 = vunpack.c.0.s8 %v6201
        %v6203 = vlaneseq
        %v6204 = vshrl.u32 %v6203, 7
        %v6205 = vsub.s32 %v6202, %v6204
        %v6206 = vrot.slane %v6192, %v6205
        %v6207 = vcombine.low %v6199, %v6206
        %v6208 = vcombine.low %v5996, %v5995
        %v6209 = vcombine.low %v6004, %v6012
        %v6211 = vunpack.c.l.s4 1983009808
        %v6212 = vunpack.c.0.s8 %v6211
        %v6213 = vlaneseq
        %v6214 = vshrl.u32 %v6213, 7
        %v6215 = vsub.s32 %v6212, %v6214
        %v6216 = vrot.slane %v6208, %v6215
        %v6218 = vunpack.c.l.s4 1983009808
        %v6219 = vunpack.c.0.s8 %v6218
        %v6220 = vlaneseq
        %v6221 = vshrl.u32 %v6220, 7
        %v6222 = vsub.s32 %v6219, %v6221
        %v6223 = vrot.slane %v6209, %v6222
        %v6224 = vcombine.low %v6216, %v6223
        %v6225 = vcombine.low %v6011, %v6020
        %v6226 = vcombine.low %v6028, %v6027
        %v6228 = vunpack.c.l.s4 1983009808
        %v6229 = vunpack.c.0.s8 %v6228
        %v6230 = vlaneseq
        %v6231 = vshrl.u32 %v6230, 7
        %v6232 = vsub.s32 %v6229, %v6231
        %v6233 = vrot.slane %v6225, %v6232
        %v6235 = vunpack.c.l.s4 1983009808
        %v6236 = vunpack.c.0.s8 %v6235
        %v6237 = vlaneseq
        %v6238 = vshrl.u32 %v6237, 7
        %v6239 = vsub.s32 %v6236, %v6238
        %v6240 = vrot.slane %v6226, %v6239
        %v6241 = vcombine.low %v6233, %v6240
        %v6242 = vcombine.low %v6036, %v6044
        %v6243 = vcombine.low %v6043, %v6052
        %v6245 = vunpack.c.l.s4 1983009808
        %v6246 = vunpack.c.0.s8 %v6245
        %v6247 = vlaneseq
        %v6248 = vshrl.u32 %v6247, 7
        %v6249 = vsub.s32 %v6246, %v6248
        %v6250 = vrot.slane %v6242, %v6249
        %v6252 = vunpack.c.l.s4 1983009808
        %v6253 = vunpack.c.0.s8 %v6252
        %v6254 = vlaneseq
        %v6255 = vshrl.u32 %v6254, 7
        %v6256 = vsub.s32 %v6253, %v6255
        %v6257 = vrot.slane %v6243, %v6256
        %v6258 = vcombine.low %v6250, %v6257
        %v6259 = vcombine.low %v6060, %v6059
        %v6260 = vcombine.low %v6068, %v6076
        %v6262 = vunpack.c.l.s4 1983009808
        %v6263 = vunpack.c.0.s8 %v6262
        %v6264 = vlaneseq
        %v6265 = vshrl.u32 %v6264, 7
        %v6266 = vsub.s32 %v6263, %v6265
        %v6267 = vrot.slane %v6259, %v6266
        %v6269 = vunpack.c.l.s4 1983009808
        %v6270 = vunpack.c.0.s8 %v6269
        %v6271 = vlaneseq
        %v6272 = vshrl.u32 %v6271, 7
        %v6273 = vsub.s32 %v6270, %v6272
        %v6274 = vrot.slane %v6260, %v6273
        %v6275 = vcombine.low %v6267, %v6274
        %v6276 = vcombine.low %v6075, %v6084
        %v6277 = vcombine.low %v6092, %v6091
        %v6279 = vunpack.c.l.s4 1983009808
        %v6280 = vunpack.c.0.s8 %v6279
        %v6281 = vlaneseq
        %v6282 = vshrl.u32 %v6281, 7
        %v6283 = vsub.s32 %v6280, %v6282
        %v6284 = vrot.slane %v6276, %v6283
        %v6286 = vunpack.c.l.s4 1983009808
        %v6287 = vunpack.c.0.s8 %v6286
        %v6288 = vlaneseq
        %v6289 = vshrl.u32 %v6288, 7
        %v6290 = vsub.s32 %v6287, %v6289
        %v6291 = vrot.slane %v6277, %v6290
        %v6292 = vcombine.low %v6284, %v6291
        %v6293 = vcombine.low %v6100, %v6108
        %v6294 = vcombine.low %v6107, %v6116
        %v6296 = vunpack.c.l.s4 1983009808
        %v6297 = vunpack.c.0.s8 %v6296
        %v6298 = vlaneseq
        %v6299 = vshrl.u32 %v6298, 7
        %v6300 = vsub.s32 %v6297, %v6299
        %v6301 = vrot.slane %v6293, %v6300
        %v6303 = vunpack.c.l.s4 1983009808
        %v6304 = vunpack.c.0.s8 %v6303
        %v6305 = vlaneseq
        %v6306 = vshrl.u32 %v6305, 7
        %v6307 = vsub.s32 %v6304, %v6306
        %v6308 = vrot.slane %v6294, %v6307
        %v6309 = vcombine.low %v6301, %v6308
        %v6310 = vcombine.low %v6124, %v6123
        %v6311 = vcombine.low %v6132, %v6140
        %v6313 = vunpack.c.l.s4 1983009808
        %v6314 = vunpack.c.0.s8 %v6313
        %v6315 = vlaneseq
        %v6316 = vshrl.u32 %v6315, 7
        %v6317 = vsub.s32 %v6314, %v6316
        %v6318 = vrot.slane %v6310, %v6317
        %v6320 = vunpack.c.l.s4 1983009808
        %v6321 = vunpack.c.0.s8 %v6320
        %v6322 = vlaneseq
        %v6323 = vshrl.u32 %v6322, 7
        %v6324 = vsub.s32 %v6321, %v6323
        %v6325 = vrot.slane %v6311, %v6324
        %v6326 = vcombine.low %v6318, %v6325
        %v6327 = vcombine.low %v6139, %v6148
        %v6328 = vcombine.low %v6156, %v6155
        %v6330 = vunpack.c.l.s4 1983009808
        %v6331 = vunpack.c.0.s8 %v6330
        %v6332 = vlaneseq
        %v6333 = vshrl.u32 %v6332, 7
        %v6334 = vsub.s32 %v6331, %v6333
        %v6335 = vrot.slane %v6327, %v6334
        %v6337 = vunpack.c.l.s4 1983009808
        %v6338 = vunpack.c.0.s8 %v6337
        %v6339 = vlaneseq
        %v6340 = vshrl.u32 %v6339, 7
        %v6341 = vsub.s32 %v6338, %v6340
        %v6342 = vrot.slane %v6328, %v6341
        %v6343 = vcombine.low %v6335, %v6342
        %v6344 = vcombine.low %v6164, %v6172
        %v6345 = vcombine.low %v6171, %v6180
        %v6347 = vunpack.c.l.s4 1983009808
        %v6348 = vunpack.c.0.s8 %v6347
        %v6349 = vlaneseq
        %v6350 = vshrl.u32 %v6349, 7
        %v6351 = vsub.s32 %v6348, %v6350
        %v6352 = vrot.slane %v6344, %v6351
        %v6354 = vunpack.c.l.s4 1983009808
        %v6355 = vunpack.c.0.s8 %v6354
        %v6356 = vlaneseq
        %v6357 = vshrl.u32 %v6356, 7
        %v6358 = vsub.s32 %v6355, %v6357
        %v6359 = vrot.slane %v6345, %v6358
        %v6360 = vcombine.low %v6352, %v6359
        %v6361 = vcombine.low %v6188, %v6187
        %v6363 = vunpack.c.l.s4 1983009808
        %v6364 = vunpack.c.0.s8 %v6363
        %v6365 = vlaneseq
        %v6366 = vshrl.u32 %v6365, 7
        %v6367 = vsub.s32 %v6364, %v6366
        %v6368 = vrot.slane %v6361, %v6367
        %v6369 = vsel %vm1407, %v6207, 0
        %v6371 = vsel %vm1407, %v6224, 0
        %v6373 = vsel %vm1407, %v6241, 0
        %v6375 = vsel %vm1407, %v6258, 0
        %v6377 = vsel %vm1407, %v6275, 0
        %v6379 = vsel %vm1407, %v6292, 0
        %v6381 = vsel %vm1407, %v6309, 0
        %v6383 = vsel %vm1407, %v6326, 0
        %v6385 = vsel %vm1407, %v6343, 0
        %v6387 = vsel %vm1407, %v6360, 0
        %v6389 = vsel %vm1407, %v6368, 0
        %6391 = vmatprep.subr.mxu0 0.0
        %6392 = vmatpush1.msra.mxu0 %v6189
        %6393 = vmatprep.subr.mxu0 0.0
        %6394 = vmatpush1.msra.mxu0 %v6190
        %6395 = vmatprep.subr.mxu0 0.0
        %6396 = vmatpush1.msra.mxu0 0.0
        %6397 = vmatprep.subr.mxu0 0.0
        %6398 = vmatpush1.msra.mxu0 0.0
        %6399 = vmatprep.subr.mxu0 0.0
        %6400 = vmatpush1.msra.mxu0 0.0
        %6401 = vmatprep.subr.mxu0 0.0
        %6402 = vmatpush1.msra.mxu0 0.0
        %6403 = vmatprep.subr.mxu0 0.0
        %6404 = vmatpush1.msra.mxu0 0.0
        %6405 = vmatprep.subr.mxu0 0.0
        %6406 = vmatpush1.msra.mxu0 0.0
        %6407 = vmatprep.subr.mxu0 0.0
        %6408 = vmatpush1.msra.mxu0 0.0
        %6409 = vmatprep.subr.mxu0 0.0
        %6410 = vmatpush1.msra.mxu0 0.0
        %6411 = vmatprep.subr.mxu0 0.0
        %6412 = vmatpush1.msra.mxu0 0.0
        %6413 = vmatprep.subr.mxu0 0.0
        %6414 = vmatpush1.msra.mxu0 0.0
        %6415 = vmatprep.subr.mxu0 0.0
        %6416 = vmatpush1.msra.mxu0 0.0
        %6417 = vmatprep.subr.mxu0 0.0
        %6418 = vmatpush1.msra.mxu0 0.0
        %6419 = vmatprep.subr.mxu0 0.0
        %6420 = vmatpush1.msra.mxu0 0.0
        %6421 = vmatprep.subr.mxu0 0.0
        %6422 = vmatpush1.msra.mxu0 0.0
        %6423 = vmatprep.subr.mxu0 0.0
        %6424 = vmatpush1.msra.mxu0 0.0
        %6425 = vmatprep.subr.mxu0 0.0
        %6426 = vmatpush1.msra.mxu0 0.0
        %6427 = vmatprep.subr.mxu0 0.0
        %6428 = vmatpush1.msra.mxu0 0.0
        %6429 = vmatprep.subr.mxu0 0.0
        %6430 = vmatpush1.msra.mxu0 0.0
        %6431 = vmatprep.subr.mxu0 0.0
        %6432 = vmatpush1.msra.mxu0 0.0
        %6433 = vmatprep.subr.mxu0 0.0
        %6434 = vmatpush1.msra.mxu0 0.0
        %6435 = vmatprep.subr.mxu0 0.0
        %6436 = vmatpush1.msra.mxu0 0.0
        %6437 = vmatprep.subr.mxu0 0.0
        %6438 = vmatpush1.msra.mxu0 0.0
        %6439 = vmatprep.subr.mxu0 0.0
        %6440 = vmatpush1.msra.mxu0 0.0
        %6441 = vmatprep.subr.mxu0 0.0
        %6442 = vmatpush1.msra.mxu0 0.0
        %6443 = vmatprep.subr.mxu0 0.0
        %6444 = vmatpush1.msra.mxu0 0.0
        %6445 = vmatprep.subr.mxu0 0.0
        %6446 = vmatpush1.msra.mxu0 0.0
        %6447 = vmatprep.subr.mxu0 0.0
        %6448 = vmatpush1.msra.mxu0 0.0
        %6449 = vmatprep.subr.mxu0 0.0
        %6450 = vmatpush1.msra.mxu0 0.0
        %6451 = vmatprep.subr.mxu0 0.0
        %6452 = vmatpush1.msra.mxu0 0.0
        %6453 = vmatprep.subr.mxu0 0.0
        %6454 = vmatpush1.msra.mxu0 0.0
        %6455 = vmatprep.mubr.f32.mxu0 0.0
        %6456 = vmatmul.mubr.f32.gmra.mrb[0].mxu0 %v6369
        %v6457 = vpop.f32.mrb[0].mxu0
        %v6458 = vadd.f32 0.0, %v6457
        %v6459 = vpop.f32.mrb[0].mxu0
        %6460 = vmatprep.mubr.f32.mxu0 0.0
        %6461 = vmatmul.mubr.f32.gmra.mrb[0].mxu0 %v6371
        %v6462 = vpop.f32.mrb[0].mxu0
        %v6463 = vadd.f32 0.0, %v6462
        %v6464 = vpop.f32.mrb[0].mxu0
        %6465 = vmatprep.mubr.f32.mxu0 0.0
        %6466 = vmatmul.mubr.f32.gmra.mrb[0].mxu0 %v6373
        %v6467 = vpop.f32.mrb[0].mxu0
        %v6468 = vadd.f32 0.0, %v6467
        %v6469 = vpop.f32.mrb[0].mxu0
        %6470 = vmatprep.mubr.f32.mxu0 0.0
        %6471 = vmatmul.mubr.f32.gmra.mrb[0].mxu0 %v6375
        %v6472 = vpop.f32.mrb[0].mxu0
        %v6473 = vadd.f32 0.0, %v6472
        %v6474 = vpop.f32.mrb[0].mxu0
        %6475 = vmatprep.mubr.f32.mxu0 0.0
        %6476 = vmatmul.mubr.f32.gmra.mrb[0].mxu0 %v6377
        %v6477 = vpop.f32.mrb[0].mxu0
        %v6478 = vadd.f32 0.0, %v6477
        %v6479 = vpop.f32.mrb[0].mxu0
        %6480 = vmatprep.mubr.f32.mxu0 0.0
        %6481 = vmatmul.mubr.f32.gmra.mrb[0].mxu0 %v6379
        %v6482 = vpop.f32.mrb[0].mxu0
        %v6483 = vadd.f32 0.0, %v6482
        %v6484 = vpop.f32.mrb[0].mxu0
        %6485 = vmatprep.mubr.f32.mxu0 0.0
        %6486 = vmatmul.mubr.f32.gmra.mrb[0].mxu0 %v6381
        %v6487 = vpop.f32.mrb[0].mxu0
        %v6488 = vadd.f32 0.0, %v6487
        %v6489 = vpop.f32.mrb[0].mxu0
        %6490 = vmatprep.mubr.f32.mxu0 0.0
        %6491 = vmatmul.mubr.f32.gmra.mrb[0].mxu0 %v6383
        %v6492 = vpop.f32.mrb[0].mxu0
        %v6493 = vadd.f32 0.0, %v6492
        %v6494 = vpop.f32.mrb[0].mxu0
        %6495 = vmatprep.mubr.f32.mxu0 0.0
        %6496 = vmatmul.mubr.f32.gmra.mrb[0].mxu0 %v6385
        %v6497 = vpop.f32.mrb[0].mxu0
        %v6498 = vadd.f32 0.0, %v6497
        %v6499 = vpop.f32.mrb[0].mxu0
        %6500 = vmatprep.mubr.f32.mxu0 0.0
        %6501 = vmatmul.mubr.f32.gmra.mrb[0].mxu0 %v6387
        %v6502 = vpop.f32.mrb[0].mxu0
        %v6503 = vadd.f32 0.0, %v6502
        %v6504 = vpop.f32.mrb[0].mxu0
        %6505 = vmatprep.mubr.f32.mxu0 0.0
        %6506 = vmatmul.mubr.f32.gmra.mrb[0].mxu0 %v6389
        %v6507 = vpop.f32.mrb[0].mxu0
        %v6508 = vadd.f32 0.0, %v6507
        %v6509 = vpop.f32.mrb[0].mxu0
        %6510 = vdwg.mxu0
        %v6522 = vcombine.high %v6458, %v6458
        %v6524 = vunpack.c.l.s4 1983009808
        %v6525 = vunpack.c.0.s8 %v6524
        %v6526 = vlaneseq
        %v6527 = vshrl.u32 %v6526, 7
        %v6528 = vsub.s32 %v6525, %v6527
        %v6529 = vrot.slane %v6458, %v6528
        %v6531 = vunpack.c.l.s4 1983009808
        %v6532 = vunpack.c.0.s8 %v6531
        %v6533 = vlaneseq
        %v6534 = vshrl.u32 %v6533, 7
        %v6535 = vsub.s32 %v6532, %v6534
        %v6536 = vrot.slane %v6522, %v6535
        %v6537 = vcombine.high %v6529, %v6529
        %v6538 = vcombine.high %v6536, %v6536
        %v6539 = vcombine.high %v6463, %v6463
        %v6541 = vunpack.c.l.s4 1983009808
        %v6542 = vunpack.c.0.s8 %v6541
        %v6543 = vlaneseq
        %v6544 = vshrl.u32 %v6543, 7
        %v6545 = vsub.s32 %v6542, %v6544
        %v6546 = vrot.slane %v6463, %v6545
        %v6548 = vunpack.c.l.s4 1983009808
        %v6549 = vunpack.c.0.s8 %v6548
        %v6550 = vlaneseq
        %v6551 = vshrl.u32 %v6550, 7
        %v6552 = vsub.s32 %v6549, %v6551
        %v6553 = vrot.slane %v6539, %v6552
        %v6554 = vcombine.high %v6546, %v6546
        %v6555 = vcombine.high %v6553, %v6553
        %v6556 = vcombine.high %v6468, %v6468
        %v6558 = vunpack.c.l.s4 1983009808
        %v6559 = vunpack.c.0.s8 %v6558
        %v6560 = vlaneseq
        %v6561 = vshrl.u32 %v6560, 7
        %v6562 = vsub.s32 %v6559, %v6561
        %v6563 = vrot.slane %v6468, %v6562
        %v6565 = vunpack.c.l.s4 1983009808
        %v6566 = vunpack.c.0.s8 %v6565
        %v6567 = vlaneseq
        %v6568 = vshrl.u32 %v6567, 7
        %v6569 = vsub.s32 %v6566, %v6568
        %v6570 = vrot.slane %v6556, %v6569
        %v6571 = vcombine.high %v6563, %v6563
        %v6572 = vcombine.high %v6570, %v6570
        %v6573 = vcombine.high %v6473, %v6473
        %v6575 = vunpack.c.l.s4 1983009808
        %v6576 = vunpack.c.0.s8 %v6575
        %v6577 = vlaneseq
        %v6578 = vshrl.u32 %v6577, 7
        %v6579 = vsub.s32 %v6576, %v6578
        %v6580 = vrot.slane %v6473, %v6579
        %v6582 = vunpack.c.l.s4 1983009808
        %v6583 = vunpack.c.0.s8 %v6582
        %v6584 = vlaneseq
        %v6585 = vshrl.u32 %v6584, 7
        %v6586 = vsub.s32 %v6583, %v6585
        %v6587 = vrot.slane %v6573, %v6586
        %v6588 = vcombine.high %v6580, %v6580
        %v6589 = vcombine.high %v6587, %v6587
        %v6590 = vcombine.high %v6478, %v6478
        %v6592 = vunpack.c.l.s4 1983009808
        %v6593 = vunpack.c.0.s8 %v6592
        %v6594 = vlaneseq
        %v6595 = vshrl.u32 %v6594, 7
        %v6596 = vsub.s32 %v6593, %v6595
        %v6597 = vrot.slane %v6478, %v6596
        %v6599 = vunpack.c.l.s4 1983009808
        %v6600 = vunpack.c.0.s8 %v6599
        %v6601 = vlaneseq
        %v6602 = vshrl.u32 %v6601, 7
        %v6603 = vsub.s32 %v6600, %v6602
        %v6604 = vrot.slane %v6590, %v6603
        %v6605 = vcombine.high %v6597, %v6597
        %v6606 = vcombine.high %v6604, %v6604
        %v6607 = vcombine.high %v6483, %v6483
        %v6609 = vunpack.c.l.s4 1983009808
        %v6610 = vunpack.c.0.s8 %v6609
        %v6611 = vlaneseq
        %v6612 = vshrl.u32 %v6611, 7
        %v6613 = vsub.s32 %v6610, %v6612
        %v6614 = vrot.slane %v6483, %v6613
        %v6616 = vunpack.c.l.s4 1983009808
        %v6617 = vunpack.c.0.s8 %v6616
        %v6618 = vlaneseq
        %v6619 = vshrl.u32 %v6618, 7
        %v6620 = vsub.s32 %v6617, %v6619
        %v6621 = vrot.slane %v6607, %v6620
        %v6622 = vcombine.high %v6614, %v6614
        %v6623 = vcombine.high %v6621, %v6621
        %v6624 = vcombine.high %v6488, %v6488
        %v6626 = vunpack.c.l.s4 1983009808
        %v6627 = vunpack.c.0.s8 %v6626
        %v6628 = vlaneseq
        %v6629 = vshrl.u32 %v6628, 7
        %v6630 = vsub.s32 %v6627, %v6629
        %v6631 = vrot.slane %v6488, %v6630
        %v6633 = vunpack.c.l.s4 1983009808
        %v6634 = vunpack.c.0.s8 %v6633
        %v6635 = vlaneseq
        %v6636 = vshrl.u32 %v6635, 7
        %v6637 = vsub.s32 %v6634, %v6636
        %v6638 = vrot.slane %v6624, %v6637
        %v6639 = vcombine.high %v6631, %v6631
        %v6640 = vcombine.high %v6638, %v6638
        %v6641 = vcombine.high %v6493, %v6493
        %v6643 = vunpack.c.l.s4 1983009808
        %v6644 = vunpack.c.0.s8 %v6643
        %v6645 = vlaneseq
        %v6646 = vshrl.u32 %v6645, 7
        %v6647 = vsub.s32 %v6644, %v6646
        %v6648 = vrot.slane %v6493, %v6647
        %v6650 = vunpack.c.l.s4 1983009808
        %v6651 = vunpack.c.0.s8 %v6650
        %v6652 = vlaneseq
        %v6653 = vshrl.u32 %v6652, 7
        %v6654 = vsub.s32 %v6651, %v6653
        %v6655 = vrot.slane %v6641, %v6654
        %v6656 = vcombine.high %v6648, %v6648
        %v6657 = vcombine.high %v6655, %v6655
        %v6658 = vcombine.high %v6498, %v6498
        %v6660 = vunpack.c.l.s4 1983009808
        %v6661 = vunpack.c.0.s8 %v6660
        %v6662 = vlaneseq
        %v6663 = vshrl.u32 %v6662, 7
        %v6664 = vsub.s32 %v6661, %v6663
        %v6665 = vrot.slane %v6498, %v6664
        %v6667 = vunpack.c.l.s4 1983009808
        %v6668 = vunpack.c.0.s8 %v6667
        %v6669 = vlaneseq
        %v6670 = vshrl.u32 %v6669, 7
        %v6671 = vsub.s32 %v6668, %v6670
        %v6672 = vrot.slane %v6658, %v6671
        %v6673 = vcombine.high %v6665, %v6665
        %v6674 = vcombine.high %v6672, %v6672
        %v6675 = vcombine.high %v6503, %v6503
        %v6677 = vunpack.c.l.s4 1983009808
        %v6678 = vunpack.c.0.s8 %v6677
        %v6679 = vlaneseq
        %v6680 = vshrl.u32 %v6679, 7
        %v6681 = vsub.s32 %v6678, %v6680
        %v6682 = vrot.slane %v6503, %v6681
        %v6684 = vunpack.c.l.s4 1983009808
        %v6685 = vunpack.c.0.s8 %v6684
        %v6686 = vlaneseq
        %v6687 = vshrl.u32 %v6686, 7
        %v6688 = vsub.s32 %v6685, %v6687
        %v6689 = vrot.slane %v6675, %v6688
        %v6690 = vcombine.high %v6682, %v6682
        %v6691 = vcombine.high %v6689, %v6689
        %v6693 = vunpack.c.l.s4 1983009808
        %v6694 = vunpack.c.0.s8 %v6693
        %v6695 = vlaneseq
        %v6696 = vshrl.u32 %v6695, 7
        %v6697 = vsub.s32 %v6694, %v6696
        %v6698 = vrot.slane %v6508, %v6697
        %v6699 = vcombine.high %v6698, %v6698
        %v6742 = vld [vmem:[#allocation6 + $0x1e8] sm:$0x1]
        %v6743 = vld [vmem:[#allocation6 + $0x1f0] sm:$0x1]
        %v6744 = vlaneseq
        %v6745 = vshrl.u32 %v6744, 7
        %v6746 = vsub.s32 0, %v6745
        %v6747 = vrot.slane %v6742, %v6746
        %v6749 = vcombine.high %v6747, %v6747
        %v6751 = vunpack.c.l.s4 1983009808
        %v6752 = vunpack.c.0.s8 %v6751
        %v6753 = vlaneseq
        %v6754 = vshrl.u32 %v6753, 7
        %v6755 = vsub.s32 %v6752, %v6754
        %v6756 = vrot.slane %v6747, %v6755
        %v6758 = vunpack.c.l.s4 1983009808
        %v6759 = vunpack.c.0.s8 %v6758
        %v6760 = vlaneseq
        %v6761 = vshrl.u32 %v6760, 7
        %v6762 = vsub.s32 %v6759, %v6761
        %v6763 = vrot.slane %v6749, %v6762
        %v6764 = vcombine.high %v6756, %v6756
        %v6768 = vmul.f32 %v6529, %v6756
        %v6769 = vmul.f32 %v6537, %v6764
        %v6770 = vmul.f32 %v6536, %v6763
        %v6771 = vmul.f32 %v6538, %v6756
        %v6772 = vmul.f32 %v6546, %v6764
        %v6773 = vmul.f32 %v6554, %v6763
        %v6774 = vmul.f32 %v6553, %v6756
        %v6775 = vmul.f32 %v6555, %v6764
        %v6776 = vmul.f32 %v6563, %v6763
        %v6777 = vmul.f32 %v6571, %v6756
        %v6778 = vmul.f32 %v6570, %v6764
        %v6779 = vmul.f32 %v6572, %v6763
        %v6780 = vmul.f32 %v6580, %v6756
        %v6781 = vmul.f32 %v6588, %v6764
        %v6782 = vmul.f32 %v6587, %v6763
        %v6783 = vmul.f32 %v6589, %v6756
        %v6784 = vmul.f32 %v6597, %v6764
        %v6785 = vmul.f32 %v6605, %v6763
        %v6786 = vmul.f32 %v6604, %v6756
        %v6787 = vmul.f32 %v6606, %v6764
        %v6788 = vmul.f32 %v6614, %v6763
        %v6789 = vmul.f32 %v6622, %v6756
        %v6790 = vmul.f32 %v6621, %v6764
        %v6791 = vmul.f32 %v6623, %v6763
        %v6792 = vmul.f32 %v6631, %v6756
        %v6793 = vmul.f32 %v6639, %v6764
        %v6794 = vmul.f32 %v6638, %v6763
        %v6795 = vmul.f32 %v6640, %v6756
        %v6796 = vmul.f32 %v6648, %v6764
        %v6797 = vmul.f32 %v6656, %v6763
        %v6798 = vmul.f32 %v6655, %v6756
        %v6799 = vmul.f32 %v6657, %v6764
        %v6800 = vmul.f32 %v6665, %v6763
        %v6801 = vmul.f32 %v6673, %v6756
        %v6802 = vmul.f32 %v6672, %v6764
        %v6803 = vmul.f32 %v6674, %v6763
        %v6804 = vmul.f32 %v6682, %v6756
        %v6805 = vmul.f32 %v6690, %v6764
        %v6806 = vmul.f32 %v6689, %v6763
        %v6807 = vmul.f32 %v6691, %v6756
        %v6808 = vmul.f32 %v6698, %v6764
        %v6809 = vmul.f32 %v6699, %v6763
        %v6852 = vcombine.low %v6768, %v6769
        %v6854 = vunpack.c.l.s4 1983009808
        %v6855 = vunpack.c.0.s8 %v6854
        %v6856 = vlaneseq
        %v6857 = vshrl.u32 %v6856, 7
        %v6858 = vsub.s32 %v6855, %v6857
        %v6859 = vrot.slane %v6852, %v6858
        %v6861 = vunpack.c.l.s4 1983009808
        %v6862 = vunpack.c.0.s8 %v6861
        %v6863 = vlaneseq
        %v6864 = vshrl.u32 %v6863, 7
        %v6865 = vsub.s32 %v6862, %v6864
        %v6866 = vrot.slane %v6770, %v6865
        %v6867 = vcombine.low %v6859, %v6866
        %v6868 = vcombine.low %v6771, %v6772
        %v6870 = vunpack.c.l.s4 1983009808
        %v6871 = vunpack.c.0.s8 %v6870
        %v6872 = vlaneseq
        %v6873 = vshrl.u32 %v6872, 7
        %v6874 = vsub.s32 %v6871, %v6873
        %v6875 = vrot.slane %v6868, %v6874
        %v6877 = vunpack.c.l.s4 1983009808
        %v6878 = vunpack.c.0.s8 %v6877
        %v6879 = vlaneseq
        %v6880 = vshrl.u32 %v6879, 7
        %v6881 = vsub.s32 %v6878, %v6880
        %v6882 = vrot.slane %v6773, %v6881
        %v6883 = vcombine.low %v6875, %v6882
        %v6884 = vcombine.low %v6774, %v6775
        %v6886 = vunpack.c.l.s4 1983009808
        %v6887 = vunpack.c.0.s8 %v6886
        %v6888 = vlaneseq
        %v6889 = vshrl.u32 %v6888, 7
        %v6890 = vsub.s32 %v6887, %v6889
        %v6891 = vrot.slane %v6884, %v6890
        %v6893 = vunpack.c.l.s4 1983009808
        %v6894 = vunpack.c.0.s8 %v6893
        %v6895 = vlaneseq
        %v6896 = vshrl.u32 %v6895, 7
        %v6897 = vsub.s32 %v6894, %v6896
        %v6898 = vrot.slane %v6776, %v6897
        %v6899 = vcombine.low %v6891, %v6898
        %v6900 = vcombine.low %v6777, %v6778
        %v6902 = vunpack.c.l.s4 1983009808
        %v6903 = vunpack.c.0.s8 %v6902
        %v6904 = vlaneseq
        %v6905 = vshrl.u32 %v6904, 7
        %v6906 = vsub.s32 %v6903, %v6905
        %v6907 = vrot.slane %v6900, %v6906
        %v6909 = vunpack.c.l.s4 1983009808
        %v6910 = vunpack.c.0.s8 %v6909
        %v6911 = vlaneseq
        %v6912 = vshrl.u32 %v6911, 7
        %v6913 = vsub.s32 %v6910, %v6912
        %v6914 = vrot.slane %v6779, %v6913
        %v6915 = vcombine.low %v6907, %v6914
        %v6916 = vcombine.low %v6780, %v6781
        %v6918 = vunpack.c.l.s4 1983009808
        %v6919 = vunpack.c.0.s8 %v6918
        %v6920 = vlaneseq
        %v6921 = vshrl.u32 %v6920, 7
        %v6922 = vsub.s32 %v6919, %v6921
        %v6923 = vrot.slane %v6916, %v6922
        %v6925 = vunpack.c.l.s4 1983009808
        %v6926 = vunpack.c.0.s8 %v6925
        %v6927 = vlaneseq
        %v6928 = vshrl.u32 %v6927, 7
        %v6929 = vsub.s32 %v6926, %v6928
        %v6930 = vrot.slane %v6782, %v6929
        %v6931 = vcombine.low %v6923, %v6930
        %v6932 = vcombine.low %v6783, %v6784
        %v6934 = vunpack.c.l.s4 1983009808
        %v6935 = vunpack.c.0.s8 %v6934
        %v6936 = vlaneseq
        %v6937 = vshrl.u32 %v6936, 7
        %v6938 = vsub.s32 %v6935, %v6937
        %v6939 = vrot.slane %v6932, %v6938
        %v6941 = vunpack.c.l.s4 1983009808
        %v6942 = vunpack.c.0.s8 %v6941
        %v6943 = vlaneseq
        %v6944 = vshrl.u32 %v6943, 7
        %v6945 = vsub.s32 %v6942, %v6944
        %v6946 = vrot.slane %v6785, %v6945
        %v6947 = vcombine.low %v6939, %v6946
        %v6948 = vcombine.low %v6786, %v6787
        %v6950 = vunpack.c.l.s4 1983009808
        %v6951 = vunpack.c.0.s8 %v6950
        %v6952 = vlaneseq
        %v6953 = vshrl.u32 %v6952, 7
        %v6954 = vsub.s32 %v6951, %v6953
        %v6955 = vrot.slane %v6948, %v6954
        %v6957 = vunpack.c.l.s4 1983009808
        %v6958 = vunpack.c.0.s8 %v6957
        %v6959 = vlaneseq
        %v6960 = vshrl.u32 %v6959, 7
        %v6961 = vsub.s32 %v6958, %v6960
        %v6962 = vrot.slane %v6788, %v6961
        %v6963 = vcombine.low %v6955, %v6962
        %v6964 = vcombine.low %v6789, %v6790
        %v6966 = vunpack.c.l.s4 1983009808
        %v6967 = vunpack.c.0.s8 %v6966
        %v6968 = vlaneseq
        %v6969 = vshrl.u32 %v6968, 7
        %v6970 = vsub.s32 %v6967, %v6969
        %v6971 = vrot.slane %v6964, %v6970
        %v6973 = vunpack.c.l.s4 1983009808
        %v6974 = vunpack.c.0.s8 %v6973
        %v6975 = vlaneseq
        %v6976 = vshrl.u32 %v6975, 7
        %v6977 = vsub.s32 %v6974, %v6976
        %v6978 = vrot.slane %v6791, %v6977
        %v6979 = vcombine.low %v6971, %v6978
        %v6980 = vcombine.low %v6792, %v6793
        %v6982 = vunpack.c.l.s4 1983009808
        %v6983 = vunpack.c.0.s8 %v6982
        %v6984 = vlaneseq
        %v6985 = vshrl.u32 %v6984, 7
        %v6986 = vsub.s32 %v6983, %v6985
        %v6987 = vrot.slane %v6980, %v6986
        %v6989 = vunpack.c.l.s4 1983009808
        %v6990 = vunpack.c.0.s8 %v6989
        %v6991 = vlaneseq
        %v6992 = vshrl.u32 %v6991, 7
        %v6993 = vsub.s32 %v6990, %v6992
        %v6994 = vrot.slane %v6794, %v6993
        %v6995 = vcombine.low %v6987, %v6994
        %v6996 = vcombine.low %v6795, %v6796
        %v6998 = vunpack.c.l.s4 1983009808
        %v6999 = vunpack.c.0.s8 %v6998
        %v7000 = vlaneseq
        %v7001 = vshrl.u32 %v7000, 7
        %v7002 = vsub.s32 %v6999, %v7001
        %v7003 = vrot.slane %v6996, %v7002
        %v7005 = vunpack.c.l.s4 1983009808
        %v7006 = vunpack.c.0.s8 %v7005
        %v7007 = vlaneseq
        %v7008 = vshrl.u32 %v7007, 7
        %v7009 = vsub.s32 %v7006, %v7008
        %v7010 = vrot.slane %v6797, %v7009
        %v7011 = vcombine.low %v7003, %v7010
        %v7012 = vcombine.low %v6798, %v6799
        %v7014 = vunpack.c.l.s4 1983009808
        %v7015 = vunpack.c.0.s8 %v7014
        %v7016 = vlaneseq
        %v7017 = vshrl.u32 %v7016, 7
        %v7018 = vsub.s32 %v7015, %v7017
        %v7019 = vrot.slane %v7012, %v7018
        %v7021 = vunpack.c.l.s4 1983009808
        %v7022 = vunpack.c.0.s8 %v7021
        %v7023 = vlaneseq
        %v7024 = vshrl.u32 %v7023, 7
        %v7025 = vsub.s32 %v7022, %v7024
        %v7026 = vrot.slane %v6800, %v7025
        %v7027 = vcombine.low %v7019, %v7026
        %v7028 = vcombine.low %v6801, %v6802
        %v7030 = vunpack.c.l.s4 1983009808
        %v7031 = vunpack.c.0.s8 %v7030
        %v7032 = vlaneseq
        %v7033 = vshrl.u32 %v7032, 7
        %v7034 = vsub.s32 %v7031, %v7033
        %v7035 = vrot.slane %v7028, %v7034
        %v7037 = vunpack.c.l.s4 1983009808
        %v7038 = vunpack.c.0.s8 %v7037
        %v7039 = vlaneseq
        %v7040 = vshrl.u32 %v7039, 7
        %v7041 = vsub.s32 %v7038, %v7040
        %v7042 = vrot.slane %v6803, %v7041
        %v7043 = vcombine.low %v7035, %v7042
        %v7044 = vcombine.low %v6804, %v6805
        %v7046 = vunpack.c.l.s4 1983009808
        %v7047 = vunpack.c.0.s8 %v7046
        %v7048 = vlaneseq
        %v7049 = vshrl.u32 %v7048, 7
        %v7050 = vsub.s32 %v7047, %v7049
        %v7051 = vrot.slane %v7044, %v7050
        %v7053 = vunpack.c.l.s4 1983009808
        %v7054 = vunpack.c.0.s8 %v7053
        %v7055 = vlaneseq
        %v7056 = vshrl.u32 %v7055, 7
        %v7057 = vsub.s32 %v7054, %v7056
        %v7058 = vrot.slane %v6806, %v7057
        %v7059 = vcombine.low %v7051, %v7058
        %v7060 = vcombine.low %v6807, %v6808
        %v7062 = vunpack.c.l.s4 1983009808
        %v7063 = vunpack.c.0.s8 %v7062
        %v7064 = vlaneseq
        %v7065 = vshrl.u32 %v7064, 7
        %v7066 = vsub.s32 %v7063, %v7065
        %v7067 = vrot.slane %v7060, %v7066
        %v7069 = vunpack.c.l.s4 1983009808
        %v7070 = vunpack.c.0.s8 %v7069
        %v7071 = vlaneseq
        %v7072 = vshrl.u32 %v7071, 7
        %v7073 = vsub.s32 %v7070, %v7072
        %v7074 = vrot.slane %v6809, %v7073
        %v7075 = vcombine.low %v7067, %v7074
        %vm7090 = vcmask 62464
        %v7091 = vsel %vm7090, %v6867, 0.0
        %7092 = vadd.xlane.f32.xlu0 %v7091
        %v7093 = vpop.xlane.xlu0 %7092
        %v7094 = vsel %vm7090, %v6883, 0.0
        %7095 = vadd.xlane.f32.xlu0 %v7094
        %v7096 = vpop.xlane.xlu0 %7095
        %v7097 = vsel %vm7090, %v6899, 0.0
        %7098 = vadd.xlane.f32.xlu0 %v7097
        %v7099 = vpop.xlane.xlu0 %7098
        %v7100 = vsel %vm7090, %v6915, 0.0
        %7101 = vadd.xlane.f32.xlu0 %v7100
        %v7102 = vpop.xlane.xlu0 %7101
        %v7103 = vsel %vm7090, %v6931, 0.0
        %7104 = vadd.xlane.f32.xlu0 %v7103
        %v7105 = vpop.xlane.xlu0 %7104
        %v7106 = vsel %vm7090, %v6947, 0.0
        %7107 = vadd.xlane.f32.xlu0 %v7106
        %v7108 = vpop.xlane.xlu0 %7107
        %v7109 = vsel %vm7090, %v6963, 0.0
        %7110 = vadd.xlane.f32.xlu0 %v7109
        %v7111 = vpop.xlane.xlu0 %7110
        %v7112 = vsel %vm7090, %v6979, 0.0
        %7113 = vadd.xlane.f32.xlu0 %v7112
        %v7114 = vpop.xlane.xlu0 %7113
        %v7115 = vsel %vm7090, %v6995, 0.0
        %7116 = vadd.xlane.f32.xlu0 %v7115
        %v7117 = vpop.xlane.xlu0 %7116
        %v7118 = vsel %vm7090, %v7011, 0.0
        %7119 = vadd.xlane.f32.xlu0 %v7118
        %v7120 = vpop.xlane.xlu0 %7119
        %v7121 = vsel %vm7090, %v7027, 0.0
        %7122 = vadd.xlane.f32.xlu0 %v7121
        %v7123 = vpop.xlane.xlu0 %7122
        %v7124 = vsel %vm7090, %v7043, 0.0
        %7125 = vadd.xlane.f32.xlu0 %v7124
        %v7126 = vpop.xlane.xlu0 %7125
        %v7127 = vsel %vm7090, %v7059, 0.0
        %7128 = vadd.xlane.f32.xlu0 %v7127
        %v7129 = vpop.xlane.xlu0 %7128
        %v7130 = vsel %vm7090, %v7075, 0.0
        %7131 = vadd.xlane.f32.xlu0 %v7130
        %v7132 = vpop.xlane.xlu0 %7131
        %v7133 = vlaneseq
        %v7134 = vshrl.u32 %v7133, 7
        %v7135 = vsub.s32 0, %v7134
        %v7136 = vrot.slane %v6743, %v7135
        %v7138 = vcombine.high %v7136, %v7136
        %v7140 = vunpack.c.l.s4 1983009808
        %v7141 = vunpack.c.0.s8 %v7140
        %v7142 = vlaneseq
        %v7143 = vshrl.u32 %v7142, 7
        %v7144 = vsub.s32 %v7141, %v7143
        %v7145 = vrot.slane %v7136, %v7144
        %v7147 = vunpack.c.l.s4 1983009808
        %v7148 = vunpack.c.0.s8 %v7147
        %v7149 = vlaneseq
        %v7150 = vshrl.u32 %v7149, 7
        %v7151 = vsub.s32 %v7148, %v7150
        %v7152 = vrot.slane %v7138, %v7151
        %v7153 = vcombine.high %v7145, %v7145
        %v7157 = vmul.f32 %v6529, %v7145
        %v7158 = vmul.f32 %v6537, %v7153
        %v7159 = vmul.f32 %v6536, %v7152
        %v7160 = vmul.f32 %v6538, %v7145
        %v7161 = vmul.f32 %v6546, %v7153
        %v7162 = vmul.f32 %v6554, %v7152
        %v7163 = vmul.f32 %v6553, %v7145
        %v7164 = vmul.f32 %v6555, %v7153
        %v7165 = vmul.f32 %v6563, %v7152
        %v7166 = vmul.f32 %v6571, %v7145
        %v7167 = vmul.f32 %v6570, %v7153
        %v7168 = vmul.f32 %v6572, %v7152
        %v7169 = vmul.f32 %v6580, %v7145
        %v7170 = vmul.f32 %v6588, %v7153
        %v7171 = vmul.f32 %v6587, %v7152
        %v7172 = vmul.f32 %v6589, %v7145
        %v7173 = vmul.f32 %v6597, %v7153
        %v7174 = vmul.f32 %v6605, %v7152
        %v7175 = vmul.f32 %v6604, %v7145
        %v7176 = vmul.f32 %v6606, %v7153
        %v7177 = vmul.f32 %v6614, %v7152
        %v7178 = vmul.f32 %v6622, %v7145
        %v7179 = vmul.f32 %v6621, %v7153
        %v7180 = vmul.f32 %v6623, %v7152
        %v7181 = vmul.f32 %v6631, %v7145
        %v7182 = vmul.f32 %v6639, %v7153
        %v7183 = vmul.f32 %v6638, %v7152
        %v7184 = vmul.f32 %v6640, %v7145
        %v7185 = vmul.f32 %v6648, %v7153
        %v7186 = vmul.f32 %v6656, %v7152
        %v7187 = vmul.f32 %v6655, %v7145
        %v7188 = vmul.f32 %v6657, %v7153
        %v7189 = vmul.f32 %v6665, %v7152
        %v7190 = vmul.f32 %v6673, %v7145
        %v7191 = vmul.f32 %v6672, %v7153
        %v7192 = vmul.f32 %v6674, %v7152
        %v7193 = vmul.f32 %v6682, %v7145
        %v7194 = vmul.f32 %v6690, %v7153
        %v7195 = vmul.f32 %v6689, %v7152
        %v7196 = vmul.f32 %v6691, %v7145
        %v7197 = vmul.f32 %v6698, %v7153
        %v7198 = vmul.f32 %v6699, %v7152
        %v7241 = vcombine.low %v7157, %v7158
        %v7243 = vunpack.c.l.s4 1983009808
        %v7244 = vunpack.c.0.s8 %v7243
        %v7245 = vlaneseq
        %v7246 = vshrl.u32 %v7245, 7
        %v7247 = vsub.s32 %v7244, %v7246
        %v7248 = vrot.slane %v7241, %v7247
        %v7250 = vunpack.c.l.s4 1983009808
        %v7251 = vunpack.c.0.s8 %v7250
        %v7252 = vlaneseq
        %v7253 = vshrl.u32 %v7252, 7
        %v7254 = vsub.s32 %v7251, %v7253
        %v7255 = vrot.slane %v7159, %v7254
        %v7256 = vcombine.low %v7248, %v7255
        %v7257 = vcombine.low %v7160, %v7161
        %v7259 = vunpack.c.l.s4 1983009808
        %v7260 = vunpack.c.0.s8 %v7259
        %v7261 = vlaneseq
        %v7262 = vshrl.u32 %v7261, 7
        %v7263 = vsub.s32 %v7260, %v7262
        %v7264 = vrot.slane %v7257, %v7263
        %v7266 = vunpack.c.l.s4 1983009808
        %v7267 = vunpack.c.0.s8 %v7266
        %v7268 = vlaneseq
        %v7269 = vshrl.u32 %v7268, 7
        %v7270 = vsub.s32 %v7267, %v7269
        %v7271 = vrot.slane %v7162, %v7270
        %v7272 = vcombine.low %v7264, %v7271
        %v7273 = vcombine.low %v7163, %v7164
        %v7275 = vunpack.c.l.s4 1983009808
        %v7276 = vunpack.c.0.s8 %v7275
        %v7277 = vlaneseq
        %v7278 = vshrl.u32 %v7277, 7
        %v7279 = vsub.s32 %v7276, %v7278
        %v7280 = vrot.slane %v7273, %v7279
        %v7282 = vunpack.c.l.s4 1983009808
        %v7283 = vunpack.c.0.s8 %v7282
        %v7284 = vlaneseq
        %v7285 = vshrl.u32 %v7284, 7
        %v7286 = vsub.s32 %v7283, %v7285
        %v7287 = vrot.slane %v7165, %v7286
        %v7288 = vcombine.low %v7280, %v7287
        %v7289 = vcombine.low %v7166, %v7167
        %v7291 = vunpack.c.l.s4 1983009808
        %v7292 = vunpack.c.0.s8 %v7291
        %v7293 = vlaneseq
        %v7294 = vshrl.u32 %v7293, 7
        %v7295 = vsub.s32 %v7292, %v7294
        %v7296 = vrot.slane %v7289, %v7295
        %v7298 = vunpack.c.l.s4 1983009808
        %v7299 = vunpack.c.0.s8 %v7298
        %v7300 = vlaneseq
        %v7301 = vshrl.u32 %v7300, 7
        %v7302 = vsub.s32 %v7299, %v7301
        %v7303 = vrot.slane %v7168, %v7302
        %v7304 = vcombine.low %v7296, %v7303
        %v7305 = vcombine.low %v7169, %v7170
        %v7307 = vunpack.c.l.s4 1983009808
        %v7308 = vunpack.c.0.s8 %v7307
        %v7309 = vlaneseq
        %v7310 = vshrl.u32 %v7309, 7
        %v7311 = vsub.s32 %v7308, %v7310
        %v7312 = vrot.slane %v7305, %v7311
        %v7314 = vunpack.c.l.s4 1983009808
        %v7315 = vunpack.c.0.s8 %v7314
        %v7316 = vlaneseq
        %v7317 = vshrl.u32 %v7316, 7
        %v7318 = vsub.s32 %v7315, %v7317
        %v7319 = vrot.slane %v7171, %v7318
        %v7320 = vcombine.low %v7312, %v7319
        %v7321 = vcombine.low %v7172, %v7173
        %v7323 = vunpack.c.l.s4 1983009808
        %v7324 = vunpack.c.0.s8 %v7323
        %v7325 = vlaneseq
        %v7326 = vshrl.u32 %v7325, 7
        %v7327 = vsub.s32 %v7324, %v7326
        %v7328 = vrot.slane %v7321, %v7327
        %v7330 = vunpack.c.l.s4 1983009808
        %v7331 = vunpack.c.0.s8 %v7330
        %v7332 = vlaneseq
        %v7333 = vshrl.u32 %v7332, 7
        %v7334 = vsub.s32 %v7331, %v7333
        %v7335 = vrot.slane %v7174, %v7334
        %v7336 = vcombine.low %v7328, %v7335
        %v7337 = vcombine.low %v7175, %v7176
        %v7339 = vunpack.c.l.s4 1983009808
        %v7340 = vunpack.c.0.s8 %v7339
        %v7341 = vlaneseq
        %v7342 = vshrl.u32 %v7341, 7
        %v7343 = vsub.s32 %v7340, %v7342
        %v7344 = vrot.slane %v7337, %v7343
        %v7346 = vunpack.c.l.s4 1983009808
        %v7347 = vunpack.c.0.s8 %v7346
        %v7348 = vlaneseq
        %v7349 = vshrl.u32 %v7348, 7
        %v7350 = vsub.s32 %v7347, %v7349
        %v7351 = vrot.slane %v7177, %v7350
        %v7352 = vcombine.low %v7344, %v7351
        %v7353 = vcombine.low %v7178, %v7179
        %v7355 = vunpack.c.l.s4 1983009808
        %v7356 = vunpack.c.0.s8 %v7355
        %v7357 = vlaneseq
        %v7358 = vshrl.u32 %v7357, 7
        %v7359 = vsub.s32 %v7356, %v7358
        %v7360 = vrot.slane %v7353, %v7359
        %v7362 = vunpack.c.l.s4 1983009808
        %v7363 = vunpack.c.0.s8 %v7362
        %v7364 = vlaneseq
        %v7365 = vshrl.u32 %v7364, 7
        %v7366 = vsub.s32 %v7363, %v7365
        %v7367 = vrot.slane %v7180, %v7366
        %v7368 = vcombine.low %v7360, %v7367
        %v7369 = vcombine.low %v7181, %v7182
        %v7371 = vunpack.c.l.s4 1983009808
        %v7372 = vunpack.c.0.s8 %v7371
        %v7373 = vlaneseq
        %v7374 = vshrl.u32 %v7373, 7
        %v7375 = vsub.s32 %v7372, %v7374
        %v7376 = vrot.slane %v7369, %v7375
        %v7378 = vunpack.c.l.s4 1983009808
        %v7379 = vunpack.c.0.s8 %v7378
        %v7380 = vlaneseq
        %v7381 = vshrl.u32 %v7380, 7
        %v7382 = vsub.s32 %v7379, %v7381
        %v7383 = vrot.slane %v7183, %v7382
        %v7384 = vcombine.low %v7376, %v7383
        %v7385 = vcombine.low %v7184, %v7185
        %v7387 = vunpack.c.l.s4 1983009808
        %v7388 = vunpack.c.0.s8 %v7387
        %v7389 = vlaneseq
        %v7390 = vshrl.u32 %v7389, 7
        %v7391 = vsub.s32 %v7388, %v7390
        %v7392 = vrot.slane %v7385, %v7391
        %v7394 = vunpack.c.l.s4 1983009808
        %v7395 = vunpack.c.0.s8 %v7394
        %v7396 = vlaneseq
        %v7397 = vshrl.u32 %v7396, 7
        %v7398 = vsub.s32 %v7395, %v7397
        %v7399 = vrot.slane %v7186, %v7398
        %v7400 = vcombine.low %v7392, %v7399
        %v7401 = vcombine.low %v7187, %v7188
        %v7403 = vunpack.c.l.s4 1983009808
        %v7404 = vunpack.c.0.s8 %v7403
        %v7405 = vlaneseq
        %v7406 = vshrl.u32 %v7405, 7
        %v7407 = vsub.s32 %v7404, %v7406
        %v7408 = vrot.slane %v7401, %v7407
        %v7410 = vunpack.c.l.s4 1983009808
        %v7411 = vunpack.c.0.s8 %v7410
        %v7412 = vlaneseq
        %v7413 = vshrl.u32 %v7412, 7
        %v7414 = vsub.s32 %v7411, %v7413
        %v7415 = vrot.slane %v7189, %v7414
        %v7416 = vcombine.low %v7408, %v7415
        %v7417 = vcombine.low %v7190, %v7191
        %v7419 = vunpack.c.l.s4 1983009808
        %v7420 = vunpack.c.0.s8 %v7419
        %v7421 = vlaneseq
        %v7422 = vshrl.u32 %v7421, 7
        %v7423 = vsub.s32 %v7420, %v7422
        %v7424 = vrot.slane %v7417, %v7423
        %v7426 = vunpack.c.l.s4 1983009808
        %v7427 = vunpack.c.0.s8 %v7426
        %v7428 = vlaneseq
        %v7429 = vshrl.u32 %v7428, 7
        %v7430 = vsub.s32 %v7427, %v7429
        %v7431 = vrot.slane %v7192, %v7430
        %v7432 = vcombine.low %v7424, %v7431
        %v7433 = vcombine.low %v7193, %v7194
        %v7435 = vunpack.c.l.s4 1983009808
        %v7436 = vunpack.c.0.s8 %v7435
        %v7437 = vlaneseq
        %v7438 = vshrl.u32 %v7437, 7
        %v7439 = vsub.s32 %v7436, %v7438
        %v7440 = vrot.slane %v7433, %v7439
        %v7442 = vunpack.c.l.s4 1983009808
        %v7443 = vunpack.c.0.s8 %v7442
        %v7444 = vlaneseq
        %v7445 = vshrl.u32 %v7444, 7
        %v7446 = vsub.s32 %v7443, %v7445
        %v7447 = vrot.slane %v7195, %v7446
        %v7448 = vcombine.low %v7440, %v7447
        %v7449 = vcombine.low %v7196, %v7197
        %v7451 = vunpack.c.l.s4 1983009808
        %v7452 = vunpack.c.0.s8 %v7451
        %v7453 = vlaneseq
        %v7454 = vshrl.u32 %v7453, 7
        %v7455 = vsub.s32 %v7452, %v7454
        %v7456 = vrot.slane %v7449, %v7455
        %v7458 = vunpack.c.l.s4 1983009808
        %v7459 = vunpack.c.0.s8 %v7458
        %v7460 = vlaneseq
        %v7461 = vshrl.u32 %v7460, 7
        %v7462 = vsub.s32 %v7459, %v7461
        %v7463 = vrot.slane %v7198, %v7462
        %v7464 = vcombine.low %v7456, %v7463
        %v7479 = vsel %vm7090, %v7256, 0.0
        %7480 = vadd.xlane.f32.xlu0 %v7479
        %v7481 = vpop.xlane.xlu0 %7480
        %v7482 = vsel %vm7090, %v7272, 0.0
        %7483 = vadd.xlane.f32.xlu0 %v7482
        %v7484 = vpop.xlane.xlu0 %7483
        %v7485 = vsel %vm7090, %v7288, 0.0
        %7486 = vadd.xlane.f32.xlu0 %v7485
        %v7487 = vpop.xlane.xlu0 %7486
        %v7488 = vsel %vm7090, %v7304, 0.0
        %7489 = vadd.xlane.f32.xlu0 %v7488
        %v7490 = vpop.xlane.xlu0 %7489
        %v7491 = vsel %vm7090, %v7320, 0.0
        %7492 = vadd.xlane.f32.xlu0 %v7491
        %v7493 = vpop.xlane.xlu0 %7492
        %v7494 = vsel %vm7090, %v7336, 0.0
        %7495 = vadd.xlane.f32.xlu0 %v7494
        %v7496 = vpop.xlane.xlu0 %7495
        %v7497 = vsel %vm7090, %v7352, 0.0
        %7498 = vadd.xlane.f32.xlu0 %v7497
        %v7499 = vpop.xlane.xlu0 %7498
        %v7500 = vsel %vm7090, %v7368, 0.0
        %7501 = vadd.xlane.f32.xlu0 %v7500
        %v7502 = vpop.xlane.xlu0 %7501
        %v7503 = vsel %vm7090, %v7384, 0.0
        %7504 = vadd.xlane.f32.xlu0 %v7503
        %v7505 = vpop.xlane.xlu0 %7504
        %v7506 = vsel %vm7090, %v7400, 0.0
        %7507 = vadd.xlane.f32.xlu0 %v7506
        %v7508 = vpop.xlane.xlu0 %7507
        %v7509 = vsel %vm7090, %v7416, 0.0
        %7510 = vadd.xlane.f32.xlu0 %v7509
        %v7511 = vpop.xlane.xlu0 %7510
        %v7512 = vsel %vm7090, %v7432, 0.0
        %7513 = vadd.xlane.f32.xlu0 %v7512
        %v7514 = vpop.xlane.xlu0 %7513
        %v7515 = vsel %vm7090, %v7448, 0.0
        %7516 = vadd.xlane.f32.xlu0 %v7515
        %v7517 = vpop.xlane.xlu0 %7516
        %v7518 = vsel %vm7090, %v7464, 0.0
        %7519 = vadd.xlane.f32.xlu0 %v7518
        %v7520 = vpop.xlane.xlu0 %7519
        %v7535 = vlaneseq
        %v7536 = vshrl.u32 %v7535, 7
        %v7537 = vsub.s32 %v189, %v7536
        %v7538 = vrot.slane %v7093, %v7537
        %v7539 = vlaneseq
        %v7540 = vshrl.u32 %v7539, 7
        %v7541 = vsub.s32 %v189, %v7540
        %v7542 = vrot.slane %v7096, %v7541
        %v7543 = vlaneseq
        %v7544 = vshrl.u32 %v7543, 7
        %v7545 = vsub.s32 %v189, %v7544
        %v7546 = vrot.slane %v7099, %v7545
        %v7547 = vlaneseq
        %v7548 = vshrl.u32 %v7547, 7
        %v7549 = vsub.s32 %v189, %v7548
        %v7550 = vrot.slane %v7102, %v7549
        %v7551 = vlaneseq
        %v7552 = vshrl.u32 %v7551, 7
        %v7553 = vsub.s32 %v189, %v7552
        %v7554 = vrot.slane %v7105, %v7553
        %v7555 = vlaneseq
        %v7556 = vshrl.u32 %v7555, 7
        %v7557 = vsub.s32 %v189, %v7556
        %v7558 = vrot.slane %v7108, %v7557
        %v7559 = vlaneseq
        %v7560 = vshrl.u32 %v7559, 7
        %v7561 = vsub.s32 %v189, %v7560
        %v7562 = vrot.slane %v7111, %v7561
        %v7563 = vlaneseq
        %v7564 = vshrl.u32 %v7563, 7
        %v7565 = vsub.s32 %v189, %v7564
        %v7566 = vrot.slane %v7114, %v7565
        %v7567 = vlaneseq
        %v7568 = vshrl.u32 %v7567, 7
        %v7569 = vsub.s32 %v189, %v7568
        %v7570 = vrot.slane %v7117, %v7569
        %v7571 = vlaneseq
        %v7572 = vshrl.u32 %v7571, 7
        %v7573 = vsub.s32 %v189, %v7572
        %v7574 = vrot.slane %v7120, %v7573
        %v7575 = vlaneseq
        %v7576 = vshrl.u32 %v7575, 7
        %v7577 = vsub.s32 %v189, %v7576
        %v7578 = vrot.slane %v7123, %v7577
        %v7579 = vlaneseq
        %v7580 = vshrl.u32 %v7579, 7
        %v7581 = vsub.s32 %v189, %v7580
        %v7582 = vrot.slane %v7126, %v7581
        %v7583 = vlaneseq
        %v7584 = vshrl.u32 %v7583, 7
        %v7585 = vsub.s32 %v189, %v7584
        %v7586 = vrot.slane %v7129, %v7585
        %v7587 = vlaneseq
        %v7588 = vshrl.u32 %v7587, 7
        %v7589 = vsub.s32 %v189, %v7588
        %v7590 = vrot.slane %v7132, %v7589
        %v7591 = vsel %vm2529, %v7538, %v7538
        %v7592 = vsel %vm2532, %v7538, %v7591
        %v7593 = vsel %vm2539, %v7538, %v7592
        %v7594 = vsel %vm2548, %v7538, %v7593
        %v7595 = vsel %vm2529, %v7542, %v7542
        %v7596 = vsel %vm2532, %v7542, %v7595
        %v7597 = vsel %vm2539, %v7542, %v7596
        %v7598 = vsel %vm2548, %v7542, %v7597
        %v7599 = vsel %vm2529, %v7546, %v7546
        %v7600 = vsel %vm2532, %v7546, %v7599
        %v7601 = vsel %vm2539, %v7546, %v7600
        %v7602 = vsel %vm2548, %v7546, %v7601
        %v7603 = vsel %vm2529, %v7550, %v7550
        %v7604 = vsel %vm2532, %v7550, %v7603
        %v7605 = vsel %vm2539, %v7550, %v7604
        %v7606 = vsel %vm2548, %v7550, %v7605
        %v7607 = vsel %vm2529, %v7554, %v7554
        %v7608 = vsel %vm2532, %v7554, %v7607
        %v7609 = vsel %vm2539, %v7554, %v7608
        %v7610 = vsel %vm2548, %v7554, %v7609
        %v7611 = vsel %vm2529, %v7558, %v7558
        %v7612 = vsel %vm2532, %v7558, %v7611
        %v7613 = vsel %vm2539, %v7558, %v7612
        %v7614 = vsel %vm2548, %v7558, %v7613
        %v7615 = vsel %vm2529, %v7562, %v7562
        %v7616 = vsel %vm2532, %v7562, %v7615
        %v7617 = vsel %vm2539, %v7562, %v7616
        %v7618 = vsel %vm2548, %v7562, %v7617
        %v7619 = vsel %vm2529, %v7566, %v7566
        %v7620 = vsel %vm2532, %v7566, %v7619
        %v7621 = vsel %vm2539, %v7566, %v7620
        %v7622 = vsel %vm2548, %v7566, %v7621
        %v7623 = vsel %vm2529, %v7570, %v7570
        %v7624 = vsel %vm2532, %v7570, %v7623
        %v7625 = vsel %vm2539, %v7570, %v7624
        %v7626 = vsel %vm2548, %v7570, %v7625
        %v7627 = vsel %vm2529, %v7574, %v7574
        %v7628 = vsel %vm2532, %v7574, %v7627
        %v7629 = vsel %vm2539, %v7574, %v7628
        %v7630 = vsel %vm2548, %v7574, %v7629
        %v7631 = vsel %vm2529, %v7578, %v7578
        %v7632 = vsel %vm2532, %v7578, %v7631
        %v7633 = vsel %vm2539, %v7578, %v7632
        %v7634 = vsel %vm2548, %v7578, %v7633
        %v7635 = vsel %vm2529, %v7582, %v7582
        %v7636 = vsel %vm2532, %v7582, %v7635
        %v7637 = vsel %vm2539, %v7582, %v7636
        %v7638 = vsel %vm2548, %v7582, %v7637
        %v7639 = vsel %vm2529, %v7586, %v7586
        %v7640 = vsel %vm2532, %v7586, %v7639
        %v7641 = vsel %vm2539, %v7586, %v7640
        %v7642 = vsel %vm2548, %v7586, %v7641
        %v7643 = vsel %vm2529, %v7590, %v7590
        %v7644 = vsel %vm2532, %v7590, %v7643
        %v7645 = vsel %vm2539, %v7590, %v7644
        %v7646 = vsel %vm2548, %v7590, %v7645
        %v7661 = vadd.f32 %v7481, %v7594
        %v7662 = vadd.f32 %v7484, %v7598
        %v7663 = vadd.f32 %v7487, %v7602
        %v7664 = vadd.f32 %v7490, %v7606
        %v7665 = vadd.f32 %v7493, %v7610
        %v7666 = vadd.f32 %v7496, %v7614
        %v7667 = vadd.f32 %v7499, %v7618
        %v7668 = vadd.f32 %v7502, %v7622
        %v7669 = vadd.f32 %v7505, %v7626
        %v7670 = vadd.f32 %v7508, %v7630
        %v7671 = vadd.f32 %v7511, %v7634
        %v7672 = vadd.f32 %v7514, %v7638
        %v7673 = vadd.f32 %v7517, %v7642
        %v7674 = vadd.f32 %v7520, %v7646
        %vm7675 = vcmp.gt.f32.partialorder %v7661, 0.0
        %vm7676 = vcmp.gt.f32.partialorder %v7662, 0.0
        %vm7677 = vcmp.gt.f32.partialorder %v7663, 0.0
        %vm7678 = vcmp.gt.f32.partialorder %v7664, 0.0
        %vm7679 = vcmp.gt.f32.partialorder %v7665, 0.0
        %vm7680 = vcmp.gt.f32.partialorder %v7666, 0.0
        %vm7681 = vcmp.gt.f32.partialorder %v7667, 0.0
        %vm7682 = vcmp.gt.f32.partialorder %v7668, 0.0
        %vm7683 = vcmp.gt.f32.partialorder %v7669, 0.0
        %vm7684 = vcmp.gt.f32.partialorder %v7670, 0.0
        %vm7685 = vcmp.gt.f32.partialorder %v7671, 0.0
        %vm7686 = vcmp.gt.f32.partialorder %v7672, 0.0
        %vm7687 = vcmp.gt.f32.partialorder %v7673, 0.0
        %vm7688 = vcmp.gt.f32.partialorder %v7674, 0.0
        %v7689 = vmul.f32 %v7661, 0.2
        %v7690 = vmul.f32 %v7662, 0.2
        %v7691 = vmul.f32 %v7663, 0.2
        %v7692 = vmul.f32 %v7664, 0.2
        %v7693 = vmul.f32 %v7665, 0.2
        %v7694 = vmul.f32 %v7666, 0.2
        %v7695 = vmul.f32 %v7667, 0.2
        %v7696 = vmul.f32 %v7668, 0.2
        %v7697 = vmul.f32 %v7669, 0.2
        %v7698 = vmul.f32 %v7670, 0.2
        %v7699 = vmul.f32 %v7671, 0.2
        %v7700 = vmul.f32 %v7672, 0.2
        %v7701 = vmul.f32 %v7673, 0.2
        %v7702 = vmul.f32 %v7674, 0.2
        %v7703 = vsel %vm7675, %v7661, %v7689
        %v7704 = vsel %vm7676, %v7662, %v7690
        %v7705 = vsel %vm7677, %v7663, %v7691
        %v7706 = vsel %vm7678, %v7664, %v7692
        %v7707 = vsel %vm7679, %v7665, %v7693
        %v7708 = vsel %vm7680, %v7666, %v7694
        %v7709 = vsel %vm7681, %v7667, %v7695
        %v7710 = vsel %vm7682, %v7668, %v7696
        %v7711 = vsel %vm7683, %v7669, %v7697
        %v7712 = vsel %vm7684, %v7670, %v7698
        %v7713 = vsel %vm7685, %v7671, %v7699
        %v7714 = vsel %vm7686, %v7672, %v7700
        %v7715 = vsel %vm7687, %v7673, %v7701
        %v7716 = vsel %vm7688, %v7674, %v7702
        %v7717 = vsel %vm4872, %v7703, -inf
        %7718 = vmax.xlane.f32.xlu0 %v7717
        %v7719 = vpop.xlane.xlu0 %7718
        %v7720 = vsel %vm4872, %v7704, -inf
        %7721 = vmax.xlane.f32.xlu0 %v7720
        %v7722 = vpop.xlane.xlu0 %7721
        %v7723 = vsel %vm4872, %v7705, -inf
        %7724 = vmax.xlane.f32.xlu0 %v7723
        %v7725 = vpop.xlane.xlu0 %7724
        %v7726 = vsel %vm4872, %v7706, -inf
        %7727 = vmax.xlane.f32.xlu0 %v7726
        %v7728 = vpop.xlane.xlu0 %7727
        %v7729 = vsel %vm4872, %v7707, -inf
        %7730 = vmax.xlane.f32.xlu0 %v7729
        %v7731 = vpop.xlane.xlu0 %7730
        %v7732 = vsel %vm4872, %v7708, -inf
        %7733 = vmax.xlane.f32.xlu0 %v7732
        %v7734 = vpop.xlane.xlu0 %7733
        %v7735 = vsel %vm4872, %v7709, -inf
        %7736 = vmax.xlane.f32.xlu0 %v7735
        %v7737 = vpop.xlane.xlu0 %7736
        %v7738 = vsel %vm4872, %v7710, -inf
        %7739 = vmax.xlane.f32.xlu0 %v7738
        %v7740 = vpop.xlane.xlu0 %7739
        %v7741 = vsel %vm4872, %v7711, -inf
        %7742 = vmax.xlane.f32.xlu0 %v7741
        %v7743 = vpop.xlane.xlu0 %7742
        %v7744 = vsel %vm4872, %v7712, -inf
        %7745 = vmax.xlane.f32.xlu0 %v7744
        %v7746 = vpop.xlane.xlu0 %7745
        %v7747 = vsel %vm4872, %v7713, -inf
        %7748 = vmax.xlane.f32.xlu0 %v7747
        %v7749 = vpop.xlane.xlu0 %7748
        %v7750 = vsel %vm4872, %v7714, -inf
        %7751 = vmax.xlane.f32.xlu0 %v7750
        %v7752 = vpop.xlane.xlu0 %7751
        %v7753 = vsel %vm4872, %v7715, -inf
        %7754 = vmax.xlane.f32.xlu0 %v7753
        %v7755 = vpop.xlane.xlu0 %7754
        %v7756 = vsel %vm4872, %v7716, -inf
        %7757 = vmax.xlane.f32.xlu0 %v7756
        %v7758 = vpop.xlane.xlu0 %7757
        %v7759 = vsub.f32 %v7703, %v7719
        %v7760 = vsub.f32 %v7704, %v7722
        %v7761 = vsub.f32 %v7705, %v7725
        %v7762 = vsub.f32 %v7706, %v7728
        %v7763 = vsub.f32 %v7707, %v7731
        %v7764 = vsub.f32 %v7708, %v7734
        %v7765 = vsub.f32 %v7709, %v7737
        %v7766 = vsub.f32 %v7710, %v7740
        %v7767 = vsub.f32 %v7711, %v7743
        %v7768 = vsub.f32 %v7712, %v7746
        %v7769 = vsub.f32 %v7713, %v7749
        %v7770 = vsub.f32 %v7714, %v7752
        %v7771 = vsub.f32 %v7715, %v7755
        %v7772 = vsub.f32 %v7716, %v7758
        %v7773 = vmul.f32 %v7759, 1.442695
        %v7774 = vpow.pop %v7773
        %v7775 = vmul.f32 %v7760, 1.442695
        %v7776 = vpow.pop %v7775
        %v7777 = vmul.f32 %v7761, 1.442695
        %v7778 = vpow.pop %v7777
        %v7779 = vmul.f32 %v7762, 1.442695
        %v7780 = vpow.pop %v7779
        %v7781 = vmul.f32 %v7763, 1.442695
        %v7782 = vpow.pop %v7781
        %v7783 = vmul.f32 %v7764, 1.442695
        %v7784 = vpow.pop %v7783
        %v7785 = vmul.f32 %v7765, 1.442695
        %v7786 = vpow.pop %v7785
        %v7787 = vmul.f32 %v7766, 1.442695
        %v7788 = vpow.pop %v7787
        %v7789 = vmul.f32 %v7767, 1.442695
        %v7790 = vpow.pop %v7789
        %v7791 = vmul.f32 %v7768, 1.442695
        %v7792 = vpow.pop %v7791
        %v7793 = vmul.f32 %v7769, 1.442695
        %v7794 = vpow.pop %v7793
        %v7795 = vmul.f32 %v7770, 1.442695
        %v7796 = vpow.pop %v7795
        %v7797 = vmul.f32 %v7771, 1.442695
        %v7798 = vpow.pop %v7797
        %v7799 = vmul.f32 %v7772, 1.442695
        %v7800 = vpow.pop %v7799
        %v7801 = vsel %vm4872, %v7774, 0.0
        %7802 = vadd.xlane.f32.xlu0 %v7801
        %v7803 = vpop.xlane.xlu0 %7802
        %v7804 = vsel %vm4872, %v7776, 0.0
        %7805 = vadd.xlane.f32.xlu0 %v7804
        %v7806 = vpop.xlane.xlu0 %7805
        %v7807 = vsel %vm4872, %v7778, 0.0
        %7808 = vadd.xlane.f32.xlu0 %v7807
        %v7809 = vpop.xlane.xlu0 %7808
        %v7810 = vsel %vm4872, %v7780, 0.0
        %7811 = vadd.xlane.f32.xlu0 %v7810
        %v7812 = vpop.xlane.xlu0 %7811
        %v7813 = vsel %vm4872, %v7782, 0.0
        %7814 = vadd.xlane.f32.xlu0 %v7813
        %v7815 = vpop.xlane.xlu0 %7814
        %v7816 = vsel %vm4872, %v7784, 0.0
        %7817 = vadd.xlane.f32.xlu0 %v7816
        %v7818 = vpop.xlane.xlu0 %7817
        %v7819 = vsel %vm4872, %v7786, 0.0
        %7820 = vadd.xlane.f32.xlu0 %v7819
        %v7821 = vpop.xlane.xlu0 %7820
        %v7822 = vsel %vm4872, %v7788, 0.0
        %7823 = vadd.xlane.f32.xlu0 %v7822
        %v7824 = vpop.xlane.xlu0 %7823
        %v7825 = vsel %vm4872, %v7790, 0.0
        %7826 = vadd.xlane.f32.xlu0 %v7825
        %v7827 = vpop.xlane.xlu0 %7826
        %v7828 = vsel %vm4872, %v7792, 0.0
        %7829 = vadd.xlane.f32.xlu0 %v7828
        %v7830 = vpop.xlane.xlu0 %7829
        %v7831 = vsel %vm4872, %v7794, 0.0
        %7832 = vadd.xlane.f32.xlu0 %v7831
        %v7833 = vpop.xlane.xlu0 %7832
        %v7834 = vsel %vm4872, %v7796, 0.0
        %7835 = vadd.xlane.f32.xlu0 %v7834
        %v7836 = vpop.xlane.xlu0 %7835
        %v7837 = vsel %vm4872, %v7798, 0.0
        %7838 = vadd.xlane.f32.xlu0 %v7837
        %v7839 = vpop.xlane.xlu0 %7838
        %v7840 = vsel %vm4872, %v7800, 0.0
        %7841 = vadd.xlane.f32.xlu0 %v7840
        %v7842 = vpop.xlane.xlu0 %7841
        %v7843 = vrcp.pop %v7803
        %v7844 = vmul.f32 %v7774, %v7843
        %v7845 = vrcp.pop %v7806
        %v7846 = vmul.f32 %v7776, %v7845
        %v7847 = vrcp.pop %v7809
        %v7848 = vmul.f32 %v7778, %v7847
        %v7849 = vrcp.pop %v7812
        %v7850 = vmul.f32 %v7780, %v7849
        %v7851 = vrcp.pop %v7815
        %v7852 = vmul.f32 %v7782, %v7851
        %v7853 = vrcp.pop %v7818
        %v7854 = vmul.f32 %v7784, %v7853
        %v7855 = vrcp.pop %v7821
        %v7856 = vmul.f32 %v7786, %v7855
        %v7857 = vrcp.pop %v7824
        %v7858 = vmul.f32 %v7788, %v7857
        %v7859 = vrcp.pop %v7827
        %v7860 = vmul.f32 %v7790, %v7859
        %v7861 = vrcp.pop %v7830
        %v7862 = vmul.f32 %v7792, %v7861
        %v7863 = vrcp.pop %v7833
        %v7864 = vmul.f32 %v7794, %v7863
        %v7865 = vrcp.pop %v7836
        %v7866 = vmul.f32 %v7796, %v7865
        %v7867 = vrcp.pop %v7839
        %v7868 = vmul.f32 %v7798, %v7867
        %v7869 = vrcp.pop %v7842
        %v7870 = vmul.f32 %v7800, %v7869
        %7872 = vset.pattern.permute.xlu0 0
        %7873 = vperm.xlu0 %7872, %v7844
        %v7874 = vpop.permute.xlu0 %7873
        %7877 = vset.pattern.permute.xlu0 0
        %7878 = vperm.xlu0 %7877, %v7846
        %v7879 = vpop.permute.xlu0 %7878
        %7882 = vset.pattern.permute.xlu0 0
        %7883 = vperm.xlu0 %7882, %v7848
        %v7884 = vpop.permute.xlu0 %7883
        %7887 = vset.pattern.permute.xlu0 0
        %7888 = vperm.xlu0 %7887, %v7850
        %v7889 = vpop.permute.xlu0 %7888
        %7892 = vset.pattern.permute.xlu0 0
        %7893 = vperm.xlu0 %7892, %v7852
        %v7894 = vpop.permute.xlu0 %7893
        %7897 = vset.pattern.permute.xlu0 0
        %7898 = vperm.xlu0 %7897, %v7854
        %v7899 = vpop.permute.xlu0 %7898
        %7902 = vset.pattern.permute.xlu0 0
        %7903 = vperm.xlu0 %7902, %v7856
        %v7904 = vpop.permute.xlu0 %7903
        %7907 = vset.pattern.permute.xlu0 0
        %7908 = vperm.xlu0 %7907, %v7858
        %v7909 = vpop.permute.xlu0 %7908
        %7912 = vset.pattern.permute.xlu0 0
        %7913 = vperm.xlu0 %7912, %v7860
        %v7914 = vpop.permute.xlu0 %7913
        %7917 = vset.pattern.permute.xlu0 0
        %7918 = vperm.xlu0 %7917, %v7862
        %v7919 = vpop.permute.xlu0 %7918
        %7922 = vset.pattern.permute.xlu0 0
        %7923 = vperm.xlu0 %7922, %v7864
        %v7924 = vpop.permute.xlu0 %7923
        %7927 = vset.pattern.permute.xlu0 0
        %7928 = vperm.xlu0 %7927, %v7866
        %v7929 = vpop.permute.xlu0 %7928
        %7932 = vset.pattern.permute.xlu0 0
        %7933 = vperm.xlu0 %7932, %v7868
        %v7934 = vpop.permute.xlu0 %7933
        %7937 = vset.pattern.permute.xlu0 0
        %7938 = vperm.xlu0 %7937, %v7870
        %v7939 = vpop.permute.xlu0 %7938
        %v7941 = vlaneseq
        %v7942 = vshrl.u32 %v7941, 7
        %v7943 = vsub.s32 0, %v7942
        %v7944 = vrot.slane %v6529, %v7943
        %v7945 = vlaneseq
        %v7946 = vshrl.u32 %v7945, 7
        %v7947 = vsub.s32 0, %v7946
        %v7948 = vrot.slane %v6538, %v7947
        %v7949 = vlaneseq
        %v7950 = vshrl.u32 %v7949, 7
        %v7951 = vsub.s32 0, %v7950
        %v7952 = vrot.slane %v6553, %v7951
        %v7953 = vlaneseq
        %v7954 = vshrl.u32 %v7953, 7
        %v7955 = vsub.s32 0, %v7954
        %v7956 = vrot.slane %v6571, %v7955
        %v7957 = vlaneseq
        %v7958 = vshrl.u32 %v7957, 7
        %v7959 = vsub.s32 0, %v7958
        %v7960 = vrot.slane %v6580, %v7959
        %v7961 = vlaneseq
        %v7962 = vshrl.u32 %v7961, 7
        %v7963 = vsub.s32 0, %v7962
        %v7964 = vrot.slane %v6589, %v7963
        %v7965 = vlaneseq
        %v7966 = vshrl.u32 %v7965, 7
        %v7967 = vsub.s32 0, %v7966
        %v7968 = vrot.slane %v6604, %v7967
        %v7969 = vlaneseq
        %v7970 = vshrl.u32 %v7969, 7
        %v7971 = vsub.s32 0, %v7970
        %v7972 = vrot.slane %v6622, %v7971
        %v7973 = vlaneseq
        %v7974 = vshrl.u32 %v7973, 7
        %v7975 = vsub.s32 0, %v7974
        %v7976 = vrot.slane %v6631, %v7975
        %v7977 = vlaneseq
        %v7978 = vshrl.u32 %v7977, 7
        %v7979 = vsub.s32 0, %v7978
        %v7980 = vrot.slane %v6640, %v7979
        %v7981 = vlaneseq
        %v7982 = vshrl.u32 %v7981, 7
        %v7983 = vsub.s32 0, %v7982
        %v7984 = vrot.slane %v6655, %v7983
        %v7985 = vlaneseq
        %v7986 = vshrl.u32 %v7985, 7
        %v7987 = vsub.s32 0, %v7986
        %v7988 = vrot.slane %v6673, %v7987
        %v7989 = vlaneseq
        %v7990 = vshrl.u32 %v7989, 7
        %v7991 = vsub.s32 0, %v7990
        %v7992 = vrot.slane %v6682, %v7991
        %v7993 = vlaneseq
        %v7994 = vshrl.u32 %v7993, 7
        %v7995 = vsub.s32 0, %v7994
        %v7996 = vrot.slane %v6691, %v7995
        %v7997 = vmul.f32 %v7874, %v7944
        %v7998 = vmul.f32 %v7879, %v7948
        %v7999 = vmul.f32 %v7884, %v7952
        %v8000 = vmul.f32 %v7889, %v7956
        %v8001 = vmul.f32 %v7894, %v7960
        %v8002 = vmul.f32 %v7899, %v7964
        %v8003 = vmul.f32 %v7904, %v7968
        %v8004 = vmul.f32 %v7909, %v7972
        %v8005 = vmul.f32 %v7914, %v7976
        %v8006 = vmul.f32 %v7919, %v7980
        %v8007 = vmul.f32 %v7924, %v7984
        %v8008 = vmul.f32 %v7929, %v7988
        %v8009 = vmul.f32 %v7934, %v7992
        %v8010 = vmul.f32 %v7939, %v7996
        %v8011 = vadd.f32 %v7997, 0.0
        %v8012 = vadd.f32 %v7998, 0.0
        %v8013 = vadd.f32 %v7999, 0.0
        %v8014 = vadd.f32 %v8000, 0.0
        %v8015 = vadd.f32 %v8001, 0.0
        %v8016 = vadd.f32 %v8002, 0.0
        %v8017 = vadd.f32 %v8003, 0.0
        %v8018 = vadd.f32 %v8004, 0.0
        %v8019 = vadd.f32 %v8005, 0.0
        %v8020 = vadd.f32 %v8006, 0.0
        %v8021 = vadd.f32 %v8007, 0.0
        %v8022 = vadd.f32 %v8008, 0.0
        %v8023 = vadd.f32 %v8009, 0.0
        %v8024 = vadd.f32 %v8010, 0.0
        %8025 = vset.pattern.permute.xlu0 1
        %8026 = vperm.xlu0 %8025, %v7844
        %v8027 = vpop.permute.xlu0 %8026
        %8029 = vset.pattern.permute.xlu0 1
        %8030 = vperm.xlu0 %8029, %v7846
        %v8031 = vpop.permute.xlu0 %8030
        %8033 = vset.pattern.permute.xlu0 1
        %8034 = vperm.xlu0 %8033, %v7848
        %v8035 = vpop.permute.xlu0 %8034
        %8037 = vset.pattern.permute.xlu0 1
        %8038 = vperm.xlu0 %8037, %v7850
        %v8039 = vpop.permute.xlu0 %8038
        %8041 = vset.pattern.permute.xlu0 1
        %8042 = vperm.xlu0 %8041, %v7852
        %v8043 = vpop.permute.xlu0 %8042
        %8045 = vset.pattern.permute.xlu0 1
        %8046 = vperm.xlu0 %8045, %v7854
        %v8047 = vpop.permute.xlu0 %8046
        %8049 = vset.pattern.permute.xlu0 1
        %8050 = vperm.xlu0 %8049, %v7856
        %v8051 = vpop.permute.xlu0 %8050
        %8053 = vset.pattern.permute.xlu0 1
        %8054 = vperm.xlu0 %8053, %v7858
        %v8055 = vpop.permute.xlu0 %8054
        %8057 = vset.pattern.permute.xlu0 1
        %8058 = vperm.xlu0 %8057, %v7860
        %v8059 = vpop.permute.xlu0 %8058
        %8061 = vset.pattern.permute.xlu0 1
        %8062 = vperm.xlu0 %8061, %v7862
        %v8063 = vpop.permute.xlu0 %8062
        %8065 = vset.pattern.permute.xlu0 1
        %8066 = vperm.xlu0 %8065, %v7864
        %v8067 = vpop.permute.xlu0 %8066
        %8069 = vset.pattern.permute.xlu0 1
        %8070 = vperm.xlu0 %8069, %v7866
        %v8071 = vpop.permute.xlu0 %8070
        %8073 = vset.pattern.permute.xlu0 1
        %8074 = vperm.xlu0 %8073, %v7868
        %v8075 = vpop.permute.xlu0 %8074
        %8077 = vset.pattern.permute.xlu0 1
        %8078 = vperm.xlu0 %8077, %v7870
        %v8079 = vpop.permute.xlu0 %8078
        %v8081 = vlaneseq
        %v8082 = vshrl.u32 %v8081, 7
        %v8083 = vsub.s32 1, %v8082
        %v8084 = vrot.slane %v6529, %v8083
        %v8085 = vlaneseq
        %v8086 = vshrl.u32 %v8085, 7
        %v8087 = vsub.s32 1, %v8086
        %v8088 = vrot.slane %v6538, %v8087
        %v8089 = vlaneseq
        %v8090 = vshrl.u32 %v8089, 7
        %v8091 = vsub.s32 1, %v8090
        %v8092 = vrot.slane %v6553, %v8091
        %v8093 = vlaneseq
        %v8094 = vshrl.u32 %v8093, 7
        %v8095 = vsub.s32 1, %v8094
        %v8096 = vrot.slane %v6571, %v8095
        %v8097 = vlaneseq
        %v8098 = vshrl.u32 %v8097, 7
        %v8099 = vsub.s32 1, %v8098
        %v8100 = vrot.slane %v6580, %v8099
        %v8101 = vlaneseq
        %v8102 = vshrl.u32 %v8101, 7
        %v8103 = vsub.s32 1, %v8102
        %v8104 = vrot.slane %v6589, %v8103
        %v8105 = vlaneseq
        %v8106 = vshrl.u32 %v8105, 7
        %v8107 = vsub.s32 1, %v8106
        %v8108 = vrot.slane %v6604, %v8107
        %v8109 = vlaneseq
        %v8110 = vshrl.u32 %v8109, 7
        %v8111 = vsub.s32 1, %v8110
        %v8112 = vrot.slane %v6622, %v8111
        %v8113 = vlaneseq
        %v8114 = vshrl.u32 %v8113, 7
        %v8115 = vsub.s32 1, %v8114
        %v8116 = vrot.slane %v6631, %v8115
        %v8117 = vlaneseq
        %v8118 = vshrl.u32 %v8117, 7
        %v8119 = vsub.s32 1, %v8118
        %v8120 = vrot.slane %v6640, %v8119
        %v8121 = vlaneseq
        %v8122 = vshrl.u32 %v8121, 7
        %v8123 = vsub.s32 1, %v8122
        %v8124 = vrot.slane %v6655, %v8123
        %v8125 = vlaneseq
        %v8126 = vshrl.u32 %v8125, 7
        %v8127 = vsub.s32 1, %v8126
        %v8128 = vrot.slane %v6673, %v8127
        %v8129 = vlaneseq
        %v8130 = vshrl.u32 %v8129, 7
        %v8131 = vsub.s32 1, %v8130
        %v8132 = vrot.slane %v6682, %v8131
        %v8133 = vlaneseq
        %v8134 = vshrl.u32 %v8133, 7
        %v8135 = vsub.s32 1, %v8134
        %v8136 = vrot.slane %v6691, %v8135
        %v8137 = vmul.f32 %v8027, %v8084
        %v8138 = vmul.f32 %v8031, %v8088
        %v8139 = vmul.f32 %v8035, %v8092
        %v8140 = vmul.f32 %v8039, %v8096
        %v8141 = vmul.f32 %v8043, %v8100
        %v8142 = vmul.f32 %v8047, %v8104
        %v8143 = vmul.f32 %v8051, %v8108
        %v8144 = vmul.f32 %v8055, %v8112
        %v8145 = vmul.f32 %v8059, %v8116
        %v8146 = vmul.f32 %v8063, %v8120
        %v8147 = vmul.f32 %v8067, %v8124
        %v8148 = vmul.f32 %v8071, %v8128
        %v8149 = vmul.f32 %v8075, %v8132
        %v8150 = vmul.f32 %v8079, %v8136
        %v8151 = vadd.f32 %v8011, %v8137
        %v8152 = vadd.f32 %v8012, %v8138
        %v8153 = vadd.f32 %v8013, %v8139
        %v8154 = vadd.f32 %v8014, %v8140
        %v8155 = vadd.f32 %v8015, %v8141
        %v8156 = vadd.f32 %v8016, %v8142
        %v8157 = vadd.f32 %v8017, %v8143
        %v8158 = vadd.f32 %v8018, %v8144
        %v8159 = vadd.f32 %v8019, %v8145
        %v8160 = vadd.f32 %v8020, %v8146
        %v8161 = vadd.f32 %v8021, %v8147
        %v8162 = vadd.f32 %v8022, %v8148
        %v8163 = vadd.f32 %v8023, %v8149
        %v8164 = vadd.f32 %v8024, %v8150
        %8165 = vset.pattern.permute.xlu0 2
        %8166 = vperm.xlu0 %8165, %v7844
        %v8167 = vpop.permute.xlu0 %8166
        %8169 = vset.pattern.permute.xlu0 2
        %8170 = vperm.xlu0 %8169, %v7846
        %v8171 = vpop.permute.xlu0 %8170
        %8173 = vset.pattern.permute.xlu0 2
        %8174 = vperm.xlu0 %8173, %v7848
        %v8175 = vpop.permute.xlu0 %8174
        %8177 = vset.pattern.permute.xlu0 2
        %8178 = vperm.xlu0 %8177, %v7850
        %v8179 = vpop.permute.xlu0 %8178
        %8181 = vset.pattern.permute.xlu0 2
        %8182 = vperm.xlu0 %8181, %v7852
        %v8183 = vpop.permute.xlu0 %8182
        %8185 = vset.pattern.permute.xlu0 2
        %8186 = vperm.xlu0 %8185, %v7854
        %v8187 = vpop.permute.xlu0 %8186
        %8189 = vset.pattern.permute.xlu0 2
        %8190 = vperm.xlu0 %8189, %v7856
        %v8191 = vpop.permute.xlu0 %8190
        %8193 = vset.pattern.permute.xlu0 2
        %8194 = vperm.xlu0 %8193, %v7858
        %v8195 = vpop.permute.xlu0 %8194
        %8197 = vset.pattern.permute.xlu0 2
        %8198 = vperm.xlu0 %8197, %v7860
        %v8199 = vpop.permute.xlu0 %8198
        %8201 = vset.pattern.permute.xlu0 2
        %8202 = vperm.xlu0 %8201, %v7862
        %v8203 = vpop.permute.xlu0 %8202
        %8205 = vset.pattern.permute.xlu0 2
        %8206 = vperm.xlu0 %8205, %v7864
        %v8207 = vpop.permute.xlu0 %8206
        %8209 = vset.pattern.permute.xlu0 2
        %8210 = vperm.xlu0 %8209, %v7866
        %v8211 = vpop.permute.xlu0 %8210
        %8213 = vset.pattern.permute.xlu0 2
        %8214 = vperm.xlu0 %8213, %v7868
        %v8215 = vpop.permute.xlu0 %8214
        %8217 = vset.pattern.permute.xlu0 2
        %8218 = vperm.xlu0 %8217, %v7870
        %v8219 = vpop.permute.xlu0 %8218
        %v8221 = vlaneseq
        %v8222 = vshrl.u32 %v8221, 7
        %v8223 = vsub.s32 0, %v8222
        %v8224 = vrot.slane %v6537, %v8223
        %v8225 = vlaneseq
        %v8226 = vshrl.u32 %v8225, 7
        %v8227 = vsub.s32 0, %v8226
        %v8228 = vrot.slane %v6546, %v8227
        %v8229 = vlaneseq
        %v8230 = vshrl.u32 %v8229, 7
        %v8231 = vsub.s32 0, %v8230
        %v8232 = vrot.slane %v6555, %v8231
        %v8233 = vlaneseq
        %v8234 = vshrl.u32 %v8233, 7
        %v8235 = vsub.s32 0, %v8234
        %v8236 = vrot.slane %v6570, %v8235
        %v8237 = vlaneseq
        %v8238 = vshrl.u32 %v8237, 7
        %v8239 = vsub.s32 0, %v8238
        %v8240 = vrot.slane %v6588, %v8239
        %v8241 = vlaneseq
        %v8242 = vshrl.u32 %v8241, 7
        %v8243 = vsub.s32 0, %v8242
        %v8244 = vrot.slane %v6597, %v8243
        %v8245 = vlaneseq
        %v8246 = vshrl.u32 %v8245, 7
        %v8247 = vsub.s32 0, %v8246
        %v8248 = vrot.slane %v6606, %v8247
        %v8249 = vlaneseq
        %v8250 = vshrl.u32 %v8249, 7
        %v8251 = vsub.s32 0, %v8250
        %v8252 = vrot.slane %v6621, %v8251
        %v8253 = vlaneseq
        %v8254 = vshrl.u32 %v8253, 7
        %v8255 = vsub.s32 0, %v8254
        %v8256 = vrot.slane %v6639, %v8255
        %v8257 = vlaneseq
        %v8258 = vshrl.u32 %v8257, 7
        %v8259 = vsub.s32 0, %v8258
        %v8260 = vrot.slane %v6648, %v8259
        %v8261 = vlaneseq
        %v8262 = vshrl.u32 %v8261, 7
        %v8263 = vsub.s32 0, %v8262
        %v8264 = vrot.slane %v6657, %v8263
        %v8265 = vlaneseq
        %v8266 = vshrl.u32 %v8265, 7
        %v8267 = vsub.s32 0, %v8266
        %v8268 = vrot.slane %v6672, %v8267
        %v8269 = vlaneseq
        %v8270 = vshrl.u32 %v8269, 7
        %v8271 = vsub.s32 0, %v8270
        %v8272 = vrot.slane %v6690, %v8271
        %v8273 = vlaneseq
        %v8274 = vshrl.u32 %v8273, 7
        %v8275 = vsub.s32 0, %v8274
        %v8276 = vrot.slane %v6698, %v8275
        %v8277 = vmul.f32 %v8167, %v8224
        %v8278 = vmul.f32 %v8171, %v8228
        %v8279 = vmul.f32 %v8175, %v8232
        %v8280 = vmul.f32 %v8179, %v8236
        %v8281 = vmul.f32 %v8183, %v8240
        %v8282 = vmul.f32 %v8187, %v8244
        %v8283 = vmul.f32 %v8191, %v8248
        %v8284 = vmul.f32 %v8195, %v8252
        %v8285 = vmul.f32 %v8199, %v8256
        %v8286 = vmul.f32 %v8203, %v8260
        %v8287 = vmul.f32 %v8207, %v8264
        %v8288 = vmul.f32 %v8211, %v8268
        %v8289 = vmul.f32 %v8215, %v8272
        %v8290 = vmul.f32 %v8219, %v8276
        %v8291 = vadd.f32 %v8151, %v8277
        %v8292 = vadd.f32 %v8152, %v8278
        %v8293 = vadd.f32 %v8153, %v8279
        %v8294 = vadd.f32 %v8154, %v8280
        %v8295 = vadd.f32 %v8155, %v8281
        %v8296 = vadd.f32 %v8156, %v8282
        %v8297 = vadd.f32 %v8157, %v8283
        %v8298 = vadd.f32 %v8158, %v8284
        %v8299 = vadd.f32 %v8159, %v8285
        %v8300 = vadd.f32 %v8160, %v8286
        %v8301 = vadd.f32 %v8161, %v8287
        %v8302 = vadd.f32 %v8162, %v8288
        %v8303 = vadd.f32 %v8163, %v8289
        %v8304 = vadd.f32 %v8164, %v8290
        %8305 = vset.pattern.permute.xlu0 3
        %8306 = vperm.xlu0 %8305, %v7844
        %v8307 = vpop.permute.xlu0 %8306
        %8309 = vset.pattern.permute.xlu0 3
        %8310 = vperm.xlu0 %8309, %v7846
        %v8311 = vpop.permute.xlu0 %8310
        %8313 = vset.pattern.permute.xlu0 3
        %8314 = vperm.xlu0 %8313, %v7848
        %v8315 = vpop.permute.xlu0 %8314
        %8317 = vset.pattern.permute.xlu0 3
        %8318 = vperm.xlu0 %8317, %v7850
        %v8319 = vpop.permute.xlu0 %8318
        %8321 = vset.pattern.permute.xlu0 3
        %8322 = vperm.xlu0 %8321, %v7852
        %v8323 = vpop.permute.xlu0 %8322
        %8325 = vset.pattern.permute.xlu0 3
        %8326 = vperm.xlu0 %8325, %v7854
        %v8327 = vpop.permute.xlu0 %8326
        %8329 = vset.pattern.permute.xlu0 3
        %8330 = vperm.xlu0 %8329, %v7856
        %v8331 = vpop.permute.xlu0 %8330
        %8333 = vset.pattern.permute.xlu0 3
        %8334 = vperm.xlu0 %8333, %v7858
        %v8335 = vpop.permute.xlu0 %8334
        %8337 = vset.pattern.permute.xlu0 3
        %8338 = vperm.xlu0 %8337, %v7860
        %v8339 = vpop.permute.xlu0 %8338
        %8341 = vset.pattern.permute.xlu0 3
        %8342 = vperm.xlu0 %8341, %v7862
        %v8343 = vpop.permute.xlu0 %8342
        %8345 = vset.pattern.permute.xlu0 3
        %8346 = vperm.xlu0 %8345, %v7864
        %v8347 = vpop.permute.xlu0 %8346
        %8349 = vset.pattern.permute.xlu0 3
        %8350 = vperm.xlu0 %8349, %v7866
        %v8351 = vpop.permute.xlu0 %8350
        %8353 = vset.pattern.permute.xlu0 3
        %8354 = vperm.xlu0 %8353, %v7868
        %v8355 = vpop.permute.xlu0 %8354
        %8357 = vset.pattern.permute.xlu0 3
        %8358 = vperm.xlu0 %8357, %v7870
        %v8359 = vpop.permute.xlu0 %8358
        %v8361 = vlaneseq
        %v8362 = vshrl.u32 %v8361, 7
        %v8363 = vsub.s32 1, %v8362
        %v8364 = vrot.slane %v6537, %v8363
        %v8365 = vlaneseq
        %v8366 = vshrl.u32 %v8365, 7
        %v8367 = vsub.s32 1, %v8366
        %v8368 = vrot.slane %v6546, %v8367
        %v8369 = vlaneseq
        %v8370 = vshrl.u32 %v8369, 7
        %v8371 = vsub.s32 1, %v8370
        %v8372 = vrot.slane %v6555, %v8371
        %v8373 = vlaneseq
        %v8374 = vshrl.u32 %v8373, 7
        %v8375 = vsub.s32 1, %v8374
        %v8376 = vrot.slane %v6570, %v8375
        %v8377 = vlaneseq
        %v8378 = vshrl.u32 %v8377, 7
        %v8379 = vsub.s32 1, %v8378
        %v8380 = vrot.slane %v6588, %v8379
        %v8381 = vlaneseq
        %v8382 = vshrl.u32 %v8381, 7
        %v8383 = vsub.s32 1, %v8382
        %v8384 = vrot.slane %v6597, %v8383
        %v8385 = vlaneseq
        %v8386 = vshrl.u32 %v8385, 7
        %v8387 = vsub.s32 1, %v8386
        %v8388 = vrot.slane %v6606, %v8387
        %v8389 = vlaneseq
        %v8390 = vshrl.u32 %v8389, 7
        %v8391 = vsub.s32 1, %v8390
        %v8392 = vrot.slane %v6621, %v8391
        %v8393 = vlaneseq
        %v8394 = vshrl.u32 %v8393, 7
        %v8395 = vsub.s32 1, %v8394
        %v8396 = vrot.slane %v6639, %v8395
        %v8397 = vlaneseq
        %v8398 = vshrl.u32 %v8397, 7
        %v8399 = vsub.s32 1, %v8398
        %v8400 = vrot.slane %v6648, %v8399
        %v8401 = vlaneseq
        %v8402 = vshrl.u32 %v8401, 7
        %v8403 = vsub.s32 1, %v8402
        %v8404 = vrot.slane %v6657, %v8403
        %v8405 = vlaneseq
        %v8406 = vshrl.u32 %v8405, 7
        %v8407 = vsub.s32 1, %v8406
        %v8408 = vrot.slane %v6672, %v8407
        %v8409 = vlaneseq
        %v8410 = vshrl.u32 %v8409, 7
        %v8411 = vsub.s32 1, %v8410
        %v8412 = vrot.slane %v6690, %v8411
        %v8413 = vlaneseq
        %v8414 = vshrl.u32 %v8413, 7
        %v8415 = vsub.s32 1, %v8414
        %v8416 = vrot.slane %v6698, %v8415
        %v8417 = vmul.f32 %v8307, %v8364
        %v8418 = vmul.f32 %v8311, %v8368
        %v8419 = vmul.f32 %v8315, %v8372
        %v8420 = vmul.f32 %v8319, %v8376
        %v8421 = vmul.f32 %v8323, %v8380
        %v8422 = vmul.f32 %v8327, %v8384
        %v8423 = vmul.f32 %v8331, %v8388
        %v8424 = vmul.f32 %v8335, %v8392
        %v8425 = vmul.f32 %v8339, %v8396
        %v8426 = vmul.f32 %v8343, %v8400
        %v8427 = vmul.f32 %v8347, %v8404
        %v8428 = vmul.f32 %v8351, %v8408
        %v8429 = vmul.f32 %v8355, %v8412
        %v8430 = vmul.f32 %v8359, %v8416
        %v8431 = vadd.f32 %v8291, %v8417
        %v8432 = vadd.f32 %v8292, %v8418
        %v8433 = vadd.f32 %v8293, %v8419
        %v8434 = vadd.f32 %v8294, %v8420
        %v8435 = vadd.f32 %v8295, %v8421
        %v8436 = vadd.f32 %v8296, %v8422
        %v8437 = vadd.f32 %v8297, %v8423
        %v8438 = vadd.f32 %v8298, %v8424
        %v8439 = vadd.f32 %v8299, %v8425
        %v8440 = vadd.f32 %v8300, %v8426
        %v8441 = vadd.f32 %v8301, %v8427
        %v8442 = vadd.f32 %v8302, %v8428
        %v8443 = vadd.f32 %v8303, %v8429
        %v8444 = vadd.f32 %v8304, %v8430
        %8445 = vset.pattern.permute.xlu0 4
        %8446 = vperm.xlu0 %8445, %v7844
        %v8447 = vpop.permute.xlu0 %8446
        %8449 = vset.pattern.permute.xlu0 4
        %8450 = vperm.xlu0 %8449, %v7846
        %v8451 = vpop.permute.xlu0 %8450
        %8453 = vset.pattern.permute.xlu0 4
        %8454 = vperm.xlu0 %8453, %v7848
        %v8455 = vpop.permute.xlu0 %8454
        %8457 = vset.pattern.permute.xlu0 4
        %8458 = vperm.xlu0 %8457, %v7850
        %v8459 = vpop.permute.xlu0 %8458
        %8461 = vset.pattern.permute.xlu0 4
        %8462 = vperm.xlu0 %8461, %v7852
        %v8463 = vpop.permute.xlu0 %8462
        %8465 = vset.pattern.permute.xlu0 4
        %8466 = vperm.xlu0 %8465, %v7854
        %v8467 = vpop.permute.xlu0 %8466
        %8469 = vset.pattern.permute.xlu0 4
        %8470 = vperm.xlu0 %8469, %v7856
        %v8471 = vpop.permute.xlu0 %8470
        %8473 = vset.pattern.permute.xlu0 4
        %8474 = vperm.xlu0 %8473, %v7858
        %v8475 = vpop.permute.xlu0 %8474
        %8477 = vset.pattern.permute.xlu0 4
        %8478 = vperm.xlu0 %8477, %v7860
        %v8479 = vpop.permute.xlu0 %8478
        %8481 = vset.pattern.permute.xlu0 4
        %8482 = vperm.xlu0 %8481, %v7862
        %v8483 = vpop.permute.xlu0 %8482
        %8485 = vset.pattern.permute.xlu0 4
        %8486 = vperm.xlu0 %8485, %v7864
        %v8487 = vpop.permute.xlu0 %8486
        %8489 = vset.pattern.permute.xlu0 4
        %8490 = vperm.xlu0 %8489, %v7866
        %v8491 = vpop.permute.xlu0 %8490
        %8493 = vset.pattern.permute.xlu0 4
        %8494 = vperm.xlu0 %8493, %v7868
        %v8495 = vpop.permute.xlu0 %8494
        %8497 = vset.pattern.permute.xlu0 4
        %8498 = vperm.xlu0 %8497, %v7870
        %v8499 = vpop.permute.xlu0 %8498
        %v8501 = vlaneseq
        %v8502 = vshrl.u32 %v8501, 7
        %v8503 = vsub.s32 0, %v8502
        %v8504 = vrot.slane %v6536, %v8503
        %v8505 = vlaneseq
        %v8506 = vshrl.u32 %v8505, 7
        %v8507 = vsub.s32 0, %v8506
        %v8508 = vrot.slane %v6554, %v8507
        %v8509 = vlaneseq
        %v8510 = vshrl.u32 %v8509, 7
        %v8511 = vsub.s32 0, %v8510
        %v8512 = vrot.slane %v6563, %v8511
        %v8513 = vlaneseq
        %v8514 = vshrl.u32 %v8513, 7
        %v8515 = vsub.s32 0, %v8514
        %v8516 = vrot.slane %v6572, %v8515
        %v8517 = vlaneseq
        %v8518 = vshrl.u32 %v8517, 7
        %v8519 = vsub.s32 0, %v8518
        %v8520 = vrot.slane %v6587, %v8519
        %v8521 = vlaneseq
        %v8522 = vshrl.u32 %v8521, 7
        %v8523 = vsub.s32 0, %v8522
        %v8524 = vrot.slane %v6605, %v8523
        %v8525 = vlaneseq
        %v8526 = vshrl.u32 %v8525, 7
        %v8527 = vsub.s32 0, %v8526
        %v8528 = vrot.slane %v6614, %v8527
        %v8529 = vlaneseq
        %v8530 = vshrl.u32 %v8529, 7
        %v8531 = vsub.s32 0, %v8530
        %v8532 = vrot.slane %v6623, %v8531
        %v8533 = vlaneseq
        %v8534 = vshrl.u32 %v8533, 7
        %v8535 = vsub.s32 0, %v8534
        %v8536 = vrot.slane %v6638, %v8535
        %v8537 = vlaneseq
        %v8538 = vshrl.u32 %v8537, 7
        %v8539 = vsub.s32 0, %v8538
        %v8540 = vrot.slane %v6656, %v8539
        %v8541 = vlaneseq
        %v8542 = vshrl.u32 %v8541, 7
        %v8543 = vsub.s32 0, %v8542
        %v8544 = vrot.slane %v6665, %v8543
        %v8545 = vlaneseq
        %v8546 = vshrl.u32 %v8545, 7
        %v8547 = vsub.s32 0, %v8546
        %v8548 = vrot.slane %v6674, %v8547
        %v8549 = vlaneseq
        %v8550 = vshrl.u32 %v8549, 7
        %v8551 = vsub.s32 0, %v8550
        %v8552 = vrot.slane %v6689, %v8551
        %v8553 = vlaneseq
        %v8554 = vshrl.u32 %v8553, 7
        %v8555 = vsub.s32 0, %v8554
        %v8556 = vrot.slane %v6699, %v8555
        %v8557 = vmul.f32 %v8447, %v8504
        %v8558 = vmul.f32 %v8451, %v8508
        %v8559 = vmul.f32 %v8455, %v8512
        %v8560 = vmul.f32 %v8459, %v8516
        %v8561 = vmul.f32 %v8463, %v8520
        %v8562 = vmul.f32 %v8467, %v8524
        %v8563 = vmul.f32 %v8471, %v8528
        %v8564 = vmul.f32 %v8475, %v8532
        %v8565 = vmul.f32 %v8479, %v8536
        %v8566 = vmul.f32 %v8483, %v8540
        %v8567 = vmul.f32 %v8487, %v8544
        %v8568 = vmul.f32 %v8491, %v8548
        %v8569 = vmul.f32 %v8495, %v8552
        %v8570 = vmul.f32 %v8499, %v8556
        %v8571 = vadd.f32 %v8431, %v8557
        %v8572 = vadd.f32 %v8432, %v8558
        %v8573 = vadd.f32 %v8433, %v8559
        %v8574 = vadd.f32 %v8434, %v8560
        %v8575 = vadd.f32 %v8435, %v8561
        %v8576 = vadd.f32 %v8436, %v8562
        %v8577 = vadd.f32 %v8437, %v8563
        %v8578 = vadd.f32 %v8438, %v8564
        %v8579 = vadd.f32 %v8439, %v8565
        %v8580 = vadd.f32 %v8440, %v8566
        %v8581 = vadd.f32 %v8441, %v8567
        %v8582 = vadd.f32 %v8442, %v8568
        %v8583 = vadd.f32 %v8443, %v8569
        %v8584 = vadd.f32 %v8444, %v8570
        %8585 = vset.pattern.permute.xlu0 5
        %8586 = vperm.xlu0 %8585, %v7844
        %v8587 = vpop.permute.xlu0 %8586
        %8589 = vset.pattern.permute.xlu0 5
        %8590 = vperm.xlu0 %8589, %v7846
        %v8591 = vpop.permute.xlu0 %8590
        %8593 = vset.pattern.permute.xlu0 5
        %8594 = vperm.xlu0 %8593, %v7848
        %v8595 = vpop.permute.xlu0 %8594
        %8597 = vset.pattern.permute.xlu0 5
        %8598 = vperm.xlu0 %8597, %v7850
        %v8599 = vpop.permute.xlu0 %8598
        %8601 = vset.pattern.permute.xlu0 5
        %8602 = vperm.xlu0 %8601, %v7852
        %v8603 = vpop.permute.xlu0 %8602
        %8605 = vset.pattern.permute.xlu0 5
        %8606 = vperm.xlu0 %8605, %v7854
        %v8607 = vpop.permute.xlu0 %8606
        %8609 = vset.pattern.permute.xlu0 5
        %8610 = vperm.xlu0 %8609, %v7856
        %v8611 = vpop.permute.xlu0 %8610
        %8613 = vset.pattern.permute.xlu0 5
        %8614 = vperm.xlu0 %8613, %v7858
        %v8615 = vpop.permute.xlu0 %8614
        %8617 = vset.pattern.permute.xlu0 5
        %8618 = vperm.xlu0 %8617, %v7860
        %v8619 = vpop.permute.xlu0 %8618
        %8621 = vset.pattern.permute.xlu0 5
        %8622 = vperm.xlu0 %8621, %v7862
        %v8623 = vpop.permute.xlu0 %8622
        %8625 = vset.pattern.permute.xlu0 5
        %8626 = vperm.xlu0 %8625, %v7864
        %v8627 = vpop.permute.xlu0 %8626
        %8629 = vset.pattern.permute.xlu0 5
        %8630 = vperm.xlu0 %8629, %v7866
        %v8631 = vpop.permute.xlu0 %8630
        %8633 = vset.pattern.permute.xlu0 5
        %8634 = vperm.xlu0 %8633, %v7868
        %v8635 = vpop.permute.xlu0 %8634
        %8637 = vset.pattern.permute.xlu0 5
        %8638 = vperm.xlu0 %8637, %v7870
        %v8639 = vpop.permute.xlu0 %8638
        %v8641 = vlaneseq
        %v8642 = vshrl.u32 %v8641, 7
        %v8643 = vsub.s32 1, %v8642
        %v8644 = vrot.slane %v6536, %v8643
        %v8645 = vlaneseq
        %v8646 = vshrl.u32 %v8645, 7
        %v8647 = vsub.s32 1, %v8646
        %v8648 = vrot.slane %v6554, %v8647
        %v8649 = vlaneseq
        %v8650 = vshrl.u32 %v8649, 7
        %v8651 = vsub.s32 1, %v8650
        %v8652 = vrot.slane %v6563, %v8651
        %v8653 = vlaneseq
        %v8654 = vshrl.u32 %v8653, 7
        %v8655 = vsub.s32 1, %v8654
        %v8656 = vrot.slane %v6572, %v8655
        %v8657 = vlaneseq
        %v8658 = vshrl.u32 %v8657, 7
        %v8659 = vsub.s32 1, %v8658
        %v8660 = vrot.slane %v6587, %v8659
        %v8661 = vlaneseq
        %v8662 = vshrl.u32 %v8661, 7
        %v8663 = vsub.s32 1, %v8662
        %v8664 = vrot.slane %v6605, %v8663
        %v8665 = vlaneseq
        %v8666 = vshrl.u32 %v8665, 7
        %v8667 = vsub.s32 1, %v8666
        %v8668 = vrot.slane %v6614, %v8667
        %v8669 = vlaneseq
        %v8670 = vshrl.u32 %v8669, 7
        %v8671 = vsub.s32 1, %v8670
        %v8672 = vrot.slane %v6623, %v8671
        %v8673 = vlaneseq
        %v8674 = vshrl.u32 %v8673, 7
        %v8675 = vsub.s32 1, %v8674
        %v8676 = vrot.slane %v6638, %v8675
        %v8677 = vlaneseq
        %v8678 = vshrl.u32 %v8677, 7
        %v8679 = vsub.s32 1, %v8678
        %v8680 = vrot.slane %v6656, %v8679
        %v8681 = vlaneseq
        %v8682 = vshrl.u32 %v8681, 7
        %v8683 = vsub.s32 1, %v8682
        %v8684 = vrot.slane %v6665, %v8683
        %v8685 = vlaneseq
        %v8686 = vshrl.u32 %v8685, 7
        %v8687 = vsub.s32 1, %v8686
        %v8688 = vrot.slane %v6674, %v8687
        %v8689 = vlaneseq
        %v8690 = vshrl.u32 %v8689, 7
        %v8691 = vsub.s32 1, %v8690
        %v8692 = vrot.slane %v6689, %v8691
        %v8693 = vlaneseq
        %v8694 = vshrl.u32 %v8693, 7
        %v8695 = vsub.s32 1, %v8694
        %v8696 = vrot.slane %v6699, %v8695
        %v8697 = vmul.f32 %v8587, %v8644
        %v8698 = vmul.f32 %v8591, %v8648
        %v8699 = vmul.f32 %v8595, %v8652
        %v8700 = vmul.f32 %v8599, %v8656
        %v8701 = vmul.f32 %v8603, %v8660
        %v8702 = vmul.f32 %v8607, %v8664
        %v8703 = vmul.f32 %v8611, %v8668
        %v8704 = vmul.f32 %v8615, %v8672
        %v8705 = vmul.f32 %v8619, %v8676
        %v8706 = vmul.f32 %v8623, %v8680
        %v8707 = vmul.f32 %v8627, %v8684
        %v8708 = vmul.f32 %v8631, %v8688
        %v8709 = vmul.f32 %v8635, %v8692
        %v8710 = vmul.f32 %v8639, %v8696
        %v8711 = vadd.f32 %v8571, %v8697
        %v8712 = vadd.f32 %v8572, %v8698
        %v8713 = vadd.f32 %v8573, %v8699
        %v8714 = vadd.f32 %v8574, %v8700
        %v8715 = vadd.f32 %v8575, %v8701
        %v8716 = vadd.f32 %v8576, %v8702
        %v8717 = vadd.f32 %v8577, %v8703
        %v8718 = vadd.f32 %v8578, %v8704
        %v8719 = vadd.f32 %v8579, %v8705
        %v8720 = vadd.f32 %v8580, %v8706
        %v8721 = vadd.f32 %v8581, %v8707
        %v8722 = vadd.f32 %v8582, %v8708
        %v8723 = vadd.f32 %v8583, %v8709
        %v8724 = vadd.f32 %v8584, %v8710
        %v8727 = vcombine.low %v8711, %v8712
        %v8729 = vunpack.c.l.s4 1983009808
        %v8730 = vunpack.c.0.s8 %v8729
        %v8731 = vlaneseq
        %v8732 = vshrl.u32 %v8731, 7
        %v8733 = vsub.s32 %v8730, %v8732
        %v8734 = vrot.slane %v8727, %v8733
        %8735 = vrot.lane.b32.xlu0 %v8734, 64
        %v8736 = vpop.permute.xlu0 %8735
        %vm8738 = vcmask 585216
        %8739 = vst.msk [vmem:[%s178] sm:$0xf] %vm8738, %v8736
        %v8741 = vunpack.c.l.s4 1983009808
        %v8742 = vunpack.c.0.s8 %v8741
        %v8743 = vlaneseq
        %v8744 = vshrl.u32 %v8743, 7
        %v8745 = vsub.s32 %v8742, %v8744
        %v8746 = vrot.slane %v8711, %v8745
        %v8747 = vcombine.high %v8746, %v8746
        %v8749 = vunpack.c.l.s4 1983009808
        %v8750 = vunpack.c.0.s8 %v8749
        %v8751 = vlaneseq
        %v8752 = vshrl.u32 %v8751, 7
        %v8753 = vsub.s32 %v8750, %v8752
        %v8754 = vrot.slane %v8712, %v8753
        %v8755 = vcombine.high %v8754, %v8754
        %v8756 = vcombine.low %v8747, %v8755
        %v8758 = vunpack.c.l.s4 1983009808
        %v8759 = vunpack.c.0.s8 %v8758
        %v8760 = vlaneseq
        %v8761 = vshrl.u32 %v8760, 7
        %v8762 = vsub.s32 %v8759, %v8761
        %v8763 = vrot.slane %v8756, %v8762
        %8764 = vrot.lane.b32.xlu0 %v8763, 72
        %v8765 = vpop.permute.xlu0 %8764
        %vm8767 = vcmask 650816
        %8768 = vst.msk [vmem:[%s178] sm:$0xf] %vm8767, %v8765
        %v8769 = vcombine.high %v8711, %v8711
        %v8771 = vunpack.c.l.s4 1983009808
        %v8772 = vunpack.c.0.s8 %v8771
        %v8773 = vlaneseq
        %v8774 = vshrl.u32 %v8773, 7
        %v8775 = vsub.s32 %v8772, %v8774
        %v8776 = vrot.slane %v8769, %v8775
        %v8777 = vcombine.high %v8712, %v8712
        %v8779 = vunpack.c.l.s4 1983009808
        %v8780 = vunpack.c.0.s8 %v8779
        %v8781 = vlaneseq
        %v8782 = vshrl.u32 %v8781, 7
        %v8783 = vsub.s32 %v8780, %v8782
        %v8784 = vrot.slane %v8777, %v8783
        %v8785 = vcombine.low %v8776, %v8784
        %v8787 = vunpack.c.l.s4 1983009808
        %v8788 = vunpack.c.0.s8 %v8787
        %v8789 = vlaneseq
        %v8790 = vshrl.u32 %v8789, 7
        %v8791 = vsub.s32 %v8788, %v8790
        %v8792 = vrot.slane %v8785, %v8791
        %8793 = vrot.lane.b32.xlu0 %v8792, 80
        %v8794 = vpop.permute.xlu0 %8793
        %vm8796 = vcmask 716416
        %8797 = vst.msk [vmem:[%s178] sm:$0xf] %vm8796, %v8794
        %v8800 = vcombine.low %v8713, %v8714
        %v8802 = vunpack.c.l.s4 1983009808
        %v8803 = vunpack.c.0.s8 %v8802
        %v8804 = vlaneseq
        %v8805 = vshrl.u32 %v8804, 7
        %v8806 = vsub.s32 %v8803, %v8805
        %v8807 = vrot.slane %v8800, %v8806
        %8808 = vrot.lane.b32.xlu0 %v8807, 88
        %v8809 = vpop.permute.xlu0 %8808
        %vm8811 = vcmask 782016
        %8812 = vst.msk [vmem:[%s178] sm:$0xf] %vm8811, %v8809
        %v8814 = vunpack.c.l.s4 1983009808
        %v8815 = vunpack.c.0.s8 %v8814
        %v8816 = vlaneseq
        %v8817 = vshrl.u32 %v8816, 7
        %v8818 = vsub.s32 %v8815, %v8817
        %v8819 = vrot.slane %v8713, %v8818
        %v8820 = vcombine.high %v8819, %v8819
        %v8822 = vunpack.c.l.s4 1983009808
        %v8823 = vunpack.c.0.s8 %v8822
        %v8824 = vlaneseq
        %v8825 = vshrl.u32 %v8824, 7
        %v8826 = vsub.s32 %v8823, %v8825
        %v8827 = vrot.slane %v8714, %v8826
        %v8828 = vcombine.high %v8827, %v8827
        %v8829 = vcombine.low %v8820, %v8828
        %v8831 = vunpack.c.l.s4 1983009808
        %v8832 = vunpack.c.0.s8 %v8831
        %v8833 = vlaneseq
        %v8834 = vshrl.u32 %v8833, 7
        %v8835 = vsub.s32 %v8832, %v8834
        %v8836 = vrot.slane %v8829, %v8835
        %8837 = vrot.lane.b32.xlu0 %v8836, 96
        %v8838 = vpop.permute.xlu0 %8837
        %vm8840 = vcmask 847616
        %8841 = vst.msk [vmem:[%s178] sm:$0xf] %vm8840, %v8838
        %v8842 = vcombine.high %v8713, %v8713
        %v8844 = vunpack.c.l.s4 1983009808
        %v8845 = vunpack.c.0.s8 %v8844
        %v8846 = vlaneseq
        %v8847 = vshrl.u32 %v8846, 7
        %v8848 = vsub.s32 %v8845, %v8847
        %v8849 = vrot.slane %v8842, %v8848
        %v8850 = vcombine.high %v8714, %v8714
        %v8852 = vunpack.c.l.s4 1983009808
        %v8853 = vunpack.c.0.s8 %v8852
        %v8854 = vlaneseq
        %v8855 = vshrl.u32 %v8854, 7
        %v8856 = vsub.s32 %v8853, %v8855
        %v8857 = vrot.slane %v8850, %v8856
        %v8858 = vcombine.low %v8849, %v8857
        %v8860 = vunpack.c.l.s4 1983009808
        %v8861 = vunpack.c.0.s8 %v8860
        %v8862 = vlaneseq
        %v8863 = vshrl.u32 %v8862, 7
        %v8864 = vsub.s32 %v8861, %v8863
        %v8865 = vrot.slane %v8858, %v8864
        %8866 = vrot.lane.b32.xlu0 %v8865, 104
        %v8867 = vpop.permute.xlu0 %8866
        %vm8869 = vcmask 913216
        %8870 = vst.msk [vmem:[%s178] sm:$0xf] %vm8869, %v8867
        %v8873 = vcombine.low %v8715, %v8716
        %v8875 = vunpack.c.l.s4 1983009808
        %v8876 = vunpack.c.0.s8 %v8875
        %v8877 = vlaneseq
        %v8878 = vshrl.u32 %v8877, 7
        %v8879 = vsub.s32 %v8876, %v8878
        %v8880 = vrot.slane %v8873, %v8879
        %8881 = vrot.lane.b32.xlu0 %v8880, 112
        %v8882 = vpop.permute.xlu0 %8881
        %vm8884 = vcmask 978816
        %8885 = vst.msk [vmem:[%s178] sm:$0xf] %vm8884, %v8882
        %v8887 = vunpack.c.l.s4 1983009808
        %v8888 = vunpack.c.0.s8 %v8887
        %v8889 = vlaneseq
        %v8890 = vshrl.u32 %v8889, 7
        %v8891 = vsub.s32 %v8888, %v8890
        %v8892 = vrot.slane %v8715, %v8891
        %v8893 = vcombine.high %v8892, %v8892
        %v8895 = vunpack.c.l.s4 1983009808
        %v8896 = vunpack.c.0.s8 %v8895
        %v8897 = vlaneseq
        %v8898 = vshrl.u32 %v8897, 7
        %v8899 = vsub.s32 %v8896, %v8898
        %v8900 = vrot.slane %v8716, %v8899
        %v8901 = vcombine.high %v8900, %v8900
        %v8902 = vcombine.low %v8893, %v8901
        %v8904 = vunpack.c.l.s4 1983009808
        %v8905 = vunpack.c.0.s8 %v8904
        %v8906 = vlaneseq
        %v8907 = vshrl.u32 %v8906, 7
        %v8908 = vsub.s32 %v8905, %v8907
        %v8909 = vrot.slane %v8902, %v8908
        %8910 = vrot.lane.b32.xlu0 %v8909, 120
        %v8911 = vpop.permute.xlu0 %8910
        %vm8913 = vcmask 1044416
        %8914 = vst.msk [vmem:[%s178] sm:$0xf] %vm8913, %v8911
        %v8915 = vcombine.high %v8715, %v8715
        %v8917 = vunpack.c.l.s4 1983009808
        %v8918 = vunpack.c.0.s8 %v8917
        %v8919 = vlaneseq
        %v8920 = vshrl.u32 %v8919, 7
        %v8921 = vsub.s32 %v8918, %v8920
        %v8922 = vrot.slane %v8915, %v8921
        %v8923 = vcombine.high %v8716, %v8716
        %v8925 = vunpack.c.l.s4 1983009808
        %v8926 = vunpack.c.0.s8 %v8925
        %v8927 = vlaneseq
        %v8928 = vshrl.u32 %v8927, 7
        %v8929 = vsub.s32 %v8926, %v8928
        %v8930 = vrot.slane %v8923, %v8929
        %v8931 = vcombine.low %v8922, %v8930
        %v8933 = vunpack.c.l.s4 1983009808
        %v8934 = vunpack.c.0.s8 %v8933
        %v8935 = vlaneseq
        %v8936 = vshrl.u32 %v8935, 7
        %v8937 = vsub.s32 %v8934, %v8936
        %v8938 = vrot.slane %v8931, %v8937
        %8940 = vst.msk [vmem:[%s178 + $0x4] sm:$0xf] %vm2535, %v8938
        %v8943 = vcombine.low %v8717, %v8718
        %v8945 = vunpack.c.l.s4 1983009808
        %v8946 = vunpack.c.0.s8 %v8945
        %v8947 = vlaneseq
        %v8948 = vshrl.u32 %v8947, 7
        %v8949 = vsub.s32 %v8946, %v8948
        %v8950 = vrot.slane %v8943, %v8949
        %8951 = vrot.lane.b32.xlu0 %v8950, 8
        %v8952 = vpop.permute.xlu0 %8951
        %vm8954 = vcmask 126016
        %8955 = vst.msk [vmem:[%s178 + $0x4] sm:$0xf] %vm8954, %v8952
        %v8957 = vunpack.c.l.s4 1983009808
        %v8958 = vunpack.c.0.s8 %v8957
        %v8959 = vlaneseq
        %v8960 = vshrl.u32 %v8959, 7
        %v8961 = vsub.s32 %v8958, %v8960
        %v8962 = vrot.slane %v8717, %v8961
        %v8963 = vcombine.high %v8962, %v8962
        %v8965 = vunpack.c.l.s4 1983009808
        %v8966 = vunpack.c.0.s8 %v8965
        %v8967 = vlaneseq
        %v8968 = vshrl.u32 %v8967, 7
        %v8969 = vsub.s32 %v8966, %v8968
        %v8970 = vrot.slane %v8718, %v8969
        %v8971 = vcombine.high %v8970, %v8970
        %v8972 = vcombine.low %v8963, %v8971
        %v8974 = vunpack.c.l.s4 1983009808
        %v8975 = vunpack.c.0.s8 %v8974
        %v8976 = vlaneseq
        %v8977 = vshrl.u32 %v8976, 7
        %v8978 = vsub.s32 %v8975, %v8977
        %v8979 = vrot.slane %v8972, %v8978
        %8980 = vrot.lane.b32.xlu0 %v8979, 16
        %v8981 = vpop.permute.xlu0 %8980
        %vm8983 = vcmask 191616
        %8984 = vst.msk [vmem:[%s178 + $0x4] sm:$0xf] %vm8983, %v8981
        %v8985 = vcombine.high %v8717, %v8717
        %v8987 = vunpack.c.l.s4 1983009808
        %v8988 = vunpack.c.0.s8 %v8987
        %v8989 = vlaneseq
        %v8990 = vshrl.u32 %v8989, 7
        %v8991 = vsub.s32 %v8988, %v8990
        %v8992 = vrot.slane %v8985, %v8991
        %v8993 = vcombine.high %v8718, %v8718
        %v8995 = vunpack.c.l.s4 1983009808
        %v8996 = vunpack.c.0.s8 %v8995
        %v8997 = vlaneseq
        %v8998 = vshrl.u32 %v8997, 7
        %v8999 = vsub.s32 %v8996, %v8998
        %v9000 = vrot.slane %v8993, %v8999
        %v9001 = vcombine.low %v8992, %v9000
        %v9003 = vunpack.c.l.s4 1983009808
        %v9004 = vunpack.c.0.s8 %v9003
        %v9005 = vlaneseq
        %v9006 = vshrl.u32 %v9005, 7
        %v9007 = vsub.s32 %v9004, %v9006
        %v9008 = vrot.slane %v9001, %v9007
        %9009 = vrot.lane.b32.xlu0 %v9008, 24
        %v9010 = vpop.permute.xlu0 %9009
        %vm9012 = vcmask 257216
        %9013 = vst.msk [vmem:[%s178 + $0x4] sm:$0xf] %vm9012, %v9010
        %v9016 = vcombine.low %v8719, %v8720
        %v9018 = vunpack.c.l.s4 1983009808
        %v9019 = vunpack.c.0.s8 %v9018
        %v9020 = vlaneseq
        %v9021 = vshrl.u32 %v9020, 7
        %v9022 = vsub.s32 %v9019, %v9021
        %v9023 = vrot.slane %v9016, %v9022
        %9024 = vrot.lane.b32.xlu0 %v9023, 32
        %v9025 = vpop.permute.xlu0 %9024
        %vm9027 = vcmask 322816
        %9028 = vst.msk [vmem:[%s178 + $0x4] sm:$0xf] %vm9027, %v9025
        %v9030 = vunpack.c.l.s4 1983009808
        %v9031 = vunpack.c.0.s8 %v9030
        %v9032 = vlaneseq
        %v9033 = vshrl.u32 %v9032, 7
        %v9034 = vsub.s32 %v9031, %v9033
        %v9035 = vrot.slane %v8719, %v9034
        %v9036 = vcombine.high %v9035, %v9035
        %v9038 = vunpack.c.l.s4 1983009808
        %v9039 = vunpack.c.0.s8 %v9038
        %v9040 = vlaneseq
        %v9041 = vshrl.u32 %v9040, 7
        %v9042 = vsub.s32 %v9039, %v9041
        %v9043 = vrot.slane %v8720, %v9042
        %v9044 = vcombine.high %v9043, %v9043
        %v9045 = vcombine.low %v9036, %v9044
        %v9047 = vunpack.c.l.s4 1983009808
        %v9048 = vunpack.c.0.s8 %v9047
        %v9049 = vlaneseq
        %v9050 = vshrl.u32 %v9049, 7
        %v9051 = vsub.s32 %v9048, %v9050
        %v9052 = vrot.slane %v9045, %v9051
        %9053 = vrot.lane.b32.xlu0 %v9052, 40
        %v9054 = vpop.permute.xlu0 %9053
        %vm9056 = vcmask 388416
        %9057 = vst.msk [vmem:[%s178 + $0x4] sm:$0xf] %vm9056, %v9054
        %v9058 = vcombine.high %v8719, %v8719
        %v9060 = vunpack.c.l.s4 1983009808
        %v9061 = vunpack.c.0.s8 %v9060
        %v9062 = vlaneseq
        %v9063 = vshrl.u32 %v9062, 7
        %v9064 = vsub.s32 %v9061, %v9063
        %v9065 = vrot.slane %v9058, %v9064
        %v9066 = vcombine.high %v8720, %v8720
        %v9068 = vunpack.c.l.s4 1983009808
        %v9069 = vunpack.c.0.s8 %v9068
        %v9070 = vlaneseq
        %v9071 = vshrl.u32 %v9070, 7
        %v9072 = vsub.s32 %v9069, %v9071
        %v9073 = vrot.slane %v9066, %v9072
        %v9074 = vcombine.low %v9065, %v9073
        %v9076 = vunpack.c.l.s4 1983009808
        %v9077 = vunpack.c.0.s8 %v9076
        %v9078 = vlaneseq
        %v9079 = vshrl.u32 %v9078, 7
        %v9080 = vsub.s32 %v9077, %v9079
        %v9081 = vrot.slane %v9074, %v9080
        %9082 = vrot.lane.b32.xlu0 %v9081, 48
        %v9083 = vpop.permute.xlu0 %9082
        %vm9085 = vcmask 454016
        %9086 = vst.msk [vmem:[%s178 + $0x4] sm:$0xf] %vm9085, %v9083
        %v9089 = vcombine.low %v8721, %v8722
        %v9091 = vunpack.c.l.s4 1983009808
        %v9092 = vunpack.c.0.s8 %v9091
        %v9093 = vlaneseq
        %v9094 = vshrl.u32 %v9093, 7
        %v9095 = vsub.s32 %v9092, %v9094
        %v9096 = vrot.slane %v9089, %v9095
        %9097 = vrot.lane.b32.xlu0 %v9096, 56
        %v9098 = vpop.permute.xlu0 %9097
        %vm9100 = vcmask 519616
        %9101 = vst.msk [vmem:[%s178 + $0x4] sm:$0xf] %vm9100, %v9098
        %v9103 = vunpack.c.l.s4 1983009808
        %v9104 = vunpack.c.0.s8 %v9103
        %v9105 = vlaneseq
        %v9106 = vshrl.u32 %v9105, 7
        %v9107 = vsub.s32 %v9104, %v9106
        %v9108 = vrot.slane %v8721, %v9107
        %v9109 = vcombine.high %v9108, %v9108
        %v9111 = vunpack.c.l.s4 1983009808
        %v9112 = vunpack.c.0.s8 %v9111
        %v9113 = vlaneseq
        %v9114 = vshrl.u32 %v9113, 7
        %v9115 = vsub.s32 %v9112, %v9114
        %v9116 = vrot.slane %v8722, %v9115
        %v9117 = vcombine.high %v9116, %v9116
        %v9118 = vcombine.low %v9109, %v9117
        %v9120 = vunpack.c.l.s4 1983009808
        %v9121 = vunpack.c.0.s8 %v9120
        %v9122 = vlaneseq
        %v9123 = vshrl.u32 %v9122, 7
        %v9124 = vsub.s32 %v9121, %v9123
        %v9125 = vrot.slane %v9118, %v9124
        %9126 = vrot.lane.b32.xlu0 %v9125, 64
        %v9127 = vpop.permute.xlu0 %9126
        %9129 = vst.msk [vmem:[%s178 + $0x4] sm:$0xf] %vm8738, %v9127
        %v9130 = vcombine.high %v8721, %v8721
        %v9132 = vunpack.c.l.s4 1983009808
        %v9133 = vunpack.c.0.s8 %v9132
        %v9134 = vlaneseq
        %v9135 = vshrl.u32 %v9134, 7
        %v9136 = vsub.s32 %v9133, %v9135
        %v9137 = vrot.slane %v9130, %v9136
        %v9138 = vcombine.high %v8722, %v8722
        %v9140 = vunpack.c.l.s4 1983009808
        %v9141 = vunpack.c.0.s8 %v9140
        %v9142 = vlaneseq
        %v9143 = vshrl.u32 %v9142, 7
        %v9144 = vsub.s32 %v9141, %v9143
        %v9145 = vrot.slane %v9138, %v9144
        %v9146 = vcombine.low %v9137, %v9145
        %v9148 = vunpack.c.l.s4 1983009808
        %v9149 = vunpack.c.0.s8 %v9148
        %v9150 = vlaneseq
        %v9151 = vshrl.u32 %v9150, 7
        %v9152 = vsub.s32 %v9149, %v9151
        %v9153 = vrot.slane %v9146, %v9152
        %9154 = vrot.lane.b32.xlu0 %v9153, 72
        %v9155 = vpop.permute.xlu0 %9154
        %9157 = vst.msk [vmem:[%s178 + $0x4] sm:$0xf] %vm8767, %v9155
        %v9160 = vcombine.low %v8723, %v8724
        %v9162 = vunpack.c.l.s4 1983009808
        %v9163 = vunpack.c.0.s8 %v9162
        %v9164 = vlaneseq
        %v9165 = vshrl.u32 %v9164, 7
        %v9166 = vsub.s32 %v9163, %v9165
        %v9167 = vrot.slane %v9160, %v9166
        %9168 = vrot.lane.b32.xlu0 %v9167, 80
        %v9169 = vpop.permute.xlu0 %9168
        %9171 = vst.msk [vmem:[%s178 + $0x4] sm:$0xf] %vm8796, %v9169
        %v9173 = vunpack.c.l.s4 1983009808
        %v9174 = vunpack.c.0.s8 %v9173
        %v9175 = vlaneseq
        %v9176 = vshrl.u32 %v9175, 7
        %v9177 = vsub.s32 %v9174, %v9176
        %v9178 = vrot.slane %v8723, %v9177
        %v9179 = vcombine.high %v9178, %v9178
        %v9181 = vunpack.c.l.s4 1983009808
        %v9182 = vunpack.c.0.s8 %v9181
        %v9183 = vlaneseq
        %v9184 = vshrl.u32 %v9183, 7
        %v9185 = vsub.s32 %v9182, %v9184
        %v9186 = vrot.slane %v8724, %v9185
        %v9187 = vcombine.high %v9186, %v9186
        %v9188 = vcombine.low %v9179, %v9187
        %v9190 = vunpack.c.l.s4 1983009808
        %v9191 = vunpack.c.0.s8 %v9190
        %v9192 = vlaneseq
        %v9193 = vshrl.u32 %v9192, 7
        %v9194 = vsub.s32 %v9191, %v9193
        %v9195 = vrot.slane %v9188, %v9194
        %9196 = vrot.lane.b32.xlu0 %v9195, 88
        %v9197 = vpop.permute.xlu0 %9196
        %9199 = vst.msk [vmem:[%s178 + $0x4] sm:$0xf] %vm8811, %v9197
        %v9200 = vcombine.high %v8723, %v8723
        %v9202 = vunpack.c.l.s4 1983009808
        %v9203 = vunpack.c.0.s8 %v9202
        %v9204 = vlaneseq
        %v9205 = vshrl.u32 %v9204, 7
        %v9206 = vsub.s32 %v9203, %v9205
        %v9207 = vrot.slane %v9200, %v9206
        %v9208 = vcombine.high %v8724, %v8724
        %v9210 = vunpack.c.l.s4 1983009808
        %v9211 = vunpack.c.0.s8 %v9210
        %v9212 = vlaneseq
        %v9213 = vshrl.u32 %v9212, 7
        %v9214 = vsub.s32 %v9211, %v9213
        %v9215 = vrot.slane %v9208, %v9214
        %v9216 = vcombine.low %v9207, %v9215
        %v9218 = vunpack.c.l.s4 1983009808
        %v9219 = vunpack.c.0.s8 %v9218
        %v9220 = vlaneseq
        %v9221 = vshrl.u32 %v9220, 7
        %v9222 = vsub.s32 %v9219, %v9221
        %v9223 = vrot.slane %v9216, %v9222
        %9224 = vrot.lane.b32.xlu0 %v9223, 96
        %v9225 = vpop.permute.xlu0 %9224
        %9227 = vst.msk [vmem:[%s178 + $0x4] sm:$0xf] %vm8840, %v9225
        %p9228 = scmp.lt.s32.totalorder %s17, 1
        %s9229 = scalar_select %p9228, %s17, 1
        %s9230 = smul.addr %s9229, 2
        %s9231 = smul.addr %s9230, 4
        %s9232 = scalar_lea.vmem %s2, %s9231
        // Predicated region
        $region37: #{past_encoder_forward.1} parent=27 // pred_check
          %p9233 = pneg %p82
        $region38: #{past_encoder_forward.1} parent=27 // pred_check_branch
          %9235 = sbr.rel (%p9233) target = $region40
        $region39: #{past_encoder_forward.1} parent=27 // pred_region
          _
        $region40: #{past_encoder_forward.1} parent=27 // pred_fallthru
          _
      $region28: #{past_encoder_forward.1} parent=5 // pred_fallthru
        _
      %p9236 = scmp.le.s32.totalorder 2, %s12
      // Predicated region
      $region41: #{past_encoder_forward.1} parent=5 // pred_check
        %p9237 = pneg %p9236
      $region42: #{past_encoder_forward.1} parent=5 // pred_check_branch
        %9239 = sbr.rel (%p9237) target = $region44
      $region43: #{past_encoder_forward.1} parent=5 // pred_region
        %s9240 = ssub.s32 %s12, 2
        // Predicated region
        $region45: #{past_encoder_forward.1} parent=43 // pred_check
          %p9241 = pneg %p88
        $region46: #{past_encoder_forward.1} parent=43 // pred_check_branch
          %9243 = sbr.rel (%p9241) target = $region48
        $region47: #{past_encoder_forward.1} parent=43 // pred_region
          %p9244 = scmp.lt.s32.totalorder %s18, 1
          %s9245 = scalar_select %p9244, %s18, 1
          %s9246 = smul.addr %s9245, 2
          %s9247 = smul.addr %s9246, 4
          %s9248 = scalar_lea.vmem %s2, %s9247
        $region48: #{past_encoder_forward.1} parent=43 // pred_fallthru
          _
      $region44: #{past_encoder_forward.1} parent=5 // pred_fallthru
        _
    $region6: #{past_encoder_forward.1} parent=1 // loop_footer
      %s16 = sadd.s32 1, %s12
    $region7: #{past_encoder_forward.1} parent=1 // loop_footer_branch
      %11 = sbr.rel target = $region3
    $region8: #{past_encoder_forward.1} parent=1 // loop_exit
      _
    %9249 = vsyncpa [#allocation5], 1
    %s9250 = scalar_lea.sflag [#allocation5], 1
    %9251 = vsyncpa %s9250, 1
    %9252 = vsyncpa [#allocation7], 1

</llo_original>
